<compile_context>
chip_gen: v7x
topology: tpu7x:2x2x1
jax: 0.10.0
libtpu: 0.0.40
codegen_flags: <defaults>
</compile_context>

<pallas_src>
import functools
import math

import jax
import jax.numpy as jnp
from jax import lax
from jax.experimental import pallas as pl
from jax.experimental.pallas import tpu as pltpu

NUM_EXPERTS = 6
NEG_BIG = -1e30


def _round_up(x, m):
    return (x + m - 1) // m * m


def _tensorcores_per_chip():
    """Best effort: 2 TensorCores on v7x, 1 on v5e/v6e (the chips we tune for)."""
    try:
        kind = jax.devices()[0].device_kind.lower()
    except Exception:
        return 1
    return 2 if "7" in kind else 1


def _moe_forward_kernel(x_ref, w1_ref, b1_ref, w2_ref, b2_ref, wg_ref,
                        we_ref, be_ref, rsel_ref, ssel_ref, w3_ref, b3_ref,
                        o_ref, *, n_cls):
    f32 = jnp.float32
    bf16 = jnp.bfloat16

    x = x_ref[...]                                                      # bf16 (tb, d_in_pad)

    # ---- block_1: Linear -> ReLU -> (Dropout=id) -> Linear -> ReLU -> (Dropout=id) ----
    h1 = jnp.maximum(
        jnp.dot(x, w1_ref[...], preferred_element_type=f32) + b1_ref[...], 0.0)
    h2 = jnp.maximum(
        jnp.dot(h1.astype(bf16), w2_ref[...], preferred_element_type=f32)
        + b2_ref[...], 0.0)
    h2b = h2.astype(bf16)

    tb = h2.shape[0]
    n_e = NUM_EXPERTS

    # ---- MoE gate: top-2, no jitter (eval). No full softmax: the renormalized ----
    # ---- top-2 mixing weights depend only on the two leading logits.          ----
    logits = jnp.dot(h2b, wg_ref[...], preferred_element_type=f32)      # (tb, E) f32
    ids = lax.broadcasted_iota(jnp.int32, (tb, n_e), 1)

    lmax = jnp.max(logits, axis=-1, keepdims=True)                      # top-1 logit
    first1 = jnp.min(jnp.where(logits == lmax, ids, n_e), axis=-1, keepdims=True)
    mask1 = ids == first1

    logits2 = jnp.where(mask1, NEG_BIG, logits)
    m2 = jnp.max(logits2, axis=-1, keepdims=True)                       # top-2 logit
    first2 = jnp.min(jnp.where(logits2 == m2, ids, n_e), axis=-1, keepdims=True)
    mask2 = ids == first2

    p2 = jnp.exp(m2 - lmax)                                             # in (0, 1]
    w_top1 = 1.0 / (1.0 + p2)                                           # exact renorm weight
    w_top2 = 1.0 - w_top1
    combine = jnp.where(mask1, w_top1, 0.0) + jnp.where(mask2, w_top2, 0.0)  # (tb, E) f32

    # ---- experts: one fused lane-dense matmul over all experts ----
    # ye_all[b, e*H + o] = expert_e(h2)[b, o]
    ye_all = jnp.dot(h2b, we_ref[...], preferred_element_type=f32) + be_ref[...]   # (tb, E*H)
    # broadcast combine over each expert's lane slab (bf16 exact-0/1 selector on the MXU),
    # weight, then sum the slabs back to (tb, H) with a second bf16 selector matmul.
    comb_rep = jnp.dot(combine.astype(bf16), rsel_ref[...],
                       preferred_element_type=f32)                      # (tb, E*H)
    weighted = (ye_all * comb_rep).astype(bf16)
    acc = jnp.dot(weighted, ssel_ref[...], preferred_element_type=f32)  # (tb, H)

    # ---- post_moe: Linear (lane-padded to 128) -> LogSoftmax over valid lanes ----
    out_logits = jnp.dot(acc.astype(bf16), w3_ref[...],
                         preferred_element_type=f32) + b3_ref[...]      # (tb, n_pad)
    n_pad = out_logits.shape[-1]
    cls_ids = lax.broadcasted_iota(jnp.int32, (tb, n_pad), 1)
    masked = jnp.where(cls_ids < n_cls, out_logits, NEG_BIG)
    mo = jnp.max(masked, axis=-1, keepdims=True)
    lse = mo + jnp.log(jnp.sum(jnp.exp(masked - mo), axis=-1, keepdims=True))
    o_ref[...] = (out_logits - lse).astype(o_ref.dtype)                 # padded lanes dropped outside


def pack_params(params):
    """One-time repack of torch-layout params into kernel layout. Call ONCE, not per step."""
    (w1, b1, w2, b2, wg, we, be, w3, b3) = params
    f32, bf16 = jnp.float32, jnp.bfloat16
    d_in, hidden = w1.shape
    n_cls = w3.shape[1]
    n_e = NUM_EXPERTS
    eh = n_e * hidden
    d_in_pad = _round_up(d_in, 128)                      # lane-dense feed of the big matmul
    n_cls_pad = _round_up(max(n_cls, 128), 128)          # lane-dense classifier / output stores

    w1p = jnp.zeros((d_in_pad, hidden), bf16).at[:d_in].set(w1.astype(bf16))
    we_flat = jnp.transpose(we, (1, 0, 2)).reshape(hidden, eh).astype(bf16)   # (H, E*H)
    w3p = jnp.zeros((hidden, n_cls_pad), bf16).at[:, :n_cls].set(w3.astype(bf16))
    b3p = jnp.zeros((1, n_cls_pad), f32).at[:, :n_cls].set(b3.astype(f32))
    # fixed exact-0/1 selection matrices for the fused expert combine (bf16 -> single MXU pass)
    r_sel = jnp.repeat(jnp.eye(n_e, dtype=bf16), hidden, axis=1)        # (E, E*H)
    s_sel = jnp.tile(jnp.eye(hidden, dtype=bf16), (n_e, 1))             # (E*H, H)

    return dict(
        w1=w1p, b1=b1.reshape(1, hidden).astype(f32),
        w2=w2.astype(bf16), b2=b2.reshape(1, hidden).astype(f32),
        wg=wg.astype(bf16),
        we=we_flat, be=be.reshape(1, eh).astype(f32),
        rsel=r_sel, ssel=s_sel,
        w3=w3p, b3=b3p,
        d_in=int(d_in), d_in_pad=int(d_in_pad), hidden=int(hidden),
        n_cls=int(n_cls), n_cls_pad=int(n_cls_pad),
    )


def moe_forward(x_nchw, packed, *, max_tile_b=512):
    """x_nchw: (B, C, H, W) float32. Returns (B, num_classes) log-probs (float32)."""
    f32, bf16 = jnp.float32, jnp.bfloat16
    d_in, d_in_pad = packed["d_in"], packed["d_in_pad"]
    hidden, n_cls, n_pad = packed["hidden"], packed["n_cls"], packed["n_cls_pad"]
    n_e = NUM_EXPERTS
    eh = n_e * hidden

    B = x_nchw.shape[0]
    x = x_nchw.reshape(B, -1)                                           # Flatten
    assert x.shape[1] == d_in, "input feature size mismatch"

    # Chip-aware batch tiling: 1 grid step on single-TC chips (v5e/v6e), an even number
    # of balanced "parallel" steps on v7x (2 TCs); capped so big batches still fit VMEM.
    n_cores = _tensorcores_per_chip()
    B8 = _round_up(B, 8)
    cap = _round_up(min(max_tile_b, B8), 8)
    min_steps = n_cores if (n_cores > 1 and B8 >= 8 * n_cores) else 1
    steps = max(min_steps, -(-B8 // cap))
    if n_cores > 1:
        steps = _round_up(steps, n_cores)
    tile_b = _round_up(-(-B8 // steps), 8)
    B_pad = _round_up(B, tile_b)
    grid = (B_pad // tile_b,)

    xb = x.astype(bf16)
    if B_pad != B or d_in_pad != d_in:
        xb = jnp.pad(xb, ((0, B_pad - B), (0, d_in_pad - d_in)))

    flops = 2 * B_pad * (d_in_pad * hidden + hidden * hidden + hidden * n_e
                         + hidden * eh + n_e * eh + eh * hidden + hidden * n_pad)
    transcendentals = B_pad * (n_pad + 2)
    bytes_accessed = (
        xb.size * 2 + B_pad * n_pad * 4
        + 2 * (packed["w1"].size + packed["w2"].size + packed["wg"].size
               + packed["we"].size + packed["rsel"].size + packed["ssel"].size
               + packed["w3"].size)
        + 4 * (packed["b1"].size + packed["b2"].size + packed["be"].size
               + packed["b3"].size))

    def call(single_buffer_weights):
        if single_buffer_weights:
            const_spec = lambda r, c: pl.BlockSpec((r, c), lambda i: (0, 0),
                                                   pipeline_mode=pl.Buffered(1))
        else:
            const_spec = lambda r, c: pl.BlockSpec((r, c), lambda i: (0, 0))

        return pl.pallas_call(
            functools.partial(_moe_forward_kernel, n_cls=n_cls),
            out_shape=jax.ShapeDtypeStruct((B_pad, n_pad), jnp.float32),
            grid_spec=pltpu.PrefetchScalarGridSpec(
                num_scalar_prefetch=0,
                grid=grid,
                in_specs=[
                    pl.BlockSpec((tile_b, d_in_pad), lambda i: (i, 0)),     # x
                    const_spec(d_in_pad, hidden), const_spec(1, hidden),    # w1, b1
                    const_spec(hidden, hidden), const_spec(1, hidden),      # w2, b2
                    const_spec(hidden, n_e),                                # gate weight
                    const_spec(hidden, eh), const_spec(1, eh),              # fused expert W, b
                    const_spec(n_e, eh), const_spec(eh, hidden),            # selection matrices
                    const_spec(hidden, n_pad), const_spec(1, n_pad),        # padded classifier W, b
                ],
                out_specs=pl.BlockSpec((tile_b, n_pad), lambda i: (i, 0)),
            ),
            compiler_params=pltpu.CompilerParams(
                dimension_semantics=("parallel",),
                vmem_limit_bytes=32 * 1024 * 1024),
            cost_estimate=pl.CostEstimate(flops=flops,
                                          transcendentals=transcendentals,
                                          bytes_accessed=bytes_accessed),
        )(xb, packed["w1"], packed["b1"], packed["w2"], packed["b2"], packed["wg"],
          packed["we"], packed["be"], packed["rsel"], packed["ssel"],
          packed["w3"], packed["b3"])

    try:
        out = call(True)
    except Exception:
        # pl.Buffered(1) on grid-invariant inputs is only a VMEM/DMA nicety; fall back
        # to default double-buffering if this jax/Mosaic build rejects it.
        out = call(False)

    return out[:B, :n_cls]


def _ref_forward(x_nchw, params):
    """Pure-JAX reference with matching math (bf16 matmuls, f32 accumulation)."""
    (w1, b1, w2, b2, wg, we, be, w3, b3) = params
    f32, bf = jnp.float32, jnp.bfloat16
    B = x_nchw.shape[0]
    x = x_nchw.reshape(B, -1).astype(bf)
    h1 = jnp.maximum(jnp.dot(x, w1.astype(bf), preferred_element_type=f32) + b1, 0.0)
    h2 = jnp.maximum(jnp.dot(h1.astype(bf), w2.astype(bf), preferred_element_type=f32) + b2, 0.0)
    logits = jnp.dot(h2.astype(bf), wg.astype(bf), preferred_element_type=f32)
    gates = jax.nn.softmax(logits, axis=-1)
    n_e = NUM_EXPERTS
    ids = jnp.arange(n_e)[None, :]
    m1 = jnp.max(logits, -1, keepdims=True)
    first1 = jnp.min(jnp.where(logits == m1, ids, n_e), -1, keepdims=True)
    mask1 = (ids == first1).astype(f32)
    logits2 = jnp.where(mask1 > 0, NEG_BIG, logits)
    m2 = jnp.max(logits2, -1, keepdims=True)
    first2 = jnp.min(jnp.where(logits2 == m2, ids, n_e), -1, keepdims=True)
    mask2 = (ids == first2).astype(f32)
    g1 = jnp.sum(gates * mask1, -1, keepdims=True)
    g2 = jnp.sum(gates * mask2, -1, keepdims=True)
    denom = jnp.maximum(g1 + g2, 1e-9)
    combine = (mask1 * g1 + mask2 * g2) / denom                          # (B, E)
    ye = jnp.einsum('bh,eho->beo', h2.astype(bf), we.astype(bf),
                    preferred_element_type=f32) + be[None, :, :]         # (B, E, H)
    moe_out = jnp.einsum('be,beh->bh', combine, ye)
    out_logits = jnp.dot(moe_out.astype(bf), w3.astype(bf),
                         preferred_element_type=f32) + b3
    return jax.nn.log_softmax(out_logits, axis=-1)


def init_params(key, d_in, hidden, n_cls):
    """Deterministic torch-like init: U(-1/sqrt(fan_in), 1/sqrt(fan_in))."""
    ks = jax.random.split(key, 9)
    u = lambda k, shape, fan: jax.random.uniform(
        k, shape, jnp.float32, -1.0 / math.sqrt(fan), 1.0 / math.sqrt(fan))
    w1 = u(ks[0], (d_in, hidden), d_in)
    b1 = u(ks[1], (1, hidden), d_in)
    w2 = u(ks[2], (hidden, hidden), hidden)
    b2 = u(ks[3], (1, hidden), hidden)
    wg = u(ks[4], (hidden, NUM_EXPERTS), hidden)                         # gate: no bias
    we = u(ks[5], (NUM_EXPERTS, hidden, hidden), hidden)
    be = u(ks[6], (NUM_EXPERTS, hidden), hidden)
    w3 = u(ks[7], (hidden, n_cls), hidden)
    b3 = u(ks[8], (1, n_cls), hidden)
    return (w1, b1, w2, b2, wg, we, be, w3, b3)


if __name__ == "__main__":
    # B=256: single 256-row grid step on v5e/v6e, two 128-row "parallel" steps on v7x.
    B, C, H_img, W_img = 256, 1, 28, 28
    hidden, n_cls = 64, 10
    d_in = C * H_img * W_img

    key = jax.random.PRNGKey(0)
    k_x, k_p = jax.random.split(key)
    x = jax.random.normal(k_x, (B, C, H_img, W_img), jnp.float32)
    params = init_params(k_p, d_in, hidden, n_cls)

    packed = pack_params(params)                      # one-time weight repack (not per call)

    out = jax.block_until_ready(moe_forward(x, packed))
    ref = jax.block_until_ready(_ref_forward(x, params))

    assert out.shape == (B, n_cls)
    assert bool(jnp.allclose(out, ref.astype(jnp.float32), atol=5e-2, rtol=5e-2)), \
        "mismatch vs JAX reference"
    print("KERNEL_OK")
</pallas_src>

<mosaic_0001>
module attributes {stable_mosaic.version = 11 : i64} {
  func.func @_moe_forward_kernel(%arg0: i32, %arg1: memref<256x896xbf16, #tpu.memory_space<vmem>>, %arg2: memref<896x64xbf16, #tpu.memory_space<vmem>>, %arg3: memref<1x64xf32, #tpu.memory_space<vmem>>, %arg4: memref<64x64xbf16, #tpu.memory_space<vmem>>, %arg5: memref<1x64xf32, #tpu.memory_space<vmem>>, %arg6: memref<64x6xbf16, #tpu.memory_space<vmem>>, %arg7: memref<64x384xbf16, #tpu.memory_space<vmem>>, %arg8: memref<1x384xf32, #tpu.memory_space<vmem>>, %arg9: memref<6x384xbf16, #tpu.memory_space<vmem>>, %arg10: memref<384x64xbf16, #tpu.memory_space<vmem>>, %arg11: memref<64x128xbf16, #tpu.memory_space<vmem>>, %arg12: memref<1x128xf32, #tpu.memory_space<vmem>>, %arg13: memref<256x128xf32, #tpu.memory_space<vmem>>) attributes {dimension_semantics = [#tpu.dimension_semantics<parallel>], iteration_bounds = array<i64: 1>, scalar_prefetch = 0 : i64, scratch_operands = 0 : i64, tpu.core_type = #tpu.core_type<tc>, window_params = [{transform_indices = @transform_0, window_bounds = array<i64: 256, 896>}, {pipeline_mode = #tpu.pipeline_mode<synchronous>, transform_indices = @transform_1, window_bounds = array<i64: 896, 64>}, {pipeline_mode = #tpu.pipeline_mode<synchronous>, transform_indices = @transform_2, window_bounds = array<i64: 1, 64>}, {pipeline_mode = #tpu.pipeline_mode<synchronous>, transform_indices = @transform_3, window_bounds = array<i64: 64, 64>}, {pipeline_mode = #tpu.pipeline_mode<synchronous>, transform_indices = @transform_4, window_bounds = array<i64: 1, 64>}, {pipeline_mode = #tpu.pipeline_mode<synchronous>, transform_indices = @transform_5, window_bounds = array<i64: 64, 6>}, {pipeline_mode = #tpu.pipeline_mode<synchronous>, transform_indices = @transform_6, window_bounds = array<i64: 64, 384>}, {pipeline_mode = #tpu.pipeline_mode<synchronous>, transform_indices = @transform_7, window_bounds = array<i64: 1, 384>}, {pipeline_mode = #tpu.pipeline_mode<synchronous>, transform_indices = @transform_8, window_bounds = array<i64: 6, 384>}, {pipeline_mode = #tpu.pipeline_mode<synchronous>, transform_indices = @transform_9, window_bounds = array<i64: 384, 64>}, {pipeline_mode = #tpu.pipeline_mode<synchronous>, transform_indices = @transform_10, window_bounds = array<i64: 64, 128>}, {pipeline_mode = #tpu.pipeline_mode<synchronous>, transform_indices = @transform_11, window_bounds = array<i64: 1, 128>}, {transform_indices = @transform_12, window_bounds = array<i64: 256, 128>}]} {
    %c0 = arith.constant 0 : index
    %c0_0 = arith.constant 0 : index
    %0 = vector.load %arg1[%c0, %c0_0] : memref<256x896xbf16, #tpu.memory_space<vmem>>, vector<256x896xbf16>
    %c0_1 = arith.constant 0 : index
    %c0_2 = arith.constant 0 : index
    %1 = vector.load %arg2[%c0_1, %c0_2] : memref<896x64xbf16, #tpu.memory_space<vmem>>, vector<896x64xbf16>
    %cst = arith.constant dense<0.000000e+00> : vector<256x64xf32>
    %2 = tpu.matmul %0, %1, %cst {dimension_numbers = #tpu.dot_dimension_numbers<[1], [0], [0], [1], [0, 0, 1, 1], [], []>} : vector<256x896xbf16>, vector<896x64xbf16>, vector<256x64xf32> -> vector<256x64xf32>
    %c0_3 = arith.constant 0 : index
    %c0_4 = arith.constant 0 : index
    %3 = vector.load %arg3[%c0_3, %c0_4] : memref<1x64xf32, #tpu.memory_space<vmem>>, vector<1x64xf32>
    %4 = vector.broadcast %3 : vector<1x64xf32> to vector<256x64xf32>
    %5 = arith.addf %2, %4 : vector<256x64xf32>
    %cst_5 = arith.constant 0.000000e+00 : f32
    %6 = vector.broadcast %cst_5 : f32 to vector<256x64xf32>
    %7 = arith.maximumf %5, %6 : vector<256x64xf32>
    %8 = arith.truncf %7 : vector<256x64xf32> to vector<256x64xbf16>
    %c0_6 = arith.constant 0 : index
    %c0_7 = arith.constant 0 : index
    %9 = vector.load %arg4[%c0_6, %c0_7] : memref<64x64xbf16, #tpu.memory_space<vmem>>, vector<64x64xbf16>
    %cst_8 = arith.constant dense<0.000000e+00> : vector<256x64xf32>
    %10 = tpu.matmul %8, %9, %cst_8 {dimension_numbers = #tpu.dot_dimension_numbers<[1], [0], [0], [1], [0, 0, 1, 1], [], []>} : vector<256x64xbf16>, vector<64x64xbf16>, vector<256x64xf32> -> vector<256x64xf32>
    %c0_9 = arith.constant 0 : index
    %c0_10 = arith.constant 0 : index
    %11 = vector.load %arg5[%c0_9, %c0_10] : memref<1x64xf32, #tpu.memory_space<vmem>>, vector<1x64xf32>
    %12 = vector.broadcast %11 : vector<1x64xf32> to vector<256x64xf32>
    %13 = arith.addf %10, %12 : vector<256x64xf32>
    %cst_11 = arith.constant 0.000000e+00 : f32
    %14 = vector.broadcast %cst_11 : f32 to vector<256x64xf32>
    %15 = arith.maximumf %13, %14 : vector<256x64xf32>
    %16 = arith.truncf %15 : vector<256x64xf32> to vector<256x64xbf16>
    %c0_12 = arith.constant 0 : index
    %c0_13 = arith.constant 0 : index
    %17 = vector.load %arg6[%c0_12, %c0_13] : memref<64x6xbf16, #tpu.memory_space<vmem>>, vector<64x6xbf16>
    %cst_14 = arith.constant dense<0.000000e+00> : vector<256x6xf32>
    %18 = tpu.matmul %16, %17, %cst_14 {dimension_numbers = #tpu.dot_dimension_numbers<[1], [0], [0], [1], [0, 0, 1, 1], [], []>} : vector<256x64xbf16>, vector<64x6xbf16>, vector<256x6xf32> -> vector<256x6xf32>
    %19 = tpu.iota {dimensions = array<i32: 1>} : vector<256x6xi32>
    %cst_15 = arith.constant dense<0xFF800000> : vector<256xf32>
    %20 = vector.multi_reduction <maximumf>, %18, %cst_15 [1] : vector<256x6xf32> to vector<256xf32>
    %21 = vector.shape_cast %20 : vector<256xf32> to vector<256x1xf32>
    %22 = vector.broadcast %21 : vector<256x1xf32> to vector<256x6xf32>
    %23 = arith.cmpf oeq, %18, %22 : vector<256x6xf32>
    %c6_i32 = arith.constant 6 : i32
    %24 = vector.broadcast %c6_i32 : i32 to vector<256x6xi32>
    %25 = arith.select %23, %19, %24 : vector<256x6xi1>, vector<256x6xi32>
    %cst_16 = arith.constant dense<2147483647> : vector<256xi32>
    %26 = vector.multi_reduction <minsi>, %25, %cst_16 [1] : vector<256x6xi32> to vector<256xi32>
    %27 = vector.shape_cast %26 : vector<256xi32> to vector<256x1xi32>
    %28 = vector.broadcast %27 : vector<256x1xi32> to vector<256x6xi32>
    %29 = arith.cmpi eq, %19, %28 : vector<256x6xi32>
    %cst_17 = arith.constant -1.000000e+30 : f32
    %30 = vector.broadcast %cst_17 : f32 to vector<256x6xf32>
    %31 = arith.select %29, %30, %18 : vector<256x6xi1>, vector<256x6xf32>
    %cst_18 = arith.constant dense<0xFF800000> : vector<256xf32>
    %32 = vector.multi_reduction <maximumf>, %31, %cst_18 [1] : vector<256x6xf32> to vector<256xf32>
    %33 = vector.shape_cast %32 : vector<256xf32> to vector<256x1xf32>
    %34 = vector.broadcast %33 : vector<256x1xf32> to vector<256x6xf32>
    %35 = arith.cmpf oeq, %31, %34 : vector<256x6xf32>
    %c6_i32_19 = arith.constant 6 : i32
    %36 = vector.broadcast %c6_i32_19 : i32 to vector<256x6xi32>
    %37 = arith.select %35, %19, %36 : vector<256x6xi1>, vector<256x6xi32>
    %cst_20 = arith.constant dense<2147483647> : vector<256xi32>
    %38 = vector.multi_reduction <minsi>, %37, %cst_20 [1] : vector<256x6xi32> to vector<256xi32>
    %39 = vector.shape_cast %38 : vector<256xi32> to vector<256x1xi32>
    %40 = vector.broadcast %39 : vector<256x1xi32> to vector<256x6xi32>
    %41 = arith.cmpi eq, %19, %40 : vector<256x6xi32>
    %42 = arith.subf %33, %21 : vector<256x1xf32>
    %43 = math.exp %42 : vector<256x1xf32>
    %cst_21 = arith.constant 1.000000e+00 : f32
    %44 = vector.broadcast %cst_21 : f32 to vector<256x1xf32>
    %45 = arith.addf %44, %43 : vector<256x1xf32>
    %cst_22 = arith.constant 1.000000e+00 : f32
    %46 = vector.broadcast %cst_22 : f32 to vector<256x1xf32>
    %47 = arith.divf %46, %45 : vector<256x1xf32>
    %cst_23 = arith.constant 1.000000e+00 : f32
    %48 = vector.broadcast %cst_23 : f32 to vector<256x1xf32>
    %49 = arith.subf %48, %47 : vector<256x1xf32>
    %cst_24 = arith.constant 0.000000e+00 : f32
    %50 = vector.shape_cast %47 : vector<256x1xf32> to vector<256x1xf32>
    %51 = vector.broadcast %50 : vector<256x1xf32> to vector<256x6xf32>
    %52 = vector.broadcast %cst_24 : f32 to vector<256x6xf32>
    %53 = arith.select %29, %51, %52 : vector<256x6xi1>, vector<256x6xf32>
    %cst_25 = arith.constant 0.000000e+00 : f32
    %54 = vector.shape_cast %49 : vector<256x1xf32> to vector<256x1xf32>
    %55 = vector.broadcast %54 : vector<256x1xf32> to vector<256x6xf32>
    %56 = vector.broadcast %cst_25 : f32 to vector<256x6xf32>
    %57 = arith.select %41, %55, %56 : vector<256x6xi1>, vector<256x6xf32>
    %58 = arith.addf %53, %57 : vector<256x6xf32>
    %c0_26 = arith.constant 0 : index
    %c0_27 = arith.constant 0 : index
    %59 = vector.load %arg7[%c0_26, %c0_27] : memref<64x384xbf16, #tpu.memory_space<vmem>>, vector<64x384xbf16>
    %cst_28 = arith.constant dense<0.000000e+00> : vector<256x384xf32>
    %60 = tpu.matmul %16, %59, %cst_28 {dimension_numbers = #tpu.dot_dimension_numbers<[1], [0], [0], [1], [0, 0, 1, 1], [], []>} : vector<256x64xbf16>, vector<64x384xbf16>, vector<256x384xf32> -> vector<256x384xf32>
    %c0_29 = arith.constant 0 : index
    %c0_30 = arith.constant 0 : index
    %61 = vector.load %arg8[%c0_29, %c0_30] : memref<1x384xf32, #tpu.memory_space<vmem>>, vector<1x384xf32>
    %62 = vector.broadcast %61 : vector<1x384xf32> to vector<256x384xf32>
    %63 = arith.addf %60, %62 : vector<256x384xf32>
    %64 = arith.truncf %58 : vector<256x6xf32> to vector<256x6xbf16>
    %c0_31 = arith.constant 0 : index
    %c0_32 = arith.constant 0 : index
    %65 = vector.load %arg9[%c0_31, %c0_32] : memref<6x384xbf16, #tpu.memory_space<vmem>>, vector<6x384xbf16>
    %cst_33 = arith.constant dense<0.000000e+00> : vector<256x384xf32>
    %66 = tpu.matmul %64, %65, %cst_33 {dimension_numbers = #tpu.dot_dimension_numbers<[1], [0], [0], [1], [0, 0, 1, 1], [], []>} : vector<256x6xbf16>, vector<6x384xbf16>, vector<256x384xf32> -> vector<256x384xf32>
    %67 = arith.mulf %63, %66 : vector<256x384xf32>
    %68 = arith.truncf %67 : vector<256x384xf32> to vector<256x384xbf16>
    %c0_34 = arith.constant 0 : index
    %c0_35 = arith.constant 0 : index
    %69 = vector.load %arg10[%c0_34, %c0_35] : memref<384x64xbf16, #tpu.memory_space<vmem>>, vector<384x64xbf16>
    %cst_36 = arith.constant dense<0.000000e+00> : vector<256x64xf32>
    %70 = tpu.matmul %68, %69, %cst_36 {dimension_numbers = #tpu.dot_dimension_numbers<[1], [0], [0], [1], [0, 0, 1, 1], [], []>} : vector<256x384xbf16>, vector<384x64xbf16>, vector<256x64xf32> -> vector<256x64xf32>
    %71 = arith.truncf %70 : vector<256x64xf32> to vector<256x64xbf16>
    %c0_37 = arith.constant 0 : index
    %c0_38 = arith.constant 0 : index
    %72 = vector.load %arg11[%c0_37, %c0_38] : memref<64x128xbf16, #tpu.memory_space<vmem>>, vector<64x128xbf16>
    %cst_39 = arith.constant dense<0.000000e+00> : vector<256x128xf32>
    %73 = tpu.matmul %71, %72, %cst_39 {dimension_numbers = #tpu.dot_dimension_numbers<[1], [0], [0], [1], [0, 0, 1, 1], [], []>} : vector<256x64xbf16>, vector<64x128xbf16>, vector<256x128xf32> -> vector<256x128xf32>
    %c0_40 = arith.constant 0 : index
    %c0_41 = arith.constant 0 : index
    %74 = vector.load %arg12[%c0_40, %c0_41] : memref<1x128xf32, #tpu.memory_space<vmem>>, vector<1x128xf32>
    %75 = vector.broadcast %74 : vector<1x128xf32> to vector<256x128xf32>
    %76 = arith.addf %73, %75 : vector<256x128xf32>
    %77 = tpu.iota {dimensions = array<i32: 1>} : vector<256x128xi32>
    %c10_i32 = arith.constant 10 : i32
    %78 = vector.broadcast %c10_i32 : i32 to vector<256x128xi32>
    %79 = arith.cmpi slt, %77, %78 : vector<256x128xi32>
    %cst_42 = arith.constant -1.000000e+30 : f32
    %80 = vector.broadcast %cst_42 : f32 to vector<256x128xf32>
    %81 = arith.select %79, %76, %80 : vector<256x128xi1>, vector<256x128xf32>
    %cst_43 = arith.constant dense<0xFF800000> : vector<256xf32>
    %82 = vector.multi_reduction <maximumf>, %81, %cst_43 [1] : vector<256x128xf32> to vector<256xf32>
    %83 = vector.shape_cast %82 : vector<256xf32> to vector<256x1xf32>
    %84 = vector.broadcast %83 : vector<256x1xf32> to vector<256x128xf32>
    %85 = arith.subf %81, %84 : vector<256x128xf32>
    %86 = math.exp %85 : vector<256x128xf32>
    %cst_44 = arith.constant dense<0.000000e+00> : vector<256xf32>
    %87 = vector.multi_reduction <add>, %86, %cst_44 [1] : vector<256x128xf32> to vector<256xf32>
    %88 = vector.shape_cast %87 : vector<256xf32> to vector<256x1xf32>
    %89 = math.log %88 : vector<256x1xf32>
    %90 = arith.addf %83, %89 : vector<256x1xf32>
    %91 = vector.broadcast %90 : vector<256x1xf32> to vector<256x128xf32>
    %92 = arith.subf %76, %91 : vector<256x128xf32>
    %c0_45 = arith.constant 0 : index
    %c0_46 = arith.constant 0 : index
    %93 = vector.load %arg13[%c0_45, %c0_46] : memref<256x128xf32, #tpu.memory_space<vmem>>, vector<256x128xf32>
    tpu.vector_store %arg13[%c0_45, %c0_46], %92 {strides = array<i32>} : memref<256x128xf32, #tpu.memory_space<vmem>>, vector<256x128xf32>,
    return
  }
  func.func @transform_0(%arg0: i32) -> (i32, i32) {
    %c0_i32 = arith.constant 0 : i32
    %c0_i32_0 = arith.constant 0 : i32
    return %arg0, %c0_i32 : i32, i32
  }
  func.func @transform_1(%arg0: i32) -> (i32, i32) {
    %c0_i32 = arith.constant 0 : i32
    %c0_i32_0 = arith.constant 0 : i32
    %c0_i32_1 = arith.constant 0 : i32
    return %c0_i32, %c0_i32_0 : i32, i32
  }
  func.func @transform_2(%arg0: i32) -> (i32, i32) {
    %c0_i32 = arith.constant 0 : i32
    %c0_i32_0 = arith.constant 0 : i32
    %c0_i32_1 = arith.constant 0 : i32
    return %c0_i32, %c0_i32_0 : i32, i32
  }
  func.func @transform_3(%arg0: i32) -> (i32, i32) {
    %c0_i32 = arith.constant 0 : i32
    %c0_i32_0 = arith.constant 0 : i32
    %c0_i32_1 = arith.constant 0 : i32
    return %c0_i32, %c0_i32_0 : i32, i32
  }
  func.func @transform_4(%arg0: i32) -> (i32, i32) {
    %c0_i32 = arith.constant 0 : i32
    %c0_i32_0 = arith.constant 0 : i32
    %c0_i32_1 = arith.constant 0 : i32
    return %c0_i32, %c0_i32_0 : i32, i32
  }
  func.func @transform_5(%arg0: i32) -> (i32, i32) {
    %c0_i32 = arith.constant 0 : i32
    %c0_i32_0 = arith.constant 0 : i32
    %c0_i32_1 = arith.constant 0 : i32
    return %c0_i32, %c0_i32_0 : i32, i32
  }
  func.func @transform_6(%arg0: i32) -> (i32, i32) {
    %c0_i32 = arith.constant 0 : i32
    %c0_i32_0 = arith.constant 0 : i32
    %c0_i32_1 = arith.constant 0 : i32
    return %c0_i32, %c0_i32_0 : i32, i32
  }
  func.func @transform_7(%arg0: i32) -> (i32, i32) {
    %c0_i32 = arith.constant 0 : i32
    %c0_i32_0 = arith.constant 0 : i32
    %c0_i32_1 = arith.constant 0 : i32
    return %c0_i32, %c0_i32_0 : i32, i32
  }
  func.func @transform_8(%arg0: i32) -> (i32, i32) {
    %c0_i32 = arith.constant 0 : i32
    %c0_i32_0 = arith.constant 0 : i32
    %c0_i32_1 = arith.constant 0 : i32
    return %c0_i32, %c0_i32_0 : i32, i32
  }
  func.func @transform_9(%arg0: i32) -> (i32, i32) {
    %c0_i32 = arith.constant 0 : i32
    %c0_i32_0 = arith.constant 0 : i32
    %c0_i32_1 = arith.constant 0 : i32
    return %c0_i32, %c0_i32_0 : i32, i32
  }
  func.func @transform_10(%arg0: i32) -> (i32, i32) {
    %c0_i32 = arith.constant 0 : i32
    %c0_i32_0 = arith.constant 0 : i32
    %c0_i32_1 = arith.constant 0 : i32
    return %c0_i32, %c0_i32_0 : i32, i32
  }
  func.func @transform_11(%arg0: i32) -> (i32, i32) {
    %c0_i32 = arith.constant 0 : i32
    %c0_i32_0 = arith.constant 0 : i32
    %c0_i32_1 = arith.constant 0 : i32
    return %c0_i32, %c0_i32_0 : i32, i32
  }
  func.func @transform_12(%arg0: i32) -> (i32, i32) {
    %c0_i32 = arith.constant 0 : i32
    %c0_i32_0 = arith.constant 0 : i32
    return %arg0, %c0_i32 : i32, i32
  }
}

module attributes {stable_mosaic.version = 11 : i64} {
  func.func @_moe_forward_kernel(%arg0: i32, %arg1: memref<256x896xbf16, #tpu.memory_space<vmem>>, %arg2: memref<896x64xbf16, #tpu.memory_space<vmem>>, %arg3: memref<1x64xf32, #tpu.memory_space<vmem>>, %arg4: memref<64x64xbf16, #tpu.memory_space<vmem>>, %arg5: memref<1x64xf32, #tpu.memory_space<vmem>>, %arg6: memref<64x6xbf16, #tpu.memory_space<vmem>>, %arg7: memref<64x384xbf16, #tpu.memory_space<vmem>>, %arg8: memref<1x384xf32, #tpu.memory_space<vmem>>, %arg9: memref<6x384xbf16, #tpu.memory_space<vmem>>, %arg10: memref<384x64xbf16, #tpu.memory_space<vmem>>, %arg11: memref<64x128xbf16, #tpu.memory_space<vmem>>, %arg12: memref<1x128xf32, #tpu.memory_space<vmem>>, %arg13: memref<256x128xf32, #tpu.memory_space<vmem>>) attributes {dimension_semantics = [#tpu.dimension_semantics<parallel>], iteration_bounds = array<i64: 1>, scalar_prefetch = 0 : i64, scratch_operands = 0 : i64, tpu.core_type = #tpu.core_type<tc>, window_params = [{transform_indices = @transform_0, window_bounds = array<i64: 256, 896>}, {pipeline_mode = #tpu.pipeline_mode<synchronous>, transform_indices = @transform_1, window_bounds = array<i64: 896, 64>}, {pipeline_mode = #tpu.pipeline_mode<synchronous>, transform_indices = @transform_2, window_bounds = array<i64: 1, 64>}, {pipeline_mode = #tpu.pipeline_mode<synchronous>, transform_indices = @transform_3, window_bounds = array<i64: 64, 64>}, {pipeline_mode = #tpu.pipeline_mode<synchronous>, transform_indices = @transform_4, window_bounds = array<i64: 1, 64>}, {pipeline_mode = #tpu.pipeline_mode<synchronous>, transform_indices = @transform_5, window_bounds = array<i64: 64, 6>}, {pipeline_mode = #tpu.pipeline_mode<synchronous>, transform_indices = @transform_6, window_bounds = array<i64: 64, 384>}, {pipeline_mode = #tpu.pipeline_mode<synchronous>, transform_indices = @transform_7, window_bounds = array<i64: 1, 384>}, {pipeline_mode = #tpu.pipeline_mode<synchronous>, transform_indices = @transform_8, window_bounds = array<i64: 6, 384>}, {pipeline_mode = #tpu.pipeline_mode<synchronous>, transform_indices = @transform_9, window_bounds = array<i64: 384, 64>}, {pipeline_mode = #tpu.pipeline_mode<synchronous>, transform_indices = @transform_10, window_bounds = array<i64: 64, 128>}, {pipeline_mode = #tpu.pipeline_mode<synchronous>, transform_indices = @transform_11, window_bounds = array<i64: 1, 128>}, {transform_indices = @transform_12, window_bounds = array<i64: 256, 128>}]} {
    %c0 = arith.constant 0 : index
    %c0_0 = arith.constant 0 : index
    %0 = vector.load %arg1[%c0, %c0_0] : memref<256x896xbf16, #tpu.memory_space<vmem>>, vector<256x896xbf16>
    %c0_1 = arith.constant 0 : index
    %c0_2 = arith.constant 0 : index
    %1 = vector.load %arg2[%c0_1, %c0_2] : memref<896x64xbf16, #tpu.memory_space<vmem>>, vector<896x64xbf16>
    %cst = arith.constant dense<0.000000e+00> : vector<256x64xf32>
    %2 = tpu.matmul %0, %1, %cst {dimension_numbers = #tpu.dot_dimension_numbers<[1], [0], [0], [1], [0, 0, 1, 1], [], []>} : vector<256x896xbf16>, vector<896x64xbf16>, vector<256x64xf32> -> vector<256x64xf32>
    %c0_3 = arith.constant 0 : index
    %c0_4 = arith.constant 0 : index
    %3 = vector.load %arg3[%c0_3, %c0_4] : memref<1x64xf32, #tpu.memory_space<vmem>>, vector<1x64xf32>
    %4 = vector.broadcast %3 : vector<1x64xf32> to vector<256x64xf32>
    %5 = arith.addf %2, %4 : vector<256x64xf32>
    %cst_5 = arith.constant 0.000000e+00 : f32
    %6 = vector.broadcast %cst_5 : f32 to vector<256x64xf32>
    %7 = arith.maximumf %5, %6 : vector<256x64xf32>
    %8 = arith.truncf %7 : vector<256x64xf32> to vector<256x64xbf16>
    %c0_6 = arith.constant 0 : index
    %c0_7 = arith.constant 0 : index
    %9 = vector.load %arg4[%c0_6, %c0_7] : memref<64x64xbf16, #tpu.memory_space<vmem>>, vector<64x64xbf16>
    %cst_8 = arith.constant dense<0.000000e+00> : vector<256x64xf32>
    %10 = tpu.matmul %8, %9, %cst_8 {dimension_numbers = #tpu.dot_dimension_numbers<[1], [0], [0], [1], [0, 0, 1, 1], [], []>} : vector<256x64xbf16>, vector<64x64xbf16>, vector<256x64xf32> -> vector<256x64xf32>
    %c0_9 = arith.constant 0 : index
    %c0_10 = arith.constant 0 : index
    %11 = vector.load %arg5[%c0_9, %c0_10] : memref<1x64xf32, #tpu.memory_space<vmem>>, vector<1x64xf32>
    %12 = vector.broadcast %11 : vector<1x64xf32> to vector<256x64xf32>
    %13 = arith.addf %10, %12 : vector<256x64xf32>
    %cst_11 = arith.constant 0.000000e+00 : f32
    %14 = vector.broadcast %cst_11 : f32 to vector<256x64xf32>
    %15 = arith.maximumf %13, %14 : vector<256x64xf32>
    %16 = arith.truncf %15 : vector<256x64xf32> to vector<256x64xbf16>
    %c0_12 = arith.constant 0 : index
    %c0_13 = arith.constant 0 : index
    %17 = vector.load %arg6[%c0_12, %c0_13] : memref<64x6xbf16, #tpu.memory_space<vmem>>, vector<64x6xbf16>
    %cst_14 = arith.constant dense<0.000000e+00> : vector<256x6xf32>
    %18 = tpu.matmul %16, %17, %cst_14 {dimension_numbers = #tpu.dot_dimension_numbers<[1], [0], [0], [1], [0, 0, 1, 1], [], []>} : vector<256x64xbf16>, vector<64x6xbf16>, vector<256x6xf32> -> vector<256x6xf32>
    %19 = tpu.iota {dimensions = array<i32: 1>} : vector<256x6xi32>
    %cst_15 = arith.constant dense<0xFF800000> : vector<256xf32>
    %20 = vector.multi_reduction <maximumf>, %18, %cst_15 [1] : vector<256x6xf32> to vector<256xf32>
    %21 = vector.shape_cast %20 : vector<256xf32> to vector<256x1xf32>
    %22 = vector.broadcast %21 : vector<256x1xf32> to vector<256x6xf32>
    %23 = arith.cmpf oeq, %18, %22 : vector<256x6xf32>
    %c6_i32 = arith.constant 6 : i32
    %24 = vector.broadcast %c6_i32 : i32 to vector<256x6xi32>
    %25 = arith.select %23, %19, %24 : vector<256x6xi1>, vector<256x6xi32>
    %cst_16 = arith.constant dense<2147483647> : vector<256xi32>
    %26 = vector.multi_reduction <minsi>, %25, %cst_16 [1] : vector<256x6xi32> to vector<256xi32>
    %27 = vector.shape_cast %26 : vector<256xi32> to vector<256x1xi32>
    %28 = vector.broadcast %27 : vector<256x1xi32> to vector<256x6xi32>
    %29 = arith.cmpi eq, %19, %28 : vector<256x6xi32>
    %cst_17 = arith.constant -1.000000e+30 : f32
    %30 = vector.broadcast %cst_17 : f32 to vector<256x6xf32>
    %31 = arith.select %29, %30, %18 : vector<256x6xi1>, vector<256x6xf32>
    %cst_18 = arith.constant dense<0xFF800000> : vector<256xf32>
    %32 = vector.multi_reduction <maximumf>, %31, %cst_18 [1] : vector<256x6xf32> to vector<256xf32>
    %33 = vector.shape_cast %32 : vector<256xf32> to vector<256x1xf32>
    %34 = vector.broadcast %33 : vector<256x1xf32> to vector<256x6xf32>
    %35 = arith.cmpf oeq, %31, %34 : vector<256x6xf32>
    %c6_i32_19 = arith.constant 6 : i32
    %36 = vector.broadcast %c6_i32_19 : i32 to vector<256x6xi32>
    %37 = arith.select %35, %19, %36 : vector<256x6xi1>, vector<256x6xi32>
    %cst_20 = arith.constant dense<2147483647> : vector<256xi32>
    %38 = vector.multi_reduction <minsi>, %37, %cst_20 [1] : vector<256x6xi32> to vector<256xi32>
    %39 = vector.shape_cast %38 : vector<256xi32> to vector<256x1xi32>
    %40 = vector.broadcast %39 : vector<256x1xi32> to vector<256x6xi32>
    %41 = arith.cmpi eq, %19, %40 : vector<256x6xi32>
    %42 = arith.subf %33, %21 : vector<256x1xf32>
    %43 = math.exp %42 : vector<256x1xf32>
    %cst_21 = arith.constant 1.000000e+00 : f32
    %44 = vector.broadcast %cst_21 : f32 to vector<256x1xf32>
    %45 = arith.addf %44, %43 : vector<256x1xf32>
    %cst_22 = arith.constant 1.000000e+00 : f32
    %46 = vector.broadcast %cst_22 : f32 to vector<256x1xf32>
    %47 = arith.divf %46, %45 : vector<256x1xf32>
    %cst_23 = arith.constant 1.000000e+00 : f32
    %48 = vector.broadcast %cst_23 : f32 to vector<256x1xf32>
    %49 = arith.subf %48, %47 : vector<256x1xf32>
    %cst_24 = arith.constant 0.000000e+00 : f32
    %50 = vector.shape_cast %47 : vector<256x1xf32> to vector<256x1xf32>
    %51 = vector.broadcast %50 : vector<256x1xf32> to vector<256x6xf32>
    %52 = vector.broadcast %cst_24 : f32 to vector<256x6xf32>
    %53 = arith.select %29, %51, %52 : vector<256x6xi1>, vector<256x6xf32>
    %cst_25 = arith.constant 0.000000e+00 : f32
    %54 = vector.shape_cast %49 : vector<256x1xf32> to vector<256x1xf32>
    %55 = vector.broadcast %54 : vector<256x1xf32> to vector<256x6xf32>
    %56 = vector.broadcast %cst_25 : f32 to vector<256x6xf32>
    %57 = arith.select %41, %55, %56 : vector<256x6xi1>, vector<256x6xf32>
    %58 = arith.addf %53, %57 : vector<256x6xf32>
    %c0_26 = arith.constant 0 : index
    %c0_27 = arith.constant 0 : index
    %59 = vector.load %arg7[%c0_26, %c0_27] : memref<64x384xbf16, #tpu.memory_space<vmem>>, vector<64x384xbf16>
    %cst_28 = arith.constant dense<0.000000e+00> : vector<256x384xf32>
    %60 = tpu.matmul %16, %59, %cst_28 {dimension_numbers = #tpu.dot_dimension_numbers<[1], [0], [0], [1], [0, 0, 1, 1], [], []>} : vector<256x64xbf16>, vector<64x384xbf16>, vector<256x384xf32> -> vector<256x384xf32>
    %c0_29 = arith.constant 0 : index
    %c0_30 = arith.constant 0 : index
    %61 = vector.load %arg8[%c0_29, %c0_30] : memref<1x384xf32, #tpu.memory_space<vmem>>, vector<1x384xf32>
    %62 = vector.broadcast %61 : vector<1x384xf32> to vector<256x384xf32>
    %63 = arith.addf %60, %62 : vector<256x384xf32>
    %64 = arith.truncf %58 : vector<256x6xf32> to vector<256x6xbf16>
    %c0_31 = arith.constant 0 : index
    %c0_32 = arith.constant 0 : index
    %65 = vector.load %arg9[%c0_31, %c0_32] : memref<6x384xbf16, #tpu.memory_space<vmem>>, vector<6x384xbf16>
    %cst_33 = arith.constant dense<0.000000e+00> : vector<256x384xf32>
    %66 = tpu.matmul %64, %65, %cst_33 {dimension_numbers = #tpu.dot_dimension_numbers<[1], [0], [0], [1], [0, 0, 1, 1], [], []>} : vector<256x6xbf16>, vector<6x384xbf16>, vector<256x384xf32> -> vector<256x384xf32>
    %67 = arith.mulf %63, %66 : vector<256x384xf32>
    %68 = arith.truncf %67 : vector<256x384xf32> to vector<256x384xbf16>
    %c0_34 = arith.constant 0 : index
    %c0_35 = arith.constant 0 : index
    %69 = vector.load %arg10[%c0_34, %c0_35] : memref<384x64xbf16, #tpu.memory_space<vmem>>, vector<384x64xbf16>
    %cst_36 = arith.constant dense<0.000000e+00> : vector<256x64xf32>
    %70 = tpu.matmul %68, %69, %cst_36 {dimension_numbers = #tpu.dot_dimension_numbers<[1], [0], [0], [1], [0, 0, 1, 1], [], []>} : vector<256x384xbf16>, vector<384x64xbf16>, vector<256x64xf32> -> vector<256x64xf32>
    %71 = arith.truncf %70 : vector<256x64xf32> to vector<256x64xbf16>
    %c0_37 = arith.constant 0 : index
    %c0_38 = arith.constant 0 : index
    %72 = vector.load %arg11[%c0_37, %c0_38] : memref<64x128xbf16, #tpu.memory_space<vmem>>, vector<64x128xbf16>
    %cst_39 = arith.constant dense<0.000000e+00> : vector<256x128xf32>
    %73 = tpu.matmul %71, %72, %cst_39 {dimension_numbers = #tpu.dot_dimension_numbers<[1], [0], [0], [1], [0, 0, 1, 1], [], []>} : vector<256x64xbf16>, vector<64x128xbf16>, vector<256x128xf32> -> vector<256x128xf32>
    %c0_40 = arith.constant 0 : index
    %c0_41 = arith.constant 0 : index
    %74 = vector.load %arg12[%c0_40, %c0_41] : memref<1x128xf32, #tpu.memory_space<vmem>>, vector<1x128xf32>
    %75 = vector.broadcast %74 : vector<1x128xf32> to vector<256x128xf32>
    %76 = arith.addf %73, %75 : vector<256x128xf32>
    %77 = tpu.iota {dimensions = array<i32: 1>} : vector<256x128xi32>
    %c10_i32 = arith.constant 10 : i32
    %78 = vector.broadcast %c10_i32 : i32 to vector<256x128xi32>
    %79 = arith.cmpi slt, %77, %78 : vector<256x128xi32>
    %cst_42 = arith.constant -1.000000e+30 : f32
    %80 = vector.broadcast %cst_42 : f32 to vector<256x128xf32>
    %81 = arith.select %79, %76, %80 : vector<256x128xi1>, vector<256x128xf32>
    %cst_43 = arith.constant dense<0xFF800000> : vector<256xf32>
    %82 = vector.multi_reduction <maximumf>, %81, %cst_43 [1] : vector<256x128xf32> to vector<256xf32>
    %83 = vector.shape_cast %82 : vector<256xf32> to vector<256x1xf32>
    %84 = vector.broadcast %83 : vector<256x1xf32> to vector<256x128xf32>
    %85 = arith.subf %81, %84 : vector<256x128xf32>
    %86 = math.exp %85 : vector<256x128xf32>
    %cst_44 = arith.constant dense<0.000000e+00> : vector<256xf32>
    %87 = vector.multi_reduction <add>, %86, %cst_44 [1] : vector<256x128xf32> to vector<256xf32>
    %88 = vector.shape_cast %87 : vector<256xf32> to vector<256x1xf32>
    %89 = math.log %88 : vector<256x1xf32>
    %90 = arith.addf %83, %89 : vector<256x1xf32>
    %91 = vector.broadcast %90 : vector<256x1xf32> to vector<256x128xf32>
    %92 = arith.subf %76, %91 : vector<256x128xf32>
    %c0_45 = arith.constant 0 : index
    %c0_46 = arith.constant 0 : index
    %93 = vector.load %arg13[%c0_45, %c0_46] : memref<256x128xf32, #tpu.memory_space<vmem>>, vector<256x128xf32>
    tpu.vector_store %arg13[%c0_45, %c0_46], %92 {strides = array<i32>} : memref<256x128xf32, #tpu.memory_space<vmem>>, vector<256x128xf32>,
    return
  }
  func.func @transform_0(%arg0: i32) -> (i32, i32) {
    %c0_i32 = arith.constant 0 : i32
    %c0_i32_0 = arith.constant 0 : i32
    return %arg0, %c0_i32 : i32, i32
  }
  func.func @transform_1(%arg0: i32) -> (i32, i32) {
    %c0_i32 = arith.constant 0 : i32
    %c0_i32_0 = arith.constant 0 : i32
    %c0_i32_1 = arith.constant 0 : i32
    return %c0_i32, %c0_i32_0 : i32, i32
  }
  func.func @transform_2(%arg0: i32) -> (i32, i32) {
    %c0_i32 = arith.constant 0 : i32
    %c0_i32_0 = arith.constant 0 : i32
    %c0_i32_1 = arith.constant 0 : i32
    return %c0_i32, %c0_i32_0 : i32, i32
  }
  func.func @transform_3(%arg0: i32) -> (i32, i32) {
    %c0_i32 = arith.constant 0 : i32
    %c0_i32_0 = arith.constant 0 : i32
    %c0_i32_1 = arith.constant 0 : i32
    return %c0_i32, %c0_i32_0 : i32, i32
  }
  func.func @transform_4(%arg0: i32) -> (i32, i32) {
    %c0_i32 = arith.constant 0 : i32
    %c0_i32_0 = arith.constant 0 : i32
    %c0_i32_1 = arith.constant 0 : i32
    return %c0_i32, %c0_i32_0 : i32, i32
  }
  func.func @transform_5(%arg0: i32) -> (i32, i32) {
    %c0_i32 = arith.constant 0 : i32
    %c0_i32_0 = arith.constant 0 : i32
    %c0_i32_1 = arith.constant 0 : i32
    return %c0_i32, %c0_i32_0 : i32, i32
  }
  func.func @transform_6(%arg0: i32) -> (i32, i32) {
    %c0_i32 = arith.constant 0 : i32
    %c0_i32_0 = arith.constant 0 : i32
    %c0_i32_1 = arith.constant 0 : i32
    return %c0_i32, %c0_i32_0 : i32, i32
  }
  func.func @transform_7(%arg0: i32) -> (i32, i32) {
    %c0_i32 = arith.constant 0 : i32
    %c0_i32_0 = arith.constant 0 : i32
    %c0_i32_1 = arith.constant 0 : i32
    return %c0_i32, %c0_i32_0 : i32, i32
  }
  func.func @transform_8(%arg0: i32) -> (i32, i32) {
    %c0_i32 = arith.constant 0 : i32
    %c0_i32_0 = arith.constant 0 : i32
    %c0_i32_1 = arith.constant 0 : i32
    return %c0_i32, %c0_i32_0 : i32, i32
  }
  func.func @transform_9(%arg0: i32) -> (i32, i32) {
    %c0_i32 = arith.constant 0 : i32
    %c0_i32_0 = arith.constant 0 : i32
    %c0_i32_1 = arith.constant 0 : i32
    return %c0_i32, %c0_i32_0 : i32, i32
  }
  func.func @transform_10(%arg0: i32) -> (i32, i32) {
    %c0_i32 = arith.constant 0 : i32
    %c0_i32_0 = arith.constant 0 : i32
    %c0_i32_1 = arith.constant 0 : i32
    return %c0_i32, %c0_i32_0 : i32, i32
  }
  func.func @transform_11(%arg0: i32) -> (i32, i32) {
    %c0_i32 = arith.constant 0 : i32
    %c0_i32_0 = arith.constant 0 : i32
    %c0_i32_1 = arith.constant 0 : i32
    return %c0_i32, %c0_i32_0 : i32, i32
  }
  func.func @transform_12(%arg0: i32) -> (i32, i32) {
    %c0_i32 = arith.constant 0 : i32
    %c0_i32_0 = arith.constant 0 : i32
    return %arg0, %c0_i32 : i32, i32
  }
}

</mosaic_0001>

<llo_original>
// kernel: tpu_custom_call.1
$region0: #{tpu_custom_call.1}
  #allocation0 [shape = 'u32[]', space=smem, size = 0x4, offset = 0x4, fixed_abs, tag = 'smem constant byte address 0x4 - core index']
  #allocation1 [shape = 'u32[144,128]{1,0:T(1,128)}', space=vmem, size = 0x12000, scoped, tag = 'internal scratch']
  %s0 = inlined_call_operand.vmem [shape: bf16[256,896], index: 0, kind: input, shape index: {}]
  %s1 = inlined_call_operand.vmem [shape: bf16[896,64], index: 1, kind: input, shape index: {}]
  %s2 = inlined_call_operand.vmem [shape: f32[1,64], index: 2, kind: input, shape index: {}]
  %s3 = inlined_call_operand.hbm [shape: bf16[64,64], index: 3, kind: input, shape index: {}]
  %s4 = inlined_call_operand.vmem [shape: f32[1,64], index: 4, kind: input, shape index: {}]
  %s5 = inlined_call_operand.vmem [shape: bf16[64,6], index: 5, kind: input, shape index: {}]
  %s6 = inlined_call_operand.vmem [shape: bf16[64,384], index: 6, kind: input, shape index: {}]
  %s7 = inlined_call_operand.vmem [shape: f32[1,384], index: 7, kind: input, shape index: {}]
  %s8 = inlined_call_operand.hbm [shape: bf16[6,384], index: 8, kind: input, shape index: {}]
  %s9 = inlined_call_operand.vmem [shape: bf16[384,64], index: 9, kind: input, shape index: {}]
  %s10 = inlined_call_operand.vmem [shape: bf16[64,128], index: 10, kind: input, shape index: {}]
  %s11 = inlined_call_operand.vmem [shape: f32[1,128], index: 11, kind: input, shape index: {}]
  %s12 = inlined_call_operand.hbm [shape: f32[256,128], index: 12, kind: output, shape index: {}]
  %s13 = sld [smem:[#allocation0]]
  $region66: #{tpu_custom_call.1} parent=0
    _
  %s15 = ssub.s32 1, %s13
  %s16 = scalar_select 0, %s15, %s13
  $region1: #{tpu_custom_call.1} parent=0
    #allocation2 [shape = 'u8[16384]{0}', space=vmem, size = 0x4000, scoped, tag = 'input window, operand 3, single buffered']
    #allocation3 [shape = 's32[1]{0}', space=sflag, size = 0x4, scoped, tag = 'scoped memory for tpu_custom_call.1']
    #allocation4 [shape = 's32[1]{0}', space=sflag, size = 0x4, scoped, tag = 'scoped memory for tpu_custom_call.1']
    #allocation5 [shape = 'u8[6144]{0}', space=vmem, size = 0x1800, scoped, tag = 'input window, operand 8, single buffered']
    #allocation6 [shape = 's32[1]{0}', space=sflag, size = 0x4, scoped, tag = 'scoped memory for tpu_custom_call.1']
    #allocation7 [shape = 'u8[131072]{0}', space=vmem, size = 0x20000, scoped, tag = 'output window, operand 0, single buffered']
    %17 = vsyncpa [#allocation3], 0
    %18 = vsyncpa [#allocation6], 0
    %19 = vsyncpa [#allocation4], 0
    // Predicated region
    $region2: #{tpu_custom_call.1} parent=1 // pred_check
      _
    $region3: #{tpu_custom_call.1} parent=1 // pred_check_branch
      %21 = sbr.rel (0) target = $region5
    $region4: #{tpu_custom_call.1} parent=1 // pred_region
      _
    $region5: #{tpu_custom_call.1} parent=1 // pred_fallthru
      _
    // Predicated region
    $region6: #{tpu_custom_call.1} parent=1 // pred_check
      _
    $region7: #{tpu_custom_call.1} parent=1 // pred_check_branch
      %23 = sbr.rel (0) target = $region9
    $region8: #{tpu_custom_call.1} parent=1 // pred_region
      _
    $region9: #{tpu_custom_call.1} parent=1 // pred_fallthru
      _
    // Predicated region
    $region10: #{tpu_custom_call.1} parent=1 // pred_check
      _
    $region11: #{tpu_custom_call.1} parent=1 // pred_check_branch
      %25 = sbr.rel (0) target = $region13
    $region12: #{tpu_custom_call.1} parent=1 // pred_region
      _
    $region13: #{tpu_custom_call.1} parent=1 // pred_fallthru
      _
    // Predicated region
    $region14: #{tpu_custom_call.1} parent=1 // pred_check
      _
    $region15: #{tpu_custom_call.1} parent=1 // pred_check_branch
      %27 = sbr.rel (0) target = $region17
    $region16: #{tpu_custom_call.1} parent=1 // pred_region
      %s29 = ssub.s32 512, 512
      %30 = vsyncadd [#allocation3], %s29
      %s31 = sshll.u32 [#allocation2], 4
      %s32 = int_to_ptr.vmem [resolvable:$true] %s31
      %37 = dma.hbm_to_vmem [thread:$0]  %s3, 512, %s32, [#allocation3], 64, 64, 4
    $region17: #{tpu_custom_call.1} parent=1 // pred_fallthru
      _
    // Predicated region
    $region18: #{tpu_custom_call.1} parent=1 // pred_check
      _
    $region19: #{tpu_custom_call.1} parent=1 // pred_check_branch
      %39 = sbr.rel (0) target = $region21
    $region20: #{tpu_custom_call.1} parent=1 // pred_region
      _
    $region21: #{tpu_custom_call.1} parent=1 // pred_fallthru
      _
    // Predicated region
    $region22: #{tpu_custom_call.1} parent=1 // pred_check
      _
    $region23: #{tpu_custom_call.1} parent=1 // pred_check_branch
      %41 = sbr.rel (0) target = $region25
    $region24: #{tpu_custom_call.1} parent=1 // pred_region
      _
    $region25: #{tpu_custom_call.1} parent=1 // pred_fallthru
      _
    // Predicated region
    $region26: #{tpu_custom_call.1} parent=1 // pred_check
      _
    $region27: #{tpu_custom_call.1} parent=1 // pred_check_branch
      %43 = sbr.rel (0) target = $region29
    $region28: #{tpu_custom_call.1} parent=1 // pred_region
      _
    $region29: #{tpu_custom_call.1} parent=1 // pred_fallthru
      _
    // Predicated region
    $region30: #{tpu_custom_call.1} parent=1 // pred_check
      _
    $region31: #{tpu_custom_call.1} parent=1 // pred_check_branch
      %45 = sbr.rel (0) target = $region33
    $region32: #{tpu_custom_call.1} parent=1 // pred_region
      _
    $region33: #{tpu_custom_call.1} parent=1 // pred_fallthru
      _
    // Predicated region
    $region34: #{tpu_custom_call.1} parent=1 // pred_check
      _
    $region35: #{tpu_custom_call.1} parent=1 // pred_check_branch
      %47 = sbr.rel (0) target = $region37
    $region36: #{tpu_custom_call.1} parent=1 // pred_region
      %s49 = ssub.s32 192, 192
      %50 = vsyncadd [#allocation6], %s49
      %s52 = sshll.u32 [#allocation5], 4
      %s53 = int_to_ptr.vmem [resolvable:$true] %s52
      %55 = dma.hbm_to_vmem [thread:$0]  %s8, 192, %s53, [#allocation6]
    $region37: #{tpu_custom_call.1} parent=1 // pred_fallthru
      _
    // Predicated region
    $region38: #{tpu_custom_call.1} parent=1 // pred_check
      _
    $region39: #{tpu_custom_call.1} parent=1 // pred_check_branch
      %57 = sbr.rel (0) target = $region41
    $region40: #{tpu_custom_call.1} parent=1 // pred_region
      _
    $region41: #{tpu_custom_call.1} parent=1 // pred_fallthru
      _
    // Predicated region
    $region42: #{tpu_custom_call.1} parent=1 // pred_check
      _
    $region43: #{tpu_custom_call.1} parent=1 // pred_check_branch
      %59 = sbr.rel (0) target = $region45
    $region44: #{tpu_custom_call.1} parent=1 // pred_region
      _
    $region45: #{tpu_custom_call.1} parent=1 // pred_fallthru
      _
    // Predicated region
    $region46: #{tpu_custom_call.1} parent=1 // pred_check
      _
    $region47: #{tpu_custom_call.1} parent=1 // pred_check_branch
      %61 = sbr.rel (0) target = $region49
    $region48: #{tpu_custom_call.1} parent=1 // pred_region
      _
    $region49: #{tpu_custom_call.1} parent=1 // pred_fallthru
      _
    // Predicated region
    $region50: #{tpu_custom_call.1} parent=1 // pred_check
      _
    $region51: #{tpu_custom_call.1} parent=1 // pred_check_branch
      %63 = sbr.rel (0) target = $region53
    $region52: #{tpu_custom_call.1} parent=1 // pred_region
      %64 = dma.done [#allocation3], 512
    $region53: #{tpu_custom_call.1} parent=1 // pred_fallthru
      _
    // Predicated region
    $region54: #{tpu_custom_call.1} parent=1 // pred_check
      _
    $region55: #{tpu_custom_call.1} parent=1 // pred_check_branch
      %66 = sbr.rel (0) target = $region57
    $region56: #{tpu_custom_call.1} parent=1 // pred_region
      %67 = dma.done [#allocation6], 192
    $region57: #{tpu_custom_call.1} parent=1 // pred_fallthru
      _
    %v69 = vld [vmem:[%s0] sm:$0xff]
    %v70 = vld [vmem:[%s0 + $0x8] sm:$0xff]
    %v71 = vld [vmem:[%s0 + $0x10] sm:$0xff]
    %v72 = vld [vmem:[%s0 + $0x18] sm:$0xf]
    %v73 = vld [vmem:[%s0 + $0x1c] sm:$0xff]
    %v74 = vld [vmem:[%s0 + $0x24] sm:$0xff]
    %v75 = vld [vmem:[%s0 + $0x2c] sm:$0xff]
    %v76 = vld [vmem:[%s0 + $0x34] sm:$0xf]
    %v77 = vld [vmem:[%s0 + $0x38] sm:$0xff]
    %v78 = vld [vmem:[%s0 + $0x40] sm:$0xff]
    %v79 = vld [vmem:[%s0 + $0x48] sm:$0xff]
    %v80 = vld [vmem:[%s0 + $0x50] sm:$0xf]
    %v81 = vld [vmem:[%s0 + $0x54] sm:$0xff]
    %v82 = vld [vmem:[%s0 + $0x5c] sm:$0xff]
    %v83 = vld [vmem:[%s0 + $0x64] sm:$0xff]
    %v84 = vld [vmem:[%s0 + $0x6c] sm:$0xf]
    %v85 = vld [vmem:[%s0 + $0x70] sm:$0xff]
    %v86 = vld [vmem:[%s0 + $0x78] sm:$0xff]
    %v87 = vld [vmem:[%s0 + $0x80] sm:$0xff]
    %v88 = vld [vmem:[%s0 + $0x88] sm:$0xf]
    %v89 = vld [vmem:[%s0 + $0x8c] sm:$0xff]
    %v90 = vld [vmem:[%s0 + $0x94] sm:$0xff]
    %v91 = vld [vmem:[%s0 + $0x9c] sm:$0xff]
    %v92 = vld [vmem:[%s0 + $0xa4] sm:$0xf]
    %v93 = vld [vmem:[%s0 + $0xa8] sm:$0xff]
    %v94 = vld [vmem:[%s0 + $0xb0] sm:$0xff]
    %v95 = vld [vmem:[%s0 + $0xb8] sm:$0xff]
    %v96 = vld [vmem:[%s0 + $0xc0] sm:$0xf]
    %v97 = vld [vmem:[%s0 + $0xc4] sm:$0xff]
    %v98 = vld [vmem:[%s0 + $0xcc] sm:$0xff]
    %v99 = vld [vmem:[%s0 + $0xd4] sm:$0xff]
    %v100 = vld [vmem:[%s0 + $0xdc] sm:$0xf]
    %v101 = vld [vmem:[%s0 + $0xe0] sm:$0xff]
    %v102 = vld [vmem:[%s0 + $0xe8] sm:$0xff]
    %v103 = vld [vmem:[%s0 + $0xf0] sm:$0xff]
    %v104 = vld [vmem:[%s0 + $0xf8] sm:$0xf]
    %v105 = vld [vmem:[%s0 + $0xfc] sm:$0xff]
    %v106 = vld [vmem:[%s0 + $0x104] sm:$0xff]
    %v107 = vld [vmem:[%s0 + $0x10c] sm:$0xff]
    %v108 = vld [vmem:[%s0 + $0x114] sm:$0xf]
    %v109 = vld [vmem:[%s0 + $0x118] sm:$0xff]
    %v110 = vld [vmem:[%s0 + $0x120] sm:$0xff]
    %v111 = vld [vmem:[%s0 + $0x128] sm:$0xff]
    %v112 = vld [vmem:[%s0 + $0x130] sm:$0xf]
    %v113 = vld [vmem:[%s0 + $0x134] sm:$0xff]
    %v114 = vld [vmem:[%s0 + $0x13c] sm:$0xff]
    %v115 = vld [vmem:[%s0 + $0x144] sm:$0xff]
    %v116 = vld [vmem:[%s0 + $0x14c] sm:$0xf]
    %v117 = vld [vmem:[%s0 + $0x150] sm:$0xff]
    %v118 = vld [vmem:[%s0 + $0x158] sm:$0xff]
    %v119 = vld [vmem:[%s0 + $0x160] sm:$0xff]
    %v120 = vld [vmem:[%s0 + $0x168] sm:$0xf]
    %v121 = vld [vmem:[%s0 + $0x16c] sm:$0xff]
    %v122 = vld [vmem:[%s0 + $0x174] sm:$0xff]
    %v123 = vld [vmem:[%s0 + $0x17c] sm:$0xff]
    %v124 = vld [vmem:[%s0 + $0x184] sm:$0xf]
    %v125 = vld [vmem:[%s0 + $0x188] sm:$0xff]
    %v126 = vld [vmem:[%s0 + $0x190] sm:$0xff]
    %v127 = vld [vmem:[%s0 + $0x198] sm:$0xff]
    %v128 = vld [vmem:[%s0 + $0x1a0] sm:$0xf]
    %v129 = vld [vmem:[%s0 + $0x1a4] sm:$0xff]
    %v130 = vld [vmem:[%s0 + $0x1ac] sm:$0xff]
    %v131 = vld [vmem:[%s0 + $0x1b4] sm:$0xff]
    %v132 = vld [vmem:[%s0 + $0x1bc] sm:$0xf]
    %v133 = vld [vmem:[%s0 + $0x1c0] sm:$0xff]
    %v134 = vld [vmem:[%s0 + $0x1c8] sm:$0xff]
    %v135 = vld [vmem:[%s0 + $0x1d0] sm:$0xff]
    %v136 = vld [vmem:[%s0 + $0x1d8] sm:$0xf]
    %v137 = vld [vmem:[%s0 + $0x1dc] sm:$0xff]
    %v138 = vld [vmem:[%s0 + $0x1e4] sm:$0xff]
    %v139 = vld [vmem:[%s0 + $0x1ec] sm:$0xff]
    %v140 = vld [vmem:[%s0 + $0x1f4] sm:$0xf]
    %v141 = vld [vmem:[%s0 + $0x1f8] sm:$0xff]
    %v142 = vld [vmem:[%s0 + $0x200] sm:$0xff]
    %v143 = vld [vmem:[%s0 + $0x208] sm:$0xff]
    %v144 = vld [vmem:[%s0 + $0x210] sm:$0xf]
    %v145 = vld [vmem:[%s0 + $0x214] sm:$0xff]
    %v146 = vld [vmem:[%s0 + $0x21c] sm:$0xff]
    %v147 = vld [vmem:[%s0 + $0x224] sm:$0xff]
    %v148 = vld [vmem:[%s0 + $0x22c] sm:$0xf]
    %v149 = vld [vmem:[%s0 + $0x230] sm:$0xff]
    %v150 = vld [vmem:[%s0 + $0x238] sm:$0xff]
    %v151 = vld [vmem:[%s0 + $0x240] sm:$0xff]
    %v152 = vld [vmem:[%s0 + $0x248] sm:$0xf]
    %v153 = vld [vmem:[%s0 + $0x24c] sm:$0xff]
    %v154 = vld [vmem:[%s0 + $0x254] sm:$0xff]
    %v155 = vld [vmem:[%s0 + $0x25c] sm:$0xff]
    %v156 = vld [vmem:[%s0 + $0x264] sm:$0xf]
    %v157 = vld [vmem:[%s0 + $0x268] sm:$0xff]
    %v158 = vld [vmem:[%s0 + $0x270] sm:$0xff]
    %v159 = vld [vmem:[%s0 + $0x278] sm:$0xff]
    %v160 = vld [vmem:[%s0 + $0x280] sm:$0xf]
    %v161 = vld [vmem:[%s0 + $0x284] sm:$0xff]
    %v162 = vld [vmem:[%s0 + $0x28c] sm:$0xff]
    %v163 = vld [vmem:[%s0 + $0x294] sm:$0xff]
    %v164 = vld [vmem:[%s0 + $0x29c] sm:$0xf]
    %v165 = vld [vmem:[%s0 + $0x2a0] sm:$0xff]
    %v166 = vld [vmem:[%s0 + $0x2a8] sm:$0xff]
    %v167 = vld [vmem:[%s0 + $0x2b0] sm:$0xff]
    %v168 = vld [vmem:[%s0 + $0x2b8] sm:$0xf]
    %v169 = vld [vmem:[%s0 + $0x2bc] sm:$0xff]
    %v170 = vld [vmem:[%s0 + $0x2c4] sm:$0xff]
    %v171 = vld [vmem:[%s0 + $0x2cc] sm:$0xff]
    %v172 = vld [vmem:[%s0 + $0x2d4] sm:$0xf]
    %v173 = vld [vmem:[%s0 + $0x2d8] sm:$0xff]
    %v174 = vld [vmem:[%s0 + $0x2e0] sm:$0xff]
    %v175 = vld [vmem:[%s0 + $0x2e8] sm:$0xff]
    %v176 = vld [vmem:[%s0 + $0x2f0] sm:$0xf]
    %v177 = vld [vmem:[%s0 + $0x2f4] sm:$0xff]
    %v178 = vld [vmem:[%s0 + $0x2fc] sm:$0xff]
    %v179 = vld [vmem:[%s0 + $0x304] sm:$0xff]
    %v180 = vld [vmem:[%s0 + $0x30c] sm:$0xf]
    %v181 = vld [vmem:[%s0 + $0x310] sm:$0xff]
    %v182 = vld [vmem:[%s0 + $0x318] sm:$0xff]
    %v183 = vld [vmem:[%s0 + $0x320] sm:$0xff]
    %v184 = vld [vmem:[%s0 + $0x328] sm:$0xf]
    %v185 = vld [vmem:[%s0 + $0x32c] sm:$0xff]
    %v186 = vld [vmem:[%s0 + $0x334] sm:$0xff]
    %v187 = vld [vmem:[%s0 + $0x33c] sm:$0xff]
    %v188 = vld [vmem:[%s0 + $0x344] sm:$0xf]
    %v189 = vld [vmem:[%s0 + $0x348] sm:$0xff]
    %v190 = vld [vmem:[%s0 + $0x350] sm:$0xff]
    %v191 = vld [vmem:[%s0 + $0x358] sm:$0xff]
    %v192 = vld [vmem:[%s0 + $0x360] sm:$0xf]
    %v193 = vld [vmem:[%s0 + $0x364] sm:$0xff]
    %v194 = vld [vmem:[%s0 + $0x36c] sm:$0xff]
    %v195 = vld [vmem:[%s0 + $0x374] sm:$0xff]
    %v196 = vld [vmem:[%s0 + $0x37c] sm:$0xf]
    %v197 = vld [vmem:[%s1] sm:$0xf]
    %v198 = vld [vmem:[%s1 + $0x4] sm:$0xf]
    %v199 = vld [vmem:[%s1 + $0x8] sm:$0xf]
    %v200 = vld [vmem:[%s1 + $0xc] sm:$0xf]
    %v201 = vld [vmem:[%s1 + $0x10] sm:$0xf]
    %v202 = vld [vmem:[%s1 + $0x14] sm:$0xf]
    %v203 = vld [vmem:[%s1 + $0x18] sm:$0xf]
    %v204 = vld [vmem:[%s1 + $0x1c] sm:$0xf]
    %v205 = vld [vmem:[%s1 + $0x20] sm:$0xf]
    %v206 = vld [vmem:[%s1 + $0x24] sm:$0xf]
    %v207 = vld [vmem:[%s1 + $0x28] sm:$0xf]
    %v208 = vld [vmem:[%s1 + $0x2c] sm:$0xf]
    %v209 = vld [vmem:[%s1 + $0x30] sm:$0xf]
    %v210 = vld [vmem:[%s1 + $0x34] sm:$0xf]
    %v211 = vld [vmem:[%s1 + $0x38] sm:$0xf]
    %v212 = vld [vmem:[%s1 + $0x3c] sm:$0xf]
    %v213 = vld [vmem:[%s1 + $0x40] sm:$0xf]
    %v214 = vld [vmem:[%s1 + $0x44] sm:$0xf]
    %v215 = vld [vmem:[%s1 + $0x48] sm:$0xf]
    %v216 = vld [vmem:[%s1 + $0x4c] sm:$0xf]
    %v217 = vld [vmem:[%s1 + $0x50] sm:$0xf]
    %v218 = vld [vmem:[%s1 + $0x54] sm:$0xf]
    %v219 = vld [vmem:[%s1 + $0x58] sm:$0xf]
    %v220 = vld [vmem:[%s1 + $0x5c] sm:$0xf]
    %v221 = vld [vmem:[%s1 + $0x60] sm:$0xf]
    %v222 = vld [vmem:[%s1 + $0x64] sm:$0xf]
    %v223 = vld [vmem:[%s1 + $0x68] sm:$0xf]
    %v224 = vld [vmem:[%s1 + $0x6c] sm:$0xf]
    %v225 = vld [vmem:[%s1 + $0x70] sm:$0xf]
    %v226 = vld [vmem:[%s1 + $0x74] sm:$0xf]
    %v227 = vld [vmem:[%s1 + $0x78] sm:$0xf]
    %v228 = vld [vmem:[%s1 + $0x7c] sm:$0xf]
    %v229 = vld [vmem:[%s1 + $0x80] sm:$0xf]
    %v230 = vld [vmem:[%s1 + $0x84] sm:$0xf]
    %v231 = vld [vmem:[%s1 + $0x88] sm:$0xf]
    %v232 = vld [vmem:[%s1 + $0x8c] sm:$0xf]
    %v233 = vld [vmem:[%s1 + $0x90] sm:$0xf]
    %v234 = vld [vmem:[%s1 + $0x94] sm:$0xf]
    %v235 = vld [vmem:[%s1 + $0x98] sm:$0xf]
    %v236 = vld [vmem:[%s1 + $0x9c] sm:$0xf]
    %v237 = vld [vmem:[%s1 + $0xa0] sm:$0xf]
    %v238 = vld [vmem:[%s1 + $0xa4] sm:$0xf]
    %v239 = vld [vmem:[%s1 + $0xa8] sm:$0xf]
    %v240 = vld [vmem:[%s1 + $0xac] sm:$0xf]
    %v241 = vld [vmem:[%s1 + $0xb0] sm:$0xf]
    %v242 = vld [vmem:[%s1 + $0xb4] sm:$0xf]
    %v243 = vld [vmem:[%s1 + $0xb8] sm:$0xf]
    %v244 = vld [vmem:[%s1 + $0xbc] sm:$0xf]
    %v245 = vld [vmem:[%s1 + $0xc0] sm:$0xf]
    %v246 = vld [vmem:[%s1 + $0xc4] sm:$0xf]
    %v247 = vld [vmem:[%s1 + $0xc8] sm:$0xf]
    %v248 = vld [vmem:[%s1 + $0xcc] sm:$0xf]
    %v249 = vld [vmem:[%s1 + $0xd0] sm:$0xf]
    %v250 = vld [vmem:[%s1 + $0xd4] sm:$0xf]
    %v251 = vld [vmem:[%s1 + $0xd8] sm:$0xf]
    %v252 = vld [vmem:[%s1 + $0xdc] sm:$0xf]
    %v253 = vld [vmem:[%s1 + $0xe0] sm:$0xf]
    %v254 = vld [vmem:[%s1 + $0xe4] sm:$0xf]
    %v255 = vld [vmem:[%s1 + $0xe8] sm:$0xf]
    %v256 = vld [vmem:[%s1 + $0xec] sm:$0xf]
    %v257 = vld [vmem:[%s1 + $0xf0] sm:$0xf]
    %v258 = vld [vmem:[%s1 + $0xf4] sm:$0xf]
    %v259 = vld [vmem:[%s1 + $0xf8] sm:$0xf]
    %v260 = vld [vmem:[%s1 + $0xfc] sm:$0xf]
    %v261 = vld [vmem:[%s1 + $0x100] sm:$0xf]
    %v262 = vld [vmem:[%s1 + $0x104] sm:$0xf]
    %v263 = vld [vmem:[%s1 + $0x108] sm:$0xf]
    %v264 = vld [vmem:[%s1 + $0x10c] sm:$0xf]
    %v265 = vld [vmem:[%s1 + $0x110] sm:$0xf]
    %v266 = vld [vmem:[%s1 + $0x114] sm:$0xf]
    %v267 = vld [vmem:[%s1 + $0x118] sm:$0xf]
    %v268 = vld [vmem:[%s1 + $0x11c] sm:$0xf]
    %v269 = vld [vmem:[%s1 + $0x120] sm:$0xf]
    %v270 = vld [vmem:[%s1 + $0x124] sm:$0xf]
    %v271 = vld [vmem:[%s1 + $0x128] sm:$0xf]
    %v272 = vld [vmem:[%s1 + $0x12c] sm:$0xf]
    %v273 = vld [vmem:[%s1 + $0x130] sm:$0xf]
    %v274 = vld [vmem:[%s1 + $0x134] sm:$0xf]
    %v275 = vld [vmem:[%s1 + $0x138] sm:$0xf]
    %v276 = vld [vmem:[%s1 + $0x13c] sm:$0xf]
    %v277 = vld [vmem:[%s1 + $0x140] sm:$0xf]
    %v278 = vld [vmem:[%s1 + $0x144] sm:$0xf]
    %v279 = vld [vmem:[%s1 + $0x148] sm:$0xf]
    %v280 = vld [vmem:[%s1 + $0x14c] sm:$0xf]
    %v281 = vld [vmem:[%s1 + $0x150] sm:$0xf]
    %v282 = vld [vmem:[%s1 + $0x154] sm:$0xf]
    %v283 = vld [vmem:[%s1 + $0x158] sm:$0xf]
    %v284 = vld [vmem:[%s1 + $0x15c] sm:$0xf]
    %v285 = vld [vmem:[%s1 + $0x160] sm:$0xf]
    %v286 = vld [vmem:[%s1 + $0x164] sm:$0xf]
    %v287 = vld [vmem:[%s1 + $0x168] sm:$0xf]
    %v288 = vld [vmem:[%s1 + $0x16c] sm:$0xf]
    %v289 = vld [vmem:[%s1 + $0x170] sm:$0xf]
    %v290 = vld [vmem:[%s1 + $0x174] sm:$0xf]
    %v291 = vld [vmem:[%s1 + $0x178] sm:$0xf]
    %v292 = vld [vmem:[%s1 + $0x17c] sm:$0xf]
    %v293 = vld [vmem:[%s1 + $0x180] sm:$0xf]
    %v294 = vld [vmem:[%s1 + $0x184] sm:$0xf]
    %v295 = vld [vmem:[%s1 + $0x188] sm:$0xf]
    %v296 = vld [vmem:[%s1 + $0x18c] sm:$0xf]
    %v297 = vld [vmem:[%s1 + $0x190] sm:$0xf]
    %v298 = vld [vmem:[%s1 + $0x194] sm:$0xf]
    %v299 = vld [vmem:[%s1 + $0x198] sm:$0xf]
    %v300 = vld [vmem:[%s1 + $0x19c] sm:$0xf]
    %v301 = vld [vmem:[%s1 + $0x1a0] sm:$0xf]
    %v302 = vld [vmem:[%s1 + $0x1a4] sm:$0xf]
    %v303 = vld [vmem:[%s1 + $0x1a8] sm:$0xf]
    %v304 = vld [vmem:[%s1 + $0x1ac] sm:$0xf]
    %v305 = vld [vmem:[%s1 + $0x1b0] sm:$0xf]
    %v306 = vld [vmem:[%s1 + $0x1b4] sm:$0xf]
    %v307 = vld [vmem:[%s1 + $0x1b8] sm:$0xf]
    %v308 = vld [vmem:[%s1 + $0x1bc] sm:$0xf]
    %v309 = vld [vmem:[%s2] sm:$0x1]
    %v311 = vlaneseq
    %v312 = vshrl.u32 %v311, 7
    %v313 = vsub.s32 0, %v312
    %v314 = vrot.slane %v309, %v313
    %v444 = vunpack.c.l.b16 %v69
    %v445 = vunpack.c.h.b16 %v69
    %v446 = vunpack.c.l.b16 %v70
    %v447 = vunpack.c.h.b16 %v70
    %v448 = vunpack.c.l.b16 %v71
    %v449 = vunpack.c.h.b16 %v71
    %v450 = vunpack.c.l.b16 %v72
    %v451 = vunpack.c.l.b16 %v73
    %v452 = vunpack.c.h.b16 %v73
    %v453 = vunpack.c.l.b16 %v74
    %v454 = vunpack.c.h.b16 %v74
    %v455 = vunpack.c.l.b16 %v75
    %v456 = vunpack.c.h.b16 %v75
    %v457 = vunpack.c.l.b16 %v76
    %v458 = vunpack.c.l.b16 %v77
    %v459 = vunpack.c.h.b16 %v77
    %v460 = vunpack.c.l.b16 %v78
    %v461 = vunpack.c.h.b16 %v78
    %v462 = vunpack.c.l.b16 %v79
    %v463 = vunpack.c.h.b16 %v79
    %v464 = vunpack.c.l.b16 %v80
    %v465 = vunpack.c.l.b16 %v81
    %v466 = vunpack.c.h.b16 %v81
    %v467 = vunpack.c.l.b16 %v82
    %v468 = vunpack.c.h.b16 %v82
    %v469 = vunpack.c.l.b16 %v83
    %v470 = vunpack.c.h.b16 %v83
    %v471 = vunpack.c.l.b16 %v84
    %v472 = vunpack.c.l.b16 %v85
    %v473 = vunpack.c.h.b16 %v85
    %v474 = vunpack.c.l.b16 %v86
    %v475 = vunpack.c.h.b16 %v86
    %v476 = vunpack.c.l.b16 %v87
    %v477 = vunpack.c.h.b16 %v87
    %v478 = vunpack.c.l.b16 %v88
    %v479 = vunpack.c.l.b16 %v89
    %v480 = vunpack.c.h.b16 %v89
    %v481 = vunpack.c.l.b16 %v90
    %v482 = vunpack.c.h.b16 %v90
    %v483 = vunpack.c.l.b16 %v91
    %v484 = vunpack.c.h.b16 %v91
    %v485 = vunpack.c.l.b16 %v92
    %v486 = vunpack.c.l.b16 %v93
    %v487 = vunpack.c.h.b16 %v93
    %v488 = vunpack.c.l.b16 %v94
    %v489 = vunpack.c.h.b16 %v94
    %v490 = vunpack.c.l.b16 %v95
    %v491 = vunpack.c.h.b16 %v95
    %v492 = vunpack.c.l.b16 %v96
    %v493 = vunpack.c.l.b16 %v97
    %v494 = vunpack.c.h.b16 %v97
    %v495 = vunpack.c.l.b16 %v98
    %v496 = vunpack.c.h.b16 %v98
    %v497 = vunpack.c.l.b16 %v99
    %v498 = vunpack.c.h.b16 %v99
    %v499 = vunpack.c.l.b16 %v100
    %v500 = vunpack.c.l.b16 %v101
    %v501 = vunpack.c.h.b16 %v101
    %v502 = vunpack.c.l.b16 %v102
    %v503 = vunpack.c.h.b16 %v102
    %v504 = vunpack.c.l.b16 %v103
    %v505 = vunpack.c.h.b16 %v103
    %v506 = vunpack.c.l.b16 %v104
    %v507 = vunpack.c.l.b16 %v105
    %v508 = vunpack.c.h.b16 %v105
    %v509 = vunpack.c.l.b16 %v106
    %v510 = vunpack.c.h.b16 %v106
    %v511 = vunpack.c.l.b16 %v107
    %v512 = vunpack.c.h.b16 %v107
    %v513 = vunpack.c.l.b16 %v108
    %v514 = vunpack.c.l.b16 %v109
    %v515 = vunpack.c.h.b16 %v109
    %v516 = vunpack.c.l.b16 %v110
    %v517 = vunpack.c.h.b16 %v110
    %v518 = vunpack.c.l.b16 %v111
    %v519 = vunpack.c.h.b16 %v111
    %v520 = vunpack.c.l.b16 %v112
    %v521 = vunpack.c.l.b16 %v113
    %v522 = vunpack.c.h.b16 %v113
    %v523 = vunpack.c.l.b16 %v114
    %v524 = vunpack.c.h.b16 %v114
    %v525 = vunpack.c.l.b16 %v115
    %v526 = vunpack.c.h.b16 %v115
    %v527 = vunpack.c.l.b16 %v116
    %v528 = vunpack.c.l.b16 %v117
    %v529 = vunpack.c.h.b16 %v117
    %v530 = vunpack.c.l.b16 %v118
    %v531 = vunpack.c.h.b16 %v118
    %v532 = vunpack.c.l.b16 %v119
    %v533 = vunpack.c.h.b16 %v119
    %v534 = vunpack.c.l.b16 %v120
    %v535 = vunpack.c.l.b16 %v121
    %v536 = vunpack.c.h.b16 %v121
    %v537 = vunpack.c.l.b16 %v122
    %v538 = vunpack.c.h.b16 %v122
    %v539 = vunpack.c.l.b16 %v123
    %v540 = vunpack.c.h.b16 %v123
    %v541 = vunpack.c.l.b16 %v124
    %v542 = vunpack.c.l.b16 %v125
    %v543 = vunpack.c.h.b16 %v125
    %v544 = vunpack.c.l.b16 %v126
    %v545 = vunpack.c.h.b16 %v126
    %v546 = vunpack.c.l.b16 %v127
    %v547 = vunpack.c.h.b16 %v127
    %v548 = vunpack.c.l.b16 %v128
    %v549 = vunpack.c.l.b16 %v129
    %v550 = vunpack.c.h.b16 %v129
    %v551 = vunpack.c.l.b16 %v130
    %v552 = vunpack.c.h.b16 %v130
    %v553 = vunpack.c.l.b16 %v131
    %v554 = vunpack.c.h.b16 %v131
    %v555 = vunpack.c.l.b16 %v132
    %v556 = vunpack.c.l.b16 %v133
    %v557 = vunpack.c.h.b16 %v133
    %v558 = vunpack.c.l.b16 %v134
    %v559 = vunpack.c.h.b16 %v134
    %v560 = vunpack.c.l.b16 %v135
    %v561 = vunpack.c.h.b16 %v135
    %v562 = vunpack.c.l.b16 %v136
    %v563 = vunpack.c.l.b16 %v137
    %v564 = vunpack.c.h.b16 %v137
    %v565 = vunpack.c.l.b16 %v138
    %v566 = vunpack.c.h.b16 %v138
    %v567 = vunpack.c.l.b16 %v139
    %v568 = vunpack.c.h.b16 %v139
    %v569 = vunpack.c.l.b16 %v140
    %v570 = vunpack.c.l.b16 %v141
    %v571 = vunpack.c.h.b16 %v141
    %v572 = vunpack.c.l.b16 %v142
    %v573 = vunpack.c.h.b16 %v142
    %v574 = vunpack.c.l.b16 %v143
    %v575 = vunpack.c.h.b16 %v143
    %v576 = vunpack.c.l.b16 %v144
    %v577 = vunpack.c.l.b16 %v145
    %v578 = vunpack.c.h.b16 %v145
    %v579 = vunpack.c.l.b16 %v146
    %v580 = vunpack.c.h.b16 %v146
    %v581 = vunpack.c.l.b16 %v147
    %v582 = vunpack.c.h.b16 %v147
    %v583 = vunpack.c.l.b16 %v148
    %v584 = vunpack.c.l.b16 %v149
    %v585 = vunpack.c.h.b16 %v149
    %v586 = vunpack.c.l.b16 %v150
    %v587 = vunpack.c.h.b16 %v150
    %v588 = vunpack.c.l.b16 %v151
    %v589 = vunpack.c.h.b16 %v151
    %v590 = vunpack.c.l.b16 %v152
    %v591 = vunpack.c.l.b16 %v153
    %v592 = vunpack.c.h.b16 %v153
    %v593 = vunpack.c.l.b16 %v154
    %v594 = vunpack.c.h.b16 %v154
    %v595 = vunpack.c.l.b16 %v155
    %v596 = vunpack.c.h.b16 %v155
    %v597 = vunpack.c.l.b16 %v156
    %v598 = vunpack.c.l.b16 %v157
    %v599 = vunpack.c.h.b16 %v157
    %v600 = vunpack.c.l.b16 %v158
    %v601 = vunpack.c.h.b16 %v158
    %v602 = vunpack.c.l.b16 %v159
    %v603 = vunpack.c.h.b16 %v159
    %v604 = vunpack.c.l.b16 %v160
    %v605 = vunpack.c.l.b16 %v161
    %v606 = vunpack.c.h.b16 %v161
    %v607 = vunpack.c.l.b16 %v162
    %v608 = vunpack.c.h.b16 %v162
    %v609 = vunpack.c.l.b16 %v163
    %v610 = vunpack.c.h.b16 %v163
    %v611 = vunpack.c.l.b16 %v164
    %v612 = vunpack.c.l.b16 %v165
    %v613 = vunpack.c.h.b16 %v165
    %v614 = vunpack.c.l.b16 %v166
    %v615 = vunpack.c.h.b16 %v166
    %v616 = vunpack.c.l.b16 %v167
    %v617 = vunpack.c.h.b16 %v167
    %v618 = vunpack.c.l.b16 %v168
    %v619 = vunpack.c.l.b16 %v169
    %v620 = vunpack.c.h.b16 %v169
    %v621 = vunpack.c.l.b16 %v170
    %v622 = vunpack.c.h.b16 %v170
    %v623 = vunpack.c.l.b16 %v171
    %v624 = vunpack.c.h.b16 %v171
    %v625 = vunpack.c.l.b16 %v172
    %v626 = vunpack.c.l.b16 %v173
    %v627 = vunpack.c.h.b16 %v173
    %v628 = vunpack.c.l.b16 %v174
    %v629 = vunpack.c.h.b16 %v174
    %v630 = vunpack.c.l.b16 %v175
    %v631 = vunpack.c.h.b16 %v175
    %v632 = vunpack.c.l.b16 %v176
    %v633 = vunpack.c.l.b16 %v177
    %v634 = vunpack.c.h.b16 %v177
    %v635 = vunpack.c.l.b16 %v178
    %v636 = vunpack.c.h.b16 %v178
    %v637 = vunpack.c.l.b16 %v179
    %v638 = vunpack.c.h.b16 %v179
    %v639 = vunpack.c.l.b16 %v180
    %v640 = vunpack.c.l.b16 %v181
    %v641 = vunpack.c.h.b16 %v181
    %v642 = vunpack.c.l.b16 %v182
    %v643 = vunpack.c.h.b16 %v182
    %v644 = vunpack.c.l.b16 %v183
    %v645 = vunpack.c.h.b16 %v183
    %v646 = vunpack.c.l.b16 %v184
    %v647 = vunpack.c.l.b16 %v185
    %v648 = vunpack.c.h.b16 %v185
    %v649 = vunpack.c.l.b16 %v186
    %v650 = vunpack.c.h.b16 %v186
    %v651 = vunpack.c.l.b16 %v187
    %v652 = vunpack.c.h.b16 %v187
    %v653 = vunpack.c.l.b16 %v188
    %v654 = vunpack.c.l.b16 %v189
    %v655 = vunpack.c.h.b16 %v189
    %v656 = vunpack.c.l.b16 %v190
    %v657 = vunpack.c.h.b16 %v190
    %v658 = vunpack.c.l.b16 %v191
    %v659 = vunpack.c.h.b16 %v191
    %v660 = vunpack.c.l.b16 %v192
    %v661 = vunpack.c.l.b16 %v193
    %v662 = vunpack.c.h.b16 %v193
    %v663 = vunpack.c.l.b16 %v194
    %v664 = vunpack.c.h.b16 %v194
    %v665 = vunpack.c.l.b16 %v195
    %v666 = vunpack.c.h.b16 %v195
    %v667 = vunpack.c.l.b16 %v196
    %v668 = vpack.c.b16 %v451, %v444
    %v669 = vpack.c.b16 %v452, %v445
    %v670 = vpack.c.b16 %v453, %v446
    %v671 = vpack.c.b16 %v454, %v447
    %v672 = vpack.c.b16 %v455, %v448
    %v673 = vpack.c.b16 %v456, %v449
    %v674 = vpack.c.b16 %v457, %v450
    %v675 = vpack.c.b16 %v465, %v458
    %v676 = vpack.c.b16 %v466, %v459
    %v677 = vpack.c.b16 %v467, %v460
    %v678 = vpack.c.b16 %v468, %v461
    %v679 = vpack.c.b16 %v469, %v462
    %v680 = vpack.c.b16 %v470, %v463
    %v681 = vpack.c.b16 %v471, %v464
    %v682 = vpack.c.b16 %v479, %v472
    %v683 = vpack.c.b16 %v480, %v473
    %v684 = vpack.c.b16 %v481, %v474
    %v685 = vpack.c.b16 %v482, %v475
    %v686 = vpack.c.b16 %v483, %v476
    %v687 = vpack.c.b16 %v484, %v477
    %v688 = vpack.c.b16 %v485, %v478
    %v689 = vpack.c.b16 %v493, %v486
    %v690 = vpack.c.b16 %v494, %v487
    %v691 = vpack.c.b16 %v495, %v488
    %v692 = vpack.c.b16 %v496, %v489
    %v693 = vpack.c.b16 %v497, %v490
    %v694 = vpack.c.b16 %v498, %v491
    %v695 = vpack.c.b16 %v499, %v492
    %v696 = vpack.c.b16 %v507, %v500
    %v697 = vpack.c.b16 %v508, %v501
    %v698 = vpack.c.b16 %v509, %v502
    %v699 = vpack.c.b16 %v510, %v503
    %v700 = vpack.c.b16 %v511, %v504
    %v701 = vpack.c.b16 %v512, %v505
    %v702 = vpack.c.b16 %v513, %v506
    %v703 = vpack.c.b16 %v521, %v514
    %v704 = vpack.c.b16 %v522, %v515
    %v705 = vpack.c.b16 %v523, %v516
    %v706 = vpack.c.b16 %v524, %v517
    %v707 = vpack.c.b16 %v525, %v518
    %v708 = vpack.c.b16 %v526, %v519
    %v709 = vpack.c.b16 %v527, %v520
    %v710 = vpack.c.b16 %v535, %v528
    %v711 = vpack.c.b16 %v536, %v529
    %v712 = vpack.c.b16 %v537, %v530
    %v713 = vpack.c.b16 %v538, %v531
    %v714 = vpack.c.b16 %v539, %v532
    %v715 = vpack.c.b16 %v540, %v533
    %v716 = vpack.c.b16 %v541, %v534
    %v717 = vpack.c.b16 %v549, %v542
    %v718 = vpack.c.b16 %v550, %v543
    %v719 = vpack.c.b16 %v551, %v544
    %v720 = vpack.c.b16 %v552, %v545
    %v721 = vpack.c.b16 %v553, %v546
    %v722 = vpack.c.b16 %v554, %v547
    %v723 = vpack.c.b16 %v555, %v548
    %v724 = vpack.c.b16 %v563, %v556
    %v725 = vpack.c.b16 %v564, %v557
    %v726 = vpack.c.b16 %v565, %v558
    %v727 = vpack.c.b16 %v566, %v559
    %v728 = vpack.c.b16 %v567, %v560
    %v729 = vpack.c.b16 %v568, %v561
    %v730 = vpack.c.b16 %v569, %v562
    %v731 = vpack.c.b16 %v577, %v570
    %v732 = vpack.c.b16 %v578, %v571
    %v733 = vpack.c.b16 %v579, %v572
    %v734 = vpack.c.b16 %v580, %v573
    %v735 = vpack.c.b16 %v581, %v574
    %v736 = vpack.c.b16 %v582, %v575
    %v737 = vpack.c.b16 %v583, %v576
    %v738 = vpack.c.b16 %v591, %v584
    %v739 = vpack.c.b16 %v592, %v585
    %v740 = vpack.c.b16 %v593, %v586
    %v741 = vpack.c.b16 %v594, %v587
    %v742 = vpack.c.b16 %v595, %v588
    %v743 = vpack.c.b16 %v596, %v589
    %v744 = vpack.c.b16 %v597, %v590
    %v745 = vpack.c.b16 %v605, %v598
    %v746 = vpack.c.b16 %v606, %v599
    %v747 = vpack.c.b16 %v607, %v600
    %v748 = vpack.c.b16 %v608, %v601
    %v749 = vpack.c.b16 %v609, %v602
    %v750 = vpack.c.b16 %v610, %v603
    %v751 = vpack.c.b16 %v611, %v604
    %v752 = vpack.c.b16 %v619, %v612
    %v753 = vpack.c.b16 %v620, %v613
    %v754 = vpack.c.b16 %v621, %v614
    %v755 = vpack.c.b16 %v622, %v615
    %v756 = vpack.c.b16 %v623, %v616
    %v757 = vpack.c.b16 %v624, %v617
    %v758 = vpack.c.b16 %v625, %v618
    %v759 = vpack.c.b16 %v633, %v626
    %v760 = vpack.c.b16 %v634, %v627
    %v761 = vpack.c.b16 %v635, %v628
    %v762 = vpack.c.b16 %v636, %v629
    %v763 = vpack.c.b16 %v637, %v630
    %v764 = vpack.c.b16 %v638, %v631
    %v765 = vpack.c.b16 %v639, %v632
    %v766 = vpack.c.b16 %v647, %v640
    %v767 = vpack.c.b16 %v648, %v641
    %v768 = vpack.c.b16 %v649, %v642
    %v769 = vpack.c.b16 %v650, %v643
    %v770 = vpack.c.b16 %v651, %v644
    %v771 = vpack.c.b16 %v652, %v645
    %v772 = vpack.c.b16 %v653, %v646
    %v773 = vpack.c.b16 %v661, %v654
    %v774 = vpack.c.b16 %v662, %v655
    %v775 = vpack.c.b16 %v663, %v656
    %v776 = vpack.c.b16 %v664, %v657
    %v777 = vpack.c.b16 %v665, %v658
    %v778 = vpack.c.b16 %v666, %v659
    %v779 = vpack.c.b16 %v667, %v660
    %v1004 = vunpack.c.l.b16 %v197
    %v1005 = vunpack.c.l.b16 %v198
    %v1006 = vunpack.c.l.b16 %v199
    %v1007 = vunpack.c.l.b16 %v200
    %v1008 = vunpack.c.l.b16 %v201
    %v1009 = vunpack.c.l.b16 %v202
    %v1010 = vunpack.c.l.b16 %v203
    %v1011 = vunpack.c.l.b16 %v204
    %v1012 = vunpack.c.l.b16 %v205
    %v1013 = vunpack.c.l.b16 %v206
    %v1014 = vunpack.c.l.b16 %v207
    %v1015 = vunpack.c.l.b16 %v208
    %v1016 = vunpack.c.l.b16 %v209
    %v1017 = vunpack.c.l.b16 %v210
    %v1018 = vunpack.c.l.b16 %v211
    %v1019 = vunpack.c.l.b16 %v212
    %v1020 = vunpack.c.l.b16 %v213
    %v1021 = vunpack.c.l.b16 %v214
    %v1022 = vunpack.c.l.b16 %v215
    %v1023 = vunpack.c.l.b16 %v216
    %v1024 = vunpack.c.l.b16 %v217
    %v1025 = vunpack.c.l.b16 %v218
    %v1026 = vunpack.c.l.b16 %v219
    %v1027 = vunpack.c.l.b16 %v220
    %v1028 = vunpack.c.l.b16 %v221
    %v1029 = vunpack.c.l.b16 %v222
    %v1030 = vunpack.c.l.b16 %v223
    %v1031 = vunpack.c.l.b16 %v224
    %v1032 = vunpack.c.l.b16 %v225
    %v1033 = vunpack.c.l.b16 %v226
    %v1034 = vunpack.c.l.b16 %v227
    %v1035 = vunpack.c.l.b16 %v228
    %v1036 = vunpack.c.l.b16 %v229
    %v1037 = vunpack.c.l.b16 %v230
    %v1038 = vunpack.c.l.b16 %v231
    %v1039 = vunpack.c.l.b16 %v232
    %v1040 = vunpack.c.l.b16 %v233
    %v1041 = vunpack.c.l.b16 %v234
    %v1042 = vunpack.c.l.b16 %v235
    %v1043 = vunpack.c.l.b16 %v236
    %v1044 = vunpack.c.l.b16 %v237
    %v1045 = vunpack.c.l.b16 %v238
    %v1046 = vunpack.c.l.b16 %v239
    %v1047 = vunpack.c.l.b16 %v240
    %v1048 = vunpack.c.l.b16 %v241
    %v1049 = vunpack.c.l.b16 %v242
    %v1050 = vunpack.c.l.b16 %v243
    %v1051 = vunpack.c.l.b16 %v244
    %v1052 = vunpack.c.l.b16 %v245
    %v1053 = vunpack.c.l.b16 %v246
    %v1054 = vunpack.c.l.b16 %v247
    %v1055 = vunpack.c.l.b16 %v248
    %v1056 = vunpack.c.l.b16 %v249
    %v1057 = vunpack.c.l.b16 %v250
    %v1058 = vunpack.c.l.b16 %v251
    %v1059 = vunpack.c.l.b16 %v252
    %v1060 = vunpack.c.l.b16 %v253
    %v1061 = vunpack.c.l.b16 %v254
    %v1062 = vunpack.c.l.b16 %v255
    %v1063 = vunpack.c.l.b16 %v256
    %v1064 = vunpack.c.l.b16 %v257
    %v1065 = vunpack.c.l.b16 %v258
    %v1066 = vunpack.c.l.b16 %v259
    %v1067 = vunpack.c.l.b16 %v260
    %v1068 = vunpack.c.l.b16 %v261
    %v1069 = vunpack.c.l.b16 %v262
    %v1070 = vunpack.c.l.b16 %v263
    %v1071 = vunpack.c.l.b16 %v264
    %v1072 = vunpack.c.l.b16 %v265
    %v1073 = vunpack.c.l.b16 %v266
    %v1074 = vunpack.c.l.b16 %v267
    %v1075 = vunpack.c.l.b16 %v268
    %v1076 = vunpack.c.l.b16 %v269
    %v1077 = vunpack.c.l.b16 %v270
    %v1078 = vunpack.c.l.b16 %v271
    %v1079 = vunpack.c.l.b16 %v272
    %v1080 = vunpack.c.l.b16 %v273
    %v1081 = vunpack.c.l.b16 %v274
    %v1082 = vunpack.c.l.b16 %v275
    %v1083 = vunpack.c.l.b16 %v276
    %v1084 = vunpack.c.l.b16 %v277
    %v1085 = vunpack.c.l.b16 %v278
    %v1086 = vunpack.c.l.b16 %v279
    %v1087 = vunpack.c.l.b16 %v280
    %v1088 = vunpack.c.l.b16 %v281
    %v1089 = vunpack.c.l.b16 %v282
    %v1090 = vunpack.c.l.b16 %v283
    %v1091 = vunpack.c.l.b16 %v284
    %v1092 = vunpack.c.l.b16 %v285
    %v1093 = vunpack.c.l.b16 %v286
    %v1094 = vunpack.c.l.b16 %v287
    %v1095 = vunpack.c.l.b16 %v288
    %v1096 = vunpack.c.l.b16 %v289
    %v1097 = vunpack.c.l.b16 %v290
    %v1098 = vunpack.c.l.b16 %v291
    %v1099 = vunpack.c.l.b16 %v292
    %v1100 = vunpack.c.l.b16 %v293
    %v1101 = vunpack.c.l.b16 %v294
    %v1102 = vunpack.c.l.b16 %v295
    %v1103 = vunpack.c.l.b16 %v296
    %v1104 = vunpack.c.l.b16 %v297
    %v1105 = vunpack.c.l.b16 %v298
    %v1106 = vunpack.c.l.b16 %v299
    %v1107 = vunpack.c.l.b16 %v300
    %v1108 = vunpack.c.l.b16 %v301
    %v1109 = vunpack.c.l.b16 %v302
    %v1110 = vunpack.c.l.b16 %v303
    %v1111 = vunpack.c.l.b16 %v304
    %v1112 = vunpack.c.l.b16 %v305
    %v1113 = vunpack.c.l.b16 %v306
    %v1114 = vunpack.c.l.b16 %v307
    %v1115 = vunpack.c.l.b16 %v308
    %v1116 = vpack.c.b16 %v1005, %v1004
    %v1117 = vpack.c.b16 %v1007, %v1006
    %v1118 = vpack.c.b16 %v1009, %v1008
    %v1119 = vpack.c.b16 %v1011, %v1010
    %v1120 = vpack.c.b16 %v1013, %v1012
    %v1121 = vpack.c.b16 %v1015, %v1014
    %v1122 = vpack.c.b16 %v1017, %v1016
    %v1123 = vpack.c.b16 %v1019, %v1018
    %v1124 = vpack.c.b16 %v1021, %v1020
    %v1125 = vpack.c.b16 %v1023, %v1022
    %v1126 = vpack.c.b16 %v1025, %v1024
    %v1127 = vpack.c.b16 %v1027, %v1026
    %v1128 = vpack.c.b16 %v1029, %v1028
    %v1129 = vpack.c.b16 %v1031, %v1030
    %v1130 = vpack.c.b16 %v1033, %v1032
    %v1131 = vpack.c.b16 %v1035, %v1034
    %v1132 = vpack.c.b16 %v1037, %v1036
    %v1133 = vpack.c.b16 %v1039, %v1038
    %v1134 = vpack.c.b16 %v1041, %v1040
    %v1135 = vpack.c.b16 %v1043, %v1042
    %v1136 = vpack.c.b16 %v1045, %v1044
    %v1137 = vpack.c.b16 %v1047, %v1046
    %v1138 = vpack.c.b16 %v1049, %v1048
    %v1139 = vpack.c.b16 %v1051, %v1050
    %v1140 = vpack.c.b16 %v1053, %v1052
    %v1141 = vpack.c.b16 %v1055, %v1054
    %v1142 = vpack.c.b16 %v1057, %v1056
    %v1143 = vpack.c.b16 %v1059, %v1058
    %v1144 = vpack.c.b16 %v1061, %v1060
    %v1145 = vpack.c.b16 %v1063, %v1062
    %v1146 = vpack.c.b16 %v1065, %v1064
    %v1147 = vpack.c.b16 %v1067, %v1066
    %v1148 = vpack.c.b16 %v1069, %v1068
    %v1149 = vpack.c.b16 %v1071, %v1070
    %v1150 = vpack.c.b16 %v1073, %v1072
    %v1151 = vpack.c.b16 %v1075, %v1074
    %v1152 = vpack.c.b16 %v1077, %v1076
    %v1153 = vpack.c.b16 %v1079, %v1078
    %v1154 = vpack.c.b16 %v1081, %v1080
    %v1155 = vpack.c.b16 %v1083, %v1082
    %v1156 = vpack.c.b16 %v1085, %v1084
    %v1157 = vpack.c.b16 %v1087, %v1086
    %v1158 = vpack.c.b16 %v1089, %v1088
    %v1159 = vpack.c.b16 %v1091, %v1090
    %v1160 = vpack.c.b16 %v1093, %v1092
    %v1161 = vpack.c.b16 %v1095, %v1094
    %v1162 = vpack.c.b16 %v1097, %v1096
    %v1163 = vpack.c.b16 %v1099, %v1098
    %v1164 = vpack.c.b16 %v1101, %v1100
    %v1165 = vpack.c.b16 %v1103, %v1102
    %v1166 = vpack.c.b16 %v1105, %v1104
    %v1167 = vpack.c.b16 %v1107, %v1106
    %v1168 = vpack.c.b16 %v1109, %v1108
    %v1169 = vpack.c.b16 %v1111, %v1110
    %v1170 = vpack.c.b16 %v1113, %v1112
    %v1171 = vpack.c.b16 %v1115, %v1114
    %1228 = vmatprep.subr.bf16.mxu0 0
    %1229 = vmatpush1.bf16.msra.mxu0 %v1116
    %1230 = vmatprep.subr.bf16.mxu0 0
    %1231 = vmatpush1.bf16.msra.mxu0 %v1117
    %1232 = vmatprep.subr.bf16.mxu0 0
    %1233 = vmatpush1.bf16.msra.mxu0 %v1118
    %1234 = vmatprep.subr.bf16.mxu0 0
    %1235 = vmatpush1.bf16.msra.mxu0 %v1119
    %1236 = vmatprep.subr.bf16.mxu0 0
    %1237 = vmatpush1.bf16.msra.mxu0 %v1120
    %1238 = vmatprep.subr.bf16.mxu0 0
    %1239 = vmatpush1.bf16.msra.mxu0 %v1121
    %1240 = vmatprep.subr.bf16.mxu0 0
    %1241 = vmatpush1.bf16.msra.mxu0 %v1122
    %1242 = vmatprep.subr.bf16.mxu0 0
    %1243 = vmatpush1.bf16.msra.mxu0 %v1123
    %1244 = vmatprep.subr.bf16.mxu0 0
    %1245 = vmatpush1.bf16.msra.mxu0 %v1124
    %1246 = vmatprep.subr.bf16.mxu0 0
    %1247 = vmatpush1.bf16.msra.mxu0 %v1125
    %1248 = vmatprep.subr.bf16.mxu0 0
    %1249 = vmatpush1.bf16.msra.mxu0 %v1126
    %1250 = vmatprep.subr.bf16.mxu0 0
    %1251 = vmatpush1.bf16.msra.mxu0 %v1127
    %1252 = vmatprep.subr.bf16.mxu0 0
    %1253 = vmatpush1.bf16.msra.mxu0 %v1128
    %1254 = vmatprep.subr.bf16.mxu0 0
    %1255 = vmatpush1.bf16.msra.mxu0 %v1129
    %1256 = vmatprep.subr.bf16.mxu0 0
    %1257 = vmatpush1.bf16.msra.mxu0 %v1130
    %1258 = vmatprep.subr.bf16.mxu0 0
    %1259 = vmatpush1.bf16.msra.mxu0 %v1131
    %1260 = vmatprep.mubr.bf16.mxu0 %v669
    %1261 = vmatmul.mubr.bf16.gmra.mrb[0].mxu0 %v668
    %v1262 = vpop.f32.mrb[0].mxu0
    %v1263 = vadd.f32 %v314, %v1262
    %v1264 = vpop.f32.mrb[0].mxu0
    %v1265 = vpop.f32.mrb[0].mxu0
    %v1266 = vadd.f32 %v314, %v1265
    %v1267 = vpop.f32.mrb[0].mxu0
    %1268 = vmatprep.mubr.bf16.mxu0 %v676
    %1269 = vmatmul.mubr.bf16.gmra.mrb[0].mxu0 %v675
    %v1270 = vpop.f32.mrb[0].mxu0
    %v1271 = vadd.f32 %v314, %v1270
    %v1272 = vpop.f32.mrb[0].mxu0
    %v1273 = vpop.f32.mrb[0].mxu0
    %v1274 = vadd.f32 %v314, %v1273
    %v1275 = vpop.f32.mrb[0].mxu0
    %1276 = vmatprep.mubr.bf16.mxu0 %v683
    %1277 = vmatmul.mubr.bf16.gmra.mrb[0].mxu0 %v682
    %v1278 = vpop.f32.mrb[0].mxu0
    %v1279 = vadd.f32 %v314, %v1278
    %v1280 = vpop.f32.mrb[0].mxu0
    %v1281 = vpop.f32.mrb[0].mxu0
    %v1282 = vadd.f32 %v314, %v1281
    %v1283 = vpop.f32.mrb[0].mxu0
    %1284 = vmatprep.mubr.bf16.mxu0 %v690
    %1285 = vmatmul.mubr.bf16.gmra.mrb[0].mxu0 %v689
    %v1286 = vpop.f32.mrb[0].mxu0
    %v1287 = vadd.f32 %v314, %v1286
    %v1288 = vpop.f32.mrb[0].mxu0
    %v1289 = vpop.f32.mrb[0].mxu0
    %v1290 = vadd.f32 %v314, %v1289
    %v1291 = vpop.f32.mrb[0].mxu0
    %1292 = vmatprep.mubr.bf16.mxu0 %v697
    %1293 = vmatmul.mubr.bf16.gmra.mrb[0].mxu0 %v696
    %v1294 = vpop.f32.mrb[0].mxu0
    %v1295 = vadd.f32 %v314, %v1294
    %v1296 = vpop.f32.mrb[0].mxu0
    %v1297 = vpop.f32.mrb[0].mxu0
    %v1298 = vadd.f32 %v314, %v1297
    %v1299 = vpop.f32.mrb[0].mxu0
    %1300 = vmatprep.mubr.bf16.mxu0 %v704
    %1301 = vmatmul.mubr.bf16.gmra.mrb[0].mxu0 %v703
    %v1302 = vpop.f32.mrb[0].mxu0
    %v1303 = vadd.f32 %v314, %v1302
    %v1304 = vpop.f32.mrb[0].mxu0
    %v1305 = vpop.f32.mrb[0].mxu0
    %v1306 = vadd.f32 %v314, %v1305
    %v1307 = vpop.f32.mrb[0].mxu0
    %1308 = vmatprep.mubr.bf16.mxu0 %v711
    %1309 = vmatmul.mubr.bf16.gmra.mrb[0].mxu0 %v710
    %v1310 = vpop.f32.mrb[0].mxu0
    %v1311 = vadd.f32 %v314, %v1310
    %v1312 = vpop.f32.mrb[0].mxu0
    %v1313 = vpop.f32.mrb[0].mxu0
    %v1314 = vadd.f32 %v314, %v1313
    %v1315 = vpop.f32.mrb[0].mxu0
    %1316 = vmatprep.mubr.bf16.mxu0 %v718
    %1317 = vmatmul.mubr.bf16.gmra.mrb[0].mxu0 %v717
    %v1318 = vpop.f32.mrb[0].mxu0
    %v1319 = vadd.f32 %v314, %v1318
    %v1320 = vpop.f32.mrb[0].mxu0
    %v1321 = vpop.f32.mrb[0].mxu0
    %v1322 = vadd.f32 %v314, %v1321
    %v1323 = vpop.f32.mrb[0].mxu0
    %1324 = vmatprep.mubr.bf16.mxu0 %v725
    %1325 = vmatmul.mubr.bf16.gmra.mrb[0].mxu0 %v724
    %v1326 = vpop.f32.mrb[0].mxu0
    %v1327 = vadd.f32 %v314, %v1326
    %v1328 = vpop.f32.mrb[0].mxu0
    %v1329 = vpop.f32.mrb[0].mxu0
    %v1330 = vadd.f32 %v314, %v1329
    %v1331 = vpop.f32.mrb[0].mxu0
    %1332 = vmatprep.mubr.bf16.mxu0 %v732
    %1333 = vmatmul.mubr.bf16.gmra.mrb[0].mxu0 %v731
    %v1334 = vpop.f32.mrb[0].mxu0
    %v1335 = vadd.f32 %v314, %v1334
    %v1336 = vpop.f32.mrb[0].mxu0
    %v1337 = vpop.f32.mrb[0].mxu0
    %v1338 = vadd.f32 %v314, %v1337
    %v1339 = vpop.f32.mrb[0].mxu0
    %1340 = vmatprep.mubr.bf16.mxu0 %v739
    %1341 = vmatmul.mubr.bf16.gmra.mrb[0].mxu0 %v738
    %v1342 = vpop.f32.mrb[0].mxu0
    %v1343 = vadd.f32 %v314, %v1342
    %v1344 = vpop.f32.mrb[0].mxu0
    %v1345 = vpop.f32.mrb[0].mxu0
    %v1346 = vadd.f32 %v314, %v1345
    %v1347 = vpop.f32.mrb[0].mxu0
    %1348 = vmatprep.mubr.bf16.mxu0 %v746
    %1349 = vmatmul.mubr.bf16.gmra.mrb[0].mxu0 %v745
    %v1350 = vpop.f32.mrb[0].mxu0
    %v1351 = vadd.f32 %v314, %v1350
    %v1352 = vpop.f32.mrb[0].mxu0
    %v1353 = vpop.f32.mrb[0].mxu0
    %v1354 = vadd.f32 %v314, %v1353
    %v1355 = vpop.f32.mrb[0].mxu0
    %1356 = vmatprep.mubr.bf16.mxu0 %v753
    %1357 = vmatmul.mubr.bf16.gmra.mrb[0].mxu0 %v752
    %v1358 = vpop.f32.mrb[0].mxu0
    %v1359 = vadd.f32 %v314, %v1358
    %v1360 = vpop.f32.mrb[0].mxu0
    %v1361 = vpop.f32.mrb[0].mxu0
    %v1362 = vadd.f32 %v314, %v1361
    %v1363 = vpop.f32.mrb[0].mxu0
    %1364 = vmatprep.mubr.bf16.mxu0 %v760
    %1365 = vmatmul.mubr.bf16.gmra.mrb[0].mxu0 %v759
    %v1366 = vpop.f32.mrb[0].mxu0
    %v1367 = vadd.f32 %v314, %v1366
    %v1368 = vpop.f32.mrb[0].mxu0
    %v1369 = vpop.f32.mrb[0].mxu0
    %v1370 = vadd.f32 %v314, %v1369
    %v1371 = vpop.f32.mrb[0].mxu0
    %1372 = vmatprep.mubr.bf16.mxu0 %v767
    %1373 = vmatmul.mubr.bf16.gmra.mrb[0].mxu0 %v766
    %v1374 = vpop.f32.mrb[0].mxu0
    %v1375 = vadd.f32 %v314, %v1374
    %v1376 = vpop.f32.mrb[0].mxu0
    %v1377 = vpop.f32.mrb[0].mxu0
    %v1378 = vadd.f32 %v314, %v1377
    %v1379 = vpop.f32.mrb[0].mxu0
    %1380 = vmatprep.mubr.bf16.mxu0 %v774
    %1381 = vmatmul.mubr.bf16.gmra.mrb[0].mxu0 %v773
    %v1382 = vpop.f32.mrb[0].mxu0
    %v1383 = vadd.f32 %v314, %v1382
    %v1384 = vpop.f32.mrb[0].mxu0
    %v1385 = vpop.f32.mrb[0].mxu0
    %v1386 = vadd.f32 %v314, %v1385
    %v1387 = vpop.f32.mrb[0].mxu0
    %1388 = vdwg.mxu0
    %1389 = vmatprep.subr.bf16.mxu0 0
    %1390 = vmatpush1.bf16.msra.mxu0 %v1132
    %1391 = vmatprep.subr.bf16.mxu0 0
    %1392 = vmatpush1.bf16.msra.mxu0 %v1133
    %1393 = vmatprep.subr.bf16.mxu0 0
    %1394 = vmatpush1.bf16.msra.mxu0 %v1134
    %1395 = vmatprep.subr.bf16.mxu0 0
    %1396 = vmatpush1.bf16.msra.mxu0 %v1135
    %1397 = vmatprep.subr.bf16.mxu0 0
    %1398 = vmatpush1.bf16.msra.mxu0 %v1136
    %1399 = vmatprep.subr.bf16.mxu0 0
    %1400 = vmatpush1.bf16.msra.mxu0 %v1137
    %1401 = vmatprep.subr.bf16.mxu0 0
    %1402 = vmatpush1.bf16.msra.mxu0 %v1138
    %1403 = vmatprep.subr.bf16.mxu0 0
    %1404 = vmatpush1.bf16.msra.mxu0 %v1139
    %1405 = vmatprep.subr.bf16.mxu0 0
    %1406 = vmatpush1.bf16.msra.mxu0 %v1140
    %1407 = vmatprep.subr.bf16.mxu0 0
    %1408 = vmatpush1.bf16.msra.mxu0 %v1141
    %1409 = vmatprep.subr.bf16.mxu0 0
    %1410 = vmatpush1.bf16.msra.mxu0 %v1142
    %1411 = vmatprep.subr.bf16.mxu0 0
    %1412 = vmatpush1.bf16.msra.mxu0 %v1143
    %1413 = vmatprep.subr.bf16.mxu0 0
    %1414 = vmatpush1.bf16.msra.mxu0 %v1144
    %1415 = vmatprep.subr.bf16.mxu0 0
    %1416 = vmatpush1.bf16.msra.mxu0 %v1145
    %1417 = vmatprep.subr.bf16.mxu0 0
    %1418 = vmatpush1.bf16.msra.mxu0 %v1146
    %1419 = vmatprep.subr.bf16.mxu0 0
    %1420 = vmatpush1.bf16.msra.mxu0 %v1147
    %1421 = vmatprep.mubr.bf16.mxu0 %v671
    %1422 = vmatmul.mubr.bf16.gmra.mrb[0].mxu0 %v670
    %v1423 = vpop.f32.mrb[0].mxu0
    %v1424 = vadd.f32 %v1263, %v1423
    %v1425 = vpop.f32.mrb[0].mxu0
    %v1426 = vpop.f32.mrb[0].mxu0
    %v1427 = vadd.f32 %v1266, %v1426
    %v1428 = vpop.f32.mrb[0].mxu0
    %1429 = vmatprep.mubr.bf16.mxu0 %v678
    %1430 = vmatmul.mubr.bf16.gmra.mrb[0].mxu0 %v677
    %v1431 = vpop.f32.mrb[0].mxu0
    %v1432 = vadd.f32 %v1271, %v1431
    %v1433 = vpop.f32.mrb[0].mxu0
    %v1434 = vpop.f32.mrb[0].mxu0
    %v1435 = vadd.f32 %v1274, %v1434
    %v1436 = vpop.f32.mrb[0].mxu0
    %1437 = vmatprep.mubr.bf16.mxu0 %v685
    %1438 = vmatmul.mubr.bf16.gmra.mrb[0].mxu0 %v684
    %v1439 = vpop.f32.mrb[0].mxu0
    %v1440 = vadd.f32 %v1279, %v1439
    %v1441 = vpop.f32.mrb[0].mxu0
    %v1442 = vpop.f32.mrb[0].mxu0
    %v1443 = vadd.f32 %v1282, %v1442
    %v1444 = vpop.f32.mrb[0].mxu0
    %1445 = vmatprep.mubr.bf16.mxu0 %v692
    %1446 = vmatmul.mubr.bf16.gmra.mrb[0].mxu0 %v691
    %v1447 = vpop.f32.mrb[0].mxu0
    %v1448 = vadd.f32 %v1287, %v1447
    %v1449 = vpop.f32.mrb[0].mxu0
    %v1450 = vpop.f32.mrb[0].mxu0
    %v1451 = vadd.f32 %v1290, %v1450
    %v1452 = vpop.f32.mrb[0].mxu0
    %1453 = vmatprep.mubr.bf16.mxu0 %v699
    %1454 = vmatmul.mubr.bf16.gmra.mrb[0].mxu0 %v698
    %v1455 = vpop.f32.mrb[0].mxu0
    %v1456 = vadd.f32 %v1295, %v1455
    %v1457 = vpop.f32.mrb[0].mxu0
    %v1458 = vpop.f32.mrb[0].mxu0
    %v1459 = vadd.f32 %v1298, %v1458
    %v1460 = vpop.f32.mrb[0].mxu0
    %1461 = vmatprep.mubr.bf16.mxu0 %v706
    %1462 = vmatmul.mubr.bf16.gmra.mrb[0].mxu0 %v705
    %v1463 = vpop.f32.mrb[0].mxu0
    %v1464 = vadd.f32 %v1303, %v1463
    %v1465 = vpop.f32.mrb[0].mxu0
    %v1466 = vpop.f32.mrb[0].mxu0
    %v1467 = vadd.f32 %v1306, %v1466
    %v1468 = vpop.f32.mrb[0].mxu0
    %1469 = vmatprep.mubr.bf16.mxu0 %v713
    %1470 = vmatmul.mubr.bf16.gmra.mrb[0].mxu0 %v712
    %v1471 = vpop.f32.mrb[0].mxu0
    %v1472 = vadd.f32 %v1311, %v1471
    %v1473 = vpop.f32.mrb[0].mxu0
    %v1474 = vpop.f32.mrb[0].mxu0
    %v1475 = vadd.f32 %v1314, %v1474
    %v1476 = vpop.f32.mrb[0].mxu0
    %1477 = vmatprep.mubr.bf16.mxu0 %v720
    %1478 = vmatmul.mubr.bf16.gmra.mrb[0].mxu0 %v719
    %v1479 = vpop.f32.mrb[0].mxu0
    %v1480 = vadd.f32 %v1319, %v1479
    %v1481 = vpop.f32.mrb[0].mxu0
    %v1482 = vpop.f32.mrb[0].mxu0
    %v1483 = vadd.f32 %v1322, %v1482
    %v1484 = vpop.f32.mrb[0].mxu0
    %1485 = vmatprep.mubr.bf16.mxu0 %v727
    %1486 = vmatmul.mubr.bf16.gmra.mrb[0].mxu0 %v726
    %v1487 = vpop.f32.mrb[0].mxu0
    %v1488 = vadd.f32 %v1327, %v1487
    %v1489 = vpop.f32.mrb[0].mxu0
    %v1490 = vpop.f32.mrb[0].mxu0
    %v1491 = vadd.f32 %v1330, %v1490
    %v1492 = vpop.f32.mrb[0].mxu0
    %1493 = vmatprep.mubr.bf16.mxu0 %v734
    %1494 = vmatmul.mubr.bf16.gmra.mrb[0].mxu0 %v733
    %v1495 = vpop.f32.mrb[0].mxu0
    %v1496 = vadd.f32 %v1335, %v1495
    %v1497 = vpop.f32.mrb[0].mxu0
    %v1498 = vpop.f32.mrb[0].mxu0
    %v1499 = vadd.f32 %v1338, %v1498
    %v1500 = vpop.f32.mrb[0].mxu0
    %1501 = vmatprep.mubr.bf16.mxu0 %v741
    %1502 = vmatmul.mubr.bf16.gmra.mrb[0].mxu0 %v740
    %v1503 = vpop.f32.mrb[0].mxu0
    %v1504 = vadd.f32 %v1343, %v1503
    %v1505 = vpop.f32.mrb[0].mxu0
    %v1506 = vpop.f32.mrb[0].mxu0
    %v1507 = vadd.f32 %v1346, %v1506
    %v1508 = vpop.f32.mrb[0].mxu0
    %1509 = vmatprep.mubr.bf16.mxu0 %v748
    %1510 = vmatmul.mubr.bf16.gmra.mrb[0].mxu0 %v747
    %v1511 = vpop.f32.mrb[0].mxu0
    %v1512 = vadd.f32 %v1351, %v1511
    %v1513 = vpop.f32.mrb[0].mxu0
    %v1514 = vpop.f32.mrb[0].mxu0
    %v1515 = vadd.f32 %v1354, %v1514
    %v1516 = vpop.f32.mrb[0].mxu0
    %1517 = vmatprep.mubr.bf16.mxu0 %v755
    %1518 = vmatmul.mubr.bf16.gmra.mrb[0].mxu0 %v754
    %v1519 = vpop.f32.mrb[0].mxu0
    %v1520 = vadd.f32 %v1359, %v1519
    %v1521 = vpop.f32.mrb[0].mxu0
    %v1522 = vpop.f32.mrb[0].mxu0
    %v1523 = vadd.f32 %v1362, %v1522
    %v1524 = vpop.f32.mrb[0].mxu0
    %1525 = vmatprep.mubr.bf16.mxu0 %v762
    %1526 = vmatmul.mubr.bf16.gmra.mrb[0].mxu0 %v761
    %v1527 = vpop.f32.mrb[0].mxu0
    %v1528 = vadd.f32 %v1367, %v1527
    %v1529 = vpop.f32.mrb[0].mxu0
    %v1530 = vpop.f32.mrb[0].mxu0
    %v1531 = vadd.f32 %v1370, %v1530
    %v1532 = vpop.f32.mrb[0].mxu0
    %1533 = vmatprep.mubr.bf16.mxu0 %v769
    %1534 = vmatmul.mubr.bf16.gmra.mrb[0].mxu0 %v768
    %v1535 = vpop.f32.mrb[0].mxu0
    %v1536 = vadd.f32 %v1375, %v1535
    %v1537 = vpop.f32.mrb[0].mxu0
    %v1538 = vpop.f32.mrb[0].mxu0
    %v1539 = vadd.f32 %v1378, %v1538
    %v1540 = vpop.f32.mrb[0].mxu0
    %1541 = vmatprep.mubr.bf16.mxu0 %v776
    %1542 = vmatmul.mubr.bf16.gmra.mrb[0].mxu0 %v775
    %v1543 = vpop.f32.mrb[0].mxu0
    %v1544 = vadd.f32 %v1383, %v1543
    %v1545 = vpop.f32.mrb[0].mxu0
    %v1546 = vpop.f32.mrb[0].mxu0
    %v1547 = vadd.f32 %v1386, %v1546
    %v1548 = vpop.f32.mrb[0].mxu0
    %1549 = vdwg.mxu0
    %1550 = vmatprep.subr.bf16.mxu0 0
    %1551 = vmatpush1.bf16.msra.mxu0 %v1148
    %1552 = vmatprep.subr.bf16.mxu0 0
    %1553 = vmatpush1.bf16.msra.mxu0 %v1149
    %1554 = vmatprep.subr.bf16.mxu0 0
    %1555 = vmatpush1.bf16.msra.mxu0 %v1150
    %1556 = vmatprep.subr.bf16.mxu0 0
    %1557 = vmatpush1.bf16.msra.mxu0 %v1151
    %1558 = vmatprep.subr.bf16.mxu0 0
    %1559 = vmatpush1.bf16.msra.mxu0 %v1152
    %1560 = vmatprep.subr.bf16.mxu0 0
    %1561 = vmatpush1.bf16.msra.mxu0 %v1153
    %1562 = vmatprep.subr.bf16.mxu0 0
    %1563 = vmatpush1.bf16.msra.mxu0 %v1154
    %1564 = vmatprep.subr.bf16.mxu0 0
    %1565 = vmatpush1.bf16.msra.mxu0 %v1155
    %1566 = vmatprep.subr.bf16.mxu0 0
    %1567 = vmatpush1.bf16.msra.mxu0 %v1156
    %1568 = vmatprep.subr.bf16.mxu0 0
    %1569 = vmatpush1.bf16.msra.mxu0 %v1157
    %1570 = vmatprep.subr.bf16.mxu0 0
    %1571 = vmatpush1.bf16.msra.mxu0 %v1158
    %1572 = vmatprep.subr.bf16.mxu0 0
    %1573 = vmatpush1.bf16.msra.mxu0 %v1159
    %1574 = vmatprep.subr.bf16.mxu0 0
    %1575 = vmatpush1.bf16.msra.mxu0 %v1160
    %1576 = vmatprep.subr.bf16.mxu0 0
    %1577 = vmatpush1.bf16.msra.mxu0 %v1161
    %1578 = vmatprep.subr.bf16.mxu0 0
    %1579 = vmatpush1.bf16.msra.mxu0 %v1162
    %1580 = vmatprep.subr.bf16.mxu0 0
    %1581 = vmatpush1.bf16.msra.mxu0 %v1163
    %1582 = vmatprep.mubr.bf16.mxu0 %v673
    %1583 = vmatmul.mubr.bf16.gmra.mrb[0].mxu0 %v672
    %v1584 = vpop.f32.mrb[0].mxu0
    %v1585 = vadd.f32 %v1424, %v1584
    %v1586 = vpop.f32.mrb[0].mxu0
    %v1587 = vpop.f32.mrb[0].mxu0
    %v1588 = vadd.f32 %v1427, %v1587
    %v1589 = vpop.f32.mrb[0].mxu0
    %1590 = vmatprep.mubr.bf16.mxu0 %v680
    %1591 = vmatmul.mubr.bf16.gmra.mrb[0].mxu0 %v679
    %v1592 = vpop.f32.mrb[0].mxu0
    %v1593 = vadd.f32 %v1432, %v1592
    %v1594 = vpop.f32.mrb[0].mxu0
    %v1595 = vpop.f32.mrb[0].mxu0
    %v1596 = vadd.f32 %v1435, %v1595
    %v1597 = vpop.f32.mrb[0].mxu0
    %1598 = vmatprep.mubr.bf16.mxu0 %v687
    %1599 = vmatmul.mubr.bf16.gmra.mrb[0].mxu0 %v686
    %v1600 = vpop.f32.mrb[0].mxu0
    %v1601 = vadd.f32 %v1440, %v1600
    %v1602 = vpop.f32.mrb[0].mxu0
    %v1603 = vpop.f32.mrb[0].mxu0
    %v1604 = vadd.f32 %v1443, %v1603
    %v1605 = vpop.f32.mrb[0].mxu0
    %1606 = vmatprep.mubr.bf16.mxu0 %v694
    %1607 = vmatmul.mubr.bf16.gmra.mrb[0].mxu0 %v693
    %v1608 = vpop.f32.mrb[0].mxu0
    %v1609 = vadd.f32 %v1448, %v1608
    %v1610 = vpop.f32.mrb[0].mxu0
    %v1611 = vpop.f32.mrb[0].mxu0
    %v1612 = vadd.f32 %v1451, %v1611
    %v1613 = vpop.f32.mrb[0].mxu0
    %1614 = vmatprep.mubr.bf16.mxu0 %v701
    %1615 = vmatmul.mubr.bf16.gmra.mrb[0].mxu0 %v700
    %v1616 = vpop.f32.mrb[0].mxu0
    %v1617 = vadd.f32 %v1456, %v1616
    %v1618 = vpop.f32.mrb[0].mxu0
    %v1619 = vpop.f32.mrb[0].mxu0
    %v1620 = vadd.f32 %v1459, %v1619
    %v1621 = vpop.f32.mrb[0].mxu0
    %1622 = vmatprep.mubr.bf16.mxu0 %v708
    %1623 = vmatmul.mubr.bf16.gmra.mrb[0].mxu0 %v707
    %v1624 = vpop.f32.mrb[0].mxu0
    %v1625 = vadd.f32 %v1464, %v1624
    %v1626 = vpop.f32.mrb[0].mxu0
    %v1627 = vpop.f32.mrb[0].mxu0
    %v1628 = vadd.f32 %v1467, %v1627
    %v1629 = vpop.f32.mrb[0].mxu0
    %1630 = vmatprep.mubr.bf16.mxu0 %v715
    %1631 = vmatmul.mubr.bf16.gmra.mrb[0].mxu0 %v714
    %v1632 = vpop.f32.mrb[0].mxu0
    %v1633 = vadd.f32 %v1472, %v1632
    %v1634 = vpop.f32.mrb[0].mxu0
    %v1635 = vpop.f32.mrb[0].mxu0
    %v1636 = vadd.f32 %v1475, %v1635
    %v1637 = vpop.f32.mrb[0].mxu0
    %1638 = vmatprep.mubr.bf16.mxu0 %v722
    %1639 = vmatmul.mubr.bf16.gmra.mrb[0].mxu0 %v721
    %v1640 = vpop.f32.mrb[0].mxu0
    %v1641 = vadd.f32 %v1480, %v1640
    %v1642 = vpop.f32.mrb[0].mxu0
    %v1643 = vpop.f32.mrb[0].mxu0
    %v1644 = vadd.f32 %v1483, %v1643
    %v1645 = vpop.f32.mrb[0].mxu0
    %1646 = vmatprep.mubr.bf16.mxu0 %v729
    %1647 = vmatmul.mubr.bf16.gmra.mrb[0].mxu0 %v728
    %v1648 = vpop.f32.mrb[0].mxu0
    %v1649 = vadd.f32 %v1488, %v1648
    %v1650 = vpop.f32.mrb[0].mxu0
    %v1651 = vpop.f32.mrb[0].mxu0
    %v1652 = vadd.f32 %v1491, %v1651
    %v1653 = vpop.f32.mrb[0].mxu0
    %1654 = vmatprep.mubr.bf16.mxu0 %v736
    %1655 = vmatmul.mubr.bf16.gmra.mrb[0].mxu0 %v735
    %v1656 = vpop.f32.mrb[0].mxu0
    %v1657 = vadd.f32 %v1496, %v1656
    %v1658 = vpop.f32.mrb[0].mxu0
    %v1659 = vpop.f32.mrb[0].mxu0
    %v1660 = vadd.f32 %v1499, %v1659
    %v1661 = vpop.f32.mrb[0].mxu0
    %1662 = vmatprep.mubr.bf16.mxu0 %v743
    %1663 = vmatmul.mubr.bf16.gmra.mrb[0].mxu0 %v742
    %v1664 = vpop.f32.mrb[0].mxu0
    %v1665 = vadd.f32 %v1504, %v1664
    %v1666 = vpop.f32.mrb[0].mxu0
    %v1667 = vpop.f32.mrb[0].mxu0
    %v1668 = vadd.f32 %v1507, %v1667
    %v1669 = vpop.f32.mrb[0].mxu0
    %1670 = vmatprep.mubr.bf16.mxu0 %v750
    %1671 = vmatmul.mubr.bf16.gmra.mrb[0].mxu0 %v749
    %v1672 = vpop.f32.mrb[0].mxu0
    %v1673 = vadd.f32 %v1512, %v1672
    %v1674 = vpop.f32.mrb[0].mxu0
    %v1675 = vpop.f32.mrb[0].mxu0
    %v1676 = vadd.f32 %v1515, %v1675
    %v1677 = vpop.f32.mrb[0].mxu0
    %1678 = vmatprep.mubr.bf16.mxu0 %v757
    %1679 = vmatmul.mubr.bf16.gmra.mrb[0].mxu0 %v756
    %v1680 = vpop.f32.mrb[0].mxu0
    %v1681 = vadd.f32 %v1520, %v1680
    %v1682 = vpop.f32.mrb[0].mxu0
    %v1683 = vpop.f32.mrb[0].mxu0
    %v1684 = vadd.f32 %v1523, %v1683
    %v1685 = vpop.f32.mrb[0].mxu0
    %1686 = vmatprep.mubr.bf16.mxu0 %v764
    %1687 = vmatmul.mubr.bf16.gmra.mrb[0].mxu0 %v763
    %v1688 = vpop.f32.mrb[0].mxu0
    %v1689 = vadd.f32 %v1528, %v1688
    %v1690 = vpop.f32.mrb[0].mxu0
    %v1691 = vpop.f32.mrb[0].mxu0
    %v1692 = vadd.f32 %v1531, %v1691
    %v1693 = vpop.f32.mrb[0].mxu0
    %1694 = vmatprep.mubr.bf16.mxu0 %v771
    %1695 = vmatmul.mubr.bf16.gmra.mrb[0].mxu0 %v770
    %v1696 = vpop.f32.mrb[0].mxu0
    %v1697 = vadd.f32 %v1536, %v1696
    %v1698 = vpop.f32.mrb[0].mxu0
    %v1699 = vpop.f32.mrb[0].mxu0
    %v1700 = vadd.f32 %v1539, %v1699
    %v1701 = vpop.f32.mrb[0].mxu0
    %1702 = vmatprep.mubr.bf16.mxu0 %v778
    %1703 = vmatmul.mubr.bf16.gmra.mrb[0].mxu0 %v777
    %v1704 = vpop.f32.mrb[0].mxu0
    %v1705 = vadd.f32 %v1544, %v1704
    %v1706 = vpop.f32.mrb[0].mxu0
    %v1707 = vpop.f32.mrb[0].mxu0
    %v1708 = vadd.f32 %v1547, %v1707
    %v1709 = vpop.f32.mrb[0].mxu0
    %1710 = vdwg.mxu0
    %1711 = vmatprep.subr.bf16.mxu0 0
    %1712 = vmatpush1.bf16.msra.mxu0 %v1164
    %1713 = vmatprep.subr.bf16.mxu0 0
    %1714 = vmatpush1.bf16.msra.mxu0 %v1165
    %1715 = vmatprep.subr.bf16.mxu0 0
    %1716 = vmatpush1.bf16.msra.mxu0 %v1166
    %1717 = vmatprep.subr.bf16.mxu0 0
    %1718 = vmatpush1.bf16.msra.mxu0 %v1167
    %1719 = vmatprep.subr.bf16.mxu0 0
    %1720 = vmatpush1.bf16.msra.mxu0 %v1168
    %1721 = vmatprep.subr.bf16.mxu0 0
    %1722 = vmatpush1.bf16.msra.mxu0 %v1169
    %1723 = vmatprep.subr.bf16.mxu0 0
    %1724 = vmatpush1.bf16.msra.mxu0 %v1170
    %1725 = vmatprep.subr.bf16.mxu0 0
    %1726 = vmatpush1.bf16.msra.mxu0 %v1171
    %1727 = vmatprep.subr.bf16.mxu0 0
    %1728 = vmatpush1.bf16.msra.mxu0 0
    %1729 = vmatprep.subr.bf16.mxu0 0
    %1730 = vmatpush1.bf16.msra.mxu0 0
    %1731 = vmatprep.subr.bf16.mxu0 0
    %1732 = vmatpush1.bf16.msra.mxu0 0
    %1733 = vmatprep.subr.bf16.mxu0 0
    %1734 = vmatpush1.bf16.msra.mxu0 0
    %1735 = vmatprep.subr.bf16.mxu0 0
    %1736 = vmatpush1.bf16.msra.mxu0 0
    %1737 = vmatprep.subr.bf16.mxu0 0
    %1738 = vmatpush1.bf16.msra.mxu0 0
    %1739 = vmatprep.subr.bf16.mxu0 0
    %1740 = vmatpush1.bf16.msra.mxu0 0
    %1741 = vmatprep.subr.bf16.mxu0 0
    %1742 = vmatpush1.bf16.msra.mxu0 0
    %1743 = vmatprep.mubr.bf16.mxu0 0
    %1744 = vmatmul.mubr.bf16.gmra.mrb[0].mxu0 %v674
    %v1745 = vpop.f32.mrb[0].mxu0
    %v1746 = vadd.f32 %v1585, %v1745
    %v1747 = vpop.f32.mrb[0].mxu0
    %v1748 = vpop.f32.mrb[0].mxu0
    %v1749 = vadd.f32 %v1588, %v1748
    %v1750 = vpop.f32.mrb[0].mxu0
    %1751 = vmatprep.mubr.bf16.mxu0 0
    %1752 = vmatmul.mubr.bf16.gmra.mrb[0].mxu0 %v681
    %v1753 = vpop.f32.mrb[0].mxu0
    %v1754 = vadd.f32 %v1593, %v1753
    %v1755 = vpop.f32.mrb[0].mxu0
    %v1756 = vpop.f32.mrb[0].mxu0
    %v1757 = vadd.f32 %v1596, %v1756
    %v1758 = vpop.f32.mrb[0].mxu0
    %1759 = vmatprep.mubr.bf16.mxu0 0
    %1760 = vmatmul.mubr.bf16.gmra.mrb[0].mxu0 %v688
    %v1761 = vpop.f32.mrb[0].mxu0
    %v1762 = vadd.f32 %v1601, %v1761
    %v1763 = vpop.f32.mrb[0].mxu0
    %v1764 = vpop.f32.mrb[0].mxu0
    %v1765 = vadd.f32 %v1604, %v1764
    %v1766 = vpop.f32.mrb[0].mxu0
    %1767 = vmatprep.mubr.bf16.mxu0 0
    %1768 = vmatmul.mubr.bf16.gmra.mrb[0].mxu0 %v695
    %v1769 = vpop.f32.mrb[0].mxu0
    %v1770 = vadd.f32 %v1609, %v1769
    %v1771 = vpop.f32.mrb[0].mxu0
    %v1772 = vpop.f32.mrb[0].mxu0
    %v1773 = vadd.f32 %v1612, %v1772
    %v1774 = vpop.f32.mrb[0].mxu0
    %1775 = vmatprep.mubr.bf16.mxu0 0
    %1776 = vmatmul.mubr.bf16.gmra.mrb[0].mxu0 %v702
    %v1777 = vpop.f32.mrb[0].mxu0
    %v1778 = vadd.f32 %v1617, %v1777
    %v1779 = vpop.f32.mrb[0].mxu0
    %v1780 = vpop.f32.mrb[0].mxu0
    %v1781 = vadd.f32 %v1620, %v1780
    %v1782 = vpop.f32.mrb[0].mxu0
    %1783 = vmatprep.mubr.bf16.mxu0 0
    %1784 = vmatmul.mubr.bf16.gmra.mrb[0].mxu0 %v709
    %v1785 = vpop.f32.mrb[0].mxu0
    %v1786 = vadd.f32 %v1625, %v1785
    %v1787 = vpop.f32.mrb[0].mxu0
    %v1788 = vpop.f32.mrb[0].mxu0
    %v1789 = vadd.f32 %v1628, %v1788
    %v1790 = vpop.f32.mrb[0].mxu0
    %1791 = vmatprep.mubr.bf16.mxu0 0
    %1792 = vmatmul.mubr.bf16.gmra.mrb[0].mxu0 %v716
    %v1793 = vpop.f32.mrb[0].mxu0
    %v1794 = vadd.f32 %v1633, %v1793
    %v1795 = vpop.f32.mrb[0].mxu0
    %v1796 = vpop.f32.mrb[0].mxu0
    %v1797 = vadd.f32 %v1636, %v1796
    %v1798 = vpop.f32.mrb[0].mxu0
    %1799 = vmatprep.mubr.bf16.mxu0 0
    %1800 = vmatmul.mubr.bf16.gmra.mrb[0].mxu0 %v723
    %v1801 = vpop.f32.mrb[0].mxu0
    %v1802 = vadd.f32 %v1641, %v1801
    %v1803 = vpop.f32.mrb[0].mxu0
    %v1804 = vpop.f32.mrb[0].mxu0
    %v1805 = vadd.f32 %v1644, %v1804
    %v1806 = vpop.f32.mrb[0].mxu0
    %1807 = vmatprep.mubr.bf16.mxu0 0
    %1808 = vmatmul.mubr.bf16.gmra.mrb[0].mxu0 %v730
    %v1809 = vpop.f32.mrb[0].mxu0
    %v1810 = vadd.f32 %v1649, %v1809
    %v1811 = vpop.f32.mrb[0].mxu0
    %v1812 = vpop.f32.mrb[0].mxu0
    %v1813 = vadd.f32 %v1652, %v1812
    %v1814 = vpop.f32.mrb[0].mxu0
    %1815 = vmatprep.mubr.bf16.mxu0 0
    %1816 = vmatmul.mubr.bf16.gmra.mrb[0].mxu0 %v737
    %v1817 = vpop.f32.mrb[0].mxu0
    %v1818 = vadd.f32 %v1657, %v1817
    %v1819 = vpop.f32.mrb[0].mxu0
    %v1820 = vpop.f32.mrb[0].mxu0
    %v1821 = vadd.f32 %v1660, %v1820
    %v1822 = vpop.f32.mrb[0].mxu0
    %1823 = vmatprep.mubr.bf16.mxu0 0
    %1824 = vmatmul.mubr.bf16.gmra.mrb[0].mxu0 %v744
    %v1825 = vpop.f32.mrb[0].mxu0
    %v1826 = vadd.f32 %v1665, %v1825
    %v1827 = vpop.f32.mrb[0].mxu0
    %v1828 = vpop.f32.mrb[0].mxu0
    %v1829 = vadd.f32 %v1668, %v1828
    %v1830 = vpop.f32.mrb[0].mxu0
    %1831 = vmatprep.mubr.bf16.mxu0 0
    %1832 = vmatmul.mubr.bf16.gmra.mrb[0].mxu0 %v751
    %v1833 = vpop.f32.mrb[0].mxu0
    %v1834 = vadd.f32 %v1673, %v1833
    %v1835 = vpop.f32.mrb[0].mxu0
    %v1836 = vpop.f32.mrb[0].mxu0
    %v1837 = vadd.f32 %v1676, %v1836
    %v1838 = vpop.f32.mrb[0].mxu0
    %1839 = vmatprep.mubr.bf16.mxu0 0
    %1840 = vmatmul.mubr.bf16.gmra.mrb[0].mxu0 %v758
    %v1841 = vpop.f32.mrb[0].mxu0
    %v1842 = vadd.f32 %v1681, %v1841
    %v1843 = vpop.f32.mrb[0].mxu0
    %v1844 = vpop.f32.mrb[0].mxu0
    %v1845 = vadd.f32 %v1684, %v1844
    %v1846 = vpop.f32.mrb[0].mxu0
    %1847 = vmatprep.mubr.bf16.mxu0 0
    %1848 = vmatmul.mubr.bf16.gmra.mrb[0].mxu0 %v765
    %v1849 = vpop.f32.mrb[0].mxu0
    %v1850 = vadd.f32 %v1689, %v1849
    %v1851 = vpop.f32.mrb[0].mxu0
    %v1852 = vpop.f32.mrb[0].mxu0
    %v1853 = vadd.f32 %v1692, %v1852
    %v1854 = vpop.f32.mrb[0].mxu0
    %1855 = vmatprep.mubr.bf16.mxu0 0
    %1856 = vmatmul.mubr.bf16.gmra.mrb[0].mxu0 %v772
    %v1857 = vpop.f32.mrb[0].mxu0
    %v1858 = vadd.f32 %v1697, %v1857
    %v1859 = vpop.f32.mrb[0].mxu0
    %v1860 = vpop.f32.mrb[0].mxu0
    %v1861 = vadd.f32 %v1700, %v1860
    %v1862 = vpop.f32.mrb[0].mxu0
    %1863 = vmatprep.mubr.bf16.mxu0 0
    %1864 = vmatmul.mubr.bf16.gmra.mrb[0].mxu0 %v779
    %v1865 = vpop.f32.mrb[0].mxu0
    %v1866 = vadd.f32 %v1705, %v1865
    %v1867 = vpop.f32.mrb[0].mxu0
    %v1868 = vpop.f32.mrb[0].mxu0
    %v1869 = vadd.f32 %v1708, %v1868
    %v1870 = vpop.f32.mrb[0].mxu0
    %1871 = vdwg.mxu0
    %v1872 = vmax.f32 %v1746, 0.0
    %v1873 = vmax.f32 %v1749, 0.0
    %v1874 = vmax.f32 %v1754, 0.0
    %v1875 = vmax.f32 %v1757, 0.0
    %v1876 = vmax.f32 %v1762, 0.0
    %v1877 = vmax.f32 %v1765, 0.0
    %v1878 = vmax.f32 %v1770, 0.0
    %v1879 = vmax.f32 %v1773, 0.0
    %v1880 = vmax.f32 %v1778, 0.0
    %v1881 = vmax.f32 %v1781, 0.0
    %v1882 = vmax.f32 %v1786, 0.0
    %v1883 = vmax.f32 %v1789, 0.0
    %v1884 = vmax.f32 %v1794, 0.0
    %v1885 = vmax.f32 %v1797, 0.0
    %v1886 = vmax.f32 %v1802, 0.0
    %v1887 = vmax.f32 %v1805, 0.0
    %v1888 = vmax.f32 %v1810, 0.0
    %v1889 = vmax.f32 %v1813, 0.0
    %v1890 = vmax.f32 %v1818, 0.0
    %v1891 = vmax.f32 %v1821, 0.0
    %v1892 = vmax.f32 %v1826, 0.0
    %v1893 = vmax.f32 %v1829, 0.0
    %v1894 = vmax.f32 %v1834, 0.0
    %v1895 = vmax.f32 %v1837, 0.0
    %v1896 = vmax.f32 %v1842, 0.0
    %v1897 = vmax.f32 %v1845, 0.0
    %v1898 = vmax.f32 %v1850, 0.0
    %v1899 = vmax.f32 %v1853, 0.0
    %v1900 = vmax.f32 %v1858, 0.0
    %v1901 = vmax.f32 %v1861, 0.0
    %v1902 = vmax.f32 %v1866, 0.0
    %v1903 = vmax.f32 %v1869, 0.0
    %v1904 = vpack.c.bf16 %v1873, %v1872
    %v1905 = vpack.c.bf16 %v1875, %v1874
    %v1906 = vpack.c.bf16 %v1877, %v1876
    %v1907 = vpack.c.bf16 %v1879, %v1878
    %v1908 = vpack.c.bf16 %v1881, %v1880
    %v1909 = vpack.c.bf16 %v1883, %v1882
    %v1910 = vpack.c.bf16 %v1885, %v1884
    %v1911 = vpack.c.bf16 %v1887, %v1886
    %v1912 = vpack.c.bf16 %v1889, %v1888
    %v1913 = vpack.c.bf16 %v1891, %v1890
    %v1914 = vpack.c.bf16 %v1893, %v1892
    %v1915 = vpack.c.bf16 %v1895, %v1894
    %v1916 = vpack.c.bf16 %v1897, %v1896
    %v1917 = vpack.c.bf16 %v1899, %v1898
    %v1918 = vpack.c.bf16 %v1901, %v1900
    %v1919 = vpack.c.bf16 %v1903, %v1902
    %v1920 = vld [vmem:[#allocation2] sm:$0xf]
    %v1921 = vld [vmem:[#allocation2 + $0x4] sm:$0xf]
    %v1922 = vld [vmem:[#allocation2 + $0x8] sm:$0xf]
    %v1923 = vld [vmem:[#allocation2 + $0xc] sm:$0xf]
    %v1924 = vld [vmem:[#allocation2 + $0x10] sm:$0xf]
    %v1925 = vld [vmem:[#allocation2 + $0x14] sm:$0xf]
    %v1926 = vld [vmem:[#allocation2 + $0x18] sm:$0xf]
    %v1927 = vld [vmem:[#allocation2 + $0x1c] sm:$0xf]
    %v1928 = vld [vmem:[%s4] sm:$0x1]
    %v1930 = vlaneseq
    %v1931 = vshrl.u32 %v1930, 7
    %v1932 = vsub.s32 0, %v1931
    %v1933 = vrot.slane %v1928, %v1932
    %v1943 = vunpack.c.l.b16 %v1920
    %v1944 = vunpack.c.l.b16 %v1921
    %v1945 = vunpack.c.l.b16 %v1922
    %v1946 = vunpack.c.l.b16 %v1923
    %v1947 = vunpack.c.l.b16 %v1924
    %v1948 = vunpack.c.l.b16 %v1925
    %v1949 = vunpack.c.l.b16 %v1926
    %v1950 = vunpack.c.l.b16 %v1927
    %v1951 = vpack.c.b16 %v1944, %v1943
    %v1952 = vpack.c.b16 %v1946, %v1945
    %v1953 = vpack.c.b16 %v1948, %v1947
    %v1954 = vpack.c.b16 %v1950, %v1949
    %vm1959 = vcmask 523264
    %v1961 = vsel %vm1959, %v1904, 0
    %v1964 = vsel %vm1959, %v1905, 0
    %v1967 = vsel %vm1959, %v1906, 0
    %v1970 = vsel %vm1959, %v1907, 0
    %v1973 = vsel %vm1959, %v1908, 0
    %v1976 = vsel %vm1959, %v1909, 0
    %v1979 = vsel %vm1959, %v1910, 0
    %v1982 = vsel %vm1959, %v1911, 0
    %v1985 = vsel %vm1959, %v1912, 0
    %v1988 = vsel %vm1959, %v1913, 0
    %v1991 = vsel %vm1959, %v1914, 0
    %v1994 = vsel %vm1959, %v1915, 0
    %v1997 = vsel %vm1959, %v1916, 0
    %v2000 = vsel %vm1959, %v1917, 0
    %v2003 = vsel %vm1959, %v1918, 0
    %v2006 = vsel %vm1959, %v1919, 0
    %2008 = vmatprep.subr.bf16.mxu0 0
    %2009 = vmatpush1.bf16.msra.mxu0 %v1951
    %2010 = vmatprep.subr.bf16.mxu0 0
    %2011 = vmatpush1.bf16.msra.mxu0 %v1952
    %2012 = vmatprep.subr.bf16.mxu0 0
    %2013 = vmatpush1.bf16.msra.mxu0 %v1953
    %2014 = vmatprep.subr.bf16.mxu0 0
    %2015 = vmatpush1.bf16.msra.mxu0 %v1954
    %2016 = vmatprep.subr.bf16.mxu0 0
    %2017 = vmatpush1.bf16.msra.mxu0 0
    %2018 = vmatprep.subr.bf16.mxu0 0
    %2019 = vmatpush1.bf16.msra.mxu0 0
    %2020 = vmatprep.subr.bf16.mxu0 0
    %2021 = vmatpush1.bf16.msra.mxu0 0
    %2022 = vmatprep.subr.bf16.mxu0 0
    %2023 = vmatpush1.bf16.msra.mxu0 0
    %2024 = vmatprep.subr.bf16.mxu0 0
    %2025 = vmatpush1.bf16.msra.mxu0 0
    %2026 = vmatprep.subr.bf16.mxu0 0
    %2027 = vmatpush1.bf16.msra.mxu0 0
    %2028 = vmatprep.subr.bf16.mxu0 0
    %2029 = vmatpush1.bf16.msra.mxu0 0
    %2030 = vmatprep.subr.bf16.mxu0 0
    %2031 = vmatpush1.bf16.msra.mxu0 0
    %2032 = vmatprep.subr.bf16.mxu0 0
    %2033 = vmatpush1.bf16.msra.mxu0 0
    %2034 = vmatprep.subr.bf16.mxu0 0
    %2035 = vmatpush1.bf16.msra.mxu0 0
    %2036 = vmatprep.subr.bf16.mxu0 0
    %2037 = vmatpush1.bf16.msra.mxu0 0
    %2038 = vmatprep.subr.bf16.mxu0 0
    %2039 = vmatpush1.bf16.msra.mxu0 0
    %2040 = vmatprep.mubr.bf16.mxu0 0
    %2041 = vmatmul.mubr.bf16.gmra.mrb[0].mxu0 %v1961
    %v2042 = vpop.f32.mrb[0].mxu0
    %v2043 = vadd.f32 %v1933, %v2042
    %v2044 = vpop.f32.mrb[0].mxu0
    %v2045 = vpop.f32.mrb[0].mxu0
    %v2046 = vadd.f32 %v1933, %v2045
    %v2047 = vpop.f32.mrb[0].mxu0
    %2048 = vmatprep.mubr.bf16.mxu0 0
    %2049 = vmatmul.mubr.bf16.gmra.mrb[0].mxu0 %v1964
    %v2050 = vpop.f32.mrb[0].mxu0
    %v2051 = vadd.f32 %v1933, %v2050
    %v2052 = vpop.f32.mrb[0].mxu0
    %v2053 = vpop.f32.mrb[0].mxu0
    %v2054 = vadd.f32 %v1933, %v2053
    %v2055 = vpop.f32.mrb[0].mxu0
    %2056 = vmatprep.mubr.bf16.mxu0 0
    %2057 = vmatmul.mubr.bf16.gmra.mrb[0].mxu0 %v1967
    %v2058 = vpop.f32.mrb[0].mxu0
    %v2059 = vadd.f32 %v1933, %v2058
    %v2060 = vpop.f32.mrb[0].mxu0
    %v2061 = vpop.f32.mrb[0].mxu0
    %v2062 = vadd.f32 %v1933, %v2061
    %v2063 = vpop.f32.mrb[0].mxu0
    %2064 = vmatprep.mubr.bf16.mxu0 0
    %2065 = vmatmul.mubr.bf16.gmra.mrb[0].mxu0 %v1970
    %v2066 = vpop.f32.mrb[0].mxu0
    %v2067 = vadd.f32 %v1933, %v2066
    %v2068 = vpop.f32.mrb[0].mxu0
    %v2069 = vpop.f32.mrb[0].mxu0
    %v2070 = vadd.f32 %v1933, %v2069
    %v2071 = vpop.f32.mrb[0].mxu0
    %2072 = vmatprep.mubr.bf16.mxu0 0
    %2073 = vmatmul.mubr.bf16.gmra.mrb[0].mxu0 %v1973
    %v2074 = vpop.f32.mrb[0].mxu0
    %v2075 = vadd.f32 %v1933, %v2074
    %v2076 = vpop.f32.mrb[0].mxu0
    %v2077 = vpop.f32.mrb[0].mxu0
    %v2078 = vadd.f32 %v1933, %v2077
    %v2079 = vpop.f32.mrb[0].mxu0
    %2080 = vmatprep.mubr.bf16.mxu0 0
    %2081 = vmatmul.mubr.bf16.gmra.mrb[0].mxu0 %v1976
    %v2082 = vpop.f32.mrb[0].mxu0
    %v2083 = vadd.f32 %v1933, %v2082
    %v2084 = vpop.f32.mrb[0].mxu0
    %v2085 = vpop.f32.mrb[0].mxu0
    %v2086 = vadd.f32 %v1933, %v2085
    %v2087 = vpop.f32.mrb[0].mxu0
    %2088 = vmatprep.mubr.bf16.mxu0 0
    %2089 = vmatmul.mubr.bf16.gmra.mrb[0].mxu0 %v1979
    %v2090 = vpop.f32.mrb[0].mxu0
    %v2091 = vadd.f32 %v1933, %v2090
    %v2092 = vpop.f32.mrb[0].mxu0
    %v2093 = vpop.f32.mrb[0].mxu0
    %v2094 = vadd.f32 %v1933, %v2093
    %v2095 = vpop.f32.mrb[0].mxu0
    %2096 = vmatprep.mubr.bf16.mxu0 0
    %2097 = vmatmul.mubr.bf16.gmra.mrb[0].mxu0 %v1982
    %v2098 = vpop.f32.mrb[0].mxu0
    %v2099 = vadd.f32 %v1933, %v2098
    %v2100 = vpop.f32.mrb[0].mxu0
    %v2101 = vpop.f32.mrb[0].mxu0
    %v2102 = vadd.f32 %v1933, %v2101
    %v2103 = vpop.f32.mrb[0].mxu0
    %2104 = vmatprep.mubr.bf16.mxu0 0
    %2105 = vmatmul.mubr.bf16.gmra.mrb[0].mxu0 %v1985
    %v2106 = vpop.f32.mrb[0].mxu0
    %v2107 = vadd.f32 %v1933, %v2106
    %v2108 = vpop.f32.mrb[0].mxu0
    %v2109 = vpop.f32.mrb[0].mxu0
    %v2110 = vadd.f32 %v1933, %v2109
    %v2111 = vpop.f32.mrb[0].mxu0
    %2112 = vmatprep.mubr.bf16.mxu0 0
    %2113 = vmatmul.mubr.bf16.gmra.mrb[0].mxu0 %v1988
    %v2114 = vpop.f32.mrb[0].mxu0
    %v2115 = vadd.f32 %v1933, %v2114
    %v2116 = vpop.f32.mrb[0].mxu0
    %v2117 = vpop.f32.mrb[0].mxu0
    %v2118 = vadd.f32 %v1933, %v2117
    %v2119 = vpop.f32.mrb[0].mxu0
    %2120 = vmatprep.mubr.bf16.mxu0 0
    %2121 = vmatmul.mubr.bf16.gmra.mrb[0].mxu0 %v1991
    %v2122 = vpop.f32.mrb[0].mxu0
    %v2123 = vadd.f32 %v1933, %v2122
    %v2124 = vpop.f32.mrb[0].mxu0
    %v2125 = vpop.f32.mrb[0].mxu0
    %v2126 = vadd.f32 %v1933, %v2125
    %v2127 = vpop.f32.mrb[0].mxu0
    %2128 = vmatprep.mubr.bf16.mxu0 0
    %2129 = vmatmul.mubr.bf16.gmra.mrb[0].mxu0 %v1994
    %v2130 = vpop.f32.mrb[0].mxu0
    %v2131 = vadd.f32 %v1933, %v2130
    %v2132 = vpop.f32.mrb[0].mxu0
    %v2133 = vpop.f32.mrb[0].mxu0
    %v2134 = vadd.f32 %v1933, %v2133
    %v2135 = vpop.f32.mrb[0].mxu0
    %2136 = vmatprep.mubr.bf16.mxu0 0
    %2137 = vmatmul.mubr.bf16.gmra.mrb[0].mxu0 %v1997
    %v2138 = vpop.f32.mrb[0].mxu0
    %v2139 = vadd.f32 %v1933, %v2138
    %v2140 = vpop.f32.mrb[0].mxu0
    %v2141 = vpop.f32.mrb[0].mxu0
    %v2142 = vadd.f32 %v1933, %v2141
    %v2143 = vpop.f32.mrb[0].mxu0
    %2144 = vmatprep.mubr.bf16.mxu0 0
    %2145 = vmatmul.mubr.bf16.gmra.mrb[0].mxu0 %v2000
    %v2146 = vpop.f32.mrb[0].mxu0
    %v2147 = vadd.f32 %v1933, %v2146
    %v2148 = vpop.f32.mrb[0].mxu0
    %v2149 = vpop.f32.mrb[0].mxu0
    %v2150 = vadd.f32 %v1933, %v2149
    %v2151 = vpop.f32.mrb[0].mxu0
    %2152 = vmatprep.mubr.bf16.mxu0 0
    %2153 = vmatmul.mubr.bf16.gmra.mrb[0].mxu0 %v2003
    %v2154 = vpop.f32.mrb[0].mxu0
    %v2155 = vadd.f32 %v1933, %v2154
    %v2156 = vpop.f32.mrb[0].mxu0
    %v2157 = vpop.f32.mrb[0].mxu0
    %v2158 = vadd.f32 %v1933, %v2157
    %v2159 = vpop.f32.mrb[0].mxu0
    %2160 = vmatprep.mubr.bf16.mxu0 0
    %2161 = vmatmul.mubr.bf16.gmra.mrb[0].mxu0 %v2006
    %v2162 = vpop.f32.mrb[0].mxu0
    %v2163 = vadd.f32 %v1933, %v2162
    %v2164 = vpop.f32.mrb[0].mxu0
    %v2165 = vpop.f32.mrb[0].mxu0
    %v2166 = vadd.f32 %v1933, %v2165
    %v2167 = vpop.f32.mrb[0].mxu0
    %2168 = vdwg.mxu0
    %v2169 = vmax.f32 %v2043, 0.0
    %v2170 = vmax.f32 %v2046, 0.0
    %v2171 = vmax.f32 %v2051, 0.0
    %v2172 = vmax.f32 %v2054, 0.0
    %v2173 = vmax.f32 %v2059, 0.0
    %v2174 = vmax.f32 %v2062, 0.0
    %v2175 = vmax.f32 %v2067, 0.0
    %v2176 = vmax.f32 %v2070, 0.0
    %v2177 = vmax.f32 %v2075, 0.0
    %v2178 = vmax.f32 %v2078, 0.0
    %v2179 = vmax.f32 %v2083, 0.0
    %v2180 = vmax.f32 %v2086, 0.0
    %v2181 = vmax.f32 %v2091, 0.0
    %v2182 = vmax.f32 %v2094, 0.0
    %v2183 = vmax.f32 %v2099, 0.0
    %v2184 = vmax.f32 %v2102, 0.0
    %v2185 = vmax.f32 %v2107, 0.0
    %v2186 = vmax.f32 %v2110, 0.0
    %v2187 = vmax.f32 %v2115, 0.0
    %v2188 = vmax.f32 %v2118, 0.0
    %v2189 = vmax.f32 %v2123, 0.0
    %v2190 = vmax.f32 %v2126, 0.0
    %v2191 = vmax.f32 %v2131, 0.0
    %v2192 = vmax.f32 %v2134, 0.0
    %v2193 = vmax.f32 %v2139, 0.0
    %v2194 = vmax.f32 %v2142, 0.0
    %v2195 = vmax.f32 %v2147, 0.0
    %v2196 = vmax.f32 %v2150, 0.0
    %v2197 = vmax.f32 %v2155, 0.0
    %v2198 = vmax.f32 %v2158, 0.0
    %v2199 = vmax.f32 %v2163, 0.0
    %v2200 = vmax.f32 %v2166, 0.0
    %v2201 = vpack.c.bf16 %v2170, %v2169
    %v2202 = vpack.c.bf16 %v2172, %v2171
    %v2203 = vpack.c.bf16 %v2174, %v2173
    %v2204 = vpack.c.bf16 %v2176, %v2175
    %v2205 = vpack.c.bf16 %v2178, %v2177
    %v2206 = vpack.c.bf16 %v2180, %v2179
    %v2207 = vpack.c.bf16 %v2182, %v2181
    %v2208 = vpack.c.bf16 %v2184, %v2183
    %v2209 = vpack.c.bf16 %v2186, %v2185
    %v2210 = vpack.c.bf16 %v2188, %v2187
    %v2211 = vpack.c.bf16 %v2190, %v2189
    %v2212 = vpack.c.bf16 %v2192, %v2191
    %v2213 = vpack.c.bf16 %v2194, %v2193
    %v2214 = vpack.c.bf16 %v2196, %v2195
    %v2215 = vpack.c.bf16 %v2198, %v2197
    %v2216 = vpack.c.bf16 %v2200, %v2199
    %v2217 = vld [vmem:[%s5] sm:$0xf]
    %v2218 = vld [vmem:[%s5 + $0x4] sm:$0xf]
    %v2219 = vld [vmem:[%s5 + $0x8] sm:$0xf]
    %v2220 = vld [vmem:[%s5 + $0xc] sm:$0xf]
    %v2221 = vld [vmem:[%s5 + $0x10] sm:$0xf]
    %v2222 = vld [vmem:[%s5 + $0x14] sm:$0xf]
    %v2223 = vld [vmem:[%s5 + $0x18] sm:$0xf]
    %v2224 = vld [vmem:[%s5 + $0x1c] sm:$0xf]
    %v2233 = vunpack.c.l.b16 %v2217
    %v2234 = vunpack.c.l.b16 %v2218
    %v2235 = vunpack.c.l.b16 %v2219
    %v2236 = vunpack.c.l.b16 %v2220
    %v2237 = vunpack.c.l.b16 %v2221
    %v2238 = vunpack.c.l.b16 %v2222
    %v2239 = vunpack.c.l.b16 %v2223
    %v2240 = vunpack.c.l.b16 %v2224
    %v2241 = vpack.c.b16 %v2234, %v2233
    %v2242 = vpack.c.b16 %v2236, %v2235
    %v2243 = vpack.c.b16 %v2238, %v2237
    %v2244 = vpack.c.b16 %v2240, %v2239
    %v2250 = vsel %vm1959, %v2201, 0
    %v2253 = vsel %vm1959, %v2202, 0
    %v2256 = vsel %vm1959, %v2203, 0
    %v2259 = vsel %vm1959, %v2204, 0
    %v2262 = vsel %vm1959, %v2205, 0
    %v2265 = vsel %vm1959, %v2206, 0
    %v2268 = vsel %vm1959, %v2207, 0
    %v2271 = vsel %vm1959, %v2208, 0
    %v2274 = vsel %vm1959, %v2209, 0
    %v2277 = vsel %vm1959, %v2210, 0
    %v2280 = vsel %vm1959, %v2211, 0
    %v2283 = vsel %vm1959, %v2212, 0
    %v2286 = vsel %vm1959, %v2213, 0
    %v2289 = vsel %vm1959, %v2214, 0
    %v2292 = vsel %vm1959, %v2215, 0
    %v2295 = vsel %vm1959, %v2216, 0
    %2297 = vmatprep.subr.bf16.mxu0 0
    %2298 = vmatpush1.bf16.msra.mxu0 %v2241
    %2299 = vmatprep.subr.bf16.mxu0 0
    %2300 = vmatpush1.bf16.msra.mxu0 %v2242
    %2301 = vmatprep.subr.bf16.mxu0 0
    %2302 = vmatpush1.bf16.msra.mxu0 %v2243
    %2303 = vmatprep.subr.bf16.mxu0 0
    %2304 = vmatpush1.bf16.msra.mxu0 %v2244
    %2305 = vmatprep.subr.bf16.mxu0 0
    %2306 = vmatpush1.bf16.msra.mxu0 0
    %2307 = vmatprep.subr.bf16.mxu0 0
    %2308 = vmatpush1.bf16.msra.mxu0 0
    %2309 = vmatprep.subr.bf16.mxu0 0
    %2310 = vmatpush1.bf16.msra.mxu0 0
    %2311 = vmatprep.subr.bf16.mxu0 0
    %2312 = vmatpush1.bf16.msra.mxu0 0
    %2313 = vmatprep.subr.bf16.mxu0 0
    %2314 = vmatpush1.bf16.msra.mxu0 0
    %2315 = vmatprep.subr.bf16.mxu0 0
    %2316 = vmatpush1.bf16.msra.mxu0 0
    %2317 = vmatprep.subr.bf16.mxu0 0
    %2318 = vmatpush1.bf16.msra.mxu0 0
    %2319 = vmatprep.subr.bf16.mxu0 0
    %2320 = vmatpush1.bf16.msra.mxu0 0
    %2321 = vmatprep.subr.bf16.mxu0 0
    %2322 = vmatpush1.bf16.msra.mxu0 0
    %2323 = vmatprep.subr.bf16.mxu0 0
    %2324 = vmatpush1.bf16.msra.mxu0 0
    %2325 = vmatprep.subr.bf16.mxu0 0
    %2326 = vmatpush1.bf16.msra.mxu0 0
    %2327 = vmatprep.subr.bf16.mxu0 0
    %2328 = vmatpush1.bf16.msra.mxu0 0
    %2329 = vmatprep.mubr.bf16.mxu0 0
    %2330 = vmatmul.mubr.bf16.gmra.mrb[0].mxu0 %v2250
    %v2331 = vpop.f32.mrb[0].mxu0
    %v2332 = vadd.f32 0.0, %v2331
    %v2333 = vpop.f32.mrb[0].mxu0
    %v2334 = vpop.f32.mrb[0].mxu0
    %v2335 = vadd.f32 0.0, %v2334
    %v2336 = vpop.f32.mrb[0].mxu0
    %2337 = vmatprep.mubr.bf16.mxu0 0
    %2338 = vmatmul.mubr.bf16.gmra.mrb[0].mxu0 %v2253
    %v2339 = vpop.f32.mrb[0].mxu0
    %v2340 = vadd.f32 0.0, %v2339
    %v2341 = vpop.f32.mrb[0].mxu0
    %v2342 = vpop.f32.mrb[0].mxu0
    %v2343 = vadd.f32 0.0, %v2342
    %v2344 = vpop.f32.mrb[0].mxu0
    %2345 = vmatprep.mubr.bf16.mxu0 0
    %2346 = vmatmul.mubr.bf16.gmra.mrb[0].mxu0 %v2256
    %v2347 = vpop.f32.mrb[0].mxu0
    %v2348 = vadd.f32 0.0, %v2347
    %v2349 = vpop.f32.mrb[0].mxu0
    %v2350 = vpop.f32.mrb[0].mxu0
    %v2351 = vadd.f32 0.0, %v2350
    %v2352 = vpop.f32.mrb[0].mxu0
    %2353 = vmatprep.mubr.bf16.mxu0 0
    %2354 = vmatmul.mubr.bf16.gmra.mrb[0].mxu0 %v2259
    %v2355 = vpop.f32.mrb[0].mxu0
    %v2356 = vadd.f32 0.0, %v2355
    %v2357 = vpop.f32.mrb[0].mxu0
    %v2358 = vpop.f32.mrb[0].mxu0
    %v2359 = vadd.f32 0.0, %v2358
    %v2360 = vpop.f32.mrb[0].mxu0
    %2361 = vmatprep.mubr.bf16.mxu0 0
    %2362 = vmatmul.mubr.bf16.gmra.mrb[0].mxu0 %v2262
    %v2363 = vpop.f32.mrb[0].mxu0
    %v2364 = vadd.f32 0.0, %v2363
    %v2365 = vpop.f32.mrb[0].mxu0
    %v2366 = vpop.f32.mrb[0].mxu0
    %v2367 = vadd.f32 0.0, %v2366
    %v2368 = vpop.f32.mrb[0].mxu0
    %2369 = vmatprep.mubr.bf16.mxu0 0
    %2370 = vmatmul.mubr.bf16.gmra.mrb[0].mxu0 %v2265
    %v2371 = vpop.f32.mrb[0].mxu0
    %v2372 = vadd.f32 0.0, %v2371
    %v2373 = vpop.f32.mrb[0].mxu0
    %v2374 = vpop.f32.mrb[0].mxu0
    %v2375 = vadd.f32 0.0, %v2374
    %v2376 = vpop.f32.mrb[0].mxu0
    %2377 = vmatprep.mubr.bf16.mxu0 0
    %2378 = vmatmul.mubr.bf16.gmra.mrb[0].mxu0 %v2268
    %v2379 = vpop.f32.mrb[0].mxu0
    %v2380 = vadd.f32 0.0, %v2379
    %v2381 = vpop.f32.mrb[0].mxu0
    %v2382 = vpop.f32.mrb[0].mxu0
    %v2383 = vadd.f32 0.0, %v2382
    %v2384 = vpop.f32.mrb[0].mxu0
    %2385 = vmatprep.mubr.bf16.mxu0 0
    %2386 = vmatmul.mubr.bf16.gmra.mrb[0].mxu0 %v2271
    %v2387 = vpop.f32.mrb[0].mxu0
    %v2388 = vadd.f32 0.0, %v2387
    %v2389 = vpop.f32.mrb[0].mxu0
    %v2390 = vpop.f32.mrb[0].mxu0
    %v2391 = vadd.f32 0.0, %v2390
    %v2392 = vpop.f32.mrb[0].mxu0
    %2393 = vmatprep.mubr.bf16.mxu0 0
    %2394 = vmatmul.mubr.bf16.gmra.mrb[0].mxu0 %v2274
    %v2395 = vpop.f32.mrb[0].mxu0
    %v2396 = vadd.f32 0.0, %v2395
    %v2397 = vpop.f32.mrb[0].mxu0
    %v2398 = vpop.f32.mrb[0].mxu0
    %v2399 = vadd.f32 0.0, %v2398
    %v2400 = vpop.f32.mrb[0].mxu0
    %2401 = vmatprep.mubr.bf16.mxu0 0
    %2402 = vmatmul.mubr.bf16.gmra.mrb[0].mxu0 %v2277
    %v2403 = vpop.f32.mrb[0].mxu0
    %v2404 = vadd.f32 0.0, %v2403
    %v2405 = vpop.f32.mrb[0].mxu0
    %v2406 = vpop.f32.mrb[0].mxu0
    %v2407 = vadd.f32 0.0, %v2406
    %v2408 = vpop.f32.mrb[0].mxu0
    %2409 = vmatprep.mubr.bf16.mxu0 0
    %2410 = vmatmul.mubr.bf16.gmra.mrb[0].mxu0 %v2280
    %v2411 = vpop.f32.mrb[0].mxu0
    %v2412 = vadd.f32 0.0, %v2411
    %v2413 = vpop.f32.mrb[0].mxu0
    %v2414 = vpop.f32.mrb[0].mxu0
    %v2415 = vadd.f32 0.0, %v2414
    %v2416 = vpop.f32.mrb[0].mxu0
    %2417 = vmatprep.mubr.bf16.mxu0 0
    %2418 = vmatmul.mubr.bf16.gmra.mrb[0].mxu0 %v2283
    %v2419 = vpop.f32.mrb[0].mxu0
    %v2420 = vadd.f32 0.0, %v2419
    %v2421 = vpop.f32.mrb[0].mxu0
    %v2422 = vpop.f32.mrb[0].mxu0
    %v2423 = vadd.f32 0.0, %v2422
    %v2424 = vpop.f32.mrb[0].mxu0
    %2425 = vmatprep.mubr.bf16.mxu0 0
    %2426 = vmatmul.mubr.bf16.gmra.mrb[0].mxu0 %v2286
    %v2427 = vpop.f32.mrb[0].mxu0
    %v2428 = vadd.f32 0.0, %v2427
    %v2429 = vpop.f32.mrb[0].mxu0
    %v2430 = vpop.f32.mrb[0].mxu0
    %v2431 = vadd.f32 0.0, %v2430
    %v2432 = vpop.f32.mrb[0].mxu0
    %2433 = vmatprep.mubr.bf16.mxu0 0
    %2434 = vmatmul.mubr.bf16.gmra.mrb[0].mxu0 %v2289
    %v2435 = vpop.f32.mrb[0].mxu0
    %v2436 = vadd.f32 0.0, %v2435
    %v2437 = vpop.f32.mrb[0].mxu0
    %v2438 = vpop.f32.mrb[0].mxu0
    %v2439 = vadd.f32 0.0, %v2438
    %v2440 = vpop.f32.mrb[0].mxu0
    %2441 = vmatprep.mubr.bf16.mxu0 0
    %2442 = vmatmul.mubr.bf16.gmra.mrb[0].mxu0 %v2292
    %v2443 = vpop.f32.mrb[0].mxu0
    %v2444 = vadd.f32 0.0, %v2443
    %v2445 = vpop.f32.mrb[0].mxu0
    %v2446 = vpop.f32.mrb[0].mxu0
    %v2447 = vadd.f32 0.0, %v2446
    %v2448 = vpop.f32.mrb[0].mxu0
    %2449 = vmatprep.mubr.bf16.mxu0 0
    %2450 = vmatmul.mubr.bf16.gmra.mrb[0].mxu0 %v2295
    %v2451 = vpop.f32.mrb[0].mxu0
    %v2452 = vadd.f32 0.0, %v2451
    %v2453 = vpop.f32.mrb[0].mxu0
    %v2454 = vpop.f32.mrb[0].mxu0
    %v2455 = vadd.f32 0.0, %v2454
    %v2456 = vpop.f32.mrb[0].mxu0
    %2457 = vdwg.mxu0
    %v2458 = vlaneseq
    %v2459 = vand.u32 %v2458, 127
    %vm2460 = vcmask 48128
    %v2461 = vsel %vm2460, %v2332, -inf
    %2462 = vmax.xlane.f32.xlu0 %v2461
    %v2463 = vpop.xlane.xlu0 %2462
    %v2464 = vsel %vm2460, %v2335, -inf
    %2465 = vmax.xlane.f32.xlu0 %v2464
    %v2466 = vpop.xlane.xlu0 %2465
    %v2467 = vsel %vm2460, %v2340, -inf
    %2468 = vmax.xlane.f32.xlu0 %v2467
    %v2469 = vpop.xlane.xlu0 %2468
    %v2470 = vsel %vm2460, %v2343, -inf
    %2471 = vmax.xlane.f32.xlu0 %v2470
    %v2472 = vpop.xlane.xlu0 %2471
    %v2473 = vsel %vm2460, %v2348, -inf
    %2474 = vmax.xlane.f32.xlu0 %v2473
    %v2475 = vpop.xlane.xlu0 %2474
    %v2476 = vsel %vm2460, %v2351, -inf
    %2477 = vmax.xlane.f32.xlu0 %v2476
    %v2478 = vpop.xlane.xlu0 %2477
    %v2479 = vsel %vm2460, %v2356, -inf
    %2480 = vmax.xlane.f32.xlu0 %v2479
    %v2481 = vpop.xlane.xlu0 %2480
    %v2482 = vsel %vm2460, %v2359, -inf
    %2483 = vmax.xlane.f32.xlu0 %v2482
    %v2484 = vpop.xlane.xlu0 %2483
    %v2485 = vsel %vm2460, %v2364, -inf
    %2486 = vmax.xlane.f32.xlu0 %v2485
    %v2487 = vpop.xlane.xlu0 %2486
    %v2488 = vsel %vm2460, %v2367, -inf
    %2489 = vmax.xlane.f32.xlu0 %v2488
    %v2490 = vpop.xlane.xlu0 %2489
    %v2491 = vsel %vm2460, %v2372, -inf
    %2492 = vmax.xlane.f32.xlu0 %v2491
    %v2493 = vpop.xlane.xlu0 %2492
    %v2494 = vsel %vm2460, %v2375, -inf
    %2495 = vmax.xlane.f32.xlu0 %v2494
    %v2496 = vpop.xlane.xlu0 %2495
    %v2497 = vsel %vm2460, %v2380, -inf
    %2498 = vmax.xlane.f32.xlu0 %v2497
    %v2499 = vpop.xlane.xlu0 %2498
    %v2500 = vsel %vm2460, %v2383, -inf
    %2501 = vmax.xlane.f32.xlu0 %v2500
    %v2502 = vpop.xlane.xlu0 %2501
    %v2503 = vsel %vm2460, %v2388, -inf
    %2504 = vmax.xlane.f32.xlu0 %v2503
    %v2505 = vpop.xlane.xlu0 %2504
    %v2506 = vsel %vm2460, %v2391, -inf
    %2507 = vmax.xlane.f32.xlu0 %v2506
    %v2508 = vpop.xlane.xlu0 %2507
    %v2509 = vsel %vm2460, %v2396, -inf
    %2510 = vmax.xlane.f32.xlu0 %v2509
    %v2511 = vpop.xlane.xlu0 %2510
    %v2512 = vsel %vm2460, %v2399, -inf
    %2513 = vmax.xlane.f32.xlu0 %v2512
    %v2514 = vpop.xlane.xlu0 %2513
    %v2515 = vsel %vm2460, %v2404, -inf
    %2516 = vmax.xlane.f32.xlu0 %v2515
    %v2517 = vpop.xlane.xlu0 %2516
    %v2518 = vsel %vm2460, %v2407, -inf
    %2519 = vmax.xlane.f32.xlu0 %v2518
    %v2520 = vpop.xlane.xlu0 %2519
    %v2521 = vsel %vm2460, %v2412, -inf
    %2522 = vmax.xlane.f32.xlu0 %v2521
    %v2523 = vpop.xlane.xlu0 %2522
    %v2524 = vsel %vm2460, %v2415, -inf
    %2525 = vmax.xlane.f32.xlu0 %v2524
    %v2526 = vpop.xlane.xlu0 %2525
    %v2527 = vsel %vm2460, %v2420, -inf
    %2528 = vmax.xlane.f32.xlu0 %v2527
    %v2529 = vpop.xlane.xlu0 %2528
    %v2530 = vsel %vm2460, %v2423, -inf
    %2531 = vmax.xlane.f32.xlu0 %v2530
    %v2532 = vpop.xlane.xlu0 %2531
    %v2533 = vsel %vm2460, %v2428, -inf
    %2534 = vmax.xlane.f32.xlu0 %v2533
    %v2535 = vpop.xlane.xlu0 %2534
    %v2536 = vsel %vm2460, %v2431, -inf
    %2537 = vmax.xlane.f32.xlu0 %v2536
    %v2538 = vpop.xlane.xlu0 %2537
    %v2539 = vsel %vm2460, %v2436, -inf
    %2540 = vmax.xlane.f32.xlu0 %v2539
    %v2541 = vpop.xlane.xlu0 %2540
    %v2542 = vsel %vm2460, %v2439, -inf
    %2543 = vmax.xlane.f32.xlu0 %v2542
    %v2544 = vpop.xlane.xlu0 %2543
    %v2545 = vsel %vm2460, %v2444, -inf
    %2546 = vmax.xlane.f32.xlu0 %v2545
    %v2547 = vpop.xlane.xlu0 %2546
    %v2548 = vsel %vm2460, %v2447, -inf
    %2549 = vmax.xlane.f32.xlu0 %v2548
    %v2550 = vpop.xlane.xlu0 %2549
    %v2551 = vsel %vm2460, %v2452, -inf
    %2552 = vmax.xlane.f32.xlu0 %v2551
    %v2553 = vpop.xlane.xlu0 %2552
    %v2554 = vsel %vm2460, %v2455, -inf
    %2555 = vmax.xlane.f32.xlu0 %v2554
    %v2556 = vpop.xlane.xlu0 %2555
    %vm2557 = vcmp.eq.f32.partialorder %v2332, %v2463
    %vm2558 = vcmp.eq.f32.partialorder %v2335, %v2466
    %vm2559 = vcmp.eq.f32.partialorder %v2340, %v2469
    %vm2560 = vcmp.eq.f32.partialorder %v2343, %v2472
    %vm2561 = vcmp.eq.f32.partialorder %v2348, %v2475
    %vm2562 = vcmp.eq.f32.partialorder %v2351, %v2478
    %vm2563 = vcmp.eq.f32.partialorder %v2356, %v2481
    %vm2564 = vcmp.eq.f32.partialorder %v2359, %v2484
    %vm2565 = vcmp.eq.f32.partialorder %v2364, %v2487
    %vm2566 = vcmp.eq.f32.partialorder %v2367, %v2490
    %vm2567 = vcmp.eq.f32.partialorder %v2372, %v2493
    %vm2568 = vcmp.eq.f32.partialorder %v2375, %v2496
    %vm2569 = vcmp.eq.f32.partialorder %v2380, %v2499
    %vm2570 = vcmp.eq.f32.partialorder %v2383, %v2502
    %vm2571 = vcmp.eq.f32.partialorder %v2388, %v2505
    %vm2572 = vcmp.eq.f32.partialorder %v2391, %v2508
    %vm2573 = vcmp.eq.f32.partialorder %v2396, %v2511
    %vm2574 = vcmp.eq.f32.partialorder %v2399, %v2514
    %vm2575 = vcmp.eq.f32.partialorder %v2404, %v2517
    %vm2576 = vcmp.eq.f32.partialorder %v2407, %v2520
    %vm2577 = vcmp.eq.f32.partialorder %v2412, %v2523
    %vm2578 = vcmp.eq.f32.partialorder %v2415, %v2526
    %vm2579 = vcmp.eq.f32.partialorder %v2420, %v2529
    %vm2580 = vcmp.eq.f32.partialorder %v2423, %v2532
    %vm2581 = vcmp.eq.f32.partialorder %v2428, %v2535
    %vm2582 = vcmp.eq.f32.partialorder %v2431, %v2538
    %vm2583 = vcmp.eq.f32.partialorder %v2436, %v2541
    %vm2584 = vcmp.eq.f32.partialorder %v2439, %v2544
    %vm2585 = vcmp.eq.f32.partialorder %v2444, %v2547
    %vm2586 = vcmp.eq.f32.partialorder %v2447, %v2550
    %vm2587 = vcmp.eq.f32.partialorder %v2452, %v2553
    %vm2588 = vcmp.eq.f32.partialorder %v2455, %v2556
    %v2589 = vsel %vm2557, %v2459, 6
    %v2590 = vsel %vm2558, %v2459, 6
    %v2591 = vsel %vm2559, %v2459, 6
    %v2592 = vsel %vm2560, %v2459, 6
    %v2593 = vsel %vm2561, %v2459, 6
    %v2594 = vsel %vm2562, %v2459, 6
    %v2595 = vsel %vm2563, %v2459, 6
    %v2596 = vsel %vm2564, %v2459, 6
    %v2597 = vsel %vm2565, %v2459, 6
    %v2598 = vsel %vm2566, %v2459, 6
    %v2599 = vsel %vm2567, %v2459, 6
    %v2600 = vsel %vm2568, %v2459, 6
    %v2601 = vsel %vm2569, %v2459, 6
    %v2602 = vsel %vm2570, %v2459, 6
    %v2603 = vsel %vm2571, %v2459, 6
    %v2604 = vsel %vm2572, %v2459, 6
    %v2605 = vsel %vm2573, %v2459, 6
    %v2606 = vsel %vm2574, %v2459, 6
    %v2607 = vsel %vm2575, %v2459, 6
    %v2608 = vsel %vm2576, %v2459, 6
    %v2609 = vsel %vm2577, %v2459, 6
    %v2610 = vsel %vm2578, %v2459, 6
    %v2611 = vsel %vm2579, %v2459, 6
    %v2612 = vsel %vm2580, %v2459, 6
    %v2613 = vsel %vm2581, %v2459, 6
    %v2614 = vsel %vm2582, %v2459, 6
    %v2615 = vsel %vm2583, %v2459, 6
    %v2616 = vsel %vm2584, %v2459, 6
    %v2617 = vsel %vm2585, %v2459, 6
    %v2618 = vsel %vm2586, %v2459, 6
    %v2619 = vsel %vm2587, %v2459, 6
    %v2620 = vsel %vm2588, %v2459, 6
    %v2621 = vsel %vm2460, %v2589, 2147483647
    %v2622 = vand.u32 %v2621, 65535
    %v2623 = vshra.s32 %v2621, 16
    %v2624 = vcvt.s32.f32 %v2622
    %v2625 = vcvt.s32.f32 %v2623
    %2626 = vmin.xlane.f32.xlu0 %v2625
    %v2627 = vpop.xlane.xlu0 %2626
    %vm2628 = vcmp.eq.f32.partialorder %v2625, %v2627
    %v2629 = vsel %vm2628, %v2624, inf
    %2630 = vmin.xlane.f32.xlu0 %v2629
    %v2631 = vpop.xlane.xlu0 %2630
    %v2632 = vcvt.f32.s32 %v2631
    %v2633 = vcvt.f32.s32 %v2627
    %v2634 = vshll.u32 %v2633, 16
    %v2635 = vadd.s32 %v2634, %v2632
    %v2636 = vsel %vm2460, %v2590, 2147483647
    %v2637 = vand.u32 %v2636, 65535
    %v2638 = vshra.s32 %v2636, 16
    %v2639 = vcvt.s32.f32 %v2637
    %v2640 = vcvt.s32.f32 %v2638
    %2641 = vmin.xlane.f32.xlu0 %v2640
    %v2642 = vpop.xlane.xlu0 %2641
    %vm2643 = vcmp.eq.f32.partialorder %v2640, %v2642
    %v2644 = vsel %vm2643, %v2639, inf
    %2645 = vmin.xlane.f32.xlu0 %v2644
    %v2646 = vpop.xlane.xlu0 %2645
    %v2647 = vcvt.f32.s32 %v2646
    %v2648 = vcvt.f32.s32 %v2642
    %v2649 = vshll.u32 %v2648, 16
    %v2650 = vadd.s32 %v2649, %v2647
    %v2651 = vsel %vm2460, %v2591, 2147483647
    %v2652 = vand.u32 %v2651, 65535
    %v2653 = vshra.s32 %v2651, 16
    %v2654 = vcvt.s32.f32 %v2652
    %v2655 = vcvt.s32.f32 %v2653
    %2656 = vmin.xlane.f32.xlu0 %v2655
    %v2657 = vpop.xlane.xlu0 %2656
    %vm2658 = vcmp.eq.f32.partialorder %v2655, %v2657
    %v2659 = vsel %vm2658, %v2654, inf
    %2660 = vmin.xlane.f32.xlu0 %v2659
    %v2661 = vpop.xlane.xlu0 %2660
    %v2662 = vcvt.f32.s32 %v2661
    %v2663 = vcvt.f32.s32 %v2657
    %v2664 = vshll.u32 %v2663, 16
    %v2665 = vadd.s32 %v2664, %v2662
    %v2666 = vsel %vm2460, %v2592, 2147483647
    %v2667 = vand.u32 %v2666, 65535
    %v2668 = vshra.s32 %v2666, 16
    %v2669 = vcvt.s32.f32 %v2667
    %v2670 = vcvt.s32.f32 %v2668
    %2671 = vmin.xlane.f32.xlu0 %v2670
    %v2672 = vpop.xlane.xlu0 %2671
    %vm2673 = vcmp.eq.f32.partialorder %v2670, %v2672
    %v2674 = vsel %vm2673, %v2669, inf
    %2675 = vmin.xlane.f32.xlu0 %v2674
    %v2676 = vpop.xlane.xlu0 %2675
    %v2677 = vcvt.f32.s32 %v2676
    %v2678 = vcvt.f32.s32 %v2672
    %v2679 = vshll.u32 %v2678, 16
    %v2680 = vadd.s32 %v2679, %v2677
    %v2681 = vsel %vm2460, %v2593, 2147483647
    %v2682 = vand.u32 %v2681, 65535
    %v2683 = vshra.s32 %v2681, 16
    %v2684 = vcvt.s32.f32 %v2682
    %v2685 = vcvt.s32.f32 %v2683
    %2686 = vmin.xlane.f32.xlu0 %v2685
    %v2687 = vpop.xlane.xlu0 %2686
    %vm2688 = vcmp.eq.f32.partialorder %v2685, %v2687
    %v2689 = vsel %vm2688, %v2684, inf
    %2690 = vmin.xlane.f32.xlu0 %v2689
    %v2691 = vpop.xlane.xlu0 %2690
    %v2692 = vcvt.f32.s32 %v2691
    %v2693 = vcvt.f32.s32 %v2687
    %v2694 = vshll.u32 %v2693, 16
    %v2695 = vadd.s32 %v2694, %v2692
    %v2696 = vsel %vm2460, %v2594, 2147483647
    %v2697 = vand.u32 %v2696, 65535
    %v2698 = vshra.s32 %v2696, 16
    %v2699 = vcvt.s32.f32 %v2697
    %v2700 = vcvt.s32.f32 %v2698
    %2701 = vmin.xlane.f32.xlu0 %v2700
    %v2702 = vpop.xlane.xlu0 %2701
    %vm2703 = vcmp.eq.f32.partialorder %v2700, %v2702
    %v2704 = vsel %vm2703, %v2699, inf
    %2705 = vmin.xlane.f32.xlu0 %v2704
    %v2706 = vpop.xlane.xlu0 %2705
    %v2707 = vcvt.f32.s32 %v2706
    %v2708 = vcvt.f32.s32 %v2702
    %v2709 = vshll.u32 %v2708, 16
    %v2710 = vadd.s32 %v2709, %v2707
    %v2711 = vsel %vm2460, %v2595, 2147483647
    %v2712 = vand.u32 %v2711, 65535
    %v2713 = vshra.s32 %v2711, 16
    %v2714 = vcvt.s32.f32 %v2712
    %v2715 = vcvt.s32.f32 %v2713
    %2716 = vmin.xlane.f32.xlu0 %v2715
    %v2717 = vpop.xlane.xlu0 %2716
    %vm2718 = vcmp.eq.f32.partialorder %v2715, %v2717
    %v2719 = vsel %vm2718, %v2714, inf
    %2720 = vmin.xlane.f32.xlu0 %v2719
    %v2721 = vpop.xlane.xlu0 %2720
    %v2722 = vcvt.f32.s32 %v2721
    %v2723 = vcvt.f32.s32 %v2717
    %v2724 = vshll.u32 %v2723, 16
    %v2725 = vadd.s32 %v2724, %v2722
    %v2726 = vsel %vm2460, %v2596, 2147483647
    %v2727 = vand.u32 %v2726, 65535
    %v2728 = vshra.s32 %v2726, 16
    %v2729 = vcvt.s32.f32 %v2727
    %v2730 = vcvt.s32.f32 %v2728
    %2731 = vmin.xlane.f32.xlu0 %v2730
    %v2732 = vpop.xlane.xlu0 %2731
    %vm2733 = vcmp.eq.f32.partialorder %v2730, %v2732
    %v2734 = vsel %vm2733, %v2729, inf
    %2735 = vmin.xlane.f32.xlu0 %v2734
    %v2736 = vpop.xlane.xlu0 %2735
    %v2737 = vcvt.f32.s32 %v2736
    %v2738 = vcvt.f32.s32 %v2732
    %v2739 = vshll.u32 %v2738, 16
    %v2740 = vadd.s32 %v2739, %v2737
    %v2741 = vsel %vm2460, %v2597, 2147483647
    %v2742 = vand.u32 %v2741, 65535
    %v2743 = vshra.s32 %v2741, 16
    %v2744 = vcvt.s32.f32 %v2742
    %v2745 = vcvt.s32.f32 %v2743
    %2746 = vmin.xlane.f32.xlu0 %v2745
    %v2747 = vpop.xlane.xlu0 %2746
    %vm2748 = vcmp.eq.f32.partialorder %v2745, %v2747
    %v2749 = vsel %vm2748, %v2744, inf
    %2750 = vmin.xlane.f32.xlu0 %v2749
    %v2751 = vpop.xlane.xlu0 %2750
    %v2752 = vcvt.f32.s32 %v2751
    %v2753 = vcvt.f32.s32 %v2747
    %v2754 = vshll.u32 %v2753, 16
    %v2755 = vadd.s32 %v2754, %v2752
    %v2756 = vsel %vm2460, %v2598, 2147483647
    %v2757 = vand.u32 %v2756, 65535
    %v2758 = vshra.s32 %v2756, 16
    %v2759 = vcvt.s32.f32 %v2757
    %v2760 = vcvt.s32.f32 %v2758
    %2761 = vmin.xlane.f32.xlu0 %v2760
    %v2762 = vpop.xlane.xlu0 %2761
    %vm2763 = vcmp.eq.f32.partialorder %v2760, %v2762
    %v2764 = vsel %vm2763, %v2759, inf
    %2765 = vmin.xlane.f32.xlu0 %v2764
    %v2766 = vpop.xlane.xlu0 %2765
    %v2767 = vcvt.f32.s32 %v2766
    %v2768 = vcvt.f32.s32 %v2762
    %v2769 = vshll.u32 %v2768, 16
    %v2770 = vadd.s32 %v2769, %v2767
    %v2771 = vsel %vm2460, %v2599, 2147483647
    %v2772 = vand.u32 %v2771, 65535
    %v2773 = vshra.s32 %v2771, 16
    %v2774 = vcvt.s32.f32 %v2772
    %v2775 = vcvt.s32.f32 %v2773
    %2776 = vmin.xlane.f32.xlu0 %v2775
    %v2777 = vpop.xlane.xlu0 %2776
    %vm2778 = vcmp.eq.f32.partialorder %v2775, %v2777
    %v2779 = vsel %vm2778, %v2774, inf
    %2780 = vmin.xlane.f32.xlu0 %v2779
    %v2781 = vpop.xlane.xlu0 %2780
    %v2782 = vcvt.f32.s32 %v2781
    %v2783 = vcvt.f32.s32 %v2777
    %v2784 = vshll.u32 %v2783, 16
    %v2785 = vadd.s32 %v2784, %v2782
    %v2786 = vsel %vm2460, %v2600, 2147483647
    %v2787 = vand.u32 %v2786, 65535
    %v2788 = vshra.s32 %v2786, 16
    %v2789 = vcvt.s32.f32 %v2787
    %v2790 = vcvt.s32.f32 %v2788
    %2791 = vmin.xlane.f32.xlu0 %v2790
    %v2792 = vpop.xlane.xlu0 %2791
    %vm2793 = vcmp.eq.f32.partialorder %v2790, %v2792
    %v2794 = vsel %vm2793, %v2789, inf
    %2795 = vmin.xlane.f32.xlu0 %v2794
    %v2796 = vpop.xlane.xlu0 %2795
    %v2797 = vcvt.f32.s32 %v2796
    %v2798 = vcvt.f32.s32 %v2792
    %v2799 = vshll.u32 %v2798, 16
    %v2800 = vadd.s32 %v2799, %v2797
    %v2801 = vsel %vm2460, %v2601, 2147483647
    %v2802 = vand.u32 %v2801, 65535
    %v2803 = vshra.s32 %v2801, 16
    %v2804 = vcvt.s32.f32 %v2802
    %v2805 = vcvt.s32.f32 %v2803
    %2806 = vmin.xlane.f32.xlu0 %v2805
    %v2807 = vpop.xlane.xlu0 %2806
    %vm2808 = vcmp.eq.f32.partialorder %v2805, %v2807
    %v2809 = vsel %vm2808, %v2804, inf
    %2810 = vmin.xlane.f32.xlu0 %v2809
    %v2811 = vpop.xlane.xlu0 %2810
    %v2812 = vcvt.f32.s32 %v2811
    %v2813 = vcvt.f32.s32 %v2807
    %v2814 = vshll.u32 %v2813, 16
    %v2815 = vadd.s32 %v2814, %v2812
    %v2816 = vsel %vm2460, %v2602, 2147483647
    %v2817 = vand.u32 %v2816, 65535
    %v2818 = vshra.s32 %v2816, 16
    %v2819 = vcvt.s32.f32 %v2817
    %v2820 = vcvt.s32.f32 %v2818
    %2821 = vmin.xlane.f32.xlu0 %v2820
    %v2822 = vpop.xlane.xlu0 %2821
    %vm2823 = vcmp.eq.f32.partialorder %v2820, %v2822
    %v2824 = vsel %vm2823, %v2819, inf
    %2825 = vmin.xlane.f32.xlu0 %v2824
    %v2826 = vpop.xlane.xlu0 %2825
    %v2827 = vcvt.f32.s32 %v2826
    %v2828 = vcvt.f32.s32 %v2822
    %v2829 = vshll.u32 %v2828, 16
    %v2830 = vadd.s32 %v2829, %v2827
    %v2831 = vsel %vm2460, %v2603, 2147483647
    %v2832 = vand.u32 %v2831, 65535
    %v2833 = vshra.s32 %v2831, 16
    %v2834 = vcvt.s32.f32 %v2832
    %v2835 = vcvt.s32.f32 %v2833
    %2836 = vmin.xlane.f32.xlu0 %v2835
    %v2837 = vpop.xlane.xlu0 %2836
    %vm2838 = vcmp.eq.f32.partialorder %v2835, %v2837
    %v2839 = vsel %vm2838, %v2834, inf
    %2840 = vmin.xlane.f32.xlu0 %v2839
    %v2841 = vpop.xlane.xlu0 %2840
    %v2842 = vcvt.f32.s32 %v2841
    %v2843 = vcvt.f32.s32 %v2837
    %v2844 = vshll.u32 %v2843, 16
    %v2845 = vadd.s32 %v2844, %v2842
    %v2846 = vsel %vm2460, %v2604, 2147483647
    %v2847 = vand.u32 %v2846, 65535
    %v2848 = vshra.s32 %v2846, 16
    %v2849 = vcvt.s32.f32 %v2847
    %v2850 = vcvt.s32.f32 %v2848
    %2851 = vmin.xlane.f32.xlu0 %v2850
    %v2852 = vpop.xlane.xlu0 %2851
    %vm2853 = vcmp.eq.f32.partialorder %v2850, %v2852
    %v2854 = vsel %vm2853, %v2849, inf
    %2855 = vmin.xlane.f32.xlu0 %v2854
    %v2856 = vpop.xlane.xlu0 %2855
    %v2857 = vcvt.f32.s32 %v2856
    %v2858 = vcvt.f32.s32 %v2852
    %v2859 = vshll.u32 %v2858, 16
    %v2860 = vadd.s32 %v2859, %v2857
    %v2861 = vsel %vm2460, %v2605, 2147483647
    %v2862 = vand.u32 %v2861, 65535
    %v2863 = vshra.s32 %v2861, 16
    %v2864 = vcvt.s32.f32 %v2862
    %v2865 = vcvt.s32.f32 %v2863
    %2866 = vmin.xlane.f32.xlu0 %v2865
    %v2867 = vpop.xlane.xlu0 %2866
    %vm2868 = vcmp.eq.f32.partialorder %v2865, %v2867
    %v2869 = vsel %vm2868, %v2864, inf
    %2870 = vmin.xlane.f32.xlu0 %v2869
    %v2871 = vpop.xlane.xlu0 %2870
    %v2872 = vcvt.f32.s32 %v2871
    %v2873 = vcvt.f32.s32 %v2867
    %v2874 = vshll.u32 %v2873, 16
    %v2875 = vadd.s32 %v2874, %v2872
    %v2876 = vsel %vm2460, %v2606, 2147483647
    %v2877 = vand.u32 %v2876, 65535
    %v2878 = vshra.s32 %v2876, 16
    %v2879 = vcvt.s32.f32 %v2877
    %v2880 = vcvt.s32.f32 %v2878
    %2881 = vmin.xlane.f32.xlu0 %v2880
    %v2882 = vpop.xlane.xlu0 %2881
    %vm2883 = vcmp.eq.f32.partialorder %v2880, %v2882
    %v2884 = vsel %vm2883, %v2879, inf
    %2885 = vmin.xlane.f32.xlu0 %v2884
    %v2886 = vpop.xlane.xlu0 %2885
    %v2887 = vcvt.f32.s32 %v2886
    %v2888 = vcvt.f32.s32 %v2882
    %v2889 = vshll.u32 %v2888, 16
    %v2890 = vadd.s32 %v2889, %v2887
    %v2891 = vsel %vm2460, %v2607, 2147483647
    %v2892 = vand.u32 %v2891, 65535
    %v2893 = vshra.s32 %v2891, 16
    %v2894 = vcvt.s32.f32 %v2892
    %v2895 = vcvt.s32.f32 %v2893
    %2896 = vmin.xlane.f32.xlu0 %v2895
    %v2897 = vpop.xlane.xlu0 %2896
    %vm2898 = vcmp.eq.f32.partialorder %v2895, %v2897
    %v2899 = vsel %vm2898, %v2894, inf
    %2900 = vmin.xlane.f32.xlu0 %v2899
    %v2901 = vpop.xlane.xlu0 %2900
    %v2902 = vcvt.f32.s32 %v2901
    %v2903 = vcvt.f32.s32 %v2897
    %v2904 = vshll.u32 %v2903, 16
    %v2905 = vadd.s32 %v2904, %v2902
    %v2906 = vsel %vm2460, %v2608, 2147483647
    %v2907 = vand.u32 %v2906, 65535
    %v2908 = vshra.s32 %v2906, 16
    %v2909 = vcvt.s32.f32 %v2907
    %v2910 = vcvt.s32.f32 %v2908
    %2911 = vmin.xlane.f32.xlu0 %v2910
    %v2912 = vpop.xlane.xlu0 %2911
    %vm2913 = vcmp.eq.f32.partialorder %v2910, %v2912
    %v2914 = vsel %vm2913, %v2909, inf
    %2915 = vmin.xlane.f32.xlu0 %v2914
    %v2916 = vpop.xlane.xlu0 %2915
    %v2917 = vcvt.f32.s32 %v2916
    %v2918 = vcvt.f32.s32 %v2912
    %v2919 = vshll.u32 %v2918, 16
    %v2920 = vadd.s32 %v2919, %v2917
    %v2921 = vsel %vm2460, %v2609, 2147483647
    %v2922 = vand.u32 %v2921, 65535
    %v2923 = vshra.s32 %v2921, 16
    %v2924 = vcvt.s32.f32 %v2922
    %v2925 = vcvt.s32.f32 %v2923
    %2926 = vmin.xlane.f32.xlu0 %v2925
    %v2927 = vpop.xlane.xlu0 %2926
    %vm2928 = vcmp.eq.f32.partialorder %v2925, %v2927
    %v2929 = vsel %vm2928, %v2924, inf
    %2930 = vmin.xlane.f32.xlu0 %v2929
    %v2931 = vpop.xlane.xlu0 %2930
    %v2932 = vcvt.f32.s32 %v2931
    %v2933 = vcvt.f32.s32 %v2927
    %v2934 = vshll.u32 %v2933, 16
    %v2935 = vadd.s32 %v2934, %v2932
    %v2936 = vsel %vm2460, %v2610, 2147483647
    %v2937 = vand.u32 %v2936, 65535
    %v2938 = vshra.s32 %v2936, 16
    %v2939 = vcvt.s32.f32 %v2937
    %v2940 = vcvt.s32.f32 %v2938
    %2941 = vmin.xlane.f32.xlu0 %v2940
    %v2942 = vpop.xlane.xlu0 %2941
    %vm2943 = vcmp.eq.f32.partialorder %v2940, %v2942
    %v2944 = vsel %vm2943, %v2939, inf
    %2945 = vmin.xlane.f32.xlu0 %v2944
    %v2946 = vpop.xlane.xlu0 %2945
    %v2947 = vcvt.f32.s32 %v2946
    %v2948 = vcvt.f32.s32 %v2942
    %v2949 = vshll.u32 %v2948, 16
    %v2950 = vadd.s32 %v2949, %v2947
    %v2951 = vsel %vm2460, %v2611, 2147483647
    %v2952 = vand.u32 %v2951, 65535
    %v2953 = vshra.s32 %v2951, 16
    %v2954 = vcvt.s32.f32 %v2952
    %v2955 = vcvt.s32.f32 %v2953
    %2956 = vmin.xlane.f32.xlu0 %v2955
    %v2957 = vpop.xlane.xlu0 %2956
    %vm2958 = vcmp.eq.f32.partialorder %v2955, %v2957
    %v2959 = vsel %vm2958, %v2954, inf
    %2960 = vmin.xlane.f32.xlu0 %v2959
    %v2961 = vpop.xlane.xlu0 %2960
    %v2962 = vcvt.f32.s32 %v2961
    %v2963 = vcvt.f32.s32 %v2957
    %v2964 = vshll.u32 %v2963, 16
    %v2965 = vadd.s32 %v2964, %v2962
    %v2966 = vsel %vm2460, %v2612, 2147483647
    %v2967 = vand.u32 %v2966, 65535
    %v2968 = vshra.s32 %v2966, 16
    %v2969 = vcvt.s32.f32 %v2967
    %v2970 = vcvt.s32.f32 %v2968
    %2971 = vmin.xlane.f32.xlu0 %v2970
    %v2972 = vpop.xlane.xlu0 %2971
    %vm2973 = vcmp.eq.f32.partialorder %v2970, %v2972
    %v2974 = vsel %vm2973, %v2969, inf
    %2975 = vmin.xlane.f32.xlu0 %v2974
    %v2976 = vpop.xlane.xlu0 %2975
    %v2977 = vcvt.f32.s32 %v2976
    %v2978 = vcvt.f32.s32 %v2972
    %v2979 = vshll.u32 %v2978, 16
    %v2980 = vadd.s32 %v2979, %v2977
    %v2981 = vsel %vm2460, %v2613, 2147483647
    %v2982 = vand.u32 %v2981, 65535
    %v2983 = vshra.s32 %v2981, 16
    %v2984 = vcvt.s32.f32 %v2982
    %v2985 = vcvt.s32.f32 %v2983
    %2986 = vmin.xlane.f32.xlu0 %v2985
    %v2987 = vpop.xlane.xlu0 %2986
    %vm2988 = vcmp.eq.f32.partialorder %v2985, %v2987
    %v2989 = vsel %vm2988, %v2984, inf
    %2990 = vmin.xlane.f32.xlu0 %v2989
    %v2991 = vpop.xlane.xlu0 %2990
    %v2992 = vcvt.f32.s32 %v2991
    %v2993 = vcvt.f32.s32 %v2987
    %v2994 = vshll.u32 %v2993, 16
    %v2995 = vadd.s32 %v2994, %v2992
    %v2996 = vsel %vm2460, %v2614, 2147483647
    %v2997 = vand.u32 %v2996, 65535
    %v2998 = vshra.s32 %v2996, 16
    %v2999 = vcvt.s32.f32 %v2997
    %v3000 = vcvt.s32.f32 %v2998
    %3001 = vmin.xlane.f32.xlu0 %v3000
    %v3002 = vpop.xlane.xlu0 %3001
    %vm3003 = vcmp.eq.f32.partialorder %v3000, %v3002
    %v3004 = vsel %vm3003, %v2999, inf
    %3005 = vmin.xlane.f32.xlu0 %v3004
    %v3006 = vpop.xlane.xlu0 %3005
    %v3007 = vcvt.f32.s32 %v3006
    %v3008 = vcvt.f32.s32 %v3002
    %v3009 = vshll.u32 %v3008, 16
    %v3010 = vadd.s32 %v3009, %v3007
    %v3011 = vsel %vm2460, %v2615, 2147483647
    %v3012 = vand.u32 %v3011, 65535
    %v3013 = vshra.s32 %v3011, 16
    %v3014 = vcvt.s32.f32 %v3012
    %v3015 = vcvt.s32.f32 %v3013
    %3016 = vmin.xlane.f32.xlu0 %v3015
    %v3017 = vpop.xlane.xlu0 %3016
    %vm3018 = vcmp.eq.f32.partialorder %v3015, %v3017
    %v3019 = vsel %vm3018, %v3014, inf
    %3020 = vmin.xlane.f32.xlu0 %v3019
    %v3021 = vpop.xlane.xlu0 %3020
    %v3022 = vcvt.f32.s32 %v3021
    %v3023 = vcvt.f32.s32 %v3017
    %v3024 = vshll.u32 %v3023, 16
    %v3025 = vadd.s32 %v3024, %v3022
    %v3026 = vsel %vm2460, %v2616, 2147483647
    %v3027 = vand.u32 %v3026, 65535
    %v3028 = vshra.s32 %v3026, 16
    %v3029 = vcvt.s32.f32 %v3027
    %v3030 = vcvt.s32.f32 %v3028
    %3031 = vmin.xlane.f32.xlu0 %v3030
    %v3032 = vpop.xlane.xlu0 %3031
    %vm3033 = vcmp.eq.f32.partialorder %v3030, %v3032
    %v3034 = vsel %vm3033, %v3029, inf
    %3035 = vmin.xlane.f32.xlu0 %v3034
    %v3036 = vpop.xlane.xlu0 %3035
    %v3037 = vcvt.f32.s32 %v3036
    %v3038 = vcvt.f32.s32 %v3032
    %v3039 = vshll.u32 %v3038, 16
    %v3040 = vadd.s32 %v3039, %v3037
    %v3041 = vsel %vm2460, %v2617, 2147483647
    %v3042 = vand.u32 %v3041, 65535
    %v3043 = vshra.s32 %v3041, 16
    %v3044 = vcvt.s32.f32 %v3042
    %v3045 = vcvt.s32.f32 %v3043
    %3046 = vmin.xlane.f32.xlu0 %v3045
    %v3047 = vpop.xlane.xlu0 %3046
    %vm3048 = vcmp.eq.f32.partialorder %v3045, %v3047
    %v3049 = vsel %vm3048, %v3044, inf
    %3050 = vmin.xlane.f32.xlu0 %v3049
    %v3051 = vpop.xlane.xlu0 %3050
    %v3052 = vcvt.f32.s32 %v3051
    %v3053 = vcvt.f32.s32 %v3047
    %v3054 = vshll.u32 %v3053, 16
    %v3055 = vadd.s32 %v3054, %v3052
    %v3056 = vsel %vm2460, %v2618, 2147483647
    %v3057 = vand.u32 %v3056, 65535
    %v3058 = vshra.s32 %v3056, 16
    %v3059 = vcvt.s32.f32 %v3057
    %v3060 = vcvt.s32.f32 %v3058
    %3061 = vmin.xlane.f32.xlu0 %v3060
    %v3062 = vpop.xlane.xlu0 %3061
    %vm3063 = vcmp.eq.f32.partialorder %v3060, %v3062
    %v3064 = vsel %vm3063, %v3059, inf
    %3065 = vmin.xlane.f32.xlu0 %v3064
    %v3066 = vpop.xlane.xlu0 %3065
    %v3067 = vcvt.f32.s32 %v3066
    %v3068 = vcvt.f32.s32 %v3062
    %v3069 = vshll.u32 %v3068, 16
    %v3070 = vadd.s32 %v3069, %v3067
    %v3071 = vsel %vm2460, %v2619, 2147483647
    %v3072 = vand.u32 %v3071, 65535
    %v3073 = vshra.s32 %v3071, 16
    %v3074 = vcvt.s32.f32 %v3072
    %v3075 = vcvt.s32.f32 %v3073
    %3076 = vmin.xlane.f32.xlu0 %v3075
    %v3077 = vpop.xlane.xlu0 %3076
    %vm3078 = vcmp.eq.f32.partialorder %v3075, %v3077
    %v3079 = vsel %vm3078, %v3074, inf
    %3080 = vmin.xlane.f32.xlu0 %v3079
    %v3081 = vpop.xlane.xlu0 %3080
    %v3082 = vcvt.f32.s32 %v3081
    %v3083 = vcvt.f32.s32 %v3077
    %v3084 = vshll.u32 %v3083, 16
    %v3085 = vadd.s32 %v3084, %v3082
    %v3086 = vsel %vm2460, %v2620, 2147483647
    %v3087 = vand.u32 %v3086, 65535
    %v3088 = vshra.s32 %v3086, 16
    %v3089 = vcvt.s32.f32 %v3087
    %v3090 = vcvt.s32.f32 %v3088
    %3091 = vmin.xlane.f32.xlu0 %v3090
    %v3092 = vpop.xlane.xlu0 %3091
    %vm3093 = vcmp.eq.f32.partialorder %v3090, %v3092
    %v3094 = vsel %vm3093, %v3089, inf
    %3095 = vmin.xlane.f32.xlu0 %v3094
    %v3096 = vpop.xlane.xlu0 %3095
    %v3097 = vcvt.f32.s32 %v3096
    %v3098 = vcvt.f32.s32 %v3092
    %v3099 = vshll.u32 %v3098, 16
    %v3100 = vadd.s32 %v3099, %v3097
    %vm3101 = vcmp.eq.s32.totalorder %v2459, %v2635
    %vm3102 = vcmp.eq.s32.totalorder %v2459, %v2650
    %vm3103 = vcmp.eq.s32.totalorder %v2459, %v2665
    %vm3104 = vcmp.eq.s32.totalorder %v2459, %v2680
    %vm3105 = vcmp.eq.s32.totalorder %v2459, %v2695
    %vm3106 = vcmp.eq.s32.totalorder %v2459, %v2710
    %vm3107 = vcmp.eq.s32.totalorder %v2459, %v2725
    %vm3108 = vcmp.eq.s32.totalorder %v2459, %v2740
    %vm3109 = vcmp.eq.s32.totalorder %v2459, %v2755
    %vm3110 = vcmp.eq.s32.totalorder %v2459, %v2770
    %vm3111 = vcmp.eq.s32.totalorder %v2459, %v2785
    %vm3112 = vcmp.eq.s32.totalorder %v2459, %v2800
    %vm3113 = vcmp.eq.s32.totalorder %v2459, %v2815
    %vm3114 = vcmp.eq.s32.totalorder %v2459, %v2830
    %vm3115 = vcmp.eq.s32.totalorder %v2459, %v2845
    %vm3116 = vcmp.eq.s32.totalorder %v2459, %v2860
    %vm3117 = vcmp.eq.s32.totalorder %v2459, %v2875
    %vm3118 = vcmp.eq.s32.totalorder %v2459, %v2890
    %vm3119 = vcmp.eq.s32.totalorder %v2459, %v2905
    %vm3120 = vcmp.eq.s32.totalorder %v2459, %v2920
    %vm3121 = vcmp.eq.s32.totalorder %v2459, %v2935
    %vm3122 = vcmp.eq.s32.totalorder %v2459, %v2950
    %vm3123 = vcmp.eq.s32.totalorder %v2459, %v2965
    %vm3124 = vcmp.eq.s32.totalorder %v2459, %v2980
    %vm3125 = vcmp.eq.s32.totalorder %v2459, %v2995
    %vm3126 = vcmp.eq.s32.totalorder %v2459, %v3010
    %vm3127 = vcmp.eq.s32.totalorder %v2459, %v3025
    %vm3128 = vcmp.eq.s32.totalorder %v2459, %v3040
    %vm3129 = vcmp.eq.s32.totalorder %v2459, %v3055
    %vm3130 = vcmp.eq.s32.totalorder %v2459, %v3070
    %vm3131 = vcmp.eq.s32.totalorder %v2459, %v3085
    %vm3132 = vcmp.eq.s32.totalorder %v2459, %v3100
    %v3133 = vsel %vm3101, -1e+30, %v2332
    %v3134 = vsel %vm3102, -1e+30, %v2335
    %v3135 = vsel %vm3103, -1e+30, %v2340
    %v3136 = vsel %vm3104, -1e+30, %v2343
    %v3137 = vsel %vm3105, -1e+30, %v2348
    %v3138 = vsel %vm3106, -1e+30, %v2351
    %v3139 = vsel %vm3107, -1e+30, %v2356
    %v3140 = vsel %vm3108, -1e+30, %v2359
    %v3141 = vsel %vm3109, -1e+30, %v2364
    %v3142 = vsel %vm3110, -1e+30, %v2367
    %v3143 = vsel %vm3111, -1e+30, %v2372
    %v3144 = vsel %vm3112, -1e+30, %v2375
    %v3145 = vsel %vm3113, -1e+30, %v2380
    %v3146 = vsel %vm3114, -1e+30, %v2383
    %v3147 = vsel %vm3115, -1e+30, %v2388
    %v3148 = vsel %vm3116, -1e+30, %v2391
    %v3149 = vsel %vm3117, -1e+30, %v2396
    %v3150 = vsel %vm3118, -1e+30, %v2399
    %v3151 = vsel %vm3119, -1e+30, %v2404
    %v3152 = vsel %vm3120, -1e+30, %v2407
    %v3153 = vsel %vm3121, -1e+30, %v2412
    %v3154 = vsel %vm3122, -1e+30, %v2415
    %v3155 = vsel %vm3123, -1e+30, %v2420
    %v3156 = vsel %vm3124, -1e+30, %v2423
    %v3157 = vsel %vm3125, -1e+30, %v2428
    %v3158 = vsel %vm3126, -1e+30, %v2431
    %v3159 = vsel %vm3127, -1e+30, %v2436
    %v3160 = vsel %vm3128, -1e+30, %v2439
    %v3161 = vsel %vm3129, -1e+30, %v2444
    %v3162 = vsel %vm3130, -1e+30, %v2447
    %v3163 = vsel %vm3131, -1e+30, %v2452
    %v3164 = vsel %vm3132, -1e+30, %v2455
    %v3165 = vsel %vm2460, %v3133, -inf
    %3166 = vmax.xlane.f32.xlu0 %v3165
    %v3167 = vpop.xlane.xlu0 %3166
    %v3168 = vsel %vm2460, %v3134, -inf
    %3169 = vmax.xlane.f32.xlu0 %v3168
    %v3170 = vpop.xlane.xlu0 %3169
    %v3171 = vsel %vm2460, %v3135, -inf
    %3172 = vmax.xlane.f32.xlu0 %v3171
    %v3173 = vpop.xlane.xlu0 %3172
    %v3174 = vsel %vm2460, %v3136, -inf
    %3175 = vmax.xlane.f32.xlu0 %v3174
    %v3176 = vpop.xlane.xlu0 %3175
    %v3177 = vsel %vm2460, %v3137, -inf
    %3178 = vmax.xlane.f32.xlu0 %v3177
    %v3179 = vpop.xlane.xlu0 %3178
    %v3180 = vsel %vm2460, %v3138, -inf
    %3181 = vmax.xlane.f32.xlu0 %v3180
    %v3182 = vpop.xlane.xlu0 %3181
    %v3183 = vsel %vm2460, %v3139, -inf
    %3184 = vmax.xlane.f32.xlu0 %v3183
    %v3185 = vpop.xlane.xlu0 %3184
    %v3186 = vsel %vm2460, %v3140, -inf
    %3187 = vmax.xlane.f32.xlu0 %v3186
    %v3188 = vpop.xlane.xlu0 %3187
    %v3189 = vsel %vm2460, %v3141, -inf
    %3190 = vmax.xlane.f32.xlu0 %v3189
    %v3191 = vpop.xlane.xlu0 %3190
    %v3192 = vsel %vm2460, %v3142, -inf
    %3193 = vmax.xlane.f32.xlu0 %v3192
    %v3194 = vpop.xlane.xlu0 %3193
    %v3195 = vsel %vm2460, %v3143, -inf
    %3196 = vmax.xlane.f32.xlu0 %v3195
    %v3197 = vpop.xlane.xlu0 %3196
    %v3198 = vsel %vm2460, %v3144, -inf
    %3199 = vmax.xlane.f32.xlu0 %v3198
    %v3200 = vpop.xlane.xlu0 %3199
    %v3201 = vsel %vm2460, %v3145, -inf
    %3202 = vmax.xlane.f32.xlu0 %v3201
    %v3203 = vpop.xlane.xlu0 %3202
    %v3204 = vsel %vm2460, %v3146, -inf
    %3205 = vmax.xlane.f32.xlu0 %v3204
    %v3206 = vpop.xlane.xlu0 %3205
    %v3207 = vsel %vm2460, %v3147, -inf
    %3208 = vmax.xlane.f32.xlu0 %v3207
    %v3209 = vpop.xlane.xlu0 %3208
    %v3210 = vsel %vm2460, %v3148, -inf
    %3211 = vmax.xlane.f32.xlu0 %v3210
    %v3212 = vpop.xlane.xlu0 %3211
    %v3213 = vsel %vm2460, %v3149, -inf
    %3214 = vmax.xlane.f32.xlu0 %v3213
    %v3215 = vpop.xlane.xlu0 %3214
    %v3216 = vsel %vm2460, %v3150, -inf
    %3217 = vmax.xlane.f32.xlu0 %v3216
    %v3218 = vpop.xlane.xlu0 %3217
    %v3219 = vsel %vm2460, %v3151, -inf
    %3220 = vmax.xlane.f32.xlu0 %v3219
    %v3221 = vpop.xlane.xlu0 %3220
    %v3222 = vsel %vm2460, %v3152, -inf
    %3223 = vmax.xlane.f32.xlu0 %v3222
    %v3224 = vpop.xlane.xlu0 %3223
    %v3225 = vsel %vm2460, %v3153, -inf
    %3226 = vmax.xlane.f32.xlu0 %v3225
    %v3227 = vpop.xlane.xlu0 %3226
    %v3228 = vsel %vm2460, %v3154, -inf
    %3229 = vmax.xlane.f32.xlu0 %v3228
    %v3230 = vpop.xlane.xlu0 %3229
    %v3231 = vsel %vm2460, %v3155, -inf
    %3232 = vmax.xlane.f32.xlu0 %v3231
    %v3233 = vpop.xlane.xlu0 %3232
    %v3234 = vsel %vm2460, %v3156, -inf
    %3235 = vmax.xlane.f32.xlu0 %v3234
    %v3236 = vpop.xlane.xlu0 %3235
    %v3237 = vsel %vm2460, %v3157, -inf
    %3238 = vmax.xlane.f32.xlu0 %v3237
    %v3239 = vpop.xlane.xlu0 %3238
    %v3240 = vsel %vm2460, %v3158, -inf
    %3241 = vmax.xlane.f32.xlu0 %v3240
    %v3242 = vpop.xlane.xlu0 %3241
    %v3243 = vsel %vm2460, %v3159, -inf
    %3244 = vmax.xlane.f32.xlu0 %v3243
    %v3245 = vpop.xlane.xlu0 %3244
    %v3246 = vsel %vm2460, %v3160, -inf
    %3247 = vmax.xlane.f32.xlu0 %v3246
    %v3248 = vpop.xlane.xlu0 %3247
    %v3249 = vsel %vm2460, %v3161, -inf
    %3250 = vmax.xlane.f32.xlu0 %v3249
    %v3251 = vpop.xlane.xlu0 %3250
    %v3252 = vsel %vm2460, %v3162, -inf
    %3253 = vmax.xlane.f32.xlu0 %v3252
    %v3254 = vpop.xlane.xlu0 %3253
    %v3255 = vsel %vm2460, %v3163, -inf
    %3256 = vmax.xlane.f32.xlu0 %v3255
    %v3257 = vpop.xlane.xlu0 %3256
    %v3258 = vsel %vm2460, %v3164, -inf
    %3259 = vmax.xlane.f32.xlu0 %v3258
    %v3260 = vpop.xlane.xlu0 %3259
    %vm3261 = vcmp.eq.f32.partialorder %v3133, %v3167
    %vm3262 = vcmp.eq.f32.partialorder %v3134, %v3170
    %vm3263 = vcmp.eq.f32.partialorder %v3135, %v3173
    %vm3264 = vcmp.eq.f32.partialorder %v3136, %v3176
    %vm3265 = vcmp.eq.f32.partialorder %v3137, %v3179
    %vm3266 = vcmp.eq.f32.partialorder %v3138, %v3182
    %vm3267 = vcmp.eq.f32.partialorder %v3139, %v3185
    %vm3268 = vcmp.eq.f32.partialorder %v3140, %v3188
    %vm3269 = vcmp.eq.f32.partialorder %v3141, %v3191
    %vm3270 = vcmp.eq.f32.partialorder %v3142, %v3194
    %vm3271 = vcmp.eq.f32.partialorder %v3143, %v3197
    %vm3272 = vcmp.eq.f32.partialorder %v3144, %v3200
    %vm3273 = vcmp.eq.f32.partialorder %v3145, %v3203
    %vm3274 = vcmp.eq.f32.partialorder %v3146, %v3206
    %vm3275 = vcmp.eq.f32.partialorder %v3147, %v3209
    %vm3276 = vcmp.eq.f32.partialorder %v3148, %v3212
    %vm3277 = vcmp.eq.f32.partialorder %v3149, %v3215
    %vm3278 = vcmp.eq.f32.partialorder %v3150, %v3218
    %vm3279 = vcmp.eq.f32.partialorder %v3151, %v3221
    %vm3280 = vcmp.eq.f32.partialorder %v3152, %v3224
    %vm3281 = vcmp.eq.f32.partialorder %v3153, %v3227
    %vm3282 = vcmp.eq.f32.partialorder %v3154, %v3230
    %vm3283 = vcmp.eq.f32.partialorder %v3155, %v3233
    %vm3284 = vcmp.eq.f32.partialorder %v3156, %v3236
    %vm3285 = vcmp.eq.f32.partialorder %v3157, %v3239
    %vm3286 = vcmp.eq.f32.partialorder %v3158, %v3242
    %vm3287 = vcmp.eq.f32.partialorder %v3159, %v3245
    %vm3288 = vcmp.eq.f32.partialorder %v3160, %v3248
    %vm3289 = vcmp.eq.f32.partialorder %v3161, %v3251
    %vm3290 = vcmp.eq.f32.partialorder %v3162, %v3254
    %vm3291 = vcmp.eq.f32.partialorder %v3163, %v3257
    %vm3292 = vcmp.eq.f32.partialorder %v3164, %v3260
    %v3293 = vsel %vm3261, %v2459, 6
    %v3294 = vsel %vm3262, %v2459, 6
    %v3295 = vsel %vm3263, %v2459, 6
    %v3296 = vsel %vm3264, %v2459, 6
    %v3297 = vsel %vm3265, %v2459, 6
    %v3298 = vsel %vm3266, %v2459, 6
    %v3299 = vsel %vm3267, %v2459, 6
    %v3300 = vsel %vm3268, %v2459, 6
    %v3301 = vsel %vm3269, %v2459, 6
    %v3302 = vsel %vm3270, %v2459, 6
    %v3303 = vsel %vm3271, %v2459, 6
    %v3304 = vsel %vm3272, %v2459, 6
    %v3305 = vsel %vm3273, %v2459, 6
    %v3306 = vsel %vm3274, %v2459, 6
    %v3307 = vsel %vm3275, %v2459, 6
    %v3308 = vsel %vm3276, %v2459, 6
    %v3309 = vsel %vm3277, %v2459, 6
    %v3310 = vsel %vm3278, %v2459, 6
    %v3311 = vsel %vm3279, %v2459, 6
    %v3312 = vsel %vm3280, %v2459, 6
    %v3313 = vsel %vm3281, %v2459, 6
    %v3314 = vsel %vm3282, %v2459, 6
    %v3315 = vsel %vm3283, %v2459, 6
    %v3316 = vsel %vm3284, %v2459, 6
    %v3317 = vsel %vm3285, %v2459, 6
    %v3318 = vsel %vm3286, %v2459, 6
    %v3319 = vsel %vm3287, %v2459, 6
    %v3320 = vsel %vm3288, %v2459, 6
    %v3321 = vsel %vm3289, %v2459, 6
    %v3322 = vsel %vm3290, %v2459, 6
    %v3323 = vsel %vm3291, %v2459, 6
    %v3324 = vsel %vm3292, %v2459, 6
    %v3325 = vsel %vm2460, %v3293, 2147483647
    %v3326 = vand.u32 %v3325, 65535
    %v3327 = vshra.s32 %v3325, 16
    %v3328 = vcvt.s32.f32 %v3326
    %v3329 = vcvt.s32.f32 %v3327
    %3330 = vmin.xlane.f32.xlu0 %v3329
    %v3331 = vpop.xlane.xlu0 %3330
    %vm3332 = vcmp.eq.f32.partialorder %v3329, %v3331
    %v3333 = vsel %vm3332, %v3328, inf
    %3334 = vmin.xlane.f32.xlu0 %v3333
    %v3335 = vpop.xlane.xlu0 %3334
    %v3336 = vcvt.f32.s32 %v3335
    %v3337 = vcvt.f32.s32 %v3331
    %v3338 = vshll.u32 %v3337, 16
    %v3339 = vadd.s32 %v3338, %v3336
    %v3340 = vsel %vm2460, %v3294, 2147483647
    %v3341 = vand.u32 %v3340, 65535
    %v3342 = vshra.s32 %v3340, 16
    %v3343 = vcvt.s32.f32 %v3341
    %v3344 = vcvt.s32.f32 %v3342
    %3345 = vmin.xlane.f32.xlu0 %v3344
    %v3346 = vpop.xlane.xlu0 %3345
    %vm3347 = vcmp.eq.f32.partialorder %v3344, %v3346
    %v3348 = vsel %vm3347, %v3343, inf
    %3349 = vmin.xlane.f32.xlu0 %v3348
    %v3350 = vpop.xlane.xlu0 %3349
    %v3351 = vcvt.f32.s32 %v3350
    %v3352 = vcvt.f32.s32 %v3346
    %v3353 = vshll.u32 %v3352, 16
    %v3354 = vadd.s32 %v3353, %v3351
    %v3355 = vsel %vm2460, %v3295, 2147483647
    %v3356 = vand.u32 %v3355, 65535
    %v3357 = vshra.s32 %v3355, 16
    %v3358 = vcvt.s32.f32 %v3356
    %v3359 = vcvt.s32.f32 %v3357
    %3360 = vmin.xlane.f32.xlu0 %v3359
    %v3361 = vpop.xlane.xlu0 %3360
    %vm3362 = vcmp.eq.f32.partialorder %v3359, %v3361
    %v3363 = vsel %vm3362, %v3358, inf
    %3364 = vmin.xlane.f32.xlu0 %v3363
    %v3365 = vpop.xlane.xlu0 %3364
    %v3366 = vcvt.f32.s32 %v3365
    %v3367 = vcvt.f32.s32 %v3361
    %v3368 = vshll.u32 %v3367, 16
    %v3369 = vadd.s32 %v3368, %v3366
    %v3370 = vsel %vm2460, %v3296, 2147483647
    %v3371 = vand.u32 %v3370, 65535
    %v3372 = vshra.s32 %v3370, 16
    %v3373 = vcvt.s32.f32 %v3371
    %v3374 = vcvt.s32.f32 %v3372
    %3375 = vmin.xlane.f32.xlu0 %v3374
    %v3376 = vpop.xlane.xlu0 %3375
    %vm3377 = vcmp.eq.f32.partialorder %v3374, %v3376
    %v3378 = vsel %vm3377, %v3373, inf
    %3379 = vmin.xlane.f32.xlu0 %v3378
    %v3380 = vpop.xlane.xlu0 %3379
    %v3381 = vcvt.f32.s32 %v3380
    %v3382 = vcvt.f32.s32 %v3376
    %v3383 = vshll.u32 %v3382, 16
    %v3384 = vadd.s32 %v3383, %v3381
    %v3385 = vsel %vm2460, %v3297, 2147483647
    %v3386 = vand.u32 %v3385, 65535
    %v3387 = vshra.s32 %v3385, 16
    %v3388 = vcvt.s32.f32 %v3386
    %v3389 = vcvt.s32.f32 %v3387
    %3390 = vmin.xlane.f32.xlu0 %v3389
    %v3391 = vpop.xlane.xlu0 %3390
    %vm3392 = vcmp.eq.f32.partialorder %v3389, %v3391
    %v3393 = vsel %vm3392, %v3388, inf
    %3394 = vmin.xlane.f32.xlu0 %v3393
    %v3395 = vpop.xlane.xlu0 %3394
    %v3396 = vcvt.f32.s32 %v3395
    %v3397 = vcvt.f32.s32 %v3391
    %v3398 = vshll.u32 %v3397, 16
    %v3399 = vadd.s32 %v3398, %v3396
    %v3400 = vsel %vm2460, %v3298, 2147483647
    %v3401 = vand.u32 %v3400, 65535
    %v3402 = vshra.s32 %v3400, 16
    %v3403 = vcvt.s32.f32 %v3401
    %v3404 = vcvt.s32.f32 %v3402
    %3405 = vmin.xlane.f32.xlu0 %v3404
    %v3406 = vpop.xlane.xlu0 %3405
    %vm3407 = vcmp.eq.f32.partialorder %v3404, %v3406
    %v3408 = vsel %vm3407, %v3403, inf
    %3409 = vmin.xlane.f32.xlu0 %v3408
    %v3410 = vpop.xlane.xlu0 %3409
    %v3411 = vcvt.f32.s32 %v3410
    %v3412 = vcvt.f32.s32 %v3406
    %v3413 = vshll.u32 %v3412, 16
    %v3414 = vadd.s32 %v3413, %v3411
    %v3415 = vsel %vm2460, %v3299, 2147483647
    %v3416 = vand.u32 %v3415, 65535
    %v3417 = vshra.s32 %v3415, 16
    %v3418 = vcvt.s32.f32 %v3416
    %v3419 = vcvt.s32.f32 %v3417
    %3420 = vmin.xlane.f32.xlu0 %v3419
    %v3421 = vpop.xlane.xlu0 %3420
    %vm3422 = vcmp.eq.f32.partialorder %v3419, %v3421
    %v3423 = vsel %vm3422, %v3418, inf
    %3424 = vmin.xlane.f32.xlu0 %v3423
    %v3425 = vpop.xlane.xlu0 %3424
    %v3426 = vcvt.f32.s32 %v3425
    %v3427 = vcvt.f32.s32 %v3421
    %v3428 = vshll.u32 %v3427, 16
    %v3429 = vadd.s32 %v3428, %v3426
    %v3430 = vsel %vm2460, %v3300, 2147483647
    %v3431 = vand.u32 %v3430, 65535
    %v3432 = vshra.s32 %v3430, 16
    %v3433 = vcvt.s32.f32 %v3431
    %v3434 = vcvt.s32.f32 %v3432
    %3435 = vmin.xlane.f32.xlu0 %v3434
    %v3436 = vpop.xlane.xlu0 %3435
    %vm3437 = vcmp.eq.f32.partialorder %v3434, %v3436
    %v3438 = vsel %vm3437, %v3433, inf
    %3439 = vmin.xlane.f32.xlu0 %v3438
    %v3440 = vpop.xlane.xlu0 %3439
    %v3441 = vcvt.f32.s32 %v3440
    %v3442 = vcvt.f32.s32 %v3436
    %v3443 = vshll.u32 %v3442, 16
    %v3444 = vadd.s32 %v3443, %v3441
    %v3445 = vsel %vm2460, %v3301, 2147483647
    %v3446 = vand.u32 %v3445, 65535
    %v3447 = vshra.s32 %v3445, 16
    %v3448 = vcvt.s32.f32 %v3446
    %v3449 = vcvt.s32.f32 %v3447
    %3450 = vmin.xlane.f32.xlu0 %v3449
    %v3451 = vpop.xlane.xlu0 %3450
    %vm3452 = vcmp.eq.f32.partialorder %v3449, %v3451
    %v3453 = vsel %vm3452, %v3448, inf
    %3454 = vmin.xlane.f32.xlu0 %v3453
    %v3455 = vpop.xlane.xlu0 %3454
    %v3456 = vcvt.f32.s32 %v3455
    %v3457 = vcvt.f32.s32 %v3451
    %v3458 = vshll.u32 %v3457, 16
    %v3459 = vadd.s32 %v3458, %v3456
    %v3460 = vsel %vm2460, %v3302, 2147483647
    %v3461 = vand.u32 %v3460, 65535
    %v3462 = vshra.s32 %v3460, 16
    %v3463 = vcvt.s32.f32 %v3461
    %v3464 = vcvt.s32.f32 %v3462
    %3465 = vmin.xlane.f32.xlu0 %v3464
    %v3466 = vpop.xlane.xlu0 %3465
    %vm3467 = vcmp.eq.f32.partialorder %v3464, %v3466
    %v3468 = vsel %vm3467, %v3463, inf
    %3469 = vmin.xlane.f32.xlu0 %v3468
    %v3470 = vpop.xlane.xlu0 %3469
    %v3471 = vcvt.f32.s32 %v3470
    %v3472 = vcvt.f32.s32 %v3466
    %v3473 = vshll.u32 %v3472, 16
    %v3474 = vadd.s32 %v3473, %v3471
    %v3475 = vsel %vm2460, %v3303, 2147483647
    %v3476 = vand.u32 %v3475, 65535
    %v3477 = vshra.s32 %v3475, 16
    %v3478 = vcvt.s32.f32 %v3476
    %v3479 = vcvt.s32.f32 %v3477
    %3480 = vmin.xlane.f32.xlu0 %v3479
    %v3481 = vpop.xlane.xlu0 %3480
    %vm3482 = vcmp.eq.f32.partialorder %v3479, %v3481
    %v3483 = vsel %vm3482, %v3478, inf
    %3484 = vmin.xlane.f32.xlu0 %v3483
    %v3485 = vpop.xlane.xlu0 %3484
    %v3486 = vcvt.f32.s32 %v3485
    %v3487 = vcvt.f32.s32 %v3481
    %v3488 = vshll.u32 %v3487, 16
    %v3489 = vadd.s32 %v3488, %v3486
    %v3490 = vsel %vm2460, %v3304, 2147483647
    %v3491 = vand.u32 %v3490, 65535
    %v3492 = vshra.s32 %v3490, 16
    %v3493 = vcvt.s32.f32 %v3491
    %v3494 = vcvt.s32.f32 %v3492
    %3495 = vmin.xlane.f32.xlu0 %v3494
    %v3496 = vpop.xlane.xlu0 %3495
    %vm3497 = vcmp.eq.f32.partialorder %v3494, %v3496
    %v3498 = vsel %vm3497, %v3493, inf
    %3499 = vmin.xlane.f32.xlu0 %v3498
    %v3500 = vpop.xlane.xlu0 %3499
    %v3501 = vcvt.f32.s32 %v3500
    %v3502 = vcvt.f32.s32 %v3496
    %v3503 = vshll.u32 %v3502, 16
    %v3504 = vadd.s32 %v3503, %v3501
    %v3505 = vsel %vm2460, %v3305, 2147483647
    %v3506 = vand.u32 %v3505, 65535
    %v3507 = vshra.s32 %v3505, 16
    %v3508 = vcvt.s32.f32 %v3506
    %v3509 = vcvt.s32.f32 %v3507
    %3510 = vmin.xlane.f32.xlu0 %v3509
    %v3511 = vpop.xlane.xlu0 %3510
    %vm3512 = vcmp.eq.f32.partialorder %v3509, %v3511
    %v3513 = vsel %vm3512, %v3508, inf
    %3514 = vmin.xlane.f32.xlu0 %v3513
    %v3515 = vpop.xlane.xlu0 %3514
    %v3516 = vcvt.f32.s32 %v3515
    %v3517 = vcvt.f32.s32 %v3511
    %v3518 = vshll.u32 %v3517, 16
    %v3519 = vadd.s32 %v3518, %v3516
    %v3520 = vsel %vm2460, %v3306, 2147483647
    %v3521 = vand.u32 %v3520, 65535
    %v3522 = vshra.s32 %v3520, 16
    %v3523 = vcvt.s32.f32 %v3521
    %v3524 = vcvt.s32.f32 %v3522
    %3525 = vmin.xlane.f32.xlu0 %v3524
    %v3526 = vpop.xlane.xlu0 %3525
    %vm3527 = vcmp.eq.f32.partialorder %v3524, %v3526
    %v3528 = vsel %vm3527, %v3523, inf
    %3529 = vmin.xlane.f32.xlu0 %v3528
    %v3530 = vpop.xlane.xlu0 %3529
    %v3531 = vcvt.f32.s32 %v3530
    %v3532 = vcvt.f32.s32 %v3526
    %v3533 = vshll.u32 %v3532, 16
    %v3534 = vadd.s32 %v3533, %v3531
    %v3535 = vsel %vm2460, %v3307, 2147483647
    %v3536 = vand.u32 %v3535, 65535
    %v3537 = vshra.s32 %v3535, 16
    %v3538 = vcvt.s32.f32 %v3536
    %v3539 = vcvt.s32.f32 %v3537
    %3540 = vmin.xlane.f32.xlu0 %v3539
    %v3541 = vpop.xlane.xlu0 %3540
    %vm3542 = vcmp.eq.f32.partialorder %v3539, %v3541
    %v3543 = vsel %vm3542, %v3538, inf
    %3544 = vmin.xlane.f32.xlu0 %v3543
    %v3545 = vpop.xlane.xlu0 %3544
    %v3546 = vcvt.f32.s32 %v3545
    %v3547 = vcvt.f32.s32 %v3541
    %v3548 = vshll.u32 %v3547, 16
    %v3549 = vadd.s32 %v3548, %v3546
    %v3550 = vsel %vm2460, %v3308, 2147483647
    %v3551 = vand.u32 %v3550, 65535
    %v3552 = vshra.s32 %v3550, 16
    %v3553 = vcvt.s32.f32 %v3551
    %v3554 = vcvt.s32.f32 %v3552
    %3555 = vmin.xlane.f32.xlu0 %v3554
    %v3556 = vpop.xlane.xlu0 %3555
    %vm3557 = vcmp.eq.f32.partialorder %v3554, %v3556
    %v3558 = vsel %vm3557, %v3553, inf
    %3559 = vmin.xlane.f32.xlu0 %v3558
    %v3560 = vpop.xlane.xlu0 %3559
    %v3561 = vcvt.f32.s32 %v3560
    %v3562 = vcvt.f32.s32 %v3556
    %v3563 = vshll.u32 %v3562, 16
    %v3564 = vadd.s32 %v3563, %v3561
    %v3565 = vsel %vm2460, %v3309, 2147483647
    %v3566 = vand.u32 %v3565, 65535
    %v3567 = vshra.s32 %v3565, 16
    %v3568 = vcvt.s32.f32 %v3566
    %v3569 = vcvt.s32.f32 %v3567
    %3570 = vmin.xlane.f32.xlu0 %v3569
    %v3571 = vpop.xlane.xlu0 %3570
    %vm3572 = vcmp.eq.f32.partialorder %v3569, %v3571
    %v3573 = vsel %vm3572, %v3568, inf
    %3574 = vmin.xlane.f32.xlu0 %v3573
    %v3575 = vpop.xlane.xlu0 %3574
    %v3576 = vcvt.f32.s32 %v3575
    %v3577 = vcvt.f32.s32 %v3571
    %v3578 = vshll.u32 %v3577, 16
    %v3579 = vadd.s32 %v3578, %v3576
    %v3580 = vsel %vm2460, %v3310, 2147483647
    %v3581 = vand.u32 %v3580, 65535
    %v3582 = vshra.s32 %v3580, 16
    %v3583 = vcvt.s32.f32 %v3581
    %v3584 = vcvt.s32.f32 %v3582
    %3585 = vmin.xlane.f32.xlu0 %v3584
    %v3586 = vpop.xlane.xlu0 %3585
    %vm3587 = vcmp.eq.f32.partialorder %v3584, %v3586
    %v3588 = vsel %vm3587, %v3583, inf
    %3589 = vmin.xlane.f32.xlu0 %v3588
    %v3590 = vpop.xlane.xlu0 %3589
    %v3591 = vcvt.f32.s32 %v3590
    %v3592 = vcvt.f32.s32 %v3586
    %v3593 = vshll.u32 %v3592, 16
    %v3594 = vadd.s32 %v3593, %v3591
    %v3595 = vsel %vm2460, %v3311, 2147483647
    %v3596 = vand.u32 %v3595, 65535
    %v3597 = vshra.s32 %v3595, 16
    %v3598 = vcvt.s32.f32 %v3596
    %v3599 = vcvt.s32.f32 %v3597
    %3600 = vmin.xlane.f32.xlu0 %v3599
    %v3601 = vpop.xlane.xlu0 %3600
    %vm3602 = vcmp.eq.f32.partialorder %v3599, %v3601
    %v3603 = vsel %vm3602, %v3598, inf
    %3604 = vmin.xlane.f32.xlu0 %v3603
    %v3605 = vpop.xlane.xlu0 %3604
    %v3606 = vcvt.f32.s32 %v3605
    %v3607 = vcvt.f32.s32 %v3601
    %v3608 = vshll.u32 %v3607, 16
    %v3609 = vadd.s32 %v3608, %v3606
    %v3610 = vsel %vm2460, %v3312, 2147483647
    %v3611 = vand.u32 %v3610, 65535
    %v3612 = vshra.s32 %v3610, 16
    %v3613 = vcvt.s32.f32 %v3611
    %v3614 = vcvt.s32.f32 %v3612
    %3615 = vmin.xlane.f32.xlu0 %v3614
    %v3616 = vpop.xlane.xlu0 %3615
    %vm3617 = vcmp.eq.f32.partialorder %v3614, %v3616
    %v3618 = vsel %vm3617, %v3613, inf
    %3619 = vmin.xlane.f32.xlu0 %v3618
    %v3620 = vpop.xlane.xlu0 %3619
    %v3621 = vcvt.f32.s32 %v3620
    %v3622 = vcvt.f32.s32 %v3616
    %v3623 = vshll.u32 %v3622, 16
    %v3624 = vadd.s32 %v3623, %v3621
    %v3625 = vsel %vm2460, %v3313, 2147483647
    %v3626 = vand.u32 %v3625, 65535
    %v3627 = vshra.s32 %v3625, 16
    %v3628 = vcvt.s32.f32 %v3626
    %v3629 = vcvt.s32.f32 %v3627
    %3630 = vmin.xlane.f32.xlu0 %v3629
    %v3631 = vpop.xlane.xlu0 %3630
    %vm3632 = vcmp.eq.f32.partialorder %v3629, %v3631
    %v3633 = vsel %vm3632, %v3628, inf
    %3634 = vmin.xlane.f32.xlu0 %v3633
    %v3635 = vpop.xlane.xlu0 %3634
    %v3636 = vcvt.f32.s32 %v3635
    %v3637 = vcvt.f32.s32 %v3631
    %v3638 = vshll.u32 %v3637, 16
    %v3639 = vadd.s32 %v3638, %v3636
    %v3640 = vsel %vm2460, %v3314, 2147483647
    %v3641 = vand.u32 %v3640, 65535
    %v3642 = vshra.s32 %v3640, 16
    %v3643 = vcvt.s32.f32 %v3641
    %v3644 = vcvt.s32.f32 %v3642
    %3645 = vmin.xlane.f32.xlu0 %v3644
    %v3646 = vpop.xlane.xlu0 %3645
    %vm3647 = vcmp.eq.f32.partialorder %v3644, %v3646
    %v3648 = vsel %vm3647, %v3643, inf
    %3649 = vmin.xlane.f32.xlu0 %v3648
    %v3650 = vpop.xlane.xlu0 %3649
    %v3651 = vcvt.f32.s32 %v3650
    %v3652 = vcvt.f32.s32 %v3646
    %v3653 = vshll.u32 %v3652, 16
    %v3654 = vadd.s32 %v3653, %v3651
    %v3655 = vsel %vm2460, %v3315, 2147483647
    %v3656 = vand.u32 %v3655, 65535
    %v3657 = vshra.s32 %v3655, 16
    %v3658 = vcvt.s32.f32 %v3656
    %v3659 = vcvt.s32.f32 %v3657
    %3660 = vmin.xlane.f32.xlu0 %v3659
    %v3661 = vpop.xlane.xlu0 %3660
    %vm3662 = vcmp.eq.f32.partialorder %v3659, %v3661
    %v3663 = vsel %vm3662, %v3658, inf
    %3664 = vmin.xlane.f32.xlu0 %v3663
    %v3665 = vpop.xlane.xlu0 %3664
    %v3666 = vcvt.f32.s32 %v3665
    %v3667 = vcvt.f32.s32 %v3661
    %v3668 = vshll.u32 %v3667, 16
    %v3669 = vadd.s32 %v3668, %v3666
    %v3670 = vsel %vm2460, %v3316, 2147483647
    %v3671 = vand.u32 %v3670, 65535
    %v3672 = vshra.s32 %v3670, 16
    %v3673 = vcvt.s32.f32 %v3671
    %v3674 = vcvt.s32.f32 %v3672
    %3675 = vmin.xlane.f32.xlu0 %v3674
    %v3676 = vpop.xlane.xlu0 %3675
    %vm3677 = vcmp.eq.f32.partialorder %v3674, %v3676
    %v3678 = vsel %vm3677, %v3673, inf
    %3679 = vmin.xlane.f32.xlu0 %v3678
    %v3680 = vpop.xlane.xlu0 %3679
    %v3681 = vcvt.f32.s32 %v3680
    %v3682 = vcvt.f32.s32 %v3676
    %v3683 = vshll.u32 %v3682, 16
    %v3684 = vadd.s32 %v3683, %v3681
    %v3685 = vsel %vm2460, %v3317, 2147483647
    %v3686 = vand.u32 %v3685, 65535
    %v3687 = vshra.s32 %v3685, 16
    %v3688 = vcvt.s32.f32 %v3686
    %v3689 = vcvt.s32.f32 %v3687
    %3690 = vmin.xlane.f32.xlu0 %v3689
    %v3691 = vpop.xlane.xlu0 %3690
    %vm3692 = vcmp.eq.f32.partialorder %v3689, %v3691
    %v3693 = vsel %vm3692, %v3688, inf
    %3694 = vmin.xlane.f32.xlu0 %v3693
    %v3695 = vpop.xlane.xlu0 %3694
    %v3696 = vcvt.f32.s32 %v3695
    %v3697 = vcvt.f32.s32 %v3691
    %v3698 = vshll.u32 %v3697, 16
    %v3699 = vadd.s32 %v3698, %v3696
    %v3700 = vsel %vm2460, %v3318, 2147483647
    %v3701 = vand.u32 %v3700, 65535
    %v3702 = vshra.s32 %v3700, 16
    %v3703 = vcvt.s32.f32 %v3701
    %v3704 = vcvt.s32.f32 %v3702
    %3705 = vmin.xlane.f32.xlu0 %v3704
    %v3706 = vpop.xlane.xlu0 %3705
    %vm3707 = vcmp.eq.f32.partialorder %v3704, %v3706
    %v3708 = vsel %vm3707, %v3703, inf
    %3709 = vmin.xlane.f32.xlu0 %v3708
    %v3710 = vpop.xlane.xlu0 %3709
    %v3711 = vcvt.f32.s32 %v3710
    %v3712 = vcvt.f32.s32 %v3706
    %v3713 = vshll.u32 %v3712, 16
    %v3714 = vadd.s32 %v3713, %v3711
    %v3715 = vsel %vm2460, %v3319, 2147483647
    %v3716 = vand.u32 %v3715, 65535
    %v3717 = vshra.s32 %v3715, 16
    %v3718 = vcvt.s32.f32 %v3716
    %v3719 = vcvt.s32.f32 %v3717
    %3720 = vmin.xlane.f32.xlu0 %v3719
    %v3721 = vpop.xlane.xlu0 %3720
    %vm3722 = vcmp.eq.f32.partialorder %v3719, %v3721
    %v3723 = vsel %vm3722, %v3718, inf
    %3724 = vmin.xlane.f32.xlu0 %v3723
    %v3725 = vpop.xlane.xlu0 %3724
    %v3726 = vcvt.f32.s32 %v3725
    %v3727 = vcvt.f32.s32 %v3721
    %v3728 = vshll.u32 %v3727, 16
    %v3729 = vadd.s32 %v3728, %v3726
    %v3730 = vsel %vm2460, %v3320, 2147483647
    %v3731 = vand.u32 %v3730, 65535
    %v3732 = vshra.s32 %v3730, 16
    %v3733 = vcvt.s32.f32 %v3731
    %v3734 = vcvt.s32.f32 %v3732
    %3735 = vmin.xlane.f32.xlu0 %v3734
    %v3736 = vpop.xlane.xlu0 %3735
    %vm3737 = vcmp.eq.f32.partialorder %v3734, %v3736
    %v3738 = vsel %vm3737, %v3733, inf
    %3739 = vmin.xlane.f32.xlu0 %v3738
    %v3740 = vpop.xlane.xlu0 %3739
    %v3741 = vcvt.f32.s32 %v3740
    %v3742 = vcvt.f32.s32 %v3736
    %v3743 = vshll.u32 %v3742, 16
    %v3744 = vadd.s32 %v3743, %v3741
    %v3745 = vsel %vm2460, %v3321, 2147483647
    %v3746 = vand.u32 %v3745, 65535
    %v3747 = vshra.s32 %v3745, 16
    %v3748 = vcvt.s32.f32 %v3746
    %v3749 = vcvt.s32.f32 %v3747
    %3750 = vmin.xlane.f32.xlu0 %v3749
    %v3751 = vpop.xlane.xlu0 %3750
    %vm3752 = vcmp.eq.f32.partialorder %v3749, %v3751
    %v3753 = vsel %vm3752, %v3748, inf
    %3754 = vmin.xlane.f32.xlu0 %v3753
    %v3755 = vpop.xlane.xlu0 %3754
    %v3756 = vcvt.f32.s32 %v3755
    %v3757 = vcvt.f32.s32 %v3751
    %v3758 = vshll.u32 %v3757, 16
    %v3759 = vadd.s32 %v3758, %v3756
    %v3760 = vsel %vm2460, %v3322, 2147483647
    %v3761 = vand.u32 %v3760, 65535
    %v3762 = vshra.s32 %v3760, 16
    %v3763 = vcvt.s32.f32 %v3761
    %v3764 = vcvt.s32.f32 %v3762
    %3765 = vmin.xlane.f32.xlu0 %v3764
    %v3766 = vpop.xlane.xlu0 %3765
    %vm3767 = vcmp.eq.f32.partialorder %v3764, %v3766
    %v3768 = vsel %vm3767, %v3763, inf
    %3769 = vmin.xlane.f32.xlu0 %v3768
    %v3770 = vpop.xlane.xlu0 %3769
    %v3771 = vcvt.f32.s32 %v3770
    %v3772 = vcvt.f32.s32 %v3766
    %v3773 = vshll.u32 %v3772, 16
    %v3774 = vadd.s32 %v3773, %v3771
    %v3775 = vsel %vm2460, %v3323, 2147483647
    %v3776 = vand.u32 %v3775, 65535
    %v3777 = vshra.s32 %v3775, 16
    %v3778 = vcvt.s32.f32 %v3776
    %v3779 = vcvt.s32.f32 %v3777
    %3780 = vmin.xlane.f32.xlu0 %v3779
    %v3781 = vpop.xlane.xlu0 %3780
    %vm3782 = vcmp.eq.f32.partialorder %v3779, %v3781
    %v3783 = vsel %vm3782, %v3778, inf
    %3784 = vmin.xlane.f32.xlu0 %v3783
    %v3785 = vpop.xlane.xlu0 %3784
    %v3786 = vcvt.f32.s32 %v3785
    %v3787 = vcvt.f32.s32 %v3781
    %v3788 = vshll.u32 %v3787, 16
    %v3789 = vadd.s32 %v3788, %v3786
    %v3790 = vsel %vm2460, %v3324, 2147483647
    %v3791 = vand.u32 %v3790, 65535
    %v3792 = vshra.s32 %v3790, 16
    %v3793 = vcvt.s32.f32 %v3791
    %v3794 = vcvt.s32.f32 %v3792
    %3795 = vmin.xlane.f32.xlu0 %v3794
    %v3796 = vpop.xlane.xlu0 %3795
    %vm3797 = vcmp.eq.f32.partialorder %v3794, %v3796
    %v3798 = vsel %vm3797, %v3793, inf
    %3799 = vmin.xlane.f32.xlu0 %v3798
    %v3800 = vpop.xlane.xlu0 %3799
    %v3801 = vcvt.f32.s32 %v3800
    %v3802 = vcvt.f32.s32 %v3796
    %v3803 = vshll.u32 %v3802, 16
    %v3804 = vadd.s32 %v3803, %v3801
    %vm3805 = vcmp.eq.s32.totalorder %v2459, %v3339
    %vm3806 = vcmp.eq.s32.totalorder %v2459, %v3354
    %vm3807 = vcmp.eq.s32.totalorder %v2459, %v3369
    %vm3808 = vcmp.eq.s32.totalorder %v2459, %v3384
    %vm3809 = vcmp.eq.s32.totalorder %v2459, %v3399
    %vm3810 = vcmp.eq.s32.totalorder %v2459, %v3414
    %vm3811 = vcmp.eq.s32.totalorder %v2459, %v3429
    %vm3812 = vcmp.eq.s32.totalorder %v2459, %v3444
    %vm3813 = vcmp.eq.s32.totalorder %v2459, %v3459
    %vm3814 = vcmp.eq.s32.totalorder %v2459, %v3474
    %vm3815 = vcmp.eq.s32.totalorder %v2459, %v3489
    %vm3816 = vcmp.eq.s32.totalorder %v2459, %v3504
    %vm3817 = vcmp.eq.s32.totalorder %v2459, %v3519
    %vm3818 = vcmp.eq.s32.totalorder %v2459, %v3534
    %vm3819 = vcmp.eq.s32.totalorder %v2459, %v3549
    %vm3820 = vcmp.eq.s32.totalorder %v2459, %v3564
    %vm3821 = vcmp.eq.s32.totalorder %v2459, %v3579
    %vm3822 = vcmp.eq.s32.totalorder %v2459, %v3594
    %vm3823 = vcmp.eq.s32.totalorder %v2459, %v3609
    %vm3824 = vcmp.eq.s32.totalorder %v2459, %v3624
    %vm3825 = vcmp.eq.s32.totalorder %v2459, %v3639
    %vm3826 = vcmp.eq.s32.totalorder %v2459, %v3654
    %vm3827 = vcmp.eq.s32.totalorder %v2459, %v3669
    %vm3828 = vcmp.eq.s32.totalorder %v2459, %v3684
    %vm3829 = vcmp.eq.s32.totalorder %v2459, %v3699
    %vm3830 = vcmp.eq.s32.totalorder %v2459, %v3714
    %vm3831 = vcmp.eq.s32.totalorder %v2459, %v3729
    %vm3832 = vcmp.eq.s32.totalorder %v2459, %v3744
    %vm3833 = vcmp.eq.s32.totalorder %v2459, %v3759
    %vm3834 = vcmp.eq.s32.totalorder %v2459, %v3774
    %vm3835 = vcmp.eq.s32.totalorder %v2459, %v3789
    %vm3836 = vcmp.eq.s32.totalorder %v2459, %v3804
    %v3837 = vsub.f32 %v3167, %v2463
    %v3838 = vsub.f32 %v3170, %v2466
    %v3839 = vsub.f32 %v3173, %v2469
    %v3840 = vsub.f32 %v3176, %v2472
    %v3841 = vsub.f32 %v3179, %v2475
    %v3842 = vsub.f32 %v3182, %v2478
    %v3843 = vsub.f32 %v3185, %v2481
    %v3844 = vsub.f32 %v3188, %v2484
    %v3845 = vsub.f32 %v3191, %v2487
    %v3846 = vsub.f32 %v3194, %v2490
    %v3847 = vsub.f32 %v3197, %v2493
    %v3848 = vsub.f32 %v3200, %v2496
    %v3849 = vsub.f32 %v3203, %v2499
    %v3850 = vsub.f32 %v3206, %v2502
    %v3851 = vsub.f32 %v3209, %v2505
    %v3852 = vsub.f32 %v3212, %v2508
    %v3853 = vsub.f32 %v3215, %v2511
    %v3854 = vsub.f32 %v3218, %v2514
    %v3855 = vsub.f32 %v3221, %v2517
    %v3856 = vsub.f32 %v3224, %v2520
    %v3857 = vsub.f32 %v3227, %v2523
    %v3858 = vsub.f32 %v3230, %v2526
    %v3859 = vsub.f32 %v3233, %v2529
    %v3860 = vsub.f32 %v3236, %v2532
    %v3861 = vsub.f32 %v3239, %v2535
    %v3862 = vsub.f32 %v3242, %v2538
    %v3863 = vsub.f32 %v3245, %v2541
    %v3864 = vsub.f32 %v3248, %v2544
    %v3865 = vsub.f32 %v3251, %v2547
    %v3866 = vsub.f32 %v3254, %v2550
    %v3867 = vsub.f32 %v3257, %v2553
    %v3868 = vsub.f32 %v3260, %v2556
    %v3869 = vmul.f32 %v3837, 1.442695
    %v3870 = vpow.pop %v3869
    %v3871 = vmul.f32 %v3838, 1.442695
    %v3872 = vpow.pop %v3871
    %v3873 = vmul.f32 %v3839, 1.442695
    %v3874 = vpow.pop %v3873
    %v3875 = vmul.f32 %v3840, 1.442695
    %v3876 = vpow.pop %v3875
    %v3877 = vmul.f32 %v3841, 1.442695
    %v3878 = vpow.pop %v3877
    %v3879 = vmul.f32 %v3842, 1.442695
    %v3880 = vpow.pop %v3879
    %v3881 = vmul.f32 %v3843, 1.442695
    %v3882 = vpow.pop %v3881
    %v3883 = vmul.f32 %v3844, 1.442695
    %v3884 = vpow.pop %v3883
    %v3885 = vmul.f32 %v3845, 1.442695
    %v3886 = vpow.pop %v3885
    %v3887 = vmul.f32 %v3846, 1.442695
    %v3888 = vpow.pop %v3887
    %v3889 = vmul.f32 %v3847, 1.442695
    %v3890 = vpow.pop %v3889
    %v3891 = vmul.f32 %v3848, 1.442695
    %v3892 = vpow.pop %v3891
    %v3893 = vmul.f32 %v3849, 1.442695
    %v3894 = vpow.pop %v3893
    %v3895 = vmul.f32 %v3850, 1.442695
    %v3896 = vpow.pop %v3895
    %v3897 = vmul.f32 %v3851, 1.442695
    %v3898 = vpow.pop %v3897
    %v3899 = vmul.f32 %v3852, 1.442695
    %v3900 = vpow.pop %v3899
    %v3901 = vmul.f32 %v3853, 1.442695
    %v3902 = vpow.pop %v3901
    %v3903 = vmul.f32 %v3854, 1.442695
    %v3904 = vpow.pop %v3903
    %v3905 = vmul.f32 %v3855, 1.442695
    %v3906 = vpow.pop %v3905
    %v3907 = vmul.f32 %v3856, 1.442695
    %v3908 = vpow.pop %v3907
    %v3909 = vmul.f32 %v3857, 1.442695
    %v3910 = vpow.pop %v3909
    %v3911 = vmul.f32 %v3858, 1.442695
    %v3912 = vpow.pop %v3911
    %v3913 = vmul.f32 %v3859, 1.442695
    %v3914 = vpow.pop %v3913
    %v3915 = vmul.f32 %v3860, 1.442695
    %v3916 = vpow.pop %v3915
    %v3917 = vmul.f32 %v3861, 1.442695
    %v3918 = vpow.pop %v3917
    %v3919 = vmul.f32 %v3862, 1.442695
    %v3920 = vpow.pop %v3919
    %v3921 = vmul.f32 %v3863, 1.442695
    %v3922 = vpow.pop %v3921
    %v3923 = vmul.f32 %v3864, 1.442695
    %v3924 = vpow.pop %v3923
    %v3925 = vmul.f32 %v3865, 1.442695
    %v3926 = vpow.pop %v3925
    %v3927 = vmul.f32 %v3866, 1.442695
    %v3928 = vpow.pop %v3927
    %v3929 = vmul.f32 %v3867, 1.442695
    %v3930 = vpow.pop %v3929
    %v3931 = vmul.f32 %v3868, 1.442695
    %v3932 = vpow.pop %v3931
    %v3933 = vadd.f32 %v3870, 1.0
    %v3934 = vadd.f32 %v3872, 1.0
    %v3935 = vadd.f32 %v3874, 1.0
    %v3936 = vadd.f32 %v3876, 1.0
    %v3937 = vadd.f32 %v3878, 1.0
    %v3938 = vadd.f32 %v3880, 1.0
    %v3939 = vadd.f32 %v3882, 1.0
    %v3940 = vadd.f32 %v3884, 1.0
    %v3941 = vadd.f32 %v3886, 1.0
    %v3942 = vadd.f32 %v3888, 1.0
    %v3943 = vadd.f32 %v3890, 1.0
    %v3944 = vadd.f32 %v3892, 1.0
    %v3945 = vadd.f32 %v3894, 1.0
    %v3946 = vadd.f32 %v3896, 1.0
    %v3947 = vadd.f32 %v3898, 1.0
    %v3948 = vadd.f32 %v3900, 1.0
    %v3949 = vadd.f32 %v3902, 1.0
    %v3950 = vadd.f32 %v3904, 1.0
    %v3951 = vadd.f32 %v3906, 1.0
    %v3952 = vadd.f32 %v3908, 1.0
    %v3953 = vadd.f32 %v3910, 1.0
    %v3954 = vadd.f32 %v3912, 1.0
    %v3955 = vadd.f32 %v3914, 1.0
    %v3956 = vadd.f32 %v3916, 1.0
    %v3957 = vadd.f32 %v3918, 1.0
    %v3958 = vadd.f32 %v3920, 1.0
    %v3959 = vadd.f32 %v3922, 1.0
    %v3960 = vadd.f32 %v3924, 1.0
    %v3961 = vadd.f32 %v3926, 1.0
    %v3962 = vadd.f32 %v3928, 1.0
    %v3963 = vadd.f32 %v3930, 1.0
    %v3964 = vadd.f32 %v3932, 1.0
    %v3965 = vrcp.pop %v3933
    %v3966 = vmul.f32 1.0, %v3965
    %v3967 = vrcp.pop %v3934
    %v3968 = vmul.f32 1.0, %v3967
    %v3969 = vrcp.pop %v3935
    %v3970 = vmul.f32 1.0, %v3969
    %v3971 = vrcp.pop %v3936
    %v3972 = vmul.f32 1.0, %v3971
    %v3973 = vrcp.pop %v3937
    %v3974 = vmul.f32 1.0, %v3973
    %v3975 = vrcp.pop %v3938
    %v3976 = vmul.f32 1.0, %v3975
    %v3977 = vrcp.pop %v3939
    %v3978 = vmul.f32 1.0, %v3977
    %v3979 = vrcp.pop %v3940
    %v3980 = vmul.f32 1.0, %v3979
    %v3981 = vrcp.pop %v3941
    %v3982 = vmul.f32 1.0, %v3981
    %v3983 = vrcp.pop %v3942
    %v3984 = vmul.f32 1.0, %v3983
    %v3985 = vrcp.pop %v3943
    %v3986 = vmul.f32 1.0, %v3985
    %v3987 = vrcp.pop %v3944
    %v3988 = vmul.f32 1.0, %v3987
    %v3989 = vrcp.pop %v3945
    %v3990 = vmul.f32 1.0, %v3989
    %v3991 = vrcp.pop %v3946
    %v3992 = vmul.f32 1.0, %v3991
    %v3993 = vrcp.pop %v3947
    %v3994 = vmul.f32 1.0, %v3993
    %v3995 = vrcp.pop %v3948
    %v3996 = vmul.f32 1.0, %v3995
    %v3997 = vrcp.pop %v3949
    %v3998 = vmul.f32 1.0, %v3997
    %v3999 = vrcp.pop %v3950
    %v4000 = vmul.f32 1.0, %v3999
    %v4001 = vrcp.pop %v3951
    %v4002 = vmul.f32 1.0, %v4001
    %v4003 = vrcp.pop %v3952
    %v4004 = vmul.f32 1.0, %v4003
    %v4005 = vrcp.pop %v3953
    %v4006 = vmul.f32 1.0, %v4005
    %v4007 = vrcp.pop %v3954
    %v4008 = vmul.f32 1.0, %v4007
    %v4009 = vrcp.pop %v3955
    %v4010 = vmul.f32 1.0, %v4009
    %v4011 = vrcp.pop %v3956
    %v4012 = vmul.f32 1.0, %v4011
    %v4013 = vrcp.pop %v3957
    %v4014 = vmul.f32 1.0, %v4013
    %v4015 = vrcp.pop %v3958
    %v4016 = vmul.f32 1.0, %v4015
    %v4017 = vrcp.pop %v3959
    %v4018 = vmul.f32 1.0, %v4017
    %v4019 = vrcp.pop %v3960
    %v4020 = vmul.f32 1.0, %v4019
    %v4021 = vrcp.pop %v3961
    %v4022 = vmul.f32 1.0, %v4021
    %v4023 = vrcp.pop %v3962
    %v4024 = vmul.f32 1.0, %v4023
    %v4025 = vrcp.pop %v3963
    %v4026 = vmul.f32 1.0, %v4025
    %v4027 = vrcp.pop %v3964
    %v4028 = vmul.f32 1.0, %v4027
    %v4029 = vsub.f32 1.0, %v3966
    %v4030 = vsub.f32 1.0, %v3968
    %v4031 = vsub.f32 1.0, %v3970
    %v4032 = vsub.f32 1.0, %v3972
    %v4033 = vsub.f32 1.0, %v3974
    %v4034 = vsub.f32 1.0, %v3976
    %v4035 = vsub.f32 1.0, %v3978
    %v4036 = vsub.f32 1.0, %v3980
    %v4037 = vsub.f32 1.0, %v3982
    %v4038 = vsub.f32 1.0, %v3984
    %v4039 = vsub.f32 1.0, %v3986
    %v4040 = vsub.f32 1.0, %v3988
    %v4041 = vsub.f32 1.0, %v3990
    %v4042 = vsub.f32 1.0, %v3992
    %v4043 = vsub.f32 1.0, %v3994
    %v4044 = vsub.f32 1.0, %v3996
    %v4045 = vsub.f32 1.0, %v3998
    %v4046 = vsub.f32 1.0, %v4000
    %v4047 = vsub.f32 1.0, %v4002
    %v4048 = vsub.f32 1.0, %v4004
    %v4049 = vsub.f32 1.0, %v4006
    %v4050 = vsub.f32 1.0, %v4008
    %v4051 = vsub.f32 1.0, %v4010
    %v4052 = vsub.f32 1.0, %v4012
    %v4053 = vsub.f32 1.0, %v4014
    %v4054 = vsub.f32 1.0, %v4016
    %v4055 = vsub.f32 1.0, %v4018
    %v4056 = vsub.f32 1.0, %v4020
    %v4057 = vsub.f32 1.0, %v4022
    %v4058 = vsub.f32 1.0, %v4024
    %v4059 = vsub.f32 1.0, %v4026
    %v4060 = vsub.f32 1.0, %v4028
    %v4061 = vsel %vm3101, %v3966, 0.0
    %v4062 = vsel %vm3102, %v3968, 0.0
    %v4063 = vsel %vm3103, %v3970, 0.0
    %v4064 = vsel %vm3104, %v3972, 0.0
    %v4065 = vsel %vm3105, %v3974, 0.0
    %v4066 = vsel %vm3106, %v3976, 0.0
    %v4067 = vsel %vm3107, %v3978, 0.0
    %v4068 = vsel %vm3108, %v3980, 0.0
    %v4069 = vsel %vm3109, %v3982, 0.0
    %v4070 = vsel %vm3110, %v3984, 0.0
    %v4071 = vsel %vm3111, %v3986, 0.0
    %v4072 = vsel %vm3112, %v3988, 0.0
    %v4073 = vsel %vm3113, %v3990, 0.0
    %v4074 = vsel %vm3114, %v3992, 0.0
    %v4075 = vsel %vm3115, %v3994, 0.0
    %v4076 = vsel %vm3116, %v3996, 0.0
    %v4077 = vsel %vm3117, %v3998, 0.0
    %v4078 = vsel %vm3118, %v4000, 0.0
    %v4079 = vsel %vm3119, %v4002, 0.0
    %v4080 = vsel %vm3120, %v4004, 0.0
    %v4081 = vsel %vm3121, %v4006, 0.0
    %v4082 = vsel %vm3122, %v4008, 0.0
    %v4083 = vsel %vm3123, %v4010, 0.0
    %v4084 = vsel %vm3124, %v4012, 0.0
    %v4085 = vsel %vm3125, %v4014, 0.0
    %v4086 = vsel %vm3126, %v4016, 0.0
    %v4087 = vsel %vm3127, %v4018, 0.0
    %v4088 = vsel %vm3128, %v4020, 0.0
    %v4089 = vsel %vm3129, %v4022, 0.0
    %v4090 = vsel %vm3130, %v4024, 0.0
    %v4091 = vsel %vm3131, %v4026, 0.0
    %v4092 = vsel %vm3132, %v4028, 0.0
    %v4093 = vsel %vm3805, %v4029, 0.0
    %v4094 = vsel %vm3806, %v4030, 0.0
    %v4095 = vsel %vm3807, %v4031, 0.0
    %v4096 = vsel %vm3808, %v4032, 0.0
    %v4097 = vsel %vm3809, %v4033, 0.0
    %v4098 = vsel %vm3810, %v4034, 0.0
    %v4099 = vsel %vm3811, %v4035, 0.0
    %v4100 = vsel %vm3812, %v4036, 0.0
    %v4101 = vsel %vm3813, %v4037, 0.0
    %v4102 = vsel %vm3814, %v4038, 0.0
    %v4103 = vsel %vm3815, %v4039, 0.0
    %v4104 = vsel %vm3816, %v4040, 0.0
    %v4105 = vsel %vm3817, %v4041, 0.0
    %v4106 = vsel %vm3818, %v4042, 0.0
    %v4107 = vsel %vm3819, %v4043, 0.0
    %v4108 = vsel %vm3820, %v4044, 0.0
    %v4109 = vsel %vm3821, %v4045, 0.0
    %v4110 = vsel %vm3822, %v4046, 0.0
    %v4111 = vsel %vm3823, %v4047, 0.0
    %v4112 = vsel %vm3824, %v4048, 0.0
    %v4113 = vsel %vm3825, %v4049, 0.0
    %v4114 = vsel %vm3826, %v4050, 0.0
    %v4115 = vsel %vm3827, %v4051, 0.0
    %v4116 = vsel %vm3828, %v4052, 0.0
    %v4117 = vsel %vm3829, %v4053, 0.0
    %v4118 = vsel %vm3830, %v4054, 0.0
    %v4119 = vsel %vm3831, %v4055, 0.0
    %v4120 = vsel %vm3832, %v4056, 0.0
    %v4121 = vsel %vm3833, %v4057, 0.0
    %v4122 = vsel %vm3834, %v4058, 0.0
    %v4123 = vsel %vm3835, %v4059, 0.0
    %v4124 = vsel %vm3836, %v4060, 0.0
    %v4125 = vadd.f32 %v4061, %v4093
    %v4126 = vadd.f32 %v4062, %v4094
    %v4127 = vadd.f32 %v4063, %v4095
    %v4128 = vadd.f32 %v4064, %v4096
    %v4129 = vadd.f32 %v4065, %v4097
    %v4130 = vadd.f32 %v4066, %v4098
    %v4131 = vadd.f32 %v4067, %v4099
    %v4132 = vadd.f32 %v4068, %v4100
    %v4133 = vadd.f32 %v4069, %v4101
    %v4134 = vadd.f32 %v4070, %v4102
    %v4135 = vadd.f32 %v4071, %v4103
    %v4136 = vadd.f32 %v4072, %v4104
    %v4137 = vadd.f32 %v4073, %v4105
    %v4138 = vadd.f32 %v4074, %v4106
    %v4139 = vadd.f32 %v4075, %v4107
    %v4140 = vadd.f32 %v4076, %v4108
    %v4141 = vadd.f32 %v4077, %v4109
    %v4142 = vadd.f32 %v4078, %v4110
    %v4143 = vadd.f32 %v4079, %v4111
    %v4144 = vadd.f32 %v4080, %v4112
    %v4145 = vadd.f32 %v4081, %v4113
    %v4146 = vadd.f32 %v4082, %v4114
    %v4147 = vadd.f32 %v4083, %v4115
    %v4148 = vadd.f32 %v4084, %v4116
    %v4149 = vadd.f32 %v4085, %v4117
    %v4150 = vadd.f32 %v4086, %v4118
    %v4151 = vadd.f32 %v4087, %v4119
    %v4152 = vadd.f32 %v4088, %v4120
    %v4153 = vadd.f32 %v4089, %v4121
    %v4154 = vadd.f32 %v4090, %v4122
    %v4155 = vadd.f32 %v4091, %v4123
    %v4156 = vadd.f32 %v4092, %v4124
    %v4157 = vld [vmem:[%s6] sm:$0xff]
    %v4158 = vld [vmem:[%s6 + $0x8] sm:$0xf]
    %v4159 = vld [vmem:[%s6 + $0xc] sm:$0xff]
    %v4160 = vld [vmem:[%s6 + $0x14] sm:$0xf]
    %v4161 = vld [vmem:[%s6 + $0x18] sm:$0xff]
    %v4162 = vld [vmem:[%s6 + $0x20] sm:$0xf]
    %v4163 = vld [vmem:[%s6 + $0x24] sm:$0xff]
    %v4164 = vld [vmem:[%s6 + $0x2c] sm:$0xf]
    %v4165 = vld [vmem:[%s6 + $0x30] sm:$0xff]
    %v4166 = vld [vmem:[%s6 + $0x38] sm:$0xf]
    %v4167 = vld [vmem:[%s6 + $0x3c] sm:$0xff]
    %v4168 = vld [vmem:[%s6 + $0x44] sm:$0xf]
    %v4169 = vld [vmem:[%s6 + $0x48] sm:$0xff]
    %v4170 = vld [vmem:[%s6 + $0x50] sm:$0xf]
    %v4171 = vld [vmem:[%s6 + $0x54] sm:$0xff]
    %v4172 = vld [vmem:[%s6 + $0x5c] sm:$0xf]
    %v4173 = vld [vmem:[%s7] sm:$0x7]
    %v4175 = vlaneseq
    %v4176 = vshrl.u32 %v4175, 7
    %v4177 = vsub.s32 0, %v4176
    %v4178 = vrot.slane %v4173, %v4177
    %v4179 = vlaneseq
    %v4180 = vshrl.u32 %v4179, 7
    %v4181 = vsub.s32 1, %v4180
    %v4182 = vrot.slane %v4173, %v4181
    %v4183 = vlaneseq
    %v4184 = vshrl.u32 %v4183, 7
    %v4185 = vsub.s32 2, %v4184
    %v4186 = vrot.slane %v4173, %v4185
    %v4206 = vunpack.c.l.b16 %v4157
    %v4207 = vunpack.c.h.b16 %v4157
    %v4208 = vunpack.c.l.b16 %v4158
    %v4209 = vunpack.c.l.b16 %v4159
    %v4210 = vunpack.c.h.b16 %v4159
    %v4211 = vunpack.c.l.b16 %v4160
    %v4212 = vunpack.c.l.b16 %v4161
    %v4213 = vunpack.c.h.b16 %v4161
    %v4214 = vunpack.c.l.b16 %v4162
    %v4215 = vunpack.c.l.b16 %v4163
    %v4216 = vunpack.c.h.b16 %v4163
    %v4217 = vunpack.c.l.b16 %v4164
    %v4218 = vunpack.c.l.b16 %v4165
    %v4219 = vunpack.c.h.b16 %v4165
    %v4220 = vunpack.c.l.b16 %v4166
    %v4221 = vunpack.c.l.b16 %v4167
    %v4222 = vunpack.c.h.b16 %v4167
    %v4223 = vunpack.c.l.b16 %v4168
    %v4224 = vunpack.c.l.b16 %v4169
    %v4225 = vunpack.c.h.b16 %v4169
    %v4226 = vunpack.c.l.b16 %v4170
    %v4227 = vunpack.c.l.b16 %v4171
    %v4228 = vunpack.c.h.b16 %v4171
    %v4229 = vunpack.c.l.b16 %v4172
    %v4230 = vpack.c.b16 %v4209, %v4206
    %v4231 = vpack.c.b16 %v4210, %v4207
    %v4232 = vpack.c.b16 %v4211, %v4208
    %v4233 = vpack.c.b16 %v4215, %v4212
    %v4234 = vpack.c.b16 %v4216, %v4213
    %v4235 = vpack.c.b16 %v4217, %v4214
    %v4236 = vpack.c.b16 %v4221, %v4218
    %v4237 = vpack.c.b16 %v4222, %v4219
    %v4238 = vpack.c.b16 %v4223, %v4220
    %v4239 = vpack.c.b16 %v4227, %v4224
    %v4240 = vpack.c.b16 %v4228, %v4225
    %v4241 = vpack.c.b16 %v4229, %v4226
    %4254 = vmatprep.subr.bf16.mxu0 %v4231
    %4255 = vmatpush1.bf16.msra.mxu0 %v4230
    %4256 = vmatprep.subr.bf16.mxu0 %v4234
    %4257 = vmatpush1.bf16.msra.mxu0 %v4233
    %4258 = vmatprep.subr.bf16.mxu0 %v4237
    %4259 = vmatpush1.bf16.msra.mxu0 %v4236
    %4260 = vmatprep.subr.bf16.mxu0 %v4240
    %4261 = vmatpush1.bf16.msra.mxu0 %v4239
    %4262 = vmatprep.subr.bf16.mxu0 0
    %4263 = vmatpush1.bf16.msra.mxu0 0
    %4264 = vmatprep.subr.bf16.mxu0 0
    %4265 = vmatpush1.bf16.msra.mxu0 0
    %4266 = vmatprep.subr.bf16.mxu0 0
    %4267 = vmatpush1.bf16.msra.mxu0 0
    %4268 = vmatprep.subr.bf16.mxu0 0
    %4269 = vmatpush1.bf16.msra.mxu0 0
    %4270 = vmatprep.subr.bf16.mxu0 0
    %4271 = vmatpush1.bf16.msra.mxu0 0
    %4272 = vmatprep.subr.bf16.mxu0 0
    %4273 = vmatpush1.bf16.msra.mxu0 0
    %4274 = vmatprep.subr.bf16.mxu0 0
    %4275 = vmatpush1.bf16.msra.mxu0 0
    %4276 = vmatprep.subr.bf16.mxu0 0
    %4277 = vmatpush1.bf16.msra.mxu0 0
    %4278 = vmatprep.subr.bf16.mxu0 0
    %4279 = vmatpush1.bf16.msra.mxu0 0
    %4280 = vmatprep.subr.bf16.mxu0 0
    %4281 = vmatpush1.bf16.msra.mxu0 0
    %4282 = vmatprep.subr.bf16.mxu0 0
    %4283 = vmatpush1.bf16.msra.mxu0 0
    %4284 = vmatprep.subr.bf16.mxu0 0
    %4285 = vmatpush1.bf16.msra.mxu0 0
    %4286 = vmatprep.mubr.bf16.mxu0 0
    %4287 = vmatmul.mubr.bf16.gmra.mrb[0].mxu0 %v2250
    %v4288 = vpop.f32.mrb[0].mxu0
    %v4289 = vadd.f32 %v4178, %v4288
    %v4290 = vpop.f32.mrb[0].mxu0
    %v4291 = vadd.f32 %v4182, %v4290
    %v4292 = vpop.f32.mrb[0].mxu0
    %v4293 = vadd.f32 %v4178, %v4292
    %v4294 = vpop.f32.mrb[0].mxu0
    %v4295 = vadd.f32 %v4182, %v4294
    %4296 = vmatprep.mubr.bf16.mxu0 0
    %4297 = vmatmul.mubr.bf16.gmra.mrb[0].mxu0 %v2253
    %v4298 = vpop.f32.mrb[0].mxu0
    %v4299 = vadd.f32 %v4178, %v4298
    %v4300 = vpop.f32.mrb[0].mxu0
    %v4301 = vadd.f32 %v4182, %v4300
    %v4302 = vpop.f32.mrb[0].mxu0
    %v4303 = vadd.f32 %v4178, %v4302
    %v4304 = vpop.f32.mrb[0].mxu0
    %v4305 = vadd.f32 %v4182, %v4304
    %4306 = vmatprep.mubr.bf16.mxu0 0
    %4307 = vmatmul.mubr.bf16.gmra.mrb[0].mxu0 %v2256
    %v4308 = vpop.f32.mrb[0].mxu0
    %v4309 = vadd.f32 %v4178, %v4308
    %v4310 = vpop.f32.mrb[0].mxu0
    %v4311 = vadd.f32 %v4182, %v4310
    %v4312 = vpop.f32.mrb[0].mxu0
    %v4313 = vadd.f32 %v4178, %v4312
    %v4314 = vpop.f32.mrb[0].mxu0
    %v4315 = vadd.f32 %v4182, %v4314
    %4316 = vmatprep.mubr.bf16.mxu0 0
    %4317 = vmatmul.mubr.bf16.gmra.mrb[0].mxu0 %v2259
    %v4318 = vpop.f32.mrb[0].mxu0
    %v4319 = vadd.f32 %v4178, %v4318
    %v4320 = vpop.f32.mrb[0].mxu0
    %v4321 = vadd.f32 %v4182, %v4320
    %v4322 = vpop.f32.mrb[0].mxu0
    %v4323 = vadd.f32 %v4178, %v4322
    %v4324 = vpop.f32.mrb[0].mxu0
    %v4325 = vadd.f32 %v4182, %v4324
    %4326 = vmatprep.mubr.bf16.mxu0 0
    %4327 = vmatmul.mubr.bf16.gmra.mrb[0].mxu0 %v2262
    %v4328 = vpop.f32.mrb[0].mxu0
    %v4329 = vadd.f32 %v4178, %v4328
    %v4330 = vpop.f32.mrb[0].mxu0
    %v4331 = vadd.f32 %v4182, %v4330
    %v4332 = vpop.f32.mrb[0].mxu0
    %v4333 = vadd.f32 %v4178, %v4332
    %v4334 = vpop.f32.mrb[0].mxu0
    %v4335 = vadd.f32 %v4182, %v4334
    %4336 = vmatprep.mubr.bf16.mxu0 0
    %4337 = vmatmul.mubr.bf16.gmra.mrb[0].mxu0 %v2265
    %v4338 = vpop.f32.mrb[0].mxu0
    %v4339 = vadd.f32 %v4178, %v4338
    %v4340 = vpop.f32.mrb[0].mxu0
    %v4341 = vadd.f32 %v4182, %v4340
    %v4342 = vpop.f32.mrb[0].mxu0
    %v4343 = vadd.f32 %v4178, %v4342
    %v4344 = vpop.f32.mrb[0].mxu0
    %v4345 = vadd.f32 %v4182, %v4344
    %4346 = vmatprep.mubr.bf16.mxu0 0
    %4347 = vmatmul.mubr.bf16.gmra.mrb[0].mxu0 %v2268
    %v4348 = vpop.f32.mrb[0].mxu0
    %v4349 = vadd.f32 %v4178, %v4348
    %v4350 = vpop.f32.mrb[0].mxu0
    %v4351 = vadd.f32 %v4182, %v4350
    %v4352 = vpop.f32.mrb[0].mxu0
    %v4353 = vadd.f32 %v4178, %v4352
    %v4354 = vpop.f32.mrb[0].mxu0
    %v4355 = vadd.f32 %v4182, %v4354
    %4356 = vmatprep.mubr.bf16.mxu0 0
    %4357 = vmatmul.mubr.bf16.gmra.mrb[0].mxu0 %v2271
    %v4358 = vpop.f32.mrb[0].mxu0
    %v4359 = vadd.f32 %v4178, %v4358
    %v4360 = vpop.f32.mrb[0].mxu0
    %v4361 = vadd.f32 %v4182, %v4360
    %v4362 = vpop.f32.mrb[0].mxu0
    %v4363 = vadd.f32 %v4178, %v4362
    %v4364 = vpop.f32.mrb[0].mxu0
    %v4365 = vadd.f32 %v4182, %v4364
    %4366 = vmatprep.mubr.bf16.mxu0 0
    %4367 = vmatmul.mubr.bf16.gmra.mrb[0].mxu0 %v2274
    %v4368 = vpop.f32.mrb[0].mxu0
    %v4369 = vadd.f32 %v4178, %v4368
    %v4370 = vpop.f32.mrb[0].mxu0
    %v4371 = vadd.f32 %v4182, %v4370
    %v4372 = vpop.f32.mrb[0].mxu0
    %v4373 = vadd.f32 %v4178, %v4372
    %v4374 = vpop.f32.mrb[0].mxu0
    %v4375 = vadd.f32 %v4182, %v4374
    %4376 = vmatprep.mubr.bf16.mxu0 0
    %4377 = vmatmul.mubr.bf16.gmra.mrb[0].mxu0 %v2277
    %v4378 = vpop.f32.mrb[0].mxu0
    %v4379 = vadd.f32 %v4178, %v4378
    %v4380 = vpop.f32.mrb[0].mxu0
    %v4381 = vadd.f32 %v4182, %v4380
    %v4382 = vpop.f32.mrb[0].mxu0
    %v4383 = vadd.f32 %v4178, %v4382
    %v4384 = vpop.f32.mrb[0].mxu0
    %v4385 = vadd.f32 %v4182, %v4384
    %4386 = vmatprep.mubr.bf16.mxu0 0
    %4387 = vmatmul.mubr.bf16.gmra.mrb[0].mxu0 %v2280
    %v4388 = vpop.f32.mrb[0].mxu0
    %v4389 = vadd.f32 %v4178, %v4388
    %v4390 = vpop.f32.mrb[0].mxu0
    %v4391 = vadd.f32 %v4182, %v4390
    %v4392 = vpop.f32.mrb[0].mxu0
    %v4393 = vadd.f32 %v4178, %v4392
    %v4394 = vpop.f32.mrb[0].mxu0
    %v4395 = vadd.f32 %v4182, %v4394
    %4396 = vmatprep.mubr.bf16.mxu0 0
    %4397 = vmatmul.mubr.bf16.gmra.mrb[0].mxu0 %v2283
    %v4398 = vpop.f32.mrb[0].mxu0
    %v4399 = vadd.f32 %v4178, %v4398
    %v4400 = vpop.f32.mrb[0].mxu0
    %v4401 = vadd.f32 %v4182, %v4400
    %v4402 = vpop.f32.mrb[0].mxu0
    %v4403 = vadd.f32 %v4178, %v4402
    %v4404 = vpop.f32.mrb[0].mxu0
    %v4405 = vadd.f32 %v4182, %v4404
    %4406 = vmatprep.mubr.bf16.mxu0 0
    %4407 = vmatmul.mubr.bf16.gmra.mrb[0].mxu0 %v2286
    %v4408 = vpop.f32.mrb[0].mxu0
    %v4409 = vadd.f32 %v4178, %v4408
    %v4410 = vpop.f32.mrb[0].mxu0
    %v4411 = vadd.f32 %v4182, %v4410
    %v4412 = vpop.f32.mrb[0].mxu0
    %v4413 = vadd.f32 %v4178, %v4412
    %v4414 = vpop.f32.mrb[0].mxu0
    %v4415 = vadd.f32 %v4182, %v4414
    %4416 = vmatprep.mubr.bf16.mxu0 0
    %4417 = vmatmul.mubr.bf16.gmra.mrb[0].mxu0 %v2289
    %v4418 = vpop.f32.mrb[0].mxu0
    %v4419 = vadd.f32 %v4178, %v4418
    %v4420 = vpop.f32.mrb[0].mxu0
    %v4421 = vadd.f32 %v4182, %v4420
    %v4422 = vpop.f32.mrb[0].mxu0
    %v4423 = vadd.f32 %v4178, %v4422
    %v4424 = vpop.f32.mrb[0].mxu0
    %v4425 = vadd.f32 %v4182, %v4424
    %4426 = vmatprep.mubr.bf16.mxu0 0
    %4427 = vmatmul.mubr.bf16.gmra.mrb[0].mxu0 %v2292
    %v4428 = vpop.f32.mrb[0].mxu0
    %v4429 = vadd.f32 %v4178, %v4428
    %v4430 = vpop.f32.mrb[0].mxu0
    %v4431 = vadd.f32 %v4182, %v4430
    %v4432 = vpop.f32.mrb[0].mxu0
    %v4433 = vadd.f32 %v4178, %v4432
    %v4434 = vpop.f32.mrb[0].mxu0
    %v4435 = vadd.f32 %v4182, %v4434
    %4436 = vmatprep.mubr.bf16.mxu0 0
    %4437 = vmatmul.mubr.bf16.gmra.mrb[0].mxu0 %v2295
    %v4438 = vpop.f32.mrb[0].mxu0
    %v4439 = vadd.f32 %v4178, %v4438
    %v4440 = vpop.f32.mrb[0].mxu0
    %v4441 = vadd.f32 %v4182, %v4440
    %v4442 = vpop.f32.mrb[0].mxu0
    %v4443 = vadd.f32 %v4178, %v4442
    %v4444 = vpop.f32.mrb[0].mxu0
    %v4445 = vadd.f32 %v4182, %v4444
    %4446 = vdwg.mxu0
    %4447 = vmatprep.subr.bf16.mxu0 0
    %4448 = vmatpush1.bf16.msra.mxu0 %v4232
    %4449 = vmatprep.subr.bf16.mxu0 0
    %4450 = vmatpush1.bf16.msra.mxu0 %v4235
    %4451 = vmatprep.subr.bf16.mxu0 0
    %4452 = vmatpush1.bf16.msra.mxu0 %v4238
    %4453 = vmatprep.subr.bf16.mxu0 0
    %4454 = vmatpush1.bf16.msra.mxu0 %v4241
    %4455 = vmatprep.subr.bf16.mxu0 0
    %4456 = vmatpush1.bf16.msra.mxu0 0
    %4457 = vmatprep.subr.bf16.mxu0 0
    %4458 = vmatpush1.bf16.msra.mxu0 0
    %4459 = vmatprep.subr.bf16.mxu0 0
    %4460 = vmatpush1.bf16.msra.mxu0 0
    %4461 = vmatprep.subr.bf16.mxu0 0
    %4462 = vmatpush1.bf16.msra.mxu0 0
    %4463 = vmatprep.subr.bf16.mxu0 0
    %4464 = vmatpush1.bf16.msra.mxu0 0
    %4465 = vmatprep.subr.bf16.mxu0 0
    %4466 = vmatpush1.bf16.msra.mxu0 0
    %4467 = vmatprep.subr.bf16.mxu0 0
    %4468 = vmatpush1.bf16.msra.mxu0 0
    %4469 = vmatprep.subr.bf16.mxu0 0
    %4470 = vmatpush1.bf16.msra.mxu0 0
    %4471 = vmatprep.subr.bf16.mxu0 0
    %4472 = vmatpush1.bf16.msra.mxu0 0
    %4473 = vmatprep.subr.bf16.mxu0 0
    %4474 = vmatpush1.bf16.msra.mxu0 0
    %4475 = vmatprep.subr.bf16.mxu0 0
    %4476 = vmatpush1.bf16.msra.mxu0 0
    %4477 = vmatprep.subr.bf16.mxu0 0
    %4478 = vmatpush1.bf16.msra.mxu0 0
    %4479 = vmatprep.mubr.bf16.mxu0 0
    %4480 = vmatmul.mubr.bf16.gmra.mrb[0].mxu0 %v2250
    %v4481 = vpop.f32.mrb[0].mxu0
    %v4482 = vadd.f32 %v4186, %v4481
    %v4483 = vpop.f32.mrb[0].mxu0
    %v4484 = vpop.f32.mrb[0].mxu0
    %v4485 = vadd.f32 %v4186, %v4484
    %v4486 = vpop.f32.mrb[0].mxu0
    %4487 = vmatprep.mubr.bf16.mxu0 0
    %4488 = vmatmul.mubr.bf16.gmra.mrb[0].mxu0 %v2253
    %v4489 = vpop.f32.mrb[0].mxu0
    %v4490 = vadd.f32 %v4186, %v4489
    %v4491 = vpop.f32.mrb[0].mxu0
    %v4492 = vpop.f32.mrb[0].mxu0
    %v4493 = vadd.f32 %v4186, %v4492
    %v4494 = vpop.f32.mrb[0].mxu0
    %4495 = vmatprep.mubr.bf16.mxu0 0
    %4496 = vmatmul.mubr.bf16.gmra.mrb[0].mxu0 %v2256
    %v4497 = vpop.f32.mrb[0].mxu0
    %v4498 = vadd.f32 %v4186, %v4497
    %v4499 = vpop.f32.mrb[0].mxu0
    %v4500 = vpop.f32.mrb[0].mxu0
    %v4501 = vadd.f32 %v4186, %v4500
    %v4502 = vpop.f32.mrb[0].mxu0
    %4503 = vmatprep.mubr.bf16.mxu0 0
    %4504 = vmatmul.mubr.bf16.gmra.mrb[0].mxu0 %v2259
    %v4505 = vpop.f32.mrb[0].mxu0
    %v4506 = vadd.f32 %v4186, %v4505
    %v4507 = vpop.f32.mrb[0].mxu0
    %v4508 = vpop.f32.mrb[0].mxu0
    %v4509 = vadd.f32 %v4186, %v4508
    %v4510 = vpop.f32.mrb[0].mxu0
    %4511 = vmatprep.mubr.bf16.mxu0 0
    %4512 = vmatmul.mubr.bf16.gmra.mrb[0].mxu0 %v2262
    %v4513 = vpop.f32.mrb[0].mxu0
    %v4514 = vadd.f32 %v4186, %v4513
    %v4515 = vpop.f32.mrb[0].mxu0
    %v4516 = vpop.f32.mrb[0].mxu0
    %v4517 = vadd.f32 %v4186, %v4516
    %v4518 = vpop.f32.mrb[0].mxu0
    %4519 = vmatprep.mubr.bf16.mxu0 0
    %4520 = vmatmul.mubr.bf16.gmra.mrb[0].mxu0 %v2265
    %v4521 = vpop.f32.mrb[0].mxu0
    %v4522 = vadd.f32 %v4186, %v4521
    %v4523 = vpop.f32.mrb[0].mxu0
    %v4524 = vpop.f32.mrb[0].mxu0
    %v4525 = vadd.f32 %v4186, %v4524
    %v4526 = vpop.f32.mrb[0].mxu0
    %4527 = vmatprep.mubr.bf16.mxu0 0
    %4528 = vmatmul.mubr.bf16.gmra.mrb[0].mxu0 %v2268
    %v4529 = vpop.f32.mrb[0].mxu0
    %v4530 = vadd.f32 %v4186, %v4529
    %v4531 = vpop.f32.mrb[0].mxu0
    %v4532 = vpop.f32.mrb[0].mxu0
    %v4533 = vadd.f32 %v4186, %v4532
    %v4534 = vpop.f32.mrb[0].mxu0
    %4535 = vmatprep.mubr.bf16.mxu0 0
    %4536 = vmatmul.mubr.bf16.gmra.mrb[0].mxu0 %v2271
    %v4537 = vpop.f32.mrb[0].mxu0
    %v4538 = vadd.f32 %v4186, %v4537
    %v4539 = vpop.f32.mrb[0].mxu0
    %v4540 = vpop.f32.mrb[0].mxu0
    %v4541 = vadd.f32 %v4186, %v4540
    %v4542 = vpop.f32.mrb[0].mxu0
    %4543 = vmatprep.mubr.bf16.mxu0 0
    %4544 = vmatmul.mubr.bf16.gmra.mrb[0].mxu0 %v2274
    %v4545 = vpop.f32.mrb[0].mxu0
    %v4546 = vadd.f32 %v4186, %v4545
    %v4547 = vpop.f32.mrb[0].mxu0
    %v4548 = vpop.f32.mrb[0].mxu0
    %v4549 = vadd.f32 %v4186, %v4548
    %v4550 = vpop.f32.mrb[0].mxu0
    %4551 = vmatprep.mubr.bf16.mxu0 0
    %4552 = vmatmul.mubr.bf16.gmra.mrb[0].mxu0 %v2277
    %v4553 = vpop.f32.mrb[0].mxu0
    %v4554 = vadd.f32 %v4186, %v4553
    %v4555 = vpop.f32.mrb[0].mxu0
    %v4556 = vpop.f32.mrb[0].mxu0
    %v4557 = vadd.f32 %v4186, %v4556
    %v4558 = vpop.f32.mrb[0].mxu0
    %4559 = vmatprep.mubr.bf16.mxu0 0
    %4560 = vmatmul.mubr.bf16.gmra.mrb[0].mxu0 %v2280
    %v4561 = vpop.f32.mrb[0].mxu0
    %v4562 = vadd.f32 %v4186, %v4561
    %v4563 = vpop.f32.mrb[0].mxu0
    %v4564 = vpop.f32.mrb[0].mxu0
    %v4565 = vadd.f32 %v4186, %v4564
    %v4566 = vpop.f32.mrb[0].mxu0
    %4567 = vmatprep.mubr.bf16.mxu0 0
    %4568 = vmatmul.mubr.bf16.gmra.mrb[0].mxu0 %v2283
    %v4569 = vpop.f32.mrb[0].mxu0
    %v4570 = vadd.f32 %v4186, %v4569
    %v4571 = vpop.f32.mrb[0].mxu0
    %v4572 = vpop.f32.mrb[0].mxu0
    %v4573 = vadd.f32 %v4186, %v4572
    %v4574 = vpop.f32.mrb[0].mxu0
    %4575 = vmatprep.mubr.bf16.mxu0 0
    %4576 = vmatmul.mubr.bf16.gmra.mrb[0].mxu0 %v2286
    %v4577 = vpop.f32.mrb[0].mxu0
    %v4578 = vadd.f32 %v4186, %v4577
    %v4579 = vpop.f32.mrb[0].mxu0
    %v4580 = vpop.f32.mrb[0].mxu0
    %v4581 = vadd.f32 %v4186, %v4580
    %v4582 = vpop.f32.mrb[0].mxu0
    %4583 = vmatprep.mubr.bf16.mxu0 0
    %4584 = vmatmul.mubr.bf16.gmra.mrb[0].mxu0 %v2289
    %v4585 = vpop.f32.mrb[0].mxu0
    %v4586 = vadd.f32 %v4186, %v4585
    %v4587 = vpop.f32.mrb[0].mxu0
    %v4588 = vpop.f32.mrb[0].mxu0
    %v4589 = vadd.f32 %v4186, %v4588
    %v4590 = vpop.f32.mrb[0].mxu0
    %4591 = vmatprep.mubr.bf16.mxu0 0
    %4592 = vmatmul.mubr.bf16.gmra.mrb[0].mxu0 %v2292
    %v4593 = vpop.f32.mrb[0].mxu0
    %v4594 = vadd.f32 %v4186, %v4593
    %v4595 = vpop.f32.mrb[0].mxu0
    %v4596 = vpop.f32.mrb[0].mxu0
    %v4597 = vadd.f32 %v4186, %v4596
    %v4598 = vpop.f32.mrb[0].mxu0
    %4599 = vmatprep.mubr.bf16.mxu0 0
    %4600 = vmatmul.mubr.bf16.gmra.mrb[0].mxu0 %v2295
    %v4601 = vpop.f32.mrb[0].mxu0
    %v4602 = vadd.f32 %v4186, %v4601
    %v4603 = vpop.f32.mrb[0].mxu0
    %v4604 = vpop.f32.mrb[0].mxu0
    %v4605 = vadd.f32 %v4186, %v4604
    %v4606 = vpop.f32.mrb[0].mxu0
    %4607 = vdwg.mxu0
    %v4608 = vpack.c.bf16 %v4126, %v4125
    %v4609 = vpack.c.bf16 %v4128, %v4127
    %v4610 = vpack.c.bf16 %v4130, %v4129
    %v4611 = vpack.c.bf16 %v4132, %v4131
    %v4612 = vpack.c.bf16 %v4134, %v4133
    %v4613 = vpack.c.bf16 %v4136, %v4135
    %v4614 = vpack.c.bf16 %v4138, %v4137
    %v4615 = vpack.c.bf16 %v4140, %v4139
    %v4616 = vpack.c.bf16 %v4142, %v4141
    %v4617 = vpack.c.bf16 %v4144, %v4143
    %v4618 = vpack.c.bf16 %v4146, %v4145
    %v4619 = vpack.c.bf16 %v4148, %v4147
    %v4620 = vpack.c.bf16 %v4150, %v4149
    %v4621 = vpack.c.bf16 %v4152, %v4151
    %v4622 = vpack.c.bf16 %v4154, %v4153
    %v4623 = vpack.c.bf16 %v4156, %v4155
    %v4624 = vld [vmem:[#allocation5] sm:$0x77]
    %v4625 = vld [vmem:[#allocation5 + $0x8] sm:$0x7]
    %v4628 = vunpack.c.l.b16 %v4624
    %v4629 = vunpack.c.h.b16 %v4624
    %v4630 = vunpack.c.l.b16 %v4625
    %v4631 = vpack.c.b16 %v4628, %v4628
    %v4632 = vpack.c.b16 %v4629, %v4629
    %v4633 = vpack.c.b16 %v4630, %v4630
    %v4635 = vsel %vm2460, %v4608, 0
    %v4638 = vsel %vm2460, %v4609, 0
    %v4641 = vsel %vm2460, %v4610, 0
    %v4644 = vsel %vm2460, %v4611, 0
    %v4647 = vsel %vm2460, %v4612, 0
    %v4650 = vsel %vm2460, %v4613, 0
    %v4653 = vsel %vm2460, %v4614, 0
    %v4656 = vsel %vm2460, %v4615, 0
    %v4659 = vsel %vm2460, %v4616, 0
    %v4662 = vsel %vm2460, %v4617, 0
    %v4665 = vsel %vm2460, %v4618, 0
    %v4668 = vsel %vm2460, %v4619, 0
    %v4671 = vsel %vm2460, %v4620, 0
    %v4674 = vsel %vm2460, %v4621, 0
    %v4677 = vsel %vm2460, %v4622, 0
    %v4680 = vsel %vm2460, %v4623, 0
    %vm4682 = vcmask 1042432
    %v4684 = vsel %vm4682, %v4631, 0
    %v4687 = vsel %vm4682, %v4632, 0
    %v4690 = vsel %vm4682, %v4633, 0
    %4692 = vmatprep.subr.bf16.mxu0 %v4687
    %4693 = vmatpush1.bf16.msra.mxu0 %v4684
    %4694 = vmatprep.subr.bf16.mxu0 0
    %4695 = vmatpush1.bf16.msra.mxu0 0
    %4696 = vmatprep.subr.bf16.mxu0 0
    %4697 = vmatpush1.bf16.msra.mxu0 0
    %4698 = vmatprep.subr.bf16.mxu0 0
    %4699 = vmatpush1.bf16.msra.mxu0 0
    %4700 = vmatprep.subr.bf16.mxu0 0
    %4701 = vmatpush1.bf16.msra.mxu0 0
    %4702 = vmatprep.subr.bf16.mxu0 0
    %4703 = vmatpush1.bf16.msra.mxu0 0
    %4704 = vmatprep.subr.bf16.mxu0 0
    %4705 = vmatpush1.bf16.msra.mxu0 0
    %4706 = vmatprep.subr.bf16.mxu0 0
    %4707 = vmatpush1.bf16.msra.mxu0 0
    %4708 = vmatprep.subr.bf16.mxu0 0
    %4709 = vmatpush1.bf16.msra.mxu0 0
    %4710 = vmatprep.subr.bf16.mxu0 0
    %4711 = vmatpush1.bf16.msra.mxu0 0
    %4712 = vmatprep.subr.bf16.mxu0 0
    %4713 = vmatpush1.bf16.msra.mxu0 0
    %4714 = vmatprep.subr.bf16.mxu0 0
    %4715 = vmatpush1.bf16.msra.mxu0 0
    %4716 = vmatprep.subr.bf16.mxu0 0
    %4717 = vmatpush1.bf16.msra.mxu0 0
    %4718 = vmatprep.subr.bf16.mxu0 0
    %4719 = vmatpush1.bf16.msra.mxu0 0
    %4720 = vmatprep.subr.bf16.mxu0 0
    %4721 = vmatpush1.bf16.msra.mxu0 0
    %4722 = vmatprep.subr.bf16.mxu0 0
    %4723 = vmatpush1.bf16.msra.mxu0 0
    %4724 = vmatprep.mubr.bf16.mxu0 0
    %4725 = vmatmul.mubr.bf16.gmra.mrb[0].mxu0 %v4635
    %v4726 = vpop.f32.mrb[0].mxu0
    %v4727 = vadd.f32 0.0, %v4726
    %v4728 = vpop.f32.mrb[0].mxu0
    %v4729 = vadd.f32 0.0, %v4728
    %v4730 = vpop.f32.mrb[0].mxu0
    %v4731 = vadd.f32 0.0, %v4730
    %v4732 = vpop.f32.mrb[0].mxu0
    %v4733 = vadd.f32 0.0, %v4732
    %4734 = vmatprep.mubr.bf16.mxu0 0
    %4735 = vmatmul.mubr.bf16.gmra.mrb[0].mxu0 %v4638
    %v4736 = vpop.f32.mrb[0].mxu0
    %v4737 = vadd.f32 0.0, %v4736
    %v4738 = vpop.f32.mrb[0].mxu0
    %v4739 = vadd.f32 0.0, %v4738
    %v4740 = vpop.f32.mrb[0].mxu0
    %v4741 = vadd.f32 0.0, %v4740
    %v4742 = vpop.f32.mrb[0].mxu0
    %v4743 = vadd.f32 0.0, %v4742
    %4744 = vmatprep.mubr.bf16.mxu0 0
    %4745 = vmatmul.mubr.bf16.gmra.mrb[0].mxu0 %v4641
    %v4746 = vpop.f32.mrb[0].mxu0
    %v4747 = vadd.f32 0.0, %v4746
    %v4748 = vpop.f32.mrb[0].mxu0
    %v4749 = vadd.f32 0.0, %v4748
    %v4750 = vpop.f32.mrb[0].mxu0
    %v4751 = vadd.f32 0.0, %v4750
    %v4752 = vpop.f32.mrb[0].mxu0
    %v4753 = vadd.f32 0.0, %v4752
    %4754 = vmatprep.mubr.bf16.mxu0 0
    %4755 = vmatmul.mubr.bf16.gmra.mrb[0].mxu0 %v4644
    %v4756 = vpop.f32.mrb[0].mxu0
    %v4757 = vadd.f32 0.0, %v4756
    %v4758 = vpop.f32.mrb[0].mxu0
    %v4759 = vadd.f32 0.0, %v4758
    %v4760 = vpop.f32.mrb[0].mxu0
    %v4761 = vadd.f32 0.0, %v4760
    %v4762 = vpop.f32.mrb[0].mxu0
    %v4763 = vadd.f32 0.0, %v4762
    %4764 = vmatprep.mubr.bf16.mxu0 0
    %4765 = vmatmul.mubr.bf16.gmra.mrb[0].mxu0 %v4647
    %v4766 = vpop.f32.mrb[0].mxu0
    %v4767 = vadd.f32 0.0, %v4766
    %v4768 = vpop.f32.mrb[0].mxu0
    %v4769 = vadd.f32 0.0, %v4768
    %v4770 = vpop.f32.mrb[0].mxu0
    %v4771 = vadd.f32 0.0, %v4770
    %v4772 = vpop.f32.mrb[0].mxu0
    %v4773 = vadd.f32 0.0, %v4772
    %4774 = vmatprep.mubr.bf16.mxu0 0
    %4775 = vmatmul.mubr.bf16.gmra.mrb[0].mxu0 %v4650
    %v4776 = vpop.f32.mrb[0].mxu0
    %v4777 = vadd.f32 0.0, %v4776
    %v4778 = vpop.f32.mrb[0].mxu0
    %v4779 = vadd.f32 0.0, %v4778
    %v4780 = vpop.f32.mrb[0].mxu0
    %v4781 = vadd.f32 0.0, %v4780
    %v4782 = vpop.f32.mrb[0].mxu0
    %v4783 = vadd.f32 0.0, %v4782
    %4784 = vmatprep.mubr.bf16.mxu0 0
    %4785 = vmatmul.mubr.bf16.gmra.mrb[0].mxu0 %v4653
    %v4786 = vpop.f32.mrb[0].mxu0
    %v4787 = vadd.f32 0.0, %v4786
    %v4788 = vpop.f32.mrb[0].mxu0
    %v4789 = vadd.f32 0.0, %v4788
    %v4790 = vpop.f32.mrb[0].mxu0
    %v4791 = vadd.f32 0.0, %v4790
    %v4792 = vpop.f32.mrb[0].mxu0
    %v4793 = vadd.f32 0.0, %v4792
    %4794 = vmatprep.mubr.bf16.mxu0 0
    %4795 = vmatmul.mubr.bf16.gmra.mrb[0].mxu0 %v4656
    %v4796 = vpop.f32.mrb[0].mxu0
    %v4797 = vadd.f32 0.0, %v4796
    %v4798 = vpop.f32.mrb[0].mxu0
    %v4799 = vadd.f32 0.0, %v4798
    %v4800 = vpop.f32.mrb[0].mxu0
    %v4801 = vadd.f32 0.0, %v4800
    %v4802 = vpop.f32.mrb[0].mxu0
    %v4803 = vadd.f32 0.0, %v4802
    %4804 = vmatprep.mubr.bf16.mxu0 0
    %4805 = vmatmul.mubr.bf16.gmra.mrb[0].mxu0 %v4659
    %v4806 = vpop.f32.mrb[0].mxu0
    %v4807 = vadd.f32 0.0, %v4806
    %v4808 = vpop.f32.mrb[0].mxu0
    %v4809 = vadd.f32 0.0, %v4808
    %v4810 = vpop.f32.mrb[0].mxu0
    %v4811 = vadd.f32 0.0, %v4810
    %v4812 = vpop.f32.mrb[0].mxu0
    %v4813 = vadd.f32 0.0, %v4812
    %4814 = vmatprep.mubr.bf16.mxu0 0
    %4815 = vmatmul.mubr.bf16.gmra.mrb[0].mxu0 %v4662
    %v4816 = vpop.f32.mrb[0].mxu0
    %v4817 = vadd.f32 0.0, %v4816
    %v4818 = vpop.f32.mrb[0].mxu0
    %v4819 = vadd.f32 0.0, %v4818
    %v4820 = vpop.f32.mrb[0].mxu0
    %v4821 = vadd.f32 0.0, %v4820
    %v4822 = vpop.f32.mrb[0].mxu0
    %v4823 = vadd.f32 0.0, %v4822
    %4824 = vmatprep.mubr.bf16.mxu0 0
    %4825 = vmatmul.mubr.bf16.gmra.mrb[0].mxu0 %v4665
    %v4826 = vpop.f32.mrb[0].mxu0
    %v4827 = vadd.f32 0.0, %v4826
    %v4828 = vpop.f32.mrb[0].mxu0
    %v4829 = vadd.f32 0.0, %v4828
    %v4830 = vpop.f32.mrb[0].mxu0
    %v4831 = vadd.f32 0.0, %v4830
    %v4832 = vpop.f32.mrb[0].mxu0
    %v4833 = vadd.f32 0.0, %v4832
    %4834 = vmatprep.mubr.bf16.mxu0 0
    %4835 = vmatmul.mubr.bf16.gmra.mrb[0].mxu0 %v4668
    %v4836 = vpop.f32.mrb[0].mxu0
    %v4837 = vadd.f32 0.0, %v4836
    %v4838 = vpop.f32.mrb[0].mxu0
    %v4839 = vadd.f32 0.0, %v4838
    %v4840 = vpop.f32.mrb[0].mxu0
    %v4841 = vadd.f32 0.0, %v4840
    %v4842 = vpop.f32.mrb[0].mxu0
    %v4843 = vadd.f32 0.0, %v4842
    %4844 = vmatprep.mubr.bf16.mxu0 0
    %4845 = vmatmul.mubr.bf16.gmra.mrb[0].mxu0 %v4671
    %v4846 = vpop.f32.mrb[0].mxu0
    %v4847 = vadd.f32 0.0, %v4846
    %v4848 = vpop.f32.mrb[0].mxu0
    %v4849 = vadd.f32 0.0, %v4848
    %v4850 = vpop.f32.mrb[0].mxu0
    %v4851 = vadd.f32 0.0, %v4850
    %v4852 = vpop.f32.mrb[0].mxu0
    %v4853 = vadd.f32 0.0, %v4852
    %4854 = vmatprep.mubr.bf16.mxu0 0
    %4855 = vmatmul.mubr.bf16.gmra.mrb[0].mxu0 %v4674
    %v4856 = vpop.f32.mrb[0].mxu0
    %v4857 = vadd.f32 0.0, %v4856
    %v4858 = vpop.f32.mrb[0].mxu0
    %v4859 = vadd.f32 0.0, %v4858
    %v4860 = vpop.f32.mrb[0].mxu0
    %v4861 = vadd.f32 0.0, %v4860
    %v4862 = vpop.f32.mrb[0].mxu0
    %v4863 = vadd.f32 0.0, %v4862
    %4864 = vmatprep.mubr.bf16.mxu0 0
    %4865 = vmatmul.mubr.bf16.gmra.mrb[0].mxu0 %v4677
    %v4866 = vpop.f32.mrb[0].mxu0
    %v4867 = vadd.f32 0.0, %v4866
    %v4868 = vpop.f32.mrb[0].mxu0
    %v4869 = vadd.f32 0.0, %v4868
    %v4870 = vpop.f32.mrb[0].mxu0
    %v4871 = vadd.f32 0.0, %v4870
    %v4872 = vpop.f32.mrb[0].mxu0
    %v4873 = vadd.f32 0.0, %v4872
    %4874 = vmatprep.mubr.bf16.mxu0 0
    %4875 = vmatmul.mubr.bf16.gmra.mrb[0].mxu0 %v4680
    %v4876 = vpop.f32.mrb[0].mxu0
    %v4877 = vadd.f32 0.0, %v4876
    %v4878 = vpop.f32.mrb[0].mxu0
    %v4879 = vadd.f32 0.0, %v4878
    %v4880 = vpop.f32.mrb[0].mxu0
    %v4881 = vadd.f32 0.0, %v4880
    %v4882 = vpop.f32.mrb[0].mxu0
    %v4883 = vadd.f32 0.0, %v4882
    %4884 = vdwg.mxu0
    %4885 = vmatprep.subr.bf16.mxu0 0
    %4886 = vmatpush1.bf16.msra.mxu0 %v4690
    %4887 = vmatprep.subr.bf16.mxu0 0
    %4888 = vmatpush1.bf16.msra.mxu0 0
    %4889 = vmatprep.subr.bf16.mxu0 0
    %4890 = vmatpush1.bf16.msra.mxu0 0
    %4891 = vmatprep.subr.bf16.mxu0 0
    %4892 = vmatpush1.bf16.msra.mxu0 0
    %4893 = vmatprep.subr.bf16.mxu0 0
    %4894 = vmatpush1.bf16.msra.mxu0 0
    %4895 = vmatprep.subr.bf16.mxu0 0
    %4896 = vmatpush1.bf16.msra.mxu0 0
    %4897 = vmatprep.subr.bf16.mxu0 0
    %4898 = vmatpush1.bf16.msra.mxu0 0
    %4899 = vmatprep.subr.bf16.mxu0 0
    %4900 = vmatpush1.bf16.msra.mxu0 0
    %4901 = vmatprep.subr.bf16.mxu0 0
    %4902 = vmatpush1.bf16.msra.mxu0 0
    %4903 = vmatprep.subr.bf16.mxu0 0
    %4904 = vmatpush1.bf16.msra.mxu0 0
    %4905 = vmatprep.subr.bf16.mxu0 0
    %4906 = vmatpush1.bf16.msra.mxu0 0
    %4907 = vmatprep.subr.bf16.mxu0 0
    %4908 = vmatpush1.bf16.msra.mxu0 0
    %4909 = vmatprep.subr.bf16.mxu0 0
    %4910 = vmatpush1.bf16.msra.mxu0 0
    %4911 = vmatprep.subr.bf16.mxu0 0
    %4912 = vmatpush1.bf16.msra.mxu0 0
    %4913 = vmatprep.subr.bf16.mxu0 0
    %4914 = vmatpush1.bf16.msra.mxu0 0
    %4915 = vmatprep.subr.bf16.mxu0 0
    %4916 = vmatpush1.bf16.msra.mxu0 0
    %4917 = vmatprep.mubr.bf16.mxu0 0
    %4918 = vmatmul.mubr.bf16.gmra.mrb[0].mxu0 %v4635
    %v4919 = vpop.f32.mrb[0].mxu0
    %v4920 = vadd.f32 0.0, %v4919
    %v4921 = vpop.f32.mrb[0].mxu0
    %v4922 = vpop.f32.mrb[0].mxu0
    %v4923 = vadd.f32 0.0, %v4922
    %v4924 = vpop.f32.mrb[0].mxu0
    %4925 = vmatprep.mubr.bf16.mxu0 0
    %4926 = vmatmul.mubr.bf16.gmra.mrb[0].mxu0 %v4638
    %v4927 = vpop.f32.mrb[0].mxu0
    %v4928 = vadd.f32 0.0, %v4927
    %v4929 = vpop.f32.mrb[0].mxu0
    %v4930 = vpop.f32.mrb[0].mxu0
    %v4931 = vadd.f32 0.0, %v4930
    %v4932 = vpop.f32.mrb[0].mxu0
    %4933 = vmatprep.mubr.bf16.mxu0 0
    %4934 = vmatmul.mubr.bf16.gmra.mrb[0].mxu0 %v4641
    %v4935 = vpop.f32.mrb[0].mxu0
    %v4936 = vadd.f32 0.0, %v4935
    %v4937 = vpop.f32.mrb[0].mxu0
    %v4938 = vpop.f32.mrb[0].mxu0
    %v4939 = vadd.f32 0.0, %v4938
    %v4940 = vpop.f32.mrb[0].mxu0
    %4941 = vmatprep.mubr.bf16.mxu0 0
    %4942 = vmatmul.mubr.bf16.gmra.mrb[0].mxu0 %v4644
    %v4943 = vpop.f32.mrb[0].mxu0
    %v4944 = vadd.f32 0.0, %v4943
    %v4945 = vpop.f32.mrb[0].mxu0
    %v4946 = vpop.f32.mrb[0].mxu0
    %v4947 = vadd.f32 0.0, %v4946
    %v4948 = vpop.f32.mrb[0].mxu0
    %4949 = vmatprep.mubr.bf16.mxu0 0
    %4950 = vmatmul.mubr.bf16.gmra.mrb[0].mxu0 %v4647
    %v4951 = vpop.f32.mrb[0].mxu0
    %v4952 = vadd.f32 0.0, %v4951
    %v4953 = vpop.f32.mrb[0].mxu0
    %v4954 = vpop.f32.mrb[0].mxu0
    %v4955 = vadd.f32 0.0, %v4954
    %v4956 = vpop.f32.mrb[0].mxu0
    %4957 = vmatprep.mubr.bf16.mxu0 0
    %4958 = vmatmul.mubr.bf16.gmra.mrb[0].mxu0 %v4650
    %v4959 = vpop.f32.mrb[0].mxu0
    %v4960 = vadd.f32 0.0, %v4959
    %v4961 = vpop.f32.mrb[0].mxu0
    %v4962 = vpop.f32.mrb[0].mxu0
    %v4963 = vadd.f32 0.0, %v4962
    %v4964 = vpop.f32.mrb[0].mxu0
    %4965 = vmatprep.mubr.bf16.mxu0 0
    %4966 = vmatmul.mubr.bf16.gmra.mrb[0].mxu0 %v4653
    %v4967 = vpop.f32.mrb[0].mxu0
    %v4968 = vadd.f32 0.0, %v4967
    %v4969 = vpop.f32.mrb[0].mxu0
    %v4970 = vpop.f32.mrb[0].mxu0
    %v4971 = vadd.f32 0.0, %v4970
    %v4972 = vpop.f32.mrb[0].mxu0
    %4973 = vmatprep.mubr.bf16.mxu0 0
    %4974 = vmatmul.mubr.bf16.gmra.mrb[0].mxu0 %v4656
    %v4975 = vpop.f32.mrb[0].mxu0
    %v4976 = vadd.f32 0.0, %v4975
    %v4977 = vpop.f32.mrb[0].mxu0
    %v4978 = vpop.f32.mrb[0].mxu0
    %v4979 = vadd.f32 0.0, %v4978
    %v4980 = vpop.f32.mrb[0].mxu0
    %4981 = vmatprep.mubr.bf16.mxu0 0
    %4982 = vmatmul.mubr.bf16.gmra.mrb[0].mxu0 %v4659
    %v4983 = vpop.f32.mrb[0].mxu0
    %v4984 = vadd.f32 0.0, %v4983
    %v4985 = vpop.f32.mrb[0].mxu0
    %v4986 = vpop.f32.mrb[0].mxu0
    %v4987 = vadd.f32 0.0, %v4986
    %v4988 = vpop.f32.mrb[0].mxu0
    %4989 = vmatprep.mubr.bf16.mxu0 0
    %4990 = vmatmul.mubr.bf16.gmra.mrb[0].mxu0 %v4662
    %v4991 = vpop.f32.mrb[0].mxu0
    %v4992 = vadd.f32 0.0, %v4991
    %v4993 = vpop.f32.mrb[0].mxu0
    %v4994 = vpop.f32.mrb[0].mxu0
    %v4995 = vadd.f32 0.0, %v4994
    %v4996 = vpop.f32.mrb[0].mxu0
    %4997 = vmatprep.mubr.bf16.mxu0 0
    %4998 = vmatmul.mubr.bf16.gmra.mrb[0].mxu0 %v4665
    %v4999 = vpop.f32.mrb[0].mxu0
    %v5000 = vadd.f32 0.0, %v4999
    %v5001 = vpop.f32.mrb[0].mxu0
    %v5002 = vpop.f32.mrb[0].mxu0
    %v5003 = vadd.f32 0.0, %v5002
    %v5004 = vpop.f32.mrb[0].mxu0
    %5005 = vmatprep.mubr.bf16.mxu0 0
    %5006 = vmatmul.mubr.bf16.gmra.mrb[0].mxu0 %v4668
    %v5007 = vpop.f32.mrb[0].mxu0
    %v5008 = vadd.f32 0.0, %v5007
    %v5009 = vpop.f32.mrb[0].mxu0
    %v5010 = vpop.f32.mrb[0].mxu0
    %v5011 = vadd.f32 0.0, %v5010
    %v5012 = vpop.f32.mrb[0].mxu0
    %5013 = vmatprep.mubr.bf16.mxu0 0
    %5014 = vmatmul.mubr.bf16.gmra.mrb[0].mxu0 %v4671
    %v5015 = vpop.f32.mrb[0].mxu0
    %v5016 = vadd.f32 0.0, %v5015
    %v5017 = vpop.f32.mrb[0].mxu0
    %v5018 = vpop.f32.mrb[0].mxu0
    %v5019 = vadd.f32 0.0, %v5018
    %v5020 = vpop.f32.mrb[0].mxu0
    %5021 = vmatprep.mubr.bf16.mxu0 0
    %5022 = vmatmul.mubr.bf16.gmra.mrb[0].mxu0 %v4674
    %v5023 = vpop.f32.mrb[0].mxu0
    %v5024 = vadd.f32 0.0, %v5023
    %v5025 = vpop.f32.mrb[0].mxu0
    %v5026 = vpop.f32.mrb[0].mxu0
    %v5027 = vadd.f32 0.0, %v5026
    %v5028 = vpop.f32.mrb[0].mxu0
    %5029 = vmatprep.mubr.bf16.mxu0 0
    %5030 = vmatmul.mubr.bf16.gmra.mrb[0].mxu0 %v4677
    %v5031 = vpop.f32.mrb[0].mxu0
    %v5032 = vadd.f32 0.0, %v5031
    %v5033 = vpop.f32.mrb[0].mxu0
    %v5034 = vpop.f32.mrb[0].mxu0
    %v5035 = vadd.f32 0.0, %v5034
    %v5036 = vpop.f32.mrb[0].mxu0
    %5037 = vmatprep.mubr.bf16.mxu0 0
    %5038 = vmatmul.mubr.bf16.gmra.mrb[0].mxu0 %v4680
    %v5039 = vpop.f32.mrb[0].mxu0
    %v5040 = vadd.f32 0.0, %v5039
    %v5041 = vpop.f32.mrb[0].mxu0
    %v5042 = vpop.f32.mrb[0].mxu0
    %v5043 = vadd.f32 0.0, %v5042
    %v5044 = vpop.f32.mrb[0].mxu0
    %5045 = vdwg.mxu0
    %v5046 = vmul.f32 %v4289, %v4727
    %v5047 = vmul.f32 %v4291, %v4729
    %v5048 = vmul.f32 %v4482, %v4920
    %v5049 = vmul.f32 %v4293, %v4731
    %v5050 = vmul.f32 %v4295, %v4733
    %v5051 = vmul.f32 %v4485, %v4923
    %v5052 = vmul.f32 %v4299, %v4737
    %v5053 = vmul.f32 %v4301, %v4739
    %v5054 = vmul.f32 %v4490, %v4928
    %v5055 = vmul.f32 %v4303, %v4741
    %v5056 = vmul.f32 %v4305, %v4743
    %v5057 = vmul.f32 %v4493, %v4931
    %v5058 = vmul.f32 %v4309, %v4747
    %v5059 = vmul.f32 %v4311, %v4749
    %v5060 = vmul.f32 %v4498, %v4936
    %v5061 = vmul.f32 %v4313, %v4751
    %v5062 = vmul.f32 %v4315, %v4753
    %v5063 = vmul.f32 %v4501, %v4939
    %v5064 = vmul.f32 %v4319, %v4757
    %v5065 = vmul.f32 %v4321, %v4759
    %v5066 = vmul.f32 %v4506, %v4944
    %v5067 = vmul.f32 %v4323, %v4761
    %v5068 = vmul.f32 %v4325, %v4763
    %v5069 = vmul.f32 %v4509, %v4947
    %v5070 = vmul.f32 %v4329, %v4767
    %v5071 = vmul.f32 %v4331, %v4769
    %v5072 = vmul.f32 %v4514, %v4952
    %v5073 = vmul.f32 %v4333, %v4771
    %v5074 = vmul.f32 %v4335, %v4773
    %v5075 = vmul.f32 %v4517, %v4955
    %v5076 = vmul.f32 %v4339, %v4777
    %v5077 = vmul.f32 %v4341, %v4779
    %v5078 = vmul.f32 %v4522, %v4960
    %v5079 = vmul.f32 %v4343, %v4781
    %v5080 = vmul.f32 %v4345, %v4783
    %v5081 = vmul.f32 %v4525, %v4963
    %v5082 = vmul.f32 %v4349, %v4787
    %v5083 = vmul.f32 %v4351, %v4789
    %v5084 = vmul.f32 %v4530, %v4968
    %v5085 = vmul.f32 %v4353, %v4791
    %v5086 = vmul.f32 %v4355, %v4793
    %v5087 = vmul.f32 %v4533, %v4971
    %v5088 = vmul.f32 %v4359, %v4797
    %v5089 = vmul.f32 %v4361, %v4799
    %v5090 = vmul.f32 %v4538, %v4976
    %v5091 = vmul.f32 %v4363, %v4801
    %v5092 = vmul.f32 %v4365, %v4803
    %v5093 = vmul.f32 %v4541, %v4979
    %v5094 = vmul.f32 %v4369, %v4807
    %v5095 = vmul.f32 %v4371, %v4809
    %v5096 = vmul.f32 %v4546, %v4984
    %v5097 = vmul.f32 %v4373, %v4811
    %v5098 = vmul.f32 %v4375, %v4813
    %v5099 = vmul.f32 %v4549, %v4987
    %v5100 = vmul.f32 %v4379, %v4817
    %v5101 = vmul.f32 %v4381, %v4819
    %v5102 = vmul.f32 %v4554, %v4992
    %v5103 = vmul.f32 %v4383, %v4821
    %v5104 = vmul.f32 %v4385, %v4823
    %v5105 = vmul.f32 %v4557, %v4995
    %v5106 = vmul.f32 %v4389, %v4827
    %v5107 = vmul.f32 %v4391, %v4829
    %v5108 = vmul.f32 %v4562, %v5000
    %v5109 = vmul.f32 %v4393, %v4831
    %v5110 = vmul.f32 %v4395, %v4833
    %v5111 = vmul.f32 %v4565, %v5003
    %v5112 = vmul.f32 %v4399, %v4837
    %v5113 = vmul.f32 %v4401, %v4839
    %v5114 = vmul.f32 %v4570, %v5008
    %v5115 = vmul.f32 %v4403, %v4841
    %v5116 = vmul.f32 %v4405, %v4843
    %v5117 = vmul.f32 %v4573, %v5011
    %v5118 = vmul.f32 %v4409, %v4847
    %v5119 = vmul.f32 %v4411, %v4849
    %v5120 = vmul.f32 %v4578, %v5016
    %v5121 = vmul.f32 %v4413, %v4851
    %v5122 = vmul.f32 %v4415, %v4853
    %v5123 = vmul.f32 %v4581, %v5019
    %v5124 = vmul.f32 %v4419, %v4857
    %v5125 = vmul.f32 %v4421, %v4859
    %v5126 = vmul.f32 %v4586, %v5024
    %v5127 = vmul.f32 %v4423, %v4861
    %v5128 = vmul.f32 %v4425, %v4863
    %v5129 = vmul.f32 %v4589, %v5027
    %v5130 = vmul.f32 %v4429, %v4867
    %v5131 = vmul.f32 %v4431, %v4869
    %v5132 = vmul.f32 %v4594, %v5032
    %v5133 = vmul.f32 %v4433, %v4871
    %v5134 = vmul.f32 %v4435, %v4873
    %v5135 = vmul.f32 %v4597, %v5035
    %v5136 = vmul.f32 %v4439, %v4877
    %v5137 = vmul.f32 %v4441, %v4879
    %v5138 = vmul.f32 %v4602, %v5040
    %v5139 = vmul.f32 %v4443, %v4881
    %v5140 = vmul.f32 %v4445, %v4883
    %v5141 = vmul.f32 %v4605, %v5043
    %v5142 = vpack.c.bf16 %v5049, %v5046
    %v5143 = vpack.c.bf16 %v5050, %v5047
    %v5144 = vpack.c.bf16 %v5051, %v5048
    %v5145 = vpack.c.bf16 %v5055, %v5052
    %v5146 = vpack.c.bf16 %v5056, %v5053
    %v5147 = vpack.c.bf16 %v5057, %v5054
    %v5148 = vpack.c.bf16 %v5061, %v5058
    %v5149 = vpack.c.bf16 %v5062, %v5059
    %v5150 = vpack.c.bf16 %v5063, %v5060
    %v5151 = vpack.c.bf16 %v5067, %v5064
    %v5152 = vpack.c.bf16 %v5068, %v5065
    %v5153 = vpack.c.bf16 %v5069, %v5066
    %v5154 = vpack.c.bf16 %v5073, %v5070
    %v5155 = vpack.c.bf16 %v5074, %v5071
    %v5156 = vpack.c.bf16 %v5075, %v5072
    %v5157 = vpack.c.bf16 %v5079, %v5076
    %v5158 = vpack.c.bf16 %v5080, %v5077
    %v5159 = vpack.c.bf16 %v5081, %v5078
    %v5160 = vpack.c.bf16 %v5085, %v5082
    %v5161 = vpack.c.bf16 %v5086, %v5083
    %v5162 = vpack.c.bf16 %v5087, %v5084
    %v5163 = vpack.c.bf16 %v5091, %v5088
    %v5164 = vpack.c.bf16 %v5092, %v5089
    %v5165 = vpack.c.bf16 %v5093, %v5090
    %v5166 = vpack.c.bf16 %v5097, %v5094
    %v5167 = vpack.c.bf16 %v5098, %v5095
    %v5168 = vpack.c.bf16 %v5099, %v5096
    %v5169 = vpack.c.bf16 %v5103, %v5100
    %v5170 = vpack.c.bf16 %v5104, %v5101
    %v5171 = vpack.c.bf16 %v5105, %v5102
    %v5172 = vpack.c.bf16 %v5109, %v5106
    %v5173 = vpack.c.bf16 %v5110, %v5107
    %v5174 = vpack.c.bf16 %v5111, %v5108
    %v5175 = vpack.c.bf16 %v5115, %v5112
    %v5176 = vpack.c.bf16 %v5116, %v5113
    %v5177 = vpack.c.bf16 %v5117, %v5114
    %v5178 = vpack.c.bf16 %v5121, %v5118
    %v5179 = vpack.c.bf16 %v5122, %v5119
    %v5180 = vpack.c.bf16 %v5123, %v5120
    %v5181 = vpack.c.bf16 %v5127, %v5124
    %v5182 = vpack.c.bf16 %v5128, %v5125
    %v5183 = vpack.c.bf16 %v5129, %v5126
    %v5184 = vpack.c.bf16 %v5133, %v5130
    %v5185 = vpack.c.bf16 %v5134, %v5131
    %v5186 = vpack.c.bf16 %v5135, %v5132
    %v5187 = vpack.c.bf16 %v5139, %v5136
    %v5188 = vpack.c.bf16 %v5140, %v5137
    %v5189 = vpack.c.bf16 %v5141, %v5138
    %v5190 = vld [vmem:[%s9] sm:$0xf]
    %v5191 = vld [vmem:[%s9 + $0x4] sm:$0xf]
    %v5192 = vld [vmem:[%s9 + $0x8] sm:$0xf]
    %v5193 = vld [vmem:[%s9 + $0xc] sm:$0xf]
    %v5194 = vld [vmem:[%s9 + $0x10] sm:$0xf]
    %v5195 = vld [vmem:[%s9 + $0x14] sm:$0xf]
    %v5196 = vld [vmem:[%s9 + $0x18] sm:$0xf]
    %v5197 = vld [vmem:[%s9 + $0x1c] sm:$0xf]
    %v5198 = vld [vmem:[%s9 + $0x20] sm:$0xf]
    %v5199 = vld [vmem:[%s9 + $0x24] sm:$0xf]
    %v5200 = vld [vmem:[%s9 + $0x28] sm:$0xf]
    %v5201 = vld [vmem:[%s9 + $0x2c] sm:$0xf]
    %v5202 = vld [vmem:[%s9 + $0x30] sm:$0xf]
    %v5203 = vld [vmem:[%s9 + $0x34] sm:$0xf]
    %v5204 = vld [vmem:[%s9 + $0x38] sm:$0xf]
    %v5205 = vld [vmem:[%s9 + $0x3c] sm:$0xf]
    %v5206 = vld [vmem:[%s9 + $0x40] sm:$0xf]
    %v5207 = vld [vmem:[%s9 + $0x44] sm:$0xf]
    %v5208 = vld [vmem:[%s9 + $0x48] sm:$0xf]
    %v5209 = vld [vmem:[%s9 + $0x4c] sm:$0xf]
    %v5210 = vld [vmem:[%s9 + $0x50] sm:$0xf]
    %v5211 = vld [vmem:[%s9 + $0x54] sm:$0xf]
    %v5212 = vld [vmem:[%s9 + $0x58] sm:$0xf]
    %v5213 = vld [vmem:[%s9 + $0x5c] sm:$0xf]
    %v5214 = vld [vmem:[%s9 + $0x60] sm:$0xf]
    %v5215 = vld [vmem:[%s9 + $0x64] sm:$0xf]
    %v5216 = vld [vmem:[%s9 + $0x68] sm:$0xf]
    %v5217 = vld [vmem:[%s9 + $0x6c] sm:$0xf]
    %v5218 = vld [vmem:[%s9 + $0x70] sm:$0xf]
    %v5219 = vld [vmem:[%s9 + $0x74] sm:$0xf]
    %v5220 = vld [vmem:[%s9 + $0x78] sm:$0xf]
    %v5221 = vld [vmem:[%s9 + $0x7c] sm:$0xf]
    %v5222 = vld [vmem:[%s9 + $0x80] sm:$0xf]
    %v5223 = vld [vmem:[%s9 + $0x84] sm:$0xf]
    %v5224 = vld [vmem:[%s9 + $0x88] sm:$0xf]
    %v5225 = vld [vmem:[%s9 + $0x8c] sm:$0xf]
    %v5226 = vld [vmem:[%s9 + $0x90] sm:$0xf]
    %v5227 = vld [vmem:[%s9 + $0x94] sm:$0xf]
    %v5228 = vld [vmem:[%s9 + $0x98] sm:$0xf]
    %v5229 = vld [vmem:[%s9 + $0x9c] sm:$0xf]
    %v5230 = vld [vmem:[%s9 + $0xa0] sm:$0xf]
    %v5231 = vld [vmem:[%s9 + $0xa4] sm:$0xf]
    %v5232 = vld [vmem:[%s9 + $0xa8] sm:$0xf]
    %v5233 = vld [vmem:[%s9 + $0xac] sm:$0xf]
    %v5234 = vld [vmem:[%s9 + $0xb0] sm:$0xf]
    %v5235 = vld [vmem:[%s9 + $0xb4] sm:$0xf]
    %v5236 = vld [vmem:[%s9 + $0xb8] sm:$0xf]
    %v5237 = vld [vmem:[%s9 + $0xbc] sm:$0xf]
    %v5286 = vunpack.c.l.b16 %v5190
    %v5287 = vunpack.c.l.b16 %v5191
    %v5288 = vunpack.c.l.b16 %v5192
    %v5289 = vunpack.c.l.b16 %v5193
    %v5290 = vunpack.c.l.b16 %v5194
    %v5291 = vunpack.c.l.b16 %v5195
    %v5292 = vunpack.c.l.b16 %v5196
    %v5293 = vunpack.c.l.b16 %v5197
    %v5294 = vunpack.c.l.b16 %v5198
    %v5295 = vunpack.c.l.b16 %v5199
    %v5296 = vunpack.c.l.b16 %v5200
    %v5297 = vunpack.c.l.b16 %v5201
    %v5298 = vunpack.c.l.b16 %v5202
    %v5299 = vunpack.c.l.b16 %v5203
    %v5300 = vunpack.c.l.b16 %v5204
    %v5301 = vunpack.c.l.b16 %v5205
    %v5302 = vunpack.c.l.b16 %v5206
    %v5303 = vunpack.c.l.b16 %v5207
    %v5304 = vunpack.c.l.b16 %v5208
    %v5305 = vunpack.c.l.b16 %v5209
    %v5306 = vunpack.c.l.b16 %v5210
    %v5307 = vunpack.c.l.b16 %v5211
    %v5308 = vunpack.c.l.b16 %v5212
    %v5309 = vunpack.c.l.b16 %v5213
    %v5310 = vunpack.c.l.b16 %v5214
    %v5311 = vunpack.c.l.b16 %v5215
    %v5312 = vunpack.c.l.b16 %v5216
    %v5313 = vunpack.c.l.b16 %v5217
    %v5314 = vunpack.c.l.b16 %v5218
    %v5315 = vunpack.c.l.b16 %v5219
    %v5316 = vunpack.c.l.b16 %v5220
    %v5317 = vunpack.c.l.b16 %v5221
    %v5318 = vunpack.c.l.b16 %v5222
    %v5319 = vunpack.c.l.b16 %v5223
    %v5320 = vunpack.c.l.b16 %v5224
    %v5321 = vunpack.c.l.b16 %v5225
    %v5322 = vunpack.c.l.b16 %v5226
    %v5323 = vunpack.c.l.b16 %v5227
    %v5324 = vunpack.c.l.b16 %v5228
    %v5325 = vunpack.c.l.b16 %v5229
    %v5326 = vunpack.c.l.b16 %v5230
    %v5327 = vunpack.c.l.b16 %v5231
    %v5328 = vunpack.c.l.b16 %v5232
    %v5329 = vunpack.c.l.b16 %v5233
    %v5330 = vunpack.c.l.b16 %v5234
    %v5331 = vunpack.c.l.b16 %v5235
    %v5332 = vunpack.c.l.b16 %v5236
    %v5333 = vunpack.c.l.b16 %v5237
    %v5334 = vpack.c.b16 %v5287, %v5286
    %v5335 = vpack.c.b16 %v5289, %v5288
    %v5336 = vpack.c.b16 %v5291, %v5290
    %v5337 = vpack.c.b16 %v5293, %v5292
    %v5338 = vpack.c.b16 %v5295, %v5294
    %v5339 = vpack.c.b16 %v5297, %v5296
    %v5340 = vpack.c.b16 %v5299, %v5298
    %v5341 = vpack.c.b16 %v5301, %v5300
    %v5342 = vpack.c.b16 %v5303, %v5302
    %v5343 = vpack.c.b16 %v5305, %v5304
    %v5344 = vpack.c.b16 %v5307, %v5306
    %v5345 = vpack.c.b16 %v5309, %v5308
    %v5346 = vpack.c.b16 %v5311, %v5310
    %v5347 = vpack.c.b16 %v5313, %v5312
    %v5348 = vpack.c.b16 %v5315, %v5314
    %v5349 = vpack.c.b16 %v5317, %v5316
    %v5350 = vpack.c.b16 %v5319, %v5318
    %v5351 = vpack.c.b16 %v5321, %v5320
    %v5352 = vpack.c.b16 %v5323, %v5322
    %v5353 = vpack.c.b16 %v5325, %v5324
    %v5354 = vpack.c.b16 %v5327, %v5326
    %v5355 = vpack.c.b16 %v5329, %v5328
    %v5356 = vpack.c.b16 %v5331, %v5330
    %v5357 = vpack.c.b16 %v5333, %v5332
    %5382 = vmatprep.subr.bf16.mxu0 0
    %5383 = vmatpush1.bf16.msra.mxu0 %v5334
    %5384 = vmatprep.subr.bf16.mxu0 0
    %5385 = vmatpush1.bf16.msra.mxu0 %v5335
    %5386 = vmatprep.subr.bf16.mxu0 0
    %5387 = vmatpush1.bf16.msra.mxu0 %v5336
    %5388 = vmatprep.subr.bf16.mxu0 0
    %5389 = vmatpush1.bf16.msra.mxu0 %v5337
    %5390 = vmatprep.subr.bf16.mxu0 0
    %5391 = vmatpush1.bf16.msra.mxu0 %v5338
    %5392 = vmatprep.subr.bf16.mxu0 0
    %5393 = vmatpush1.bf16.msra.mxu0 %v5339
    %5394 = vmatprep.subr.bf16.mxu0 0
    %5395 = vmatpush1.bf16.msra.mxu0 %v5340
    %5396 = vmatprep.subr.bf16.mxu0 0
    %5397 = vmatpush1.bf16.msra.mxu0 %v5341
    %5398 = vmatprep.subr.bf16.mxu0 0
    %5399 = vmatpush1.bf16.msra.mxu0 %v5342
    %5400 = vmatprep.subr.bf16.mxu0 0
    %5401 = vmatpush1.bf16.msra.mxu0 %v5343
    %5402 = vmatprep.subr.bf16.mxu0 0
    %5403 = vmatpush1.bf16.msra.mxu0 %v5344
    %5404 = vmatprep.subr.bf16.mxu0 0
    %5405 = vmatpush1.bf16.msra.mxu0 %v5345
    %5406 = vmatprep.subr.bf16.mxu0 0
    %5407 = vmatpush1.bf16.msra.mxu0 %v5346
    %5408 = vmatprep.subr.bf16.mxu0 0
    %5409 = vmatpush1.bf16.msra.mxu0 %v5347
    %5410 = vmatprep.subr.bf16.mxu0 0
    %5411 = vmatpush1.bf16.msra.mxu0 %v5348
    %5412 = vmatprep.subr.bf16.mxu0 0
    %5413 = vmatpush1.bf16.msra.mxu0 %v5349
    %5414 = vmatprep.mubr.bf16.mxu0 %v5143
    %5415 = vmatmul.mubr.bf16.gmra.mrb[0].mxu0 %v5142
    %v5416 = vpop.f32.mrb[0].mxu0
    %v5417 = vadd.f32 0.0, %v5416
    %v5418 = vpop.f32.mrb[0].mxu0
    %v5419 = vpop.f32.mrb[0].mxu0
    %v5420 = vadd.f32 0.0, %v5419
    %v5421 = vpop.f32.mrb[0].mxu0
    %5422 = vmatprep.mubr.bf16.mxu0 %v5146
    %5423 = vmatmul.mubr.bf16.gmra.mrb[0].mxu0 %v5145
    %v5424 = vpop.f32.mrb[0].mxu0
    %v5425 = vadd.f32 0.0, %v5424
    %v5426 = vpop.f32.mrb[0].mxu0
    %v5427 = vpop.f32.mrb[0].mxu0
    %v5428 = vadd.f32 0.0, %v5427
    %v5429 = vpop.f32.mrb[0].mxu0
    %5430 = vmatprep.mubr.bf16.mxu0 %v5149
    %5431 = vmatmul.mubr.bf16.gmra.mrb[0].mxu0 %v5148
    %v5432 = vpop.f32.mrb[0].mxu0
    %v5433 = vadd.f32 0.0, %v5432
    %v5434 = vpop.f32.mrb[0].mxu0
    %v5435 = vpop.f32.mrb[0].mxu0
    %v5436 = vadd.f32 0.0, %v5435
    %v5437 = vpop.f32.mrb[0].mxu0
    %5438 = vmatprep.mubr.bf16.mxu0 %v5152
    %5439 = vmatmul.mubr.bf16.gmra.mrb[0].mxu0 %v5151
    %v5440 = vpop.f32.mrb[0].mxu0
    %v5441 = vadd.f32 0.0, %v5440
    %v5442 = vpop.f32.mrb[0].mxu0
    %v5443 = vpop.f32.mrb[0].mxu0
    %v5444 = vadd.f32 0.0, %v5443
    %v5445 = vpop.f32.mrb[0].mxu0
    %5446 = vmatprep.mubr.bf16.mxu0 %v5155
    %5447 = vmatmul.mubr.bf16.gmra.mrb[0].mxu0 %v5154
    %v5448 = vpop.f32.mrb[0].mxu0
    %v5449 = vadd.f32 0.0, %v5448
    %v5450 = vpop.f32.mrb[0].mxu0
    %v5451 = vpop.f32.mrb[0].mxu0
    %v5452 = vadd.f32 0.0, %v5451
    %v5453 = vpop.f32.mrb[0].mxu0
    %5454 = vmatprep.mubr.bf16.mxu0 %v5158
    %5455 = vmatmul.mubr.bf16.gmra.mrb[0].mxu0 %v5157
    %v5456 = vpop.f32.mrb[0].mxu0
    %v5457 = vadd.f32 0.0, %v5456
    %v5458 = vpop.f32.mrb[0].mxu0
    %v5459 = vpop.f32.mrb[0].mxu0
    %v5460 = vadd.f32 0.0, %v5459
    %v5461 = vpop.f32.mrb[0].mxu0
    %5462 = vmatprep.mubr.bf16.mxu0 %v5161
    %5463 = vmatmul.mubr.bf16.gmra.mrb[0].mxu0 %v5160
    %v5464 = vpop.f32.mrb[0].mxu0
    %v5465 = vadd.f32 0.0, %v5464
    %v5466 = vpop.f32.mrb[0].mxu0
    %v5467 = vpop.f32.mrb[0].mxu0
    %v5468 = vadd.f32 0.0, %v5467
    %v5469 = vpop.f32.mrb[0].mxu0
    %5470 = vmatprep.mubr.bf16.mxu0 %v5164
    %5471 = vmatmul.mubr.bf16.gmra.mrb[0].mxu0 %v5163
    %v5472 = vpop.f32.mrb[0].mxu0
    %v5473 = vadd.f32 0.0, %v5472
    %v5474 = vpop.f32.mrb[0].mxu0
    %v5475 = vpop.f32.mrb[0].mxu0
    %v5476 = vadd.f32 0.0, %v5475
    %v5477 = vpop.f32.mrb[0].mxu0
    %5478 = vmatprep.mubr.bf16.mxu0 %v5167
    %5479 = vmatmul.mubr.bf16.gmra.mrb[0].mxu0 %v5166
    %v5480 = vpop.f32.mrb[0].mxu0
    %v5481 = vadd.f32 0.0, %v5480
    %v5482 = vpop.f32.mrb[0].mxu0
    %v5483 = vpop.f32.mrb[0].mxu0
    %v5484 = vadd.f32 0.0, %v5483
    %v5485 = vpop.f32.mrb[0].mxu0
    %5486 = vmatprep.mubr.bf16.mxu0 %v5170
    %5487 = vmatmul.mubr.bf16.gmra.mrb[0].mxu0 %v5169
    %v5488 = vpop.f32.mrb[0].mxu0
    %v5489 = vadd.f32 0.0, %v5488
    %v5490 = vpop.f32.mrb[0].mxu0
    %v5491 = vpop.f32.mrb[0].mxu0
    %v5492 = vadd.f32 0.0, %v5491
    %v5493 = vpop.f32.mrb[0].mxu0
    %5494 = vmatprep.mubr.bf16.mxu0 %v5173
    %5495 = vmatmul.mubr.bf16.gmra.mrb[0].mxu0 %v5172
    %v5496 = vpop.f32.mrb[0].mxu0
    %v5497 = vadd.f32 0.0, %v5496
    %v5498 = vpop.f32.mrb[0].mxu0
    %v5499 = vpop.f32.mrb[0].mxu0
    %v5500 = vadd.f32 0.0, %v5499
    %v5501 = vpop.f32.mrb[0].mxu0
    %5502 = vmatprep.mubr.bf16.mxu0 %v5176
    %5503 = vmatmul.mubr.bf16.gmra.mrb[0].mxu0 %v5175
    %v5504 = vpop.f32.mrb[0].mxu0
    %v5505 = vadd.f32 0.0, %v5504
    %v5506 = vpop.f32.mrb[0].mxu0
    %v5507 = vpop.f32.mrb[0].mxu0
    %v5508 = vadd.f32 0.0, %v5507
    %v5509 = vpop.f32.mrb[0].mxu0
    %5510 = vmatprep.mubr.bf16.mxu0 %v5179
    %5511 = vmatmul.mubr.bf16.gmra.mrb[0].mxu0 %v5178
    %v5512 = vpop.f32.mrb[0].mxu0
    %v5513 = vadd.f32 0.0, %v5512
    %v5514 = vpop.f32.mrb[0].mxu0
    %v5515 = vpop.f32.mrb[0].mxu0
    %v5516 = vadd.f32 0.0, %v5515
    %v5517 = vpop.f32.mrb[0].mxu0
    %5518 = vmatprep.mubr.bf16.mxu0 %v5182
    %5519 = vmatmul.mubr.bf16.gmra.mrb[0].mxu0 %v5181
    %v5520 = vpop.f32.mrb[0].mxu0
    %v5521 = vadd.f32 0.0, %v5520
    %v5522 = vpop.f32.mrb[0].mxu0
    %v5523 = vpop.f32.mrb[0].mxu0
    %v5524 = vadd.f32 0.0, %v5523
    %v5525 = vpop.f32.mrb[0].mxu0
    %5526 = vmatprep.mubr.bf16.mxu0 %v5185
    %5527 = vmatmul.mubr.bf16.gmra.mrb[0].mxu0 %v5184
    %v5528 = vpop.f32.mrb[0].mxu0
    %v5529 = vadd.f32 0.0, %v5528
    %v5530 = vpop.f32.mrb[0].mxu0
    %v5531 = vpop.f32.mrb[0].mxu0
    %v5532 = vadd.f32 0.0, %v5531
    %v5533 = vpop.f32.mrb[0].mxu0
    %5534 = vmatprep.mubr.bf16.mxu0 %v5188
    %5535 = vmatmul.mubr.bf16.gmra.mrb[0].mxu0 %v5187
    %v5536 = vpop.f32.mrb[0].mxu0
    %v5537 = vadd.f32 0.0, %v5536
    %v5538 = vpop.f32.mrb[0].mxu0
    %v5539 = vpop.f32.mrb[0].mxu0
    %v5540 = vadd.f32 0.0, %v5539
    %v5541 = vpop.f32.mrb[0].mxu0
    %5542 = vdwg.mxu0
    %5543 = vmatprep.subr.bf16.mxu0 0
    %5544 = vmatpush1.bf16.msra.mxu0 %v5350
    %5545 = vmatprep.subr.bf16.mxu0 0
    %5546 = vmatpush1.bf16.msra.mxu0 %v5351
    %5547 = vmatprep.subr.bf16.mxu0 0
    %5548 = vmatpush1.bf16.msra.mxu0 %v5352
    %5549 = vmatprep.subr.bf16.mxu0 0
    %5550 = vmatpush1.bf16.msra.mxu0 %v5353
    %5551 = vmatprep.subr.bf16.mxu0 0
    %5552 = vmatpush1.bf16.msra.mxu0 %v5354
    %5553 = vmatprep.subr.bf16.mxu0 0
    %5554 = vmatpush1.bf16.msra.mxu0 %v5355
    %5555 = vmatprep.subr.bf16.mxu0 0
    %5556 = vmatpush1.bf16.msra.mxu0 %v5356
    %5557 = vmatprep.subr.bf16.mxu0 0
    %5558 = vmatpush1.bf16.msra.mxu0 %v5357
    %5559 = vmatprep.subr.bf16.mxu0 0
    %5560 = vmatpush1.bf16.msra.mxu0 0
    %5561 = vmatprep.subr.bf16.mxu0 0
    %5562 = vmatpush1.bf16.msra.mxu0 0
    %5563 = vmatprep.subr.bf16.mxu0 0
    %5564 = vmatpush1.bf16.msra.mxu0 0
    %5565 = vmatprep.subr.bf16.mxu0 0
    %5566 = vmatpush1.bf16.msra.mxu0 0
    %5567 = vmatprep.subr.bf16.mxu0 0
    %5568 = vmatpush1.bf16.msra.mxu0 0
    %5569 = vmatprep.subr.bf16.mxu0 0
    %5570 = vmatpush1.bf16.msra.mxu0 0
    %5571 = vmatprep.subr.bf16.mxu0 0
    %5572 = vmatpush1.bf16.msra.mxu0 0
    %5573 = vmatprep.subr.bf16.mxu0 0
    %5574 = vmatpush1.bf16.msra.mxu0 0
    %5575 = vmatprep.mubr.bf16.mxu0 0
    %5576 = vmatmul.mubr.bf16.gmra.mrb[0].mxu0 %v5144
    %v5577 = vpop.f32.mrb[0].mxu0
    %v5578 = vadd.f32 %v5417, %v5577
    %v5579 = vpop.f32.mrb[0].mxu0
    %v5580 = vpop.f32.mrb[0].mxu0
    %v5581 = vadd.f32 %v5420, %v5580
    %v5582 = vpop.f32.mrb[0].mxu0
    %5583 = vmatprep.mubr.bf16.mxu0 0
    %5584 = vmatmul.mubr.bf16.gmra.mrb[0].mxu0 %v5147
    %v5585 = vpop.f32.mrb[0].mxu0
    %v5586 = vadd.f32 %v5425, %v5585
    %v5587 = vpop.f32.mrb[0].mxu0
    %v5588 = vpop.f32.mrb[0].mxu0
    %v5589 = vadd.f32 %v5428, %v5588
    %v5590 = vpop.f32.mrb[0].mxu0
    %5591 = vmatprep.mubr.bf16.mxu0 0
    %5592 = vmatmul.mubr.bf16.gmra.mrb[0].mxu0 %v5150
    %v5593 = vpop.f32.mrb[0].mxu0
    %v5594 = vadd.f32 %v5433, %v5593
    %v5595 = vpop.f32.mrb[0].mxu0
    %v5596 = vpop.f32.mrb[0].mxu0
    %v5597 = vadd.f32 %v5436, %v5596
    %v5598 = vpop.f32.mrb[0].mxu0
    %5599 = vmatprep.mubr.bf16.mxu0 0
    %5600 = vmatmul.mubr.bf16.gmra.mrb[0].mxu0 %v5153
    %v5601 = vpop.f32.mrb[0].mxu0
    %v5602 = vadd.f32 %v5441, %v5601
    %v5603 = vpop.f32.mrb[0].mxu0
    %v5604 = vpop.f32.mrb[0].mxu0
    %v5605 = vadd.f32 %v5444, %v5604
    %v5606 = vpop.f32.mrb[0].mxu0
    %5607 = vmatprep.mubr.bf16.mxu0 0
    %5608 = vmatmul.mubr.bf16.gmra.mrb[0].mxu0 %v5156
    %v5609 = vpop.f32.mrb[0].mxu0
    %v5610 = vadd.f32 %v5449, %v5609
    %v5611 = vpop.f32.mrb[0].mxu0
    %v5612 = vpop.f32.mrb[0].mxu0
    %v5613 = vadd.f32 %v5452, %v5612
    %v5614 = vpop.f32.mrb[0].mxu0
    %5615 = vmatprep.mubr.bf16.mxu0 0
    %5616 = vmatmul.mubr.bf16.gmra.mrb[0].mxu0 %v5159
    %v5617 = vpop.f32.mrb[0].mxu0
    %v5618 = vadd.f32 %v5457, %v5617
    %v5619 = vpop.f32.mrb[0].mxu0
    %v5620 = vpop.f32.mrb[0].mxu0
    %v5621 = vadd.f32 %v5460, %v5620
    %v5622 = vpop.f32.mrb[0].mxu0
    %5623 = vmatprep.mubr.bf16.mxu0 0
    %5624 = vmatmul.mubr.bf16.gmra.mrb[0].mxu0 %v5162
    %v5625 = vpop.f32.mrb[0].mxu0
    %v5626 = vadd.f32 %v5465, %v5625
    %v5627 = vpop.f32.mrb[0].mxu0
    %v5628 = vpop.f32.mrb[0].mxu0
    %v5629 = vadd.f32 %v5468, %v5628
    %v5630 = vpop.f32.mrb[0].mxu0
    %5631 = vmatprep.mubr.bf16.mxu0 0
    %5632 = vmatmul.mubr.bf16.gmra.mrb[0].mxu0 %v5165
    %v5633 = vpop.f32.mrb[0].mxu0
    %v5634 = vadd.f32 %v5473, %v5633
    %v5635 = vpop.f32.mrb[0].mxu0
    %v5636 = vpop.f32.mrb[0].mxu0
    %v5637 = vadd.f32 %v5476, %v5636
    %v5638 = vpop.f32.mrb[0].mxu0
    %5639 = vmatprep.mubr.bf16.mxu0 0
    %5640 = vmatmul.mubr.bf16.gmra.mrb[0].mxu0 %v5168
    %v5641 = vpop.f32.mrb[0].mxu0
    %v5642 = vadd.f32 %v5481, %v5641
    %v5643 = vpop.f32.mrb[0].mxu0
    %v5644 = vpop.f32.mrb[0].mxu0
    %v5645 = vadd.f32 %v5484, %v5644
    %v5646 = vpop.f32.mrb[0].mxu0
    %5647 = vmatprep.mubr.bf16.mxu0 0
    %5648 = vmatmul.mubr.bf16.gmra.mrb[0].mxu0 %v5171
    %v5649 = vpop.f32.mrb[0].mxu0
    %v5650 = vadd.f32 %v5489, %v5649
    %v5651 = vpop.f32.mrb[0].mxu0
    %v5652 = vpop.f32.mrb[0].mxu0
    %v5653 = vadd.f32 %v5492, %v5652
    %v5654 = vpop.f32.mrb[0].mxu0
    %5655 = vmatprep.mubr.bf16.mxu0 0
    %5656 = vmatmul.mubr.bf16.gmra.mrb[0].mxu0 %v5174
    %v5657 = vpop.f32.mrb[0].mxu0
    %v5658 = vadd.f32 %v5497, %v5657
    %v5659 = vpop.f32.mrb[0].mxu0
    %v5660 = vpop.f32.mrb[0].mxu0
    %v5661 = vadd.f32 %v5500, %v5660
    %v5662 = vpop.f32.mrb[0].mxu0
    %5663 = vmatprep.mubr.bf16.mxu0 0
    %5664 = vmatmul.mubr.bf16.gmra.mrb[0].mxu0 %v5177
    %v5665 = vpop.f32.mrb[0].mxu0
    %v5666 = vadd.f32 %v5505, %v5665
    %v5667 = vpop.f32.mrb[0].mxu0
    %v5668 = vpop.f32.mrb[0].mxu0
    %v5669 = vadd.f32 %v5508, %v5668
    %v5670 = vpop.f32.mrb[0].mxu0
    %5671 = vmatprep.mubr.bf16.mxu0 0
    %5672 = vmatmul.mubr.bf16.gmra.mrb[0].mxu0 %v5180
    %v5673 = vpop.f32.mrb[0].mxu0
    %v5674 = vadd.f32 %v5513, %v5673
    %v5675 = vpop.f32.mrb[0].mxu0
    %v5676 = vpop.f32.mrb[0].mxu0
    %v5677 = vadd.f32 %v5516, %v5676
    %v5678 = vpop.f32.mrb[0].mxu0
    %5679 = vmatprep.mubr.bf16.mxu0 0
    %5680 = vmatmul.mubr.bf16.gmra.mrb[0].mxu0 %v5183
    %v5681 = vpop.f32.mrb[0].mxu0
    %v5682 = vadd.f32 %v5521, %v5681
    %v5683 = vpop.f32.mrb[0].mxu0
    %v5684 = vpop.f32.mrb[0].mxu0
    %v5685 = vadd.f32 %v5524, %v5684
    %v5686 = vpop.f32.mrb[0].mxu0
    %5687 = vmatprep.mubr.bf16.mxu0 0
    %5688 = vmatmul.mubr.bf16.gmra.mrb[0].mxu0 %v5186
    %v5689 = vpop.f32.mrb[0].mxu0
    %v5690 = vadd.f32 %v5529, %v5689
    %v5691 = vpop.f32.mrb[0].mxu0
    %v5692 = vpop.f32.mrb[0].mxu0
    %v5693 = vadd.f32 %v5532, %v5692
    %v5694 = vpop.f32.mrb[0].mxu0
    %5695 = vmatprep.mubr.bf16.mxu0 0
    %5696 = vmatmul.mubr.bf16.gmra.mrb[0].mxu0 %v5189
    %v5697 = vpop.f32.mrb[0].mxu0
    %v5698 = vadd.f32 %v5537, %v5697
    %v5699 = vpop.f32.mrb[0].mxu0
    %v5700 = vpop.f32.mrb[0].mxu0
    %v5701 = vadd.f32 %v5540, %v5700
    %v5702 = vpop.f32.mrb[0].mxu0
    %5703 = vdwg.mxu0
    %v5704 = vpack.c.bf16 %v5581, %v5578
    %v5705 = vpack.c.bf16 %v5589, %v5586
    %v5706 = vpack.c.bf16 %v5597, %v5594
    %v5707 = vpack.c.bf16 %v5605, %v5602
    %v5708 = vpack.c.bf16 %v5613, %v5610
    %v5709 = vpack.c.bf16 %v5621, %v5618
    %v5710 = vpack.c.bf16 %v5629, %v5626
    %v5711 = vpack.c.bf16 %v5637, %v5634
    %v5712 = vpack.c.bf16 %v5645, %v5642
    %v5713 = vpack.c.bf16 %v5653, %v5650
    %v5714 = vpack.c.bf16 %v5661, %v5658
    %v5715 = vpack.c.bf16 %v5669, %v5666
    %v5716 = vpack.c.bf16 %v5677, %v5674
    %v5717 = vpack.c.bf16 %v5685, %v5682
    %v5718 = vpack.c.bf16 %v5693, %v5690
    %v5719 = vpack.c.bf16 %v5701, %v5698
    %v5720 = vld [vmem:[%s10] sm:$0xf]
    %v5721 = vld [vmem:[%s10 + $0x4] sm:$0xf]
    %v5722 = vld [vmem:[%s10 + $0x8] sm:$0xf]
    %v5723 = vld [vmem:[%s10 + $0xc] sm:$0xf]
    %v5724 = vld [vmem:[%s10 + $0x10] sm:$0xf]
    %v5725 = vld [vmem:[%s10 + $0x14] sm:$0xf]
    %v5726 = vld [vmem:[%s10 + $0x18] sm:$0xf]
    %v5727 = vld [vmem:[%s10 + $0x1c] sm:$0xf]
    %v5728 = vld [vmem:[%s11] sm:$0x1]
    %v5730 = vlaneseq
    %v5731 = vshrl.u32 %v5730, 7
    %v5732 = vsub.s32 0, %v5731
    %v5733 = vrot.slane %v5728, %v5732
    %v5743 = vunpack.c.l.b16 %v5720
    %v5744 = vunpack.c.l.b16 %v5721
    %v5745 = vunpack.c.l.b16 %v5722
    %v5746 = vunpack.c.l.b16 %v5723
    %v5747 = vunpack.c.l.b16 %v5724
    %v5748 = vunpack.c.l.b16 %v5725
    %v5749 = vunpack.c.l.b16 %v5726
    %v5750 = vunpack.c.l.b16 %v5727
    %v5751 = vpack.c.b16 %v5744, %v5743
    %v5752 = vpack.c.b16 %v5746, %v5745
    %v5753 = vpack.c.b16 %v5748, %v5747
    %v5754 = vpack.c.b16 %v5750, %v5749
    %v5760 = vsel %vm1959, %v5704, 0
    %v5763 = vsel %vm1959, %v5705, 0
    %v5766 = vsel %vm1959, %v5706, 0
    %v5769 = vsel %vm1959, %v5707, 0
    %v5772 = vsel %vm1959, %v5708, 0
    %v5775 = vsel %vm1959, %v5709, 0
    %v5778 = vsel %vm1959, %v5710, 0
    %v5781 = vsel %vm1959, %v5711, 0
    %v5784 = vsel %vm1959, %v5712, 0
    %v5787 = vsel %vm1959, %v5713, 0
    %v5790 = vsel %vm1959, %v5714, 0
    %v5793 = vsel %vm1959, %v5715, 0
    %v5796 = vsel %vm1959, %v5716, 0
    %v5799 = vsel %vm1959, %v5717, 0
    %v5802 = vsel %vm1959, %v5718, 0
    %v5805 = vsel %vm1959, %v5719, 0
    %5807 = vmatprep.subr.bf16.mxu0 0
    %5808 = vmatpush1.bf16.msra.mxu0 %v5751
    %5809 = vmatprep.subr.bf16.mxu0 0
    %5810 = vmatpush1.bf16.msra.mxu0 %v5752
    %5811 = vmatprep.subr.bf16.mxu0 0
    %5812 = vmatpush1.bf16.msra.mxu0 %v5753
    %5813 = vmatprep.subr.bf16.mxu0 0
    %5814 = vmatpush1.bf16.msra.mxu0 %v5754
    %5815 = vmatprep.subr.bf16.mxu0 0
    %5816 = vmatpush1.bf16.msra.mxu0 0
    %5817 = vmatprep.subr.bf16.mxu0 0
    %5818 = vmatpush1.bf16.msra.mxu0 0
    %5819 = vmatprep.subr.bf16.mxu0 0
    %5820 = vmatpush1.bf16.msra.mxu0 0
    %5821 = vmatprep.subr.bf16.mxu0 0
    %5822 = vmatpush1.bf16.msra.mxu0 0
    %5823 = vmatprep.subr.bf16.mxu0 0
    %5824 = vmatpush1.bf16.msra.mxu0 0
    %5825 = vmatprep.subr.bf16.mxu0 0
    %5826 = vmatpush1.bf16.msra.mxu0 0
    %5827 = vmatprep.subr.bf16.mxu0 0
    %5828 = vmatpush1.bf16.msra.mxu0 0
    %5829 = vmatprep.subr.bf16.mxu0 0
    %5830 = vmatpush1.bf16.msra.mxu0 0
    %5831 = vmatprep.subr.bf16.mxu0 0
    %5832 = vmatpush1.bf16.msra.mxu0 0
    %5833 = vmatprep.subr.bf16.mxu0 0
    %5834 = vmatpush1.bf16.msra.mxu0 0
    %5835 = vmatprep.subr.bf16.mxu0 0
    %5836 = vmatpush1.bf16.msra.mxu0 0
    %5837 = vmatprep.subr.bf16.mxu0 0
    %5838 = vmatpush1.bf16.msra.mxu0 0
    %5839 = vmatprep.mubr.bf16.mxu0 0
    %5840 = vmatmul.mubr.bf16.gmra.mrb[0].mxu0 %v5760
    %v5841 = vpop.f32.mrb[0].mxu0
    %v5842 = vadd.f32 %v5733, %v5841
    %v5843 = vpop.f32.mrb[0].mxu0
    %v5844 = vpop.f32.mrb[0].mxu0
    %v5845 = vadd.f32 %v5733, %v5844
    %v5846 = vpop.f32.mrb[0].mxu0
    %5847 = vmatprep.mubr.bf16.mxu0 0
    %5848 = vmatmul.mubr.bf16.gmra.mrb[0].mxu0 %v5763
    %v5849 = vpop.f32.mrb[0].mxu0
    %v5850 = vadd.f32 %v5733, %v5849
    %v5851 = vpop.f32.mrb[0].mxu0
    %v5852 = vpop.f32.mrb[0].mxu0
    %v5853 = vadd.f32 %v5733, %v5852
    %v5854 = vpop.f32.mrb[0].mxu0
    %5855 = vmatprep.mubr.bf16.mxu0 0
    %5856 = vmatmul.mubr.bf16.gmra.mrb[0].mxu0 %v5766
    %v5857 = vpop.f32.mrb[0].mxu0
    %v5858 = vadd.f32 %v5733, %v5857
    %v5859 = vpop.f32.mrb[0].mxu0
    %v5860 = vpop.f32.mrb[0].mxu0
    %v5861 = vadd.f32 %v5733, %v5860
    %v5862 = vpop.f32.mrb[0].mxu0
    %5863 = vmatprep.mubr.bf16.mxu0 0
    %5864 = vmatmul.mubr.bf16.gmra.mrb[0].mxu0 %v5769
    %v5865 = vpop.f32.mrb[0].mxu0
    %v5866 = vadd.f32 %v5733, %v5865
    %v5867 = vpop.f32.mrb[0].mxu0
    %v5868 = vpop.f32.mrb[0].mxu0
    %v5869 = vadd.f32 %v5733, %v5868
    %v5870 = vpop.f32.mrb[0].mxu0
    %5871 = vmatprep.mubr.bf16.mxu0 0
    %5872 = vmatmul.mubr.bf16.gmra.mrb[0].mxu0 %v5772
    %v5873 = vpop.f32.mrb[0].mxu0
    %v5874 = vadd.f32 %v5733, %v5873
    %v5875 = vpop.f32.mrb[0].mxu0
    %v5876 = vpop.f32.mrb[0].mxu0
    %v5877 = vadd.f32 %v5733, %v5876
    %v5878 = vpop.f32.mrb[0].mxu0
    %5879 = vmatprep.mubr.bf16.mxu0 0
    %5880 = vmatmul.mubr.bf16.gmra.mrb[0].mxu0 %v5775
    %v5881 = vpop.f32.mrb[0].mxu0
    %v5882 = vadd.f32 %v5733, %v5881
    %v5883 = vpop.f32.mrb[0].mxu0
    %v5884 = vpop.f32.mrb[0].mxu0
    %v5885 = vadd.f32 %v5733, %v5884
    %v5886 = vpop.f32.mrb[0].mxu0
    %5887 = vmatprep.mubr.bf16.mxu0 0
    %5888 = vmatmul.mubr.bf16.gmra.mrb[0].mxu0 %v5778
    %v5889 = vpop.f32.mrb[0].mxu0
    %v5890 = vadd.f32 %v5733, %v5889
    %v5891 = vpop.f32.mrb[0].mxu0
    %v5892 = vpop.f32.mrb[0].mxu0
    %v5893 = vadd.f32 %v5733, %v5892
    %v5894 = vpop.f32.mrb[0].mxu0
    %5895 = vmatprep.mubr.bf16.mxu0 0
    %5896 = vmatmul.mubr.bf16.gmra.mrb[0].mxu0 %v5781
    %v5897 = vpop.f32.mrb[0].mxu0
    %v5898 = vadd.f32 %v5733, %v5897
    %v5899 = vpop.f32.mrb[0].mxu0
    %v5900 = vpop.f32.mrb[0].mxu0
    %v5901 = vadd.f32 %v5733, %v5900
    %v5902 = vpop.f32.mrb[0].mxu0
    %5903 = vmatprep.mubr.bf16.mxu0 0
    %5904 = vmatmul.mubr.bf16.gmra.mrb[0].mxu0 %v5784
    %v5905 = vpop.f32.mrb[0].mxu0
    %v5906 = vadd.f32 %v5733, %v5905
    %v5907 = vpop.f32.mrb[0].mxu0
    %v5908 = vpop.f32.mrb[0].mxu0
    %v5909 = vadd.f32 %v5733, %v5908
    %v5910 = vpop.f32.mrb[0].mxu0
    %5911 = vmatprep.mubr.bf16.mxu0 0
    %5912 = vmatmul.mubr.bf16.gmra.mrb[0].mxu0 %v5787
    %v5913 = vpop.f32.mrb[0].mxu0
    %v5914 = vadd.f32 %v5733, %v5913
    %v5915 = vpop.f32.mrb[0].mxu0
    %v5916 = vpop.f32.mrb[0].mxu0
    %v5917 = vadd.f32 %v5733, %v5916
    %v5918 = vpop.f32.mrb[0].mxu0
    %5919 = vmatprep.mubr.bf16.mxu0 0
    %5920 = vmatmul.mubr.bf16.gmra.mrb[0].mxu0 %v5790
    %v5921 = vpop.f32.mrb[0].mxu0
    %v5922 = vadd.f32 %v5733, %v5921
    %v5923 = vpop.f32.mrb[0].mxu0
    %v5924 = vpop.f32.mrb[0].mxu0
    %v5925 = vadd.f32 %v5733, %v5924
    %v5926 = vpop.f32.mrb[0].mxu0
    %5927 = vmatprep.mubr.bf16.mxu0 0
    %5928 = vmatmul.mubr.bf16.gmra.mrb[0].mxu0 %v5793
    %v5929 = vpop.f32.mrb[0].mxu0
    %v5930 = vadd.f32 %v5733, %v5929
    %v5931 = vpop.f32.mrb[0].mxu0
    %v5932 = vpop.f32.mrb[0].mxu0
    %v5933 = vadd.f32 %v5733, %v5932
    %v5934 = vpop.f32.mrb[0].mxu0
    %5935 = vmatprep.mubr.bf16.mxu0 0
    %5936 = vmatmul.mubr.bf16.gmra.mrb[0].mxu0 %v5796
    %v5937 = vpop.f32.mrb[0].mxu0
    %v5938 = vadd.f32 %v5733, %v5937
    %v5939 = vpop.f32.mrb[0].mxu0
    %v5940 = vpop.f32.mrb[0].mxu0
    %v5941 = vadd.f32 %v5733, %v5940
    %v5942 = vpop.f32.mrb[0].mxu0
    %5943 = vmatprep.mubr.bf16.mxu0 0
    %5944 = vmatmul.mubr.bf16.gmra.mrb[0].mxu0 %v5799
    %v5945 = vpop.f32.mrb[0].mxu0
    %v5946 = vadd.f32 %v5733, %v5945
    %v5947 = vpop.f32.mrb[0].mxu0
    %v5948 = vpop.f32.mrb[0].mxu0
    %v5949 = vadd.f32 %v5733, %v5948
    %v5950 = vpop.f32.mrb[0].mxu0
    %5951 = vmatprep.mubr.bf16.mxu0 0
    %5952 = vmatmul.mubr.bf16.gmra.mrb[0].mxu0 %v5802
    %v5953 = vpop.f32.mrb[0].mxu0
    %v5954 = vadd.f32 %v5733, %v5953
    %v5955 = vpop.f32.mrb[0].mxu0
    %v5956 = vpop.f32.mrb[0].mxu0
    %v5957 = vadd.f32 %v5733, %v5956
    %v5958 = vpop.f32.mrb[0].mxu0
    %5959 = vmatprep.mubr.bf16.mxu0 0
    %5960 = vmatmul.mubr.bf16.gmra.mrb[0].mxu0 %v5805
    %v5961 = vpop.f32.mrb[0].mxu0
    %v5962 = vadd.f32 %v5733, %v5961
    %v5963 = vpop.f32.mrb[0].mxu0
    %v5964 = vpop.f32.mrb[0].mxu0
    %v5965 = vadd.f32 %v5733, %v5964
    %v5966 = vpop.f32.mrb[0].mxu0
    %5967 = vdwg.mxu0
    %vm5968 = vcmp.lt.s32.totalorder %v2459, 10
    %v5969 = vsel %vm5968, %v5842, -1e+30
    %v5970 = vsel %vm5968, %v5845, -1e+30
    %v5971 = vsel %vm5968, %v5850, -1e+30
    %v5972 = vsel %vm5968, %v5853, -1e+30
    %v5973 = vsel %vm5968, %v5858, -1e+30
    %v5974 = vsel %vm5968, %v5861, -1e+30
    %v5975 = vsel %vm5968, %v5866, -1e+30
    %v5976 = vsel %vm5968, %v5869, -1e+30
    %v5977 = vsel %vm5968, %v5874, -1e+30
    %v5978 = vsel %vm5968, %v5877, -1e+30
    %v5979 = vsel %vm5968, %v5882, -1e+30
    %v5980 = vsel %vm5968, %v5885, -1e+30
    %v5981 = vsel %vm5968, %v5890, -1e+30
    %v5982 = vsel %vm5968, %v5893, -1e+30
    %v5983 = vsel %vm5968, %v5898, -1e+30
    %v5984 = vsel %vm5968, %v5901, -1e+30
    %v5985 = vsel %vm5968, %v5906, -1e+30
    %v5986 = vsel %vm5968, %v5909, -1e+30
    %v5987 = vsel %vm5968, %v5914, -1e+30
    %v5988 = vsel %vm5968, %v5917, -1e+30
    %v5989 = vsel %vm5968, %v5922, -1e+30
    %v5990 = vsel %vm5968, %v5925, -1e+30
    %v5991 = vsel %vm5968, %v5930, -1e+30
    %v5992 = vsel %vm5968, %v5933, -1e+30
    %v5993 = vsel %vm5968, %v5938, -1e+30
    %v5994 = vsel %vm5968, %v5941, -1e+30
    %v5995 = vsel %vm5968, %v5946, -1e+30
    %v5996 = vsel %vm5968, %v5949, -1e+30
    %v5997 = vsel %vm5968, %v5954, -1e+30
    %v5998 = vsel %vm5968, %v5957, -1e+30
    %v5999 = vsel %vm5968, %v5962, -1e+30
    %v6000 = vsel %vm5968, %v5965, -1e+30
    %6001 = vmax.xlane.f32.xlu0 %v5969
    %v6002 = vpop.xlane.xlu0 %6001
    %6003 = vmax.xlane.f32.xlu0 %v5970
    %v6004 = vpop.xlane.xlu0 %6003
    %6005 = vmax.xlane.f32.xlu0 %v5971
    %v6006 = vpop.xlane.xlu0 %6005
    %6007 = vmax.xlane.f32.xlu0 %v5972
    %v6008 = vpop.xlane.xlu0 %6007
    %6009 = vmax.xlane.f32.xlu0 %v5973
    %v6010 = vpop.xlane.xlu0 %6009
    %6011 = vmax.xlane.f32.xlu0 %v5974
    %v6012 = vpop.xlane.xlu0 %6011
    %6013 = vmax.xlane.f32.xlu0 %v5975
    %v6014 = vpop.xlane.xlu0 %6013
    %6015 = vmax.xlane.f32.xlu0 %v5976
    %v6016 = vpop.xlane.xlu0 %6015
    %6017 = vmax.xlane.f32.xlu0 %v5977
    %v6018 = vpop.xlane.xlu0 %6017
    %6019 = vmax.xlane.f32.xlu0 %v5978
    %v6020 = vpop.xlane.xlu0 %6019
    %6021 = vmax.xlane.f32.xlu0 %v5979
    %v6022 = vpop.xlane.xlu0 %6021
    %6023 = vmax.xlane.f32.xlu0 %v5980
    %v6024 = vpop.xlane.xlu0 %6023
    %6025 = vmax.xlane.f32.xlu0 %v5981
    %v6026 = vpop.xlane.xlu0 %6025
    %6027 = vmax.xlane.f32.xlu0 %v5982
    %v6028 = vpop.xlane.xlu0 %6027
    %6029 = vmax.xlane.f32.xlu0 %v5983
    %v6030 = vpop.xlane.xlu0 %6029
    %6031 = vmax.xlane.f32.xlu0 %v5984
    %v6032 = vpop.xlane.xlu0 %6031
    %6033 = vmax.xlane.f32.xlu0 %v5985
    %v6034 = vpop.xlane.xlu0 %6033
    %6035 = vmax.xlane.f32.xlu0 %v5986
    %v6036 = vpop.xlane.xlu0 %6035
    %6037 = vmax.xlane.f32.xlu0 %v5987
    %v6038 = vpop.xlane.xlu0 %6037
    %6039 = vmax.xlane.f32.xlu0 %v5988
    %v6040 = vpop.xlane.xlu0 %6039
    %6041 = vmax.xlane.f32.xlu0 %v5989
    %v6042 = vpop.xlane.xlu0 %6041
    %6043 = vmax.xlane.f32.xlu0 %v5990
    %v6044 = vpop.xlane.xlu0 %6043
    %6045 = vmax.xlane.f32.xlu0 %v5991
    %v6046 = vpop.xlane.xlu0 %6045
    %6047 = vmax.xlane.f32.xlu0 %v5992
    %v6048 = vpop.xlane.xlu0 %6047
    %6049 = vmax.xlane.f32.xlu0 %v5993
    %v6050 = vpop.xlane.xlu0 %6049
    %6051 = vmax.xlane.f32.xlu0 %v5994
    %v6052 = vpop.xlane.xlu0 %6051
    %6053 = vmax.xlane.f32.xlu0 %v5995
    %v6054 = vpop.xlane.xlu0 %6053
    %6055 = vmax.xlane.f32.xlu0 %v5996
    %v6056 = vpop.xlane.xlu0 %6055
    %6057 = vmax.xlane.f32.xlu0 %v5997
    %v6058 = vpop.xlane.xlu0 %6057
    %6059 = vmax.xlane.f32.xlu0 %v5998
    %v6060 = vpop.xlane.xlu0 %6059
    %6061 = vmax.xlane.f32.xlu0 %v5999
    %v6062 = vpop.xlane.xlu0 %6061
    %6063 = vmax.xlane.f32.xlu0 %v6000
    %v6064 = vpop.xlane.xlu0 %6063
    %v6065 = vsub.f32 %v5969, %v6002
    %v6066 = vsub.f32 %v5970, %v6004
    %v6067 = vsub.f32 %v5971, %v6006
    %v6068 = vsub.f32 %v5972, %v6008
    %v6069 = vsub.f32 %v5973, %v6010
    %v6070 = vsub.f32 %v5974, %v6012
    %v6071 = vsub.f32 %v5975, %v6014
    %v6072 = vsub.f32 %v5976, %v6016
    %v6073 = vsub.f32 %v5977, %v6018
    %v6074 = vsub.f32 %v5978, %v6020
    %v6075 = vsub.f32 %v5979, %v6022
    %v6076 = vsub.f32 %v5980, %v6024
    %v6077 = vsub.f32 %v5981, %v6026
    %v6078 = vsub.f32 %v5982, %v6028
    %v6079 = vsub.f32 %v5983, %v6030
    %v6080 = vsub.f32 %v5984, %v6032
    %v6081 = vsub.f32 %v5985, %v6034
    %v6082 = vsub.f32 %v5986, %v6036
    %v6083 = vsub.f32 %v5987, %v6038
    %v6084 = vsub.f32 %v5988, %v6040
    %v6085 = vsub.f32 %v5989, %v6042
    %v6086 = vsub.f32 %v5990, %v6044
    %v6087 = vsub.f32 %v5991, %v6046
    %v6088 = vsub.f32 %v5992, %v6048
    %v6089 = vsub.f32 %v5993, %v6050
    %v6090 = vsub.f32 %v5994, %v6052
    %v6091 = vsub.f32 %v5995, %v6054
    %v6092 = vsub.f32 %v5996, %v6056
    %v6093 = vsub.f32 %v5997, %v6058
    %v6094 = vsub.f32 %v5998, %v6060
    %v6095 = vsub.f32 %v5999, %v6062
    %v6096 = vsub.f32 %v6000, %v6064
    %v6097 = vmul.f32 %v6065, 1.442695
    %v6098 = vpow.pop %v6097
    %v6099 = vmul.f32 %v6066, 1.442695
    %v6100 = vpow.pop %v6099
    %v6101 = vmul.f32 %v6067, 1.442695
    %v6102 = vpow.pop %v6101
    %v6103 = vmul.f32 %v6068, 1.442695
    %v6104 = vpow.pop %v6103
    %v6105 = vmul.f32 %v6069, 1.442695
    %v6106 = vpow.pop %v6105
    %v6107 = vmul.f32 %v6070, 1.442695
    %v6108 = vpow.pop %v6107
    %v6109 = vmul.f32 %v6071, 1.442695
    %v6110 = vpow.pop %v6109
    %v6111 = vmul.f32 %v6072, 1.442695
    %v6112 = vpow.pop %v6111
    %v6113 = vmul.f32 %v6073, 1.442695
    %v6114 = vpow.pop %v6113
    %v6115 = vmul.f32 %v6074, 1.442695
    %v6116 = vpow.pop %v6115
    %v6117 = vmul.f32 %v6075, 1.442695
    %v6118 = vpow.pop %v6117
    %v6119 = vmul.f32 %v6076, 1.442695
    %v6120 = vpow.pop %v6119
    %v6121 = vmul.f32 %v6077, 1.442695
    %v6122 = vpow.pop %v6121
    %v6123 = vmul.f32 %v6078, 1.442695
    %v6124 = vpow.pop %v6123
    %v6125 = vmul.f32 %v6079, 1.442695
    %v6126 = vpow.pop %v6125
    %v6127 = vmul.f32 %v6080, 1.442695
    %v6128 = vpow.pop %v6127
    %v6129 = vmul.f32 %v6081, 1.442695
    %v6130 = vpow.pop %v6129
    %v6131 = vmul.f32 %v6082, 1.442695
    %v6132 = vpow.pop %v6131
    %v6133 = vmul.f32 %v6083, 1.442695
    %v6134 = vpow.pop %v6133
    %v6135 = vmul.f32 %v6084, 1.442695
    %v6136 = vpow.pop %v6135
    %v6137 = vmul.f32 %v6085, 1.442695
    %v6138 = vpow.pop %v6137
    %v6139 = vmul.f32 %v6086, 1.442695
    %v6140 = vpow.pop %v6139
    %v6141 = vmul.f32 %v6087, 1.442695
    %v6142 = vpow.pop %v6141
    %v6143 = vmul.f32 %v6088, 1.442695
    %v6144 = vpow.pop %v6143
    %v6145 = vmul.f32 %v6089, 1.442695
    %v6146 = vpow.pop %v6145
    %v6147 = vmul.f32 %v6090, 1.442695
    %v6148 = vpow.pop %v6147
    %v6149 = vmul.f32 %v6091, 1.442695
    %v6150 = vpow.pop %v6149
    %v6151 = vmul.f32 %v6092, 1.442695
    %v6152 = vpow.pop %v6151
    %v6153 = vmul.f32 %v6093, 1.442695
    %v6154 = vpow.pop %v6153
    %v6155 = vmul.f32 %v6094, 1.442695
    %v6156 = vpow.pop %v6155
    %v6157 = vmul.f32 %v6095, 1.442695
    %v6158 = vpow.pop %v6157
    %v6159 = vmul.f32 %v6096, 1.442695
    %v6160 = vpow.pop %v6159
    %6161 = vadd.xlane.f32.xlu0 %v6098
    %v6162 = vpop.xlane.xlu0 %6161
    %6163 = vadd.xlane.f32.xlu0 %v6100
    %v6164 = vpop.xlane.xlu0 %6163
    %6165 = vadd.xlane.f32.xlu0 %v6102
    %v6166 = vpop.xlane.xlu0 %6165
    %6167 = vadd.xlane.f32.xlu0 %v6104
    %v6168 = vpop.xlane.xlu0 %6167
    %6169 = vadd.xlane.f32.xlu0 %v6106
    %v6170 = vpop.xlane.xlu0 %6169
    %6171 = vadd.xlane.f32.xlu0 %v6108
    %v6172 = vpop.xlane.xlu0 %6171
    %6173 = vadd.xlane.f32.xlu0 %v6110
    %v6174 = vpop.xlane.xlu0 %6173
    %6175 = vadd.xlane.f32.xlu0 %v6112
    %v6176 = vpop.xlane.xlu0 %6175
    %6177 = vadd.xlane.f32.xlu0 %v6114
    %v6178 = vpop.xlane.xlu0 %6177
    %6179 = vadd.xlane.f32.xlu0 %v6116
    %v6180 = vpop.xlane.xlu0 %6179
    %6181 = vadd.xlane.f32.xlu0 %v6118
    %v6182 = vpop.xlane.xlu0 %6181
    %6183 = vadd.xlane.f32.xlu0 %v6120
    %v6184 = vpop.xlane.xlu0 %6183
    %6185 = vadd.xlane.f32.xlu0 %v6122
    %v6186 = vpop.xlane.xlu0 %6185
    %6187 = vadd.xlane.f32.xlu0 %v6124
    %v6188 = vpop.xlane.xlu0 %6187
    %6189 = vadd.xlane.f32.xlu0 %v6126
    %v6190 = vpop.xlane.xlu0 %6189
    %6191 = vadd.xlane.f32.xlu0 %v6128
    %v6192 = vpop.xlane.xlu0 %6191
    %6193 = vadd.xlane.f32.xlu0 %v6130
    %v6194 = vpop.xlane.xlu0 %6193
    %6195 = vadd.xlane.f32.xlu0 %v6132
    %v6196 = vpop.xlane.xlu0 %6195
    %6197 = vadd.xlane.f32.xlu0 %v6134
    %v6198 = vpop.xlane.xlu0 %6197
    %6199 = vadd.xlane.f32.xlu0 %v6136
    %v6200 = vpop.xlane.xlu0 %6199
    %6201 = vadd.xlane.f32.xlu0 %v6138
    %v6202 = vpop.xlane.xlu0 %6201
    %6203 = vadd.xlane.f32.xlu0 %v6140
    %v6204 = vpop.xlane.xlu0 %6203
    %6205 = vadd.xlane.f32.xlu0 %v6142
    %v6206 = vpop.xlane.xlu0 %6205
    %6207 = vadd.xlane.f32.xlu0 %v6144
    %v6208 = vpop.xlane.xlu0 %6207
    %6209 = vadd.xlane.f32.xlu0 %v6146
    %v6210 = vpop.xlane.xlu0 %6209
    %6211 = vadd.xlane.f32.xlu0 %v6148
    %v6212 = vpop.xlane.xlu0 %6211
    %6213 = vadd.xlane.f32.xlu0 %v6150
    %v6214 = vpop.xlane.xlu0 %6213
    %6215 = vadd.xlane.f32.xlu0 %v6152
    %v6216 = vpop.xlane.xlu0 %6215
    %6217 = vadd.xlane.f32.xlu0 %v6154
    %v6218 = vpop.xlane.xlu0 %6217
    %6219 = vadd.xlane.f32.xlu0 %v6156
    %v6220 = vpop.xlane.xlu0 %6219
    %6221 = vadd.xlane.f32.xlu0 %v6158
    %v6222 = vpop.xlane.xlu0 %6221
    %6223 = vadd.xlane.f32.xlu0 %v6160
    %v6224 = vpop.xlane.xlu0 %6223
    %v6225 = vlog2.pop %v6162
    %v6226 = vmul.f32 %v6225, 0.6931472
    %v6227 = vlog2.pop %v6164
    %v6228 = vmul.f32 %v6227, 0.6931472
    %v6229 = vlog2.pop %v6166
    %v6230 = vmul.f32 %v6229, 0.6931472
    %v6231 = vlog2.pop %v6168
    %v6232 = vmul.f32 %v6231, 0.6931472
    %v6233 = vlog2.pop %v6170
    %v6234 = vmul.f32 %v6233, 0.6931472
    %v6235 = vlog2.pop %v6172
    %v6236 = vmul.f32 %v6235, 0.6931472
    %v6237 = vlog2.pop %v6174
    %v6238 = vmul.f32 %v6237, 0.6931472
    %v6239 = vlog2.pop %v6176
    %v6240 = vmul.f32 %v6239, 0.6931472
    %v6241 = vlog2.pop %v6178
    %v6242 = vmul.f32 %v6241, 0.6931472
    %v6243 = vlog2.pop %v6180
    %v6244 = vmul.f32 %v6243, 0.6931472
    %v6245 = vlog2.pop %v6182
    %v6246 = vmul.f32 %v6245, 0.6931472
    %v6247 = vlog2.pop %v6184
    %v6248 = vmul.f32 %v6247, 0.6931472
    %v6249 = vlog2.pop %v6186
    %v6250 = vmul.f32 %v6249, 0.6931472
    %v6251 = vlog2.pop %v6188
    %v6252 = vmul.f32 %v6251, 0.6931472
    %v6253 = vlog2.pop %v6190
    %v6254 = vmul.f32 %v6253, 0.6931472
    %v6255 = vlog2.pop %v6192
    %v6256 = vmul.f32 %v6255, 0.6931472
    %v6257 = vlog2.pop %v6194
    %v6258 = vmul.f32 %v6257, 0.6931472
    %v6259 = vlog2.pop %v6196
    %v6260 = vmul.f32 %v6259, 0.6931472
    %v6261 = vlog2.pop %v6198
    %v6262 = vmul.f32 %v6261, 0.6931472
    %v6263 = vlog2.pop %v6200
    %v6264 = vmul.f32 %v6263, 0.6931472
    %v6265 = vlog2.pop %v6202
    %v6266 = vmul.f32 %v6265, 0.6931472
    %v6267 = vlog2.pop %v6204
    %v6268 = vmul.f32 %v6267, 0.6931472
    %v6269 = vlog2.pop %v6206
    %v6270 = vmul.f32 %v6269, 0.6931472
    %v6271 = vlog2.pop %v6208
    %v6272 = vmul.f32 %v6271, 0.6931472
    %v6273 = vlog2.pop %v6210
    %v6274 = vmul.f32 %v6273, 0.6931472
    %v6275 = vlog2.pop %v6212
    %v6276 = vmul.f32 %v6275, 0.6931472
    %v6277 = vlog2.pop %v6214
    %v6278 = vmul.f32 %v6277, 0.6931472
    %v6279 = vlog2.pop %v6216
    %v6280 = vmul.f32 %v6279, 0.6931472
    %v6281 = vlog2.pop %v6218
    %v6282 = vmul.f32 %v6281, 0.6931472
    %v6283 = vlog2.pop %v6220
    %v6284 = vmul.f32 %v6283, 0.6931472
    %v6285 = vlog2.pop %v6222
    %v6286 = vmul.f32 %v6285, 0.6931472
    %v6287 = vlog2.pop %v6224
    %v6288 = vmul.f32 %v6287, 0.6931472
    %v6289 = vadd.f32 %v6002, %v6226
    %v6290 = vadd.f32 %v6004, %v6228
    %v6291 = vadd.f32 %v6006, %v6230
    %v6292 = vadd.f32 %v6008, %v6232
    %v6293 = vadd.f32 %v6010, %v6234
    %v6294 = vadd.f32 %v6012, %v6236
    %v6295 = vadd.f32 %v6014, %v6238
    %v6296 = vadd.f32 %v6016, %v6240
    %v6297 = vadd.f32 %v6018, %v6242
    %v6298 = vadd.f32 %v6020, %v6244
    %v6299 = vadd.f32 %v6022, %v6246
    %v6300 = vadd.f32 %v6024, %v6248
    %v6301 = vadd.f32 %v6026, %v6250
    %v6302 = vadd.f32 %v6028, %v6252
    %v6303 = vadd.f32 %v6030, %v6254
    %v6304 = vadd.f32 %v6032, %v6256
    %v6305 = vadd.f32 %v6034, %v6258
    %v6306 = vadd.f32 %v6036, %v6260
    %v6307 = vadd.f32 %v6038, %v6262
    %v6308 = vadd.f32 %v6040, %v6264
    %v6309 = vadd.f32 %v6042, %v6266
    %v6310 = vadd.f32 %v6044, %v6268
    %v6311 = vadd.f32 %v6046, %v6270
    %v6312 = vadd.f32 %v6048, %v6272
    %v6313 = vadd.f32 %v6050, %v6274
    %v6314 = vadd.f32 %v6052, %v6276
    %v6315 = vadd.f32 %v6054, %v6278
    %v6316 = vadd.f32 %v6056, %v6280
    %v6317 = vadd.f32 %v6058, %v6282
    %v6318 = vadd.f32 %v6060, %v6284
    %v6319 = vadd.f32 %v6062, %v6286
    %v6320 = vadd.f32 %v6064, %v6288
    %v6321 = vsub.f32 %v5842, %v6289
    %v6322 = vsub.f32 %v5845, %v6290
    %v6323 = vsub.f32 %v5850, %v6291
    %v6324 = vsub.f32 %v5853, %v6292
    %v6325 = vsub.f32 %v5858, %v6293
    %v6326 = vsub.f32 %v5861, %v6294
    %v6327 = vsub.f32 %v5866, %v6295
    %v6328 = vsub.f32 %v5869, %v6296
    %v6329 = vsub.f32 %v5874, %v6297
    %v6330 = vsub.f32 %v5877, %v6298
    %v6331 = vsub.f32 %v5882, %v6299
    %v6332 = vsub.f32 %v5885, %v6300
    %v6333 = vsub.f32 %v5890, %v6301
    %v6334 = vsub.f32 %v5893, %v6302
    %v6335 = vsub.f32 %v5898, %v6303
    %v6336 = vsub.f32 %v5901, %v6304
    %v6337 = vsub.f32 %v5906, %v6305
    %v6338 = vsub.f32 %v5909, %v6306
    %v6339 = vsub.f32 %v5914, %v6307
    %v6340 = vsub.f32 %v5917, %v6308
    %v6341 = vsub.f32 %v5922, %v6309
    %v6342 = vsub.f32 %v5925, %v6310
    %v6343 = vsub.f32 %v5930, %v6311
    %v6344 = vsub.f32 %v5933, %v6312
    %v6345 = vsub.f32 %v5938, %v6313
    %v6346 = vsub.f32 %v5941, %v6314
    %v6347 = vsub.f32 %v5946, %v6315
    %v6348 = vsub.f32 %v5949, %v6316
    %v6349 = vsub.f32 %v5954, %v6317
    %v6350 = vsub.f32 %v5957, %v6318
    %v6351 = vsub.f32 %v5962, %v6319
    %v6352 = vsub.f32 %v5965, %v6320
    %6353 = vst [vmem:[#allocation7] sm:$0xff] %v6321
    %6354 = vst [vmem:[#allocation7 + $0x8] sm:$0xff] %v6322
    %6355 = vst [vmem:[#allocation7 + $0x10] sm:$0xff] %v6323
    %6356 = vst [vmem:[#allocation7 + $0x18] sm:$0xff] %v6324
    %6357 = vst [vmem:[#allocation7 + $0x20] sm:$0xff] %v6325
    %6358 = vst [vmem:[#allocation7 + $0x28] sm:$0xff] %v6326
    %6359 = vst [vmem:[#allocation7 + $0x30] sm:$0xff] %v6327
    %6360 = vst [vmem:[#allocation7 + $0x38] sm:$0xff] %v6328
    %6361 = vst [vmem:[#allocation7 + $0x40] sm:$0xff] %v6329
    %6362 = vst [vmem:[#allocation7 + $0x48] sm:$0xff] %v6330
    %6363 = vst [vmem:[#allocation7 + $0x50] sm:$0xff] %v6331
    %6364 = vst [vmem:[#allocation7 + $0x58] sm:$0xff] %v6332
    %6365 = vst [vmem:[#allocation7 + $0x60] sm:$0xff] %v6333
    %6366 = vst [vmem:[#allocation7 + $0x68] sm:$0xff] %v6334
    %6367 = vst [vmem:[#allocation7 + $0x70] sm:$0xff] %v6335
    %6368 = vst [vmem:[#allocation7 + $0x78] sm:$0xff] %v6336
    %6369 = vst [vmem:[#allocation7 + $0x80] sm:$0xff] %v6337
    %6370 = vst [vmem:[#allocation7 + $0x88] sm:$0xff] %v6338
    %6371 = vst [vmem:[#allocation7 + $0x90] sm:$0xff] %v6339
    %6372 = vst [vmem:[#allocation7 + $0x98] sm:$0xff] %v6340
    %6373 = vst [vmem:[#allocation7 + $0xa0] sm:$0xff] %v6341
    %6374 = vst [vmem:[#allocation7 + $0xa8] sm:$0xff] %v6342
    %6375 = vst [vmem:[#allocation7 + $0xb0] sm:$0xff] %v6343
    %6376 = vst [vmem:[#allocation7 + $0xb8] sm:$0xff] %v6344
    %6377 = vst [vmem:[#allocation7 + $0xc0] sm:$0xff] %v6345
    %6378 = vst [vmem:[#allocation7 + $0xc8] sm:$0xff] %v6346
    %6379 = vst [vmem:[#allocation7 + $0xd0] sm:$0xff] %v6347
    %6380 = vst [vmem:[#allocation7 + $0xd8] sm:$0xff] %v6348
    %6381 = vst [vmem:[#allocation7 + $0xe0] sm:$0xff] %v6349
    %6382 = vst [vmem:[#allocation7 + $0xe8] sm:$0xff] %v6350
    %6383 = vst [vmem:[#allocation7 + $0xf0] sm:$0xff] %v6351
    %6384 = vst [vmem:[#allocation7 + $0xf8] sm:$0xff] %v6352
    // Predicated region
    $region58: #{tpu_custom_call.1} parent=1 // pred_check
      _
    $region59: #{tpu_custom_call.1} parent=1 // pred_check_branch
      %6386 = sbr.rel (0) target = $region61
    $region60: #{tpu_custom_call.1} parent=1 // pred_region
      %s6388 = ssub.s32 4096, 4096
      %6389 = vsyncadd [#allocation4], %s6388
      %s6390 = sshll.u32 [#allocation7], 4
      %s6391 = int_to_ptr.vmem [resolvable:$true] %s6390
      %6396 = dma.vmem_to_hbm [thread:$0]  %s6391, 4096, %s12, [#allocation4], 128, 128, 8
    $region61: #{tpu_custom_call.1} parent=1 // pred_fallthru
      _
    // Predicated region
    $region62: #{tpu_custom_call.1} parent=1 // pred_check
      _
    $region63: #{tpu_custom_call.1} parent=1 // pred_check_branch
      %6398 = sbr.rel (0) target = $region65
    $region64: #{tpu_custom_call.1} parent=1 // pred_region
      %6399 = dma.done [#allocation4], 4096
    $region65: #{tpu_custom_call.1} parent=1 // pred_fallthru
      _
    %6400 = vsyncpa [#allocation3], 1
    %6401 = vsyncpa [#allocation6], 1
    %6402 = vsyncpa [#allocation4], 1

// kernel: tpu_custom_call.1
$region0: #{tpu_custom_call.1}
  #allocation0 [shape = 'u32[]', space=smem, size = 0x4, offset = 0x4, fixed_abs, tag = 'smem constant byte address 0x4 - core index']
  #allocation1 [shape = 'u32[144,128]{1,0:T(1,128)}', space=vmem, size = 0x12000, scoped, tag = 'internal scratch']
  %s0 = inlined_call_operand.vmem [shape: bf16[256,896], index: 0, kind: input, shape index: {}]
  %s1 = inlined_call_operand.vmem [shape: bf16[896,64], index: 1, kind: input, shape index: {}]
  %s2 = inlined_call_operand.vmem [shape: f32[1,64], index: 2, kind: input, shape index: {}]
  %s3 = inlined_call_operand.hbm [shape: bf16[64,64], index: 3, kind: input, shape index: {}]
  %s4 = inlined_call_operand.vmem [shape: f32[1,64], index: 4, kind: input, shape index: {}]
  %s5 = inlined_call_operand.vmem [shape: bf16[64,6], index: 5, kind: input, shape index: {}]
  %s6 = inlined_call_operand.vmem [shape: bf16[64,384], index: 6, kind: input, shape index: {}]
  %s7 = inlined_call_operand.vmem [shape: f32[1,384], index: 7, kind: input, shape index: {}]
  %s8 = inlined_call_operand.hbm [shape: bf16[6,384], index: 8, kind: input, shape index: {}]
  %s9 = inlined_call_operand.vmem [shape: bf16[384,64], index: 9, kind: input, shape index: {}]
  %s10 = inlined_call_operand.vmem [shape: bf16[64,128], index: 10, kind: input, shape index: {}]
  %s11 = inlined_call_operand.vmem [shape: f32[1,128], index: 11, kind: input, shape index: {}]
  %s12 = inlined_call_operand.hbm [shape: f32[256,128], index: 12, kind: output, shape index: {}]
  %s13 = sld [smem:[#allocation0]]
  $region66: #{tpu_custom_call.1} parent=0
    _
  %s15 = ssub.s32 1, %s13
  %s16 = scalar_select 0, %s15, %s13
  $region1: #{tpu_custom_call.1} parent=0
    #allocation2 [shape = 'u8[16384]{0}', space=vmem, size = 0x4000, scoped, tag = 'input window, operand 3, single buffered']
    #allocation3 [shape = 's32[1]{0}', space=sflag, size = 0x4, scoped, tag = 'scoped memory for tpu_custom_call.1']
    #allocation4 [shape = 's32[1]{0}', space=sflag, size = 0x4, scoped, tag = 'scoped memory for tpu_custom_call.1']
    #allocation5 [shape = 'u8[6144]{0}', space=vmem, size = 0x1800, scoped, tag = 'input window, operand 8, single buffered']
    #allocation6 [shape = 's32[1]{0}', space=sflag, size = 0x4, scoped, tag = 'scoped memory for tpu_custom_call.1']
    #allocation7 [shape = 'u8[131072]{0}', space=vmem, size = 0x20000, scoped, tag = 'output window, operand 0, single buffered']
    %17 = vsyncpa [#allocation3], 0
    %18 = vsyncpa [#allocation6], 0
    %19 = vsyncpa [#allocation4], 0
    // Predicated region
    $region2: #{tpu_custom_call.1} parent=1 // pred_check
      _
    $region3: #{tpu_custom_call.1} parent=1 // pred_check_branch
      %21 = sbr.rel (0) target = $region5
    $region4: #{tpu_custom_call.1} parent=1 // pred_region
      _
    $region5: #{tpu_custom_call.1} parent=1 // pred_fallthru
      _
    // Predicated region
    $region6: #{tpu_custom_call.1} parent=1 // pred_check
      _
    $region7: #{tpu_custom_call.1} parent=1 // pred_check_branch
      %23 = sbr.rel (0) target = $region9
    $region8: #{tpu_custom_call.1} parent=1 // pred_region
      _
    $region9: #{tpu_custom_call.1} parent=1 // pred_fallthru
      _
    // Predicated region
    $region10: #{tpu_custom_call.1} parent=1 // pred_check
      _
    $region11: #{tpu_custom_call.1} parent=1 // pred_check_branch
      %25 = sbr.rel (0) target = $region13
    $region12: #{tpu_custom_call.1} parent=1 // pred_region
      _
    $region13: #{tpu_custom_call.1} parent=1 // pred_fallthru
      _
    // Predicated region
    $region14: #{tpu_custom_call.1} parent=1 // pred_check
      _
    $region15: #{tpu_custom_call.1} parent=1 // pred_check_branch
      %27 = sbr.rel (0) target = $region17
    $region16: #{tpu_custom_call.1} parent=1 // pred_region
      %s29 = ssub.s32 512, 512
      %30 = vsyncadd [#allocation3], %s29
      %s31 = sshll.u32 [#allocation2], 4
      %s32 = int_to_ptr.vmem [resolvable:$true] %s31
      %37 = dma.hbm_to_vmem [thread:$0]  %s3, 512, %s32, [#allocation3], 64, 64, 4
    $region17: #{tpu_custom_call.1} parent=1 // pred_fallthru
      _
    // Predicated region
    $region18: #{tpu_custom_call.1} parent=1 // pred_check
      _
    $region19: #{tpu_custom_call.1} parent=1 // pred_check_branch
      %39 = sbr.rel (0) target = $region21
    $region20: #{tpu_custom_call.1} parent=1 // pred_region
      _
    $region21: #{tpu_custom_call.1} parent=1 // pred_fallthru
      _
    // Predicated region
    $region22: #{tpu_custom_call.1} parent=1 // pred_check
      _
    $region23: #{tpu_custom_call.1} parent=1 // pred_check_branch
      %41 = sbr.rel (0) target = $region25
    $region24: #{tpu_custom_call.1} parent=1 // pred_region
      _
    $region25: #{tpu_custom_call.1} parent=1 // pred_fallthru
      _
    // Predicated region
    $region26: #{tpu_custom_call.1} parent=1 // pred_check
      _
    $region27: #{tpu_custom_call.1} parent=1 // pred_check_branch
      %43 = sbr.rel (0) target = $region29
    $region28: #{tpu_custom_call.1} parent=1 // pred_region
      _
    $region29: #{tpu_custom_call.1} parent=1 // pred_fallthru
      _
    // Predicated region
    $region30: #{tpu_custom_call.1} parent=1 // pred_check
      _
    $region31: #{tpu_custom_call.1} parent=1 // pred_check_branch
      %45 = sbr.rel (0) target = $region33
    $region32: #{tpu_custom_call.1} parent=1 // pred_region
      _
    $region33: #{tpu_custom_call.1} parent=1 // pred_fallthru
      _
    // Predicated region
    $region34: #{tpu_custom_call.1} parent=1 // pred_check
      _
    $region35: #{tpu_custom_call.1} parent=1 // pred_check_branch
      %47 = sbr.rel (0) target = $region37
    $region36: #{tpu_custom_call.1} parent=1 // pred_region
      %s49 = ssub.s32 192, 192
      %50 = vsyncadd [#allocation6], %s49
      %s52 = sshll.u32 [#allocation5], 4
      %s53 = int_to_ptr.vmem [resolvable:$true] %s52
      %55 = dma.hbm_to_vmem [thread:$0]  %s8, 192, %s53, [#allocation6]
    $region37: #{tpu_custom_call.1} parent=1 // pred_fallthru
      _
    // Predicated region
    $region38: #{tpu_custom_call.1} parent=1 // pred_check
      _
    $region39: #{tpu_custom_call.1} parent=1 // pred_check_branch
      %57 = sbr.rel (0) target = $region41
    $region40: #{tpu_custom_call.1} parent=1 // pred_region
      _
    $region41: #{tpu_custom_call.1} parent=1 // pred_fallthru
      _
    // Predicated region
    $region42: #{tpu_custom_call.1} parent=1 // pred_check
      _
    $region43: #{tpu_custom_call.1} parent=1 // pred_check_branch
      %59 = sbr.rel (0) target = $region45
    $region44: #{tpu_custom_call.1} parent=1 // pred_region
      _
    $region45: #{tpu_custom_call.1} parent=1 // pred_fallthru
      _
    // Predicated region
    $region46: #{tpu_custom_call.1} parent=1 // pred_check
      _
    $region47: #{tpu_custom_call.1} parent=1 // pred_check_branch
      %61 = sbr.rel (0) target = $region49
    $region48: #{tpu_custom_call.1} parent=1 // pred_region
      _
    $region49: #{tpu_custom_call.1} parent=1 // pred_fallthru
      _
    // Predicated region
    $region50: #{tpu_custom_call.1} parent=1 // pred_check
      _
    $region51: #{tpu_custom_call.1} parent=1 // pred_check_branch
      %63 = sbr.rel (0) target = $region53
    $region52: #{tpu_custom_call.1} parent=1 // pred_region
      %64 = dma.done [#allocation3], 512
    $region53: #{tpu_custom_call.1} parent=1 // pred_fallthru
      _
    // Predicated region
    $region54: #{tpu_custom_call.1} parent=1 // pred_check
      _
    $region55: #{tpu_custom_call.1} parent=1 // pred_check_branch
      %66 = sbr.rel (0) target = $region57
    $region56: #{tpu_custom_call.1} parent=1 // pred_region
      %67 = dma.done [#allocation6], 192
    $region57: #{tpu_custom_call.1} parent=1 // pred_fallthru
      _
    %v69 = vld [vmem:[%s0] sm:$0xff]
    %v70 = vld [vmem:[%s0 + $0x8] sm:$0xff]
    %v71 = vld [vmem:[%s0 + $0x10] sm:$0xff]
    %v72 = vld [vmem:[%s0 + $0x18] sm:$0xf]
    %v73 = vld [vmem:[%s0 + $0x1c] sm:$0xff]
    %v74 = vld [vmem:[%s0 + $0x24] sm:$0xff]
    %v75 = vld [vmem:[%s0 + $0x2c] sm:$0xff]
    %v76 = vld [vmem:[%s0 + $0x34] sm:$0xf]
    %v77 = vld [vmem:[%s0 + $0x38] sm:$0xff]
    %v78 = vld [vmem:[%s0 + $0x40] sm:$0xff]
    %v79 = vld [vmem:[%s0 + $0x48] sm:$0xff]
    %v80 = vld [vmem:[%s0 + $0x50] sm:$0xf]
    %v81 = vld [vmem:[%s0 + $0x54] sm:$0xff]
    %v82 = vld [vmem:[%s0 + $0x5c] sm:$0xff]
    %v83 = vld [vmem:[%s0 + $0x64] sm:$0xff]
    %v84 = vld [vmem:[%s0 + $0x6c] sm:$0xf]
    %v85 = vld [vmem:[%s0 + $0x70] sm:$0xff]
    %v86 = vld [vmem:[%s0 + $0x78] sm:$0xff]
    %v87 = vld [vmem:[%s0 + $0x80] sm:$0xff]
    %v88 = vld [vmem:[%s0 + $0x88] sm:$0xf]
    %v89 = vld [vmem:[%s0 + $0x8c] sm:$0xff]
    %v90 = vld [vmem:[%s0 + $0x94] sm:$0xff]
    %v91 = vld [vmem:[%s0 + $0x9c] sm:$0xff]
    %v92 = vld [vmem:[%s0 + $0xa4] sm:$0xf]
    %v93 = vld [vmem:[%s0 + $0xa8] sm:$0xff]
    %v94 = vld [vmem:[%s0 + $0xb0] sm:$0xff]
    %v95 = vld [vmem:[%s0 + $0xb8] sm:$0xff]
    %v96 = vld [vmem:[%s0 + $0xc0] sm:$0xf]
    %v97 = vld [vmem:[%s0 + $0xc4] sm:$0xff]
    %v98 = vld [vmem:[%s0 + $0xcc] sm:$0xff]
    %v99 = vld [vmem:[%s0 + $0xd4] sm:$0xff]
    %v100 = vld [vmem:[%s0 + $0xdc] sm:$0xf]
    %v101 = vld [vmem:[%s0 + $0xe0] sm:$0xff]
    %v102 = vld [vmem:[%s0 + $0xe8] sm:$0xff]
    %v103 = vld [vmem:[%s0 + $0xf0] sm:$0xff]
    %v104 = vld [vmem:[%s0 + $0xf8] sm:$0xf]
    %v105 = vld [vmem:[%s0 + $0xfc] sm:$0xff]
    %v106 = vld [vmem:[%s0 + $0x104] sm:$0xff]
    %v107 = vld [vmem:[%s0 + $0x10c] sm:$0xff]
    %v108 = vld [vmem:[%s0 + $0x114] sm:$0xf]
    %v109 = vld [vmem:[%s0 + $0x118] sm:$0xff]
    %v110 = vld [vmem:[%s0 + $0x120] sm:$0xff]
    %v111 = vld [vmem:[%s0 + $0x128] sm:$0xff]
    %v112 = vld [vmem:[%s0 + $0x130] sm:$0xf]
    %v113 = vld [vmem:[%s0 + $0x134] sm:$0xff]
    %v114 = vld [vmem:[%s0 + $0x13c] sm:$0xff]
    %v115 = vld [vmem:[%s0 + $0x144] sm:$0xff]
    %v116 = vld [vmem:[%s0 + $0x14c] sm:$0xf]
    %v117 = vld [vmem:[%s0 + $0x150] sm:$0xff]
    %v118 = vld [vmem:[%s0 + $0x158] sm:$0xff]
    %v119 = vld [vmem:[%s0 + $0x160] sm:$0xff]
    %v120 = vld [vmem:[%s0 + $0x168] sm:$0xf]
    %v121 = vld [vmem:[%s0 + $0x16c] sm:$0xff]
    %v122 = vld [vmem:[%s0 + $0x174] sm:$0xff]
    %v123 = vld [vmem:[%s0 + $0x17c] sm:$0xff]
    %v124 = vld [vmem:[%s0 + $0x184] sm:$0xf]
    %v125 = vld [vmem:[%s0 + $0x188] sm:$0xff]
    %v126 = vld [vmem:[%s0 + $0x190] sm:$0xff]
    %v127 = vld [vmem:[%s0 + $0x198] sm:$0xff]
    %v128 = vld [vmem:[%s0 + $0x1a0] sm:$0xf]
    %v129 = vld [vmem:[%s0 + $0x1a4] sm:$0xff]
    %v130 = vld [vmem:[%s0 + $0x1ac] sm:$0xff]
    %v131 = vld [vmem:[%s0 + $0x1b4] sm:$0xff]
    %v132 = vld [vmem:[%s0 + $0x1bc] sm:$0xf]
    %v133 = vld [vmem:[%s0 + $0x1c0] sm:$0xff]
    %v134 = vld [vmem:[%s0 + $0x1c8] sm:$0xff]
    %v135 = vld [vmem:[%s0 + $0x1d0] sm:$0xff]
    %v136 = vld [vmem:[%s0 + $0x1d8] sm:$0xf]
    %v137 = vld [vmem:[%s0 + $0x1dc] sm:$0xff]
    %v138 = vld [vmem:[%s0 + $0x1e4] sm:$0xff]
    %v139 = vld [vmem:[%s0 + $0x1ec] sm:$0xff]
    %v140 = vld [vmem:[%s0 + $0x1f4] sm:$0xf]
    %v141 = vld [vmem:[%s0 + $0x1f8] sm:$0xff]
    %v142 = vld [vmem:[%s0 + $0x200] sm:$0xff]
    %v143 = vld [vmem:[%s0 + $0x208] sm:$0xff]
    %v144 = vld [vmem:[%s0 + $0x210] sm:$0xf]
    %v145 = vld [vmem:[%s0 + $0x214] sm:$0xff]
    %v146 = vld [vmem:[%s0 + $0x21c] sm:$0xff]
    %v147 = vld [vmem:[%s0 + $0x224] sm:$0xff]
    %v148 = vld [vmem:[%s0 + $0x22c] sm:$0xf]
    %v149 = vld [vmem:[%s0 + $0x230] sm:$0xff]
    %v150 = vld [vmem:[%s0 + $0x238] sm:$0xff]
    %v151 = vld [vmem:[%s0 + $0x240] sm:$0xff]
    %v152 = vld [vmem:[%s0 + $0x248] sm:$0xf]
    %v153 = vld [vmem:[%s0 + $0x24c] sm:$0xff]
    %v154 = vld [vmem:[%s0 + $0x254] sm:$0xff]
    %v155 = vld [vmem:[%s0 + $0x25c] sm:$0xff]
    %v156 = vld [vmem:[%s0 + $0x264] sm:$0xf]
    %v157 = vld [vmem:[%s0 + $0x268] sm:$0xff]
    %v158 = vld [vmem:[%s0 + $0x270] sm:$0xff]
    %v159 = vld [vmem:[%s0 + $0x278] sm:$0xff]
    %v160 = vld [vmem:[%s0 + $0x280] sm:$0xf]
    %v161 = vld [vmem:[%s0 + $0x284] sm:$0xff]
    %v162 = vld [vmem:[%s0 + $0x28c] sm:$0xff]
    %v163 = vld [vmem:[%s0 + $0x294] sm:$0xff]
    %v164 = vld [vmem:[%s0 + $0x29c] sm:$0xf]
    %v165 = vld [vmem:[%s0 + $0x2a0] sm:$0xff]
    %v166 = vld [vmem:[%s0 + $0x2a8] sm:$0xff]
    %v167 = vld [vmem:[%s0 + $0x2b0] sm:$0xff]
    %v168 = vld [vmem:[%s0 + $0x2b8] sm:$0xf]
    %v169 = vld [vmem:[%s0 + $0x2bc] sm:$0xff]
    %v170 = vld [vmem:[%s0 + $0x2c4] sm:$0xff]
    %v171 = vld [vmem:[%s0 + $0x2cc] sm:$0xff]
    %v172 = vld [vmem:[%s0 + $0x2d4] sm:$0xf]
    %v173 = vld [vmem:[%s0 + $0x2d8] sm:$0xff]
    %v174 = vld [vmem:[%s0 + $0x2e0] sm:$0xff]
    %v175 = vld [vmem:[%s0 + $0x2e8] sm:$0xff]
    %v176 = vld [vmem:[%s0 + $0x2f0] sm:$0xf]
    %v177 = vld [vmem:[%s0 + $0x2f4] sm:$0xff]
    %v178 = vld [vmem:[%s0 + $0x2fc] sm:$0xff]
    %v179 = vld [vmem:[%s0 + $0x304] sm:$0xff]
    %v180 = vld [vmem:[%s0 + $0x30c] sm:$0xf]
    %v181 = vld [vmem:[%s0 + $0x310] sm:$0xff]
    %v182 = vld [vmem:[%s0 + $0x318] sm:$0xff]
    %v183 = vld [vmem:[%s0 + $0x320] sm:$0xff]
    %v184 = vld [vmem:[%s0 + $0x328] sm:$0xf]
    %v185 = vld [vmem:[%s0 + $0x32c] sm:$0xff]
    %v186 = vld [vmem:[%s0 + $0x334] sm:$0xff]
    %v187 = vld [vmem:[%s0 + $0x33c] sm:$0xff]
    %v188 = vld [vmem:[%s0 + $0x344] sm:$0xf]
    %v189 = vld [vmem:[%s0 + $0x348] sm:$0xff]
    %v190 = vld [vmem:[%s0 + $0x350] sm:$0xff]
    %v191 = vld [vmem:[%s0 + $0x358] sm:$0xff]
    %v192 = vld [vmem:[%s0 + $0x360] sm:$0xf]
    %v193 = vld [vmem:[%s0 + $0x364] sm:$0xff]
    %v194 = vld [vmem:[%s0 + $0x36c] sm:$0xff]
    %v195 = vld [vmem:[%s0 + $0x374] sm:$0xff]
    %v196 = vld [vmem:[%s0 + $0x37c] sm:$0xf]
    %v197 = vld [vmem:[%s1] sm:$0xf]
    %v198 = vld [vmem:[%s1 + $0x4] sm:$0xf]
    %v199 = vld [vmem:[%s1 + $0x8] sm:$0xf]
    %v200 = vld [vmem:[%s1 + $0xc] sm:$0xf]
    %v201 = vld [vmem:[%s1 + $0x10] sm:$0xf]
    %v202 = vld [vmem:[%s1 + $0x14] sm:$0xf]
    %v203 = vld [vmem:[%s1 + $0x18] sm:$0xf]
    %v204 = vld [vmem:[%s1 + $0x1c] sm:$0xf]
    %v205 = vld [vmem:[%s1 + $0x20] sm:$0xf]
    %v206 = vld [vmem:[%s1 + $0x24] sm:$0xf]
    %v207 = vld [vmem:[%s1 + $0x28] sm:$0xf]
    %v208 = vld [vmem:[%s1 + $0x2c] sm:$0xf]
    %v209 = vld [vmem:[%s1 + $0x30] sm:$0xf]
    %v210 = vld [vmem:[%s1 + $0x34] sm:$0xf]
    %v211 = vld [vmem:[%s1 + $0x38] sm:$0xf]
    %v212 = vld [vmem:[%s1 + $0x3c] sm:$0xf]
    %v213 = vld [vmem:[%s1 + $0x40] sm:$0xf]
    %v214 = vld [vmem:[%s1 + $0x44] sm:$0xf]
    %v215 = vld [vmem:[%s1 + $0x48] sm:$0xf]
    %v216 = vld [vmem:[%s1 + $0x4c] sm:$0xf]
    %v217 = vld [vmem:[%s1 + $0x50] sm:$0xf]
    %v218 = vld [vmem:[%s1 + $0x54] sm:$0xf]
    %v219 = vld [vmem:[%s1 + $0x58] sm:$0xf]
    %v220 = vld [vmem:[%s1 + $0x5c] sm:$0xf]
    %v221 = vld [vmem:[%s1 + $0x60] sm:$0xf]
    %v222 = vld [vmem:[%s1 + $0x64] sm:$0xf]
    %v223 = vld [vmem:[%s1 + $0x68] sm:$0xf]
    %v224 = vld [vmem:[%s1 + $0x6c] sm:$0xf]
    %v225 = vld [vmem:[%s1 + $0x70] sm:$0xf]
    %v226 = vld [vmem:[%s1 + $0x74] sm:$0xf]
    %v227 = vld [vmem:[%s1 + $0x78] sm:$0xf]
    %v228 = vld [vmem:[%s1 + $0x7c] sm:$0xf]
    %v229 = vld [vmem:[%s1 + $0x80] sm:$0xf]
    %v230 = vld [vmem:[%s1 + $0x84] sm:$0xf]
    %v231 = vld [vmem:[%s1 + $0x88] sm:$0xf]
    %v232 = vld [vmem:[%s1 + $0x8c] sm:$0xf]
    %v233 = vld [vmem:[%s1 + $0x90] sm:$0xf]
    %v234 = vld [vmem:[%s1 + $0x94] sm:$0xf]
    %v235 = vld [vmem:[%s1 + $0x98] sm:$0xf]
    %v236 = vld [vmem:[%s1 + $0x9c] sm:$0xf]
    %v237 = vld [vmem:[%s1 + $0xa0] sm:$0xf]
    %v238 = vld [vmem:[%s1 + $0xa4] sm:$0xf]
    %v239 = vld [vmem:[%s1 + $0xa8] sm:$0xf]
    %v240 = vld [vmem:[%s1 + $0xac] sm:$0xf]
    %v241 = vld [vmem:[%s1 + $0xb0] sm:$0xf]
    %v242 = vld [vmem:[%s1 + $0xb4] sm:$0xf]
    %v243 = vld [vmem:[%s1 + $0xb8] sm:$0xf]
    %v244 = vld [vmem:[%s1 + $0xbc] sm:$0xf]
    %v245 = vld [vmem:[%s1 + $0xc0] sm:$0xf]
    %v246 = vld [vmem:[%s1 + $0xc4] sm:$0xf]
    %v247 = vld [vmem:[%s1 + $0xc8] sm:$0xf]
    %v248 = vld [vmem:[%s1 + $0xcc] sm:$0xf]
    %v249 = vld [vmem:[%s1 + $0xd0] sm:$0xf]
    %v250 = vld [vmem:[%s1 + $0xd4] sm:$0xf]
    %v251 = vld [vmem:[%s1 + $0xd8] sm:$0xf]
    %v252 = vld [vmem:[%s1 + $0xdc] sm:$0xf]
    %v253 = vld [vmem:[%s1 + $0xe0] sm:$0xf]
    %v254 = vld [vmem:[%s1 + $0xe4] sm:$0xf]
    %v255 = vld [vmem:[%s1 + $0xe8] sm:$0xf]
    %v256 = vld [vmem:[%s1 + $0xec] sm:$0xf]
    %v257 = vld [vmem:[%s1 + $0xf0] sm:$0xf]
    %v258 = vld [vmem:[%s1 + $0xf4] sm:$0xf]
    %v259 = vld [vmem:[%s1 + $0xf8] sm:$0xf]
    %v260 = vld [vmem:[%s1 + $0xfc] sm:$0xf]
    %v261 = vld [vmem:[%s1 + $0x100] sm:$0xf]
    %v262 = vld [vmem:[%s1 + $0x104] sm:$0xf]
    %v263 = vld [vmem:[%s1 + $0x108] sm:$0xf]
    %v264 = vld [vmem:[%s1 + $0x10c] sm:$0xf]
    %v265 = vld [vmem:[%s1 + $0x110] sm:$0xf]
    %v266 = vld [vmem:[%s1 + $0x114] sm:$0xf]
    %v267 = vld [vmem:[%s1 + $0x118] sm:$0xf]
    %v268 = vld [vmem:[%s1 + $0x11c] sm:$0xf]
    %v269 = vld [vmem:[%s1 + $0x120] sm:$0xf]
    %v270 = vld [vmem:[%s1 + $0x124] sm:$0xf]
    %v271 = vld [vmem:[%s1 + $0x128] sm:$0xf]
    %v272 = vld [vmem:[%s1 + $0x12c] sm:$0xf]
    %v273 = vld [vmem:[%s1 + $0x130] sm:$0xf]
    %v274 = vld [vmem:[%s1 + $0x134] sm:$0xf]
    %v275 = vld [vmem:[%s1 + $0x138] sm:$0xf]
    %v276 = vld [vmem:[%s1 + $0x13c] sm:$0xf]
    %v277 = vld [vmem:[%s1 + $0x140] sm:$0xf]
    %v278 = vld [vmem:[%s1 + $0x144] sm:$0xf]
    %v279 = vld [vmem:[%s1 + $0x148] sm:$0xf]
    %v280 = vld [vmem:[%s1 + $0x14c] sm:$0xf]
    %v281 = vld [vmem:[%s1 + $0x150] sm:$0xf]
    %v282 = vld [vmem:[%s1 + $0x154] sm:$0xf]
    %v283 = vld [vmem:[%s1 + $0x158] sm:$0xf]
    %v284 = vld [vmem:[%s1 + $0x15c] sm:$0xf]
    %v285 = vld [vmem:[%s1 + $0x160] sm:$0xf]
    %v286 = vld [vmem:[%s1 + $0x164] sm:$0xf]
    %v287 = vld [vmem:[%s1 + $0x168] sm:$0xf]
    %v288 = vld [vmem:[%s1 + $0x16c] sm:$0xf]
    %v289 = vld [vmem:[%s1 + $0x170] sm:$0xf]
    %v290 = vld [vmem:[%s1 + $0x174] sm:$0xf]
    %v291 = vld [vmem:[%s1 + $0x178] sm:$0xf]
    %v292 = vld [vmem:[%s1 + $0x17c] sm:$0xf]
    %v293 = vld [vmem:[%s1 + $0x180] sm:$0xf]
    %v294 = vld [vmem:[%s1 + $0x184] sm:$0xf]
    %v295 = vld [vmem:[%s1 + $0x188] sm:$0xf]
    %v296 = vld [vmem:[%s1 + $0x18c] sm:$0xf]
    %v297 = vld [vmem:[%s1 + $0x190] sm:$0xf]
    %v298 = vld [vmem:[%s1 + $0x194] sm:$0xf]
    %v299 = vld [vmem:[%s1 + $0x198] sm:$0xf]
    %v300 = vld [vmem:[%s1 + $0x19c] sm:$0xf]
    %v301 = vld [vmem:[%s1 + $0x1a0] sm:$0xf]
    %v302 = vld [vmem:[%s1 + $0x1a4] sm:$0xf]
    %v303 = vld [vmem:[%s1 + $0x1a8] sm:$0xf]
    %v304 = vld [vmem:[%s1 + $0x1ac] sm:$0xf]
    %v305 = vld [vmem:[%s1 + $0x1b0] sm:$0xf]
    %v306 = vld [vmem:[%s1 + $0x1b4] sm:$0xf]
    %v307 = vld [vmem:[%s1 + $0x1b8] sm:$0xf]
    %v308 = vld [vmem:[%s1 + $0x1bc] sm:$0xf]
    %v309 = vld [vmem:[%s2] sm:$0x1]
    %v311 = vlaneseq
    %v312 = vshrl.u32 %v311, 7
    %v313 = vsub.s32 0, %v312
    %v314 = vrot.slane %v309, %v313
    %v444 = vunpack.c.l.b16 %v69
    %v445 = vunpack.c.h.b16 %v69
    %v446 = vunpack.c.l.b16 %v70
    %v447 = vunpack.c.h.b16 %v70
    %v448 = vunpack.c.l.b16 %v71
    %v449 = vunpack.c.h.b16 %v71
    %v450 = vunpack.c.l.b16 %v72
    %v451 = vunpack.c.l.b16 %v73
    %v452 = vunpack.c.h.b16 %v73
    %v453 = vunpack.c.l.b16 %v74
    %v454 = vunpack.c.h.b16 %v74
    %v455 = vunpack.c.l.b16 %v75
    %v456 = vunpack.c.h.b16 %v75
    %v457 = vunpack.c.l.b16 %v76
    %v458 = vunpack.c.l.b16 %v77
    %v459 = vunpack.c.h.b16 %v77
    %v460 = vunpack.c.l.b16 %v78
    %v461 = vunpack.c.h.b16 %v78
    %v462 = vunpack.c.l.b16 %v79
    %v463 = vunpack.c.h.b16 %v79
    %v464 = vunpack.c.l.b16 %v80
    %v465 = vunpack.c.l.b16 %v81
    %v466 = vunpack.c.h.b16 %v81
    %v467 = vunpack.c.l.b16 %v82
    %v468 = vunpack.c.h.b16 %v82
    %v469 = vunpack.c.l.b16 %v83
    %v470 = vunpack.c.h.b16 %v83
    %v471 = vunpack.c.l.b16 %v84
    %v472 = vunpack.c.l.b16 %v85
    %v473 = vunpack.c.h.b16 %v85
    %v474 = vunpack.c.l.b16 %v86
    %v475 = vunpack.c.h.b16 %v86
    %v476 = vunpack.c.l.b16 %v87
    %v477 = vunpack.c.h.b16 %v87
    %v478 = vunpack.c.l.b16 %v88
    %v479 = vunpack.c.l.b16 %v89
    %v480 = vunpack.c.h.b16 %v89
    %v481 = vunpack.c.l.b16 %v90
    %v482 = vunpack.c.h.b16 %v90
    %v483 = vunpack.c.l.b16 %v91
    %v484 = vunpack.c.h.b16 %v91
    %v485 = vunpack.c.l.b16 %v92
    %v486 = vunpack.c.l.b16 %v93
    %v487 = vunpack.c.h.b16 %v93
    %v488 = vunpack.c.l.b16 %v94
    %v489 = vunpack.c.h.b16 %v94
    %v490 = vunpack.c.l.b16 %v95
    %v491 = vunpack.c.h.b16 %v95
    %v492 = vunpack.c.l.b16 %v96
    %v493 = vunpack.c.l.b16 %v97
    %v494 = vunpack.c.h.b16 %v97
    %v495 = vunpack.c.l.b16 %v98
    %v496 = vunpack.c.h.b16 %v98
    %v497 = vunpack.c.l.b16 %v99
    %v498 = vunpack.c.h.b16 %v99
    %v499 = vunpack.c.l.b16 %v100
    %v500 = vunpack.c.l.b16 %v101
    %v501 = vunpack.c.h.b16 %v101
    %v502 = vunpack.c.l.b16 %v102
    %v503 = vunpack.c.h.b16 %v102
    %v504 = vunpack.c.l.b16 %v103
    %v505 = vunpack.c.h.b16 %v103
    %v506 = vunpack.c.l.b16 %v104
    %v507 = vunpack.c.l.b16 %v105
    %v508 = vunpack.c.h.b16 %v105
    %v509 = vunpack.c.l.b16 %v106
    %v510 = vunpack.c.h.b16 %v106
    %v511 = vunpack.c.l.b16 %v107
    %v512 = vunpack.c.h.b16 %v107
    %v513 = vunpack.c.l.b16 %v108
    %v514 = vunpack.c.l.b16 %v109
    %v515 = vunpack.c.h.b16 %v109
    %v516 = vunpack.c.l.b16 %v110
    %v517 = vunpack.c.h.b16 %v110
    %v518 = vunpack.c.l.b16 %v111
    %v519 = vunpack.c.h.b16 %v111
    %v520 = vunpack.c.l.b16 %v112
    %v521 = vunpack.c.l.b16 %v113
    %v522 = vunpack.c.h.b16 %v113
    %v523 = vunpack.c.l.b16 %v114
    %v524 = vunpack.c.h.b16 %v114
    %v525 = vunpack.c.l.b16 %v115
    %v526 = vunpack.c.h.b16 %v115
    %v527 = vunpack.c.l.b16 %v116
    %v528 = vunpack.c.l.b16 %v117
    %v529 = vunpack.c.h.b16 %v117
    %v530 = vunpack.c.l.b16 %v118
    %v531 = vunpack.c.h.b16 %v118
    %v532 = vunpack.c.l.b16 %v119
    %v533 = vunpack.c.h.b16 %v119
    %v534 = vunpack.c.l.b16 %v120
    %v535 = vunpack.c.l.b16 %v121
    %v536 = vunpack.c.h.b16 %v121
    %v537 = vunpack.c.l.b16 %v122
    %v538 = vunpack.c.h.b16 %v122
    %v539 = vunpack.c.l.b16 %v123
    %v540 = vunpack.c.h.b16 %v123
    %v541 = vunpack.c.l.b16 %v124
    %v542 = vunpack.c.l.b16 %v125
    %v543 = vunpack.c.h.b16 %v125
    %v544 = vunpack.c.l.b16 %v126
    %v545 = vunpack.c.h.b16 %v126
    %v546 = vunpack.c.l.b16 %v127
    %v547 = vunpack.c.h.b16 %v127
    %v548 = vunpack.c.l.b16 %v128
    %v549 = vunpack.c.l.b16 %v129
    %v550 = vunpack.c.h.b16 %v129
    %v551 = vunpack.c.l.b16 %v130
    %v552 = vunpack.c.h.b16 %v130
    %v553 = vunpack.c.l.b16 %v131
    %v554 = vunpack.c.h.b16 %v131
    %v555 = vunpack.c.l.b16 %v132
    %v556 = vunpack.c.l.b16 %v133
    %v557 = vunpack.c.h.b16 %v133
    %v558 = vunpack.c.l.b16 %v134
    %v559 = vunpack.c.h.b16 %v134
    %v560 = vunpack.c.l.b16 %v135
    %v561 = vunpack.c.h.b16 %v135
    %v562 = vunpack.c.l.b16 %v136
    %v563 = vunpack.c.l.b16 %v137
    %v564 = vunpack.c.h.b16 %v137
    %v565 = vunpack.c.l.b16 %v138
    %v566 = vunpack.c.h.b16 %v138
    %v567 = vunpack.c.l.b16 %v139
    %v568 = vunpack.c.h.b16 %v139
    %v569 = vunpack.c.l.b16 %v140
    %v570 = vunpack.c.l.b16 %v141
    %v571 = vunpack.c.h.b16 %v141
    %v572 = vunpack.c.l.b16 %v142
    %v573 = vunpack.c.h.b16 %v142
    %v574 = vunpack.c.l.b16 %v143
    %v575 = vunpack.c.h.b16 %v143
    %v576 = vunpack.c.l.b16 %v144
    %v577 = vunpack.c.l.b16 %v145
    %v578 = vunpack.c.h.b16 %v145
    %v579 = vunpack.c.l.b16 %v146
    %v580 = vunpack.c.h.b16 %v146
    %v581 = vunpack.c.l.b16 %v147
    %v582 = vunpack.c.h.b16 %v147
    %v583 = vunpack.c.l.b16 %v148
    %v584 = vunpack.c.l.b16 %v149
    %v585 = vunpack.c.h.b16 %v149
    %v586 = vunpack.c.l.b16 %v150
    %v587 = vunpack.c.h.b16 %v150
    %v588 = vunpack.c.l.b16 %v151
    %v589 = vunpack.c.h.b16 %v151
    %v590 = vunpack.c.l.b16 %v152
    %v591 = vunpack.c.l.b16 %v153
    %v592 = vunpack.c.h.b16 %v153
    %v593 = vunpack.c.l.b16 %v154
    %v594 = vunpack.c.h.b16 %v154
    %v595 = vunpack.c.l.b16 %v155
    %v596 = vunpack.c.h.b16 %v155
    %v597 = vunpack.c.l.b16 %v156
    %v598 = vunpack.c.l.b16 %v157
    %v599 = vunpack.c.h.b16 %v157
    %v600 = vunpack.c.l.b16 %v158
    %v601 = vunpack.c.h.b16 %v158
    %v602 = vunpack.c.l.b16 %v159
    %v603 = vunpack.c.h.b16 %v159
    %v604 = vunpack.c.l.b16 %v160
    %v605 = vunpack.c.l.b16 %v161
    %v606 = vunpack.c.h.b16 %v161
    %v607 = vunpack.c.l.b16 %v162
    %v608 = vunpack.c.h.b16 %v162
    %v609 = vunpack.c.l.b16 %v163
    %v610 = vunpack.c.h.b16 %v163
    %v611 = vunpack.c.l.b16 %v164
    %v612 = vunpack.c.l.b16 %v165
    %v613 = vunpack.c.h.b16 %v165
    %v614 = vunpack.c.l.b16 %v166
    %v615 = vunpack.c.h.b16 %v166
    %v616 = vunpack.c.l.b16 %v167
    %v617 = vunpack.c.h.b16 %v167
    %v618 = vunpack.c.l.b16 %v168
    %v619 = vunpack.c.l.b16 %v169
    %v620 = vunpack.c.h.b16 %v169
    %v621 = vunpack.c.l.b16 %v170
    %v622 = vunpack.c.h.b16 %v170
    %v623 = vunpack.c.l.b16 %v171
    %v624 = vunpack.c.h.b16 %v171
    %v625 = vunpack.c.l.b16 %v172
    %v626 = vunpack.c.l.b16 %v173
    %v627 = vunpack.c.h.b16 %v173
    %v628 = vunpack.c.l.b16 %v174
    %v629 = vunpack.c.h.b16 %v174
    %v630 = vunpack.c.l.b16 %v175
    %v631 = vunpack.c.h.b16 %v175
    %v632 = vunpack.c.l.b16 %v176
    %v633 = vunpack.c.l.b16 %v177
    %v634 = vunpack.c.h.b16 %v177
    %v635 = vunpack.c.l.b16 %v178
    %v636 = vunpack.c.h.b16 %v178
    %v637 = vunpack.c.l.b16 %v179
    %v638 = vunpack.c.h.b16 %v179
    %v639 = vunpack.c.l.b16 %v180
    %v640 = vunpack.c.l.b16 %v181
    %v641 = vunpack.c.h.b16 %v181
    %v642 = vunpack.c.l.b16 %v182
    %v643 = vunpack.c.h.b16 %v182
    %v644 = vunpack.c.l.b16 %v183
    %v645 = vunpack.c.h.b16 %v183
    %v646 = vunpack.c.l.b16 %v184
    %v647 = vunpack.c.l.b16 %v185
    %v648 = vunpack.c.h.b16 %v185
    %v649 = vunpack.c.l.b16 %v186
    %v650 = vunpack.c.h.b16 %v186
    %v651 = vunpack.c.l.b16 %v187
    %v652 = vunpack.c.h.b16 %v187
    %v653 = vunpack.c.l.b16 %v188
    %v654 = vunpack.c.l.b16 %v189
    %v655 = vunpack.c.h.b16 %v189
    %v656 = vunpack.c.l.b16 %v190
    %v657 = vunpack.c.h.b16 %v190
    %v658 = vunpack.c.l.b16 %v191
    %v659 = vunpack.c.h.b16 %v191
    %v660 = vunpack.c.l.b16 %v192
    %v661 = vunpack.c.l.b16 %v193
    %v662 = vunpack.c.h.b16 %v193
    %v663 = vunpack.c.l.b16 %v194
    %v664 = vunpack.c.h.b16 %v194
    %v665 = vunpack.c.l.b16 %v195
    %v666 = vunpack.c.h.b16 %v195
    %v667 = vunpack.c.l.b16 %v196
    %v668 = vpack.c.b16 %v451, %v444
    %v669 = vpack.c.b16 %v452, %v445
    %v670 = vpack.c.b16 %v453, %v446
    %v671 = vpack.c.b16 %v454, %v447
    %v672 = vpack.c.b16 %v455, %v448
    %v673 = vpack.c.b16 %v456, %v449
    %v674 = vpack.c.b16 %v457, %v450
    %v675 = vpack.c.b16 %v465, %v458
    %v676 = vpack.c.b16 %v466, %v459
    %v677 = vpack.c.b16 %v467, %v460
    %v678 = vpack.c.b16 %v468, %v461
    %v679 = vpack.c.b16 %v469, %v462
    %v680 = vpack.c.b16 %v470, %v463
    %v681 = vpack.c.b16 %v471, %v464
    %v682 = vpack.c.b16 %v479, %v472
    %v683 = vpack.c.b16 %v480, %v473
    %v684 = vpack.c.b16 %v481, %v474
    %v685 = vpack.c.b16 %v482, %v475
    %v686 = vpack.c.b16 %v483, %v476
    %v687 = vpack.c.b16 %v484, %v477
    %v688 = vpack.c.b16 %v485, %v478
    %v689 = vpack.c.b16 %v493, %v486
    %v690 = vpack.c.b16 %v494, %v487
    %v691 = vpack.c.b16 %v495, %v488
    %v692 = vpack.c.b16 %v496, %v489
    %v693 = vpack.c.b16 %v497, %v490
    %v694 = vpack.c.b16 %v498, %v491
    %v695 = vpack.c.b16 %v499, %v492
    %v696 = vpack.c.b16 %v507, %v500
    %v697 = vpack.c.b16 %v508, %v501
    %v698 = vpack.c.b16 %v509, %v502
    %v699 = vpack.c.b16 %v510, %v503
    %v700 = vpack.c.b16 %v511, %v504
    %v701 = vpack.c.b16 %v512, %v505
    %v702 = vpack.c.b16 %v513, %v506
    %v703 = vpack.c.b16 %v521, %v514
    %v704 = vpack.c.b16 %v522, %v515
    %v705 = vpack.c.b16 %v523, %v516
    %v706 = vpack.c.b16 %v524, %v517
    %v707 = vpack.c.b16 %v525, %v518
    %v708 = vpack.c.b16 %v526, %v519
    %v709 = vpack.c.b16 %v527, %v520
    %v710 = vpack.c.b16 %v535, %v528
    %v711 = vpack.c.b16 %v536, %v529
    %v712 = vpack.c.b16 %v537, %v530
    %v713 = vpack.c.b16 %v538, %v531
    %v714 = vpack.c.b16 %v539, %v532
    %v715 = vpack.c.b16 %v540, %v533
    %v716 = vpack.c.b16 %v541, %v534
    %v717 = vpack.c.b16 %v549, %v542
    %v718 = vpack.c.b16 %v550, %v543
    %v719 = vpack.c.b16 %v551, %v544
    %v720 = vpack.c.b16 %v552, %v545
    %v721 = vpack.c.b16 %v553, %v546
    %v722 = vpack.c.b16 %v554, %v547
    %v723 = vpack.c.b16 %v555, %v548
    %v724 = vpack.c.b16 %v563, %v556
    %v725 = vpack.c.b16 %v564, %v557
    %v726 = vpack.c.b16 %v565, %v558
    %v727 = vpack.c.b16 %v566, %v559
    %v728 = vpack.c.b16 %v567, %v560
    %v729 = vpack.c.b16 %v568, %v561
    %v730 = vpack.c.b16 %v569, %v562
    %v731 = vpack.c.b16 %v577, %v570
    %v732 = vpack.c.b16 %v578, %v571
    %v733 = vpack.c.b16 %v579, %v572
    %v734 = vpack.c.b16 %v580, %v573
    %v735 = vpack.c.b16 %v581, %v574
    %v736 = vpack.c.b16 %v582, %v575
    %v737 = vpack.c.b16 %v583, %v576
    %v738 = vpack.c.b16 %v591, %v584
    %v739 = vpack.c.b16 %v592, %v585
    %v740 = vpack.c.b16 %v593, %v586
    %v741 = vpack.c.b16 %v594, %v587
    %v742 = vpack.c.b16 %v595, %v588
    %v743 = vpack.c.b16 %v596, %v589
    %v744 = vpack.c.b16 %v597, %v590
    %v745 = vpack.c.b16 %v605, %v598
    %v746 = vpack.c.b16 %v606, %v599
    %v747 = vpack.c.b16 %v607, %v600
    %v748 = vpack.c.b16 %v608, %v601
    %v749 = vpack.c.b16 %v609, %v602
    %v750 = vpack.c.b16 %v610, %v603
    %v751 = vpack.c.b16 %v611, %v604
    %v752 = vpack.c.b16 %v619, %v612
    %v753 = vpack.c.b16 %v620, %v613
    %v754 = vpack.c.b16 %v621, %v614
    %v755 = vpack.c.b16 %v622, %v615
    %v756 = vpack.c.b16 %v623, %v616
    %v757 = vpack.c.b16 %v624, %v617
    %v758 = vpack.c.b16 %v625, %v618
    %v759 = vpack.c.b16 %v633, %v626
    %v760 = vpack.c.b16 %v634, %v627
    %v761 = vpack.c.b16 %v635, %v628
    %v762 = vpack.c.b16 %v636, %v629
    %v763 = vpack.c.b16 %v637, %v630
    %v764 = vpack.c.b16 %v638, %v631
    %v765 = vpack.c.b16 %v639, %v632
    %v766 = vpack.c.b16 %v647, %v640
    %v767 = vpack.c.b16 %v648, %v641
    %v768 = vpack.c.b16 %v649, %v642
    %v769 = vpack.c.b16 %v650, %v643
    %v770 = vpack.c.b16 %v651, %v644
    %v771 = vpack.c.b16 %v652, %v645
    %v772 = vpack.c.b16 %v653, %v646
    %v773 = vpack.c.b16 %v661, %v654
    %v774 = vpack.c.b16 %v662, %v655
    %v775 = vpack.c.b16 %v663, %v656
    %v776 = vpack.c.b16 %v664, %v657
    %v777 = vpack.c.b16 %v665, %v658
    %v778 = vpack.c.b16 %v666, %v659
    %v779 = vpack.c.b16 %v667, %v660
    %v1004 = vunpack.c.l.b16 %v197
    %v1005 = vunpack.c.l.b16 %v198
    %v1006 = vunpack.c.l.b16 %v199
    %v1007 = vunpack.c.l.b16 %v200
    %v1008 = vunpack.c.l.b16 %v201
    %v1009 = vunpack.c.l.b16 %v202
    %v1010 = vunpack.c.l.b16 %v203
    %v1011 = vunpack.c.l.b16 %v204
    %v1012 = vunpack.c.l.b16 %v205
    %v1013 = vunpack.c.l.b16 %v206
    %v1014 = vunpack.c.l.b16 %v207
    %v1015 = vunpack.c.l.b16 %v208
    %v1016 = vunpack.c.l.b16 %v209
    %v1017 = vunpack.c.l.b16 %v210
    %v1018 = vunpack.c.l.b16 %v211
    %v1019 = vunpack.c.l.b16 %v212
    %v1020 = vunpack.c.l.b16 %v213
    %v1021 = vunpack.c.l.b16 %v214
    %v1022 = vunpack.c.l.b16 %v215
    %v1023 = vunpack.c.l.b16 %v216
    %v1024 = vunpack.c.l.b16 %v217
    %v1025 = vunpack.c.l.b16 %v218
    %v1026 = vunpack.c.l.b16 %v219
    %v1027 = vunpack.c.l.b16 %v220
    %v1028 = vunpack.c.l.b16 %v221
    %v1029 = vunpack.c.l.b16 %v222
    %v1030 = vunpack.c.l.b16 %v223
    %v1031 = vunpack.c.l.b16 %v224
    %v1032 = vunpack.c.l.b16 %v225
    %v1033 = vunpack.c.l.b16 %v226
    %v1034 = vunpack.c.l.b16 %v227
    %v1035 = vunpack.c.l.b16 %v228
    %v1036 = vunpack.c.l.b16 %v229
    %v1037 = vunpack.c.l.b16 %v230
    %v1038 = vunpack.c.l.b16 %v231
    %v1039 = vunpack.c.l.b16 %v232
    %v1040 = vunpack.c.l.b16 %v233
    %v1041 = vunpack.c.l.b16 %v234
    %v1042 = vunpack.c.l.b16 %v235
    %v1043 = vunpack.c.l.b16 %v236
    %v1044 = vunpack.c.l.b16 %v237
    %v1045 = vunpack.c.l.b16 %v238
    %v1046 = vunpack.c.l.b16 %v239
    %v1047 = vunpack.c.l.b16 %v240
    %v1048 = vunpack.c.l.b16 %v241
    %v1049 = vunpack.c.l.b16 %v242
    %v1050 = vunpack.c.l.b16 %v243
    %v1051 = vunpack.c.l.b16 %v244
    %v1052 = vunpack.c.l.b16 %v245
    %v1053 = vunpack.c.l.b16 %v246
    %v1054 = vunpack.c.l.b16 %v247
    %v1055 = vunpack.c.l.b16 %v248
    %v1056 = vunpack.c.l.b16 %v249
    %v1057 = vunpack.c.l.b16 %v250
    %v1058 = vunpack.c.l.b16 %v251
    %v1059 = vunpack.c.l.b16 %v252
    %v1060 = vunpack.c.l.b16 %v253
    %v1061 = vunpack.c.l.b16 %v254
    %v1062 = vunpack.c.l.b16 %v255
    %v1063 = vunpack.c.l.b16 %v256
    %v1064 = vunpack.c.l.b16 %v257
    %v1065 = vunpack.c.l.b16 %v258
    %v1066 = vunpack.c.l.b16 %v259
    %v1067 = vunpack.c.l.b16 %v260
    %v1068 = vunpack.c.l.b16 %v261
    %v1069 = vunpack.c.l.b16 %v262
    %v1070 = vunpack.c.l.b16 %v263
    %v1071 = vunpack.c.l.b16 %v264
    %v1072 = vunpack.c.l.b16 %v265
    %v1073 = vunpack.c.l.b16 %v266
    %v1074 = vunpack.c.l.b16 %v267
    %v1075 = vunpack.c.l.b16 %v268
    %v1076 = vunpack.c.l.b16 %v269
    %v1077 = vunpack.c.l.b16 %v270
    %v1078 = vunpack.c.l.b16 %v271
    %v1079 = vunpack.c.l.b16 %v272
    %v1080 = vunpack.c.l.b16 %v273
    %v1081 = vunpack.c.l.b16 %v274
    %v1082 = vunpack.c.l.b16 %v275
    %v1083 = vunpack.c.l.b16 %v276
    %v1084 = vunpack.c.l.b16 %v277
    %v1085 = vunpack.c.l.b16 %v278
    %v1086 = vunpack.c.l.b16 %v279
    %v1087 = vunpack.c.l.b16 %v280
    %v1088 = vunpack.c.l.b16 %v281
    %v1089 = vunpack.c.l.b16 %v282
    %v1090 = vunpack.c.l.b16 %v283
    %v1091 = vunpack.c.l.b16 %v284
    %v1092 = vunpack.c.l.b16 %v285
    %v1093 = vunpack.c.l.b16 %v286
    %v1094 = vunpack.c.l.b16 %v287
    %v1095 = vunpack.c.l.b16 %v288
    %v1096 = vunpack.c.l.b16 %v289
    %v1097 = vunpack.c.l.b16 %v290
    %v1098 = vunpack.c.l.b16 %v291
    %v1099 = vunpack.c.l.b16 %v292
    %v1100 = vunpack.c.l.b16 %v293
    %v1101 = vunpack.c.l.b16 %v294
    %v1102 = vunpack.c.l.b16 %v295
    %v1103 = vunpack.c.l.b16 %v296
    %v1104 = vunpack.c.l.b16 %v297
    %v1105 = vunpack.c.l.b16 %v298
    %v1106 = vunpack.c.l.b16 %v299
    %v1107 = vunpack.c.l.b16 %v300
    %v1108 = vunpack.c.l.b16 %v301
    %v1109 = vunpack.c.l.b16 %v302
    %v1110 = vunpack.c.l.b16 %v303
    %v1111 = vunpack.c.l.b16 %v304
    %v1112 = vunpack.c.l.b16 %v305
    %v1113 = vunpack.c.l.b16 %v306
    %v1114 = vunpack.c.l.b16 %v307
    %v1115 = vunpack.c.l.b16 %v308
    %v1116 = vpack.c.b16 %v1005, %v1004
    %v1117 = vpack.c.b16 %v1007, %v1006
    %v1118 = vpack.c.b16 %v1009, %v1008
    %v1119 = vpack.c.b16 %v1011, %v1010
    %v1120 = vpack.c.b16 %v1013, %v1012
    %v1121 = vpack.c.b16 %v1015, %v1014
    %v1122 = vpack.c.b16 %v1017, %v1016
    %v1123 = vpack.c.b16 %v1019, %v1018
    %v1124 = vpack.c.b16 %v1021, %v1020
    %v1125 = vpack.c.b16 %v1023, %v1022
    %v1126 = vpack.c.b16 %v1025, %v1024
    %v1127 = vpack.c.b16 %v1027, %v1026
    %v1128 = vpack.c.b16 %v1029, %v1028
    %v1129 = vpack.c.b16 %v1031, %v1030
    %v1130 = vpack.c.b16 %v1033, %v1032
    %v1131 = vpack.c.b16 %v1035, %v1034
    %v1132 = vpack.c.b16 %v1037, %v1036
    %v1133 = vpack.c.b16 %v1039, %v1038
    %v1134 = vpack.c.b16 %v1041, %v1040
    %v1135 = vpack.c.b16 %v1043, %v1042
    %v1136 = vpack.c.b16 %v1045, %v1044
    %v1137 = vpack.c.b16 %v1047, %v1046
    %v1138 = vpack.c.b16 %v1049, %v1048
    %v1139 = vpack.c.b16 %v1051, %v1050
    %v1140 = vpack.c.b16 %v1053, %v1052
    %v1141 = vpack.c.b16 %v1055, %v1054
    %v1142 = vpack.c.b16 %v1057, %v1056
    %v1143 = vpack.c.b16 %v1059, %v1058
    %v1144 = vpack.c.b16 %v1061, %v1060
    %v1145 = vpack.c.b16 %v1063, %v1062
    %v1146 = vpack.c.b16 %v1065, %v1064
    %v1147 = vpack.c.b16 %v1067, %v1066
    %v1148 = vpack.c.b16 %v1069, %v1068
    %v1149 = vpack.c.b16 %v1071, %v1070
    %v1150 = vpack.c.b16 %v1073, %v1072
    %v1151 = vpack.c.b16 %v1075, %v1074
    %v1152 = vpack.c.b16 %v1077, %v1076
    %v1153 = vpack.c.b16 %v1079, %v1078
    %v1154 = vpack.c.b16 %v1081, %v1080
    %v1155 = vpack.c.b16 %v1083, %v1082
    %v1156 = vpack.c.b16 %v1085, %v1084
    %v1157 = vpack.c.b16 %v1087, %v1086
    %v1158 = vpack.c.b16 %v1089, %v1088
    %v1159 = vpack.c.b16 %v1091, %v1090
    %v1160 = vpack.c.b16 %v1093, %v1092
    %v1161 = vpack.c.b16 %v1095, %v1094
    %v1162 = vpack.c.b16 %v1097, %v1096
    %v1163 = vpack.c.b16 %v1099, %v1098
    %v1164 = vpack.c.b16 %v1101, %v1100
    %v1165 = vpack.c.b16 %v1103, %v1102
    %v1166 = vpack.c.b16 %v1105, %v1104
    %v1167 = vpack.c.b16 %v1107, %v1106
    %v1168 = vpack.c.b16 %v1109, %v1108
    %v1169 = vpack.c.b16 %v1111, %v1110
    %v1170 = vpack.c.b16 %v1113, %v1112
    %v1171 = vpack.c.b16 %v1115, %v1114
    %1228 = vmatprep.subr.bf16.mxu0 0
    %1229 = vmatpush1.bf16.msra.mxu0 %v1116
    %1230 = vmatprep.subr.bf16.mxu0 0
    %1231 = vmatpush1.bf16.msra.mxu0 %v1117
    %1232 = vmatprep.subr.bf16.mxu0 0
    %1233 = vmatpush1.bf16.msra.mxu0 %v1118
    %1234 = vmatprep.subr.bf16.mxu0 0
    %1235 = vmatpush1.bf16.msra.mxu0 %v1119
    %1236 = vmatprep.subr.bf16.mxu0 0
    %1237 = vmatpush1.bf16.msra.mxu0 %v1120
    %1238 = vmatprep.subr.bf16.mxu0 0
    %1239 = vmatpush1.bf16.msra.mxu0 %v1121
    %1240 = vmatprep.subr.bf16.mxu0 0
    %1241 = vmatpush1.bf16.msra.mxu0 %v1122
    %1242 = vmatprep.subr.bf16.mxu0 0
    %1243 = vmatpush1.bf16.msra.mxu0 %v1123
    %1244 = vmatprep.subr.bf16.mxu0 0
    %1245 = vmatpush1.bf16.msra.mxu0 %v1124
    %1246 = vmatprep.subr.bf16.mxu0 0
    %1247 = vmatpush1.bf16.msra.mxu0 %v1125
    %1248 = vmatprep.subr.bf16.mxu0 0
    %1249 = vmatpush1.bf16.msra.mxu0 %v1126
    %1250 = vmatprep.subr.bf16.mxu0 0
    %1251 = vmatpush1.bf16.msra.mxu0 %v1127
    %1252 = vmatprep.subr.bf16.mxu0 0
    %1253 = vmatpush1.bf16.msra.mxu0 %v1128
    %1254 = vmatprep.subr.bf16.mxu0 0
    %1255 = vmatpush1.bf16.msra.mxu0 %v1129
    %1256 = vmatprep.subr.bf16.mxu0 0
    %1257 = vmatpush1.bf16.msra.mxu0 %v1130
    %1258 = vmatprep.subr.bf16.mxu0 0
    %1259 = vmatpush1.bf16.msra.mxu0 %v1131
    %1260 = vmatprep.mubr.bf16.mxu0 %v669
    %1261 = vmatmul.mubr.bf16.gmra.mrb[0].mxu0 %v668
    %v1262 = vpop.f32.mrb[0].mxu0
    %v1263 = vadd.f32 %v314, %v1262
    %v1264 = vpop.f32.mrb[0].mxu0
    %v1265 = vpop.f32.mrb[0].mxu0
    %v1266 = vadd.f32 %v314, %v1265
    %v1267 = vpop.f32.mrb[0].mxu0
    %1268 = vmatprep.mubr.bf16.mxu0 %v676
    %1269 = vmatmul.mubr.bf16.gmra.mrb[0].mxu0 %v675
    %v1270 = vpop.f32.mrb[0].mxu0
    %v1271 = vadd.f32 %v314, %v1270
    %v1272 = vpop.f32.mrb[0].mxu0
    %v1273 = vpop.f32.mrb[0].mxu0
    %v1274 = vadd.f32 %v314, %v1273
    %v1275 = vpop.f32.mrb[0].mxu0
    %1276 = vmatprep.mubr.bf16.mxu0 %v683
    %1277 = vmatmul.mubr.bf16.gmra.mrb[0].mxu0 %v682
    %v1278 = vpop.f32.mrb[0].mxu0
    %v1279 = vadd.f32 %v314, %v1278
    %v1280 = vpop.f32.mrb[0].mxu0
    %v1281 = vpop.f32.mrb[0].mxu0
    %v1282 = vadd.f32 %v314, %v1281
    %v1283 = vpop.f32.mrb[0].mxu0
    %1284 = vmatprep.mubr.bf16.mxu0 %v690
    %1285 = vmatmul.mubr.bf16.gmra.mrb[0].mxu0 %v689
    %v1286 = vpop.f32.mrb[0].mxu0
    %v1287 = vadd.f32 %v314, %v1286
    %v1288 = vpop.f32.mrb[0].mxu0
    %v1289 = vpop.f32.mrb[0].mxu0
    %v1290 = vadd.f32 %v314, %v1289
    %v1291 = vpop.f32.mrb[0].mxu0
    %1292 = vmatprep.mubr.bf16.mxu0 %v697
    %1293 = vmatmul.mubr.bf16.gmra.mrb[0].mxu0 %v696
    %v1294 = vpop.f32.mrb[0].mxu0
    %v1295 = vadd.f32 %v314, %v1294
    %v1296 = vpop.f32.mrb[0].mxu0
    %v1297 = vpop.f32.mrb[0].mxu0
    %v1298 = vadd.f32 %v314, %v1297
    %v1299 = vpop.f32.mrb[0].mxu0
    %1300 = vmatprep.mubr.bf16.mxu0 %v704
    %1301 = vmatmul.mubr.bf16.gmra.mrb[0].mxu0 %v703
    %v1302 = vpop.f32.mrb[0].mxu0
    %v1303 = vadd.f32 %v314, %v1302
    %v1304 = vpop.f32.mrb[0].mxu0
    %v1305 = vpop.f32.mrb[0].mxu0
    %v1306 = vadd.f32 %v314, %v1305
    %v1307 = vpop.f32.mrb[0].mxu0
    %1308 = vmatprep.mubr.bf16.mxu0 %v711
    %1309 = vmatmul.mubr.bf16.gmra.mrb[0].mxu0 %v710
    %v1310 = vpop.f32.mrb[0].mxu0
    %v1311 = vadd.f32 %v314, %v1310
    %v1312 = vpop.f32.mrb[0].mxu0
    %v1313 = vpop.f32.mrb[0].mxu0
    %v1314 = vadd.f32 %v314, %v1313
    %v1315 = vpop.f32.mrb[0].mxu0
    %1316 = vmatprep.mubr.bf16.mxu0 %v718
    %1317 = vmatmul.mubr.bf16.gmra.mrb[0].mxu0 %v717
    %v1318 = vpop.f32.mrb[0].mxu0
    %v1319 = vadd.f32 %v314, %v1318
    %v1320 = vpop.f32.mrb[0].mxu0
    %v1321 = vpop.f32.mrb[0].mxu0
    %v1322 = vadd.f32 %v314, %v1321
    %v1323 = vpop.f32.mrb[0].mxu0
    %1324 = vmatprep.mubr.bf16.mxu0 %v725
    %1325 = vmatmul.mubr.bf16.gmra.mrb[0].mxu0 %v724
    %v1326 = vpop.f32.mrb[0].mxu0
    %v1327 = vadd.f32 %v314, %v1326
    %v1328 = vpop.f32.mrb[0].mxu0
    %v1329 = vpop.f32.mrb[0].mxu0
    %v1330 = vadd.f32 %v314, %v1329
    %v1331 = vpop.f32.mrb[0].mxu0
    %1332 = vmatprep.mubr.bf16.mxu0 %v732
    %1333 = vmatmul.mubr.bf16.gmra.mrb[0].mxu0 %v731
    %v1334 = vpop.f32.mrb[0].mxu0
    %v1335 = vadd.f32 %v314, %v1334
    %v1336 = vpop.f32.mrb[0].mxu0
    %v1337 = vpop.f32.mrb[0].mxu0
    %v1338 = vadd.f32 %v314, %v1337
    %v1339 = vpop.f32.mrb[0].mxu0
    %1340 = vmatprep.mubr.bf16.mxu0 %v739
    %1341 = vmatmul.mubr.bf16.gmra.mrb[0].mxu0 %v738
    %v1342 = vpop.f32.mrb[0].mxu0
    %v1343 = vadd.f32 %v314, %v1342
    %v1344 = vpop.f32.mrb[0].mxu0
    %v1345 = vpop.f32.mrb[0].mxu0
    %v1346 = vadd.f32 %v314, %v1345
    %v1347 = vpop.f32.mrb[0].mxu0
    %1348 = vmatprep.mubr.bf16.mxu0 %v746
    %1349 = vmatmul.mubr.bf16.gmra.mrb[0].mxu0 %v745
    %v1350 = vpop.f32.mrb[0].mxu0
    %v1351 = vadd.f32 %v314, %v1350
    %v1352 = vpop.f32.mrb[0].mxu0
    %v1353 = vpop.f32.mrb[0].mxu0
    %v1354 = vadd.f32 %v314, %v1353
    %v1355 = vpop.f32.mrb[0].mxu0
    %1356 = vmatprep.mubr.bf16.mxu0 %v753
    %1357 = vmatmul.mubr.bf16.gmra.mrb[0].mxu0 %v752
    %v1358 = vpop.f32.mrb[0].mxu0
    %v1359 = vadd.f32 %v314, %v1358
    %v1360 = vpop.f32.mrb[0].mxu0
    %v1361 = vpop.f32.mrb[0].mxu0
    %v1362 = vadd.f32 %v314, %v1361
    %v1363 = vpop.f32.mrb[0].mxu0
    %1364 = vmatprep.mubr.bf16.mxu0 %v760
    %1365 = vmatmul.mubr.bf16.gmra.mrb[0].mxu0 %v759
    %v1366 = vpop.f32.mrb[0].mxu0
    %v1367 = vadd.f32 %v314, %v1366
    %v1368 = vpop.f32.mrb[0].mxu0
    %v1369 = vpop.f32.mrb[0].mxu0
    %v1370 = vadd.f32 %v314, %v1369
    %v1371 = vpop.f32.mrb[0].mxu0
    %1372 = vmatprep.mubr.bf16.mxu0 %v767
    %1373 = vmatmul.mubr.bf16.gmra.mrb[0].mxu0 %v766
    %v1374 = vpop.f32.mrb[0].mxu0
    %v1375 = vadd.f32 %v314, %v1374
    %v1376 = vpop.f32.mrb[0].mxu0
    %v1377 = vpop.f32.mrb[0].mxu0
    %v1378 = vadd.f32 %v314, %v1377
    %v1379 = vpop.f32.mrb[0].mxu0
    %1380 = vmatprep.mubr.bf16.mxu0 %v774
    %1381 = vmatmul.mubr.bf16.gmra.mrb[0].mxu0 %v773
    %v1382 = vpop.f32.mrb[0].mxu0
    %v1383 = vadd.f32 %v314, %v1382
    %v1384 = vpop.f32.mrb[0].mxu0
    %v1385 = vpop.f32.mrb[0].mxu0
    %v1386 = vadd.f32 %v314, %v1385
    %v1387 = vpop.f32.mrb[0].mxu0
    %1388 = vdwg.mxu0
    %1389 = vmatprep.subr.bf16.mxu0 0
    %1390 = vmatpush1.bf16.msra.mxu0 %v1132
    %1391 = vmatprep.subr.bf16.mxu0 0
    %1392 = vmatpush1.bf16.msra.mxu0 %v1133
    %1393 = vmatprep.subr.bf16.mxu0 0
    %1394 = vmatpush1.bf16.msra.mxu0 %v1134
    %1395 = vmatprep.subr.bf16.mxu0 0
    %1396 = vmatpush1.bf16.msra.mxu0 %v1135
    %1397 = vmatprep.subr.bf16.mxu0 0
    %1398 = vmatpush1.bf16.msra.mxu0 %v1136
    %1399 = vmatprep.subr.bf16.mxu0 0
    %1400 = vmatpush1.bf16.msra.mxu0 %v1137
    %1401 = vmatprep.subr.bf16.mxu0 0
    %1402 = vmatpush1.bf16.msra.mxu0 %v1138
    %1403 = vmatprep.subr.bf16.mxu0 0
    %1404 = vmatpush1.bf16.msra.mxu0 %v1139
    %1405 = vmatprep.subr.bf16.mxu0 0
    %1406 = vmatpush1.bf16.msra.mxu0 %v1140
    %1407 = vmatprep.subr.bf16.mxu0 0
    %1408 = vmatpush1.bf16.msra.mxu0 %v1141
    %1409 = vmatprep.subr.bf16.mxu0 0
    %1410 = vmatpush1.bf16.msra.mxu0 %v1142
    %1411 = vmatprep.subr.bf16.mxu0 0
    %1412 = vmatpush1.bf16.msra.mxu0 %v1143
    %1413 = vmatprep.subr.bf16.mxu0 0
    %1414 = vmatpush1.bf16.msra.mxu0 %v1144
    %1415 = vmatprep.subr.bf16.mxu0 0
    %1416 = vmatpush1.bf16.msra.mxu0 %v1145
    %1417 = vmatprep.subr.bf16.mxu0 0
    %1418 = vmatpush1.bf16.msra.mxu0 %v1146
    %1419 = vmatprep.subr.bf16.mxu0 0
    %1420 = vmatpush1.bf16.msra.mxu0 %v1147
    %1421 = vmatprep.mubr.bf16.mxu0 %v671
    %1422 = vmatmul.mubr.bf16.gmra.mrb[0].mxu0 %v670
    %v1423 = vpop.f32.mrb[0].mxu0
    %v1424 = vadd.f32 %v1263, %v1423
    %v1425 = vpop.f32.mrb[0].mxu0
    %v1426 = vpop.f32.mrb[0].mxu0
    %v1427 = vadd.f32 %v1266, %v1426
    %v1428 = vpop.f32.mrb[0].mxu0
    %1429 = vmatprep.mubr.bf16.mxu0 %v678
    %1430 = vmatmul.mubr.bf16.gmra.mrb[0].mxu0 %v677
    %v1431 = vpop.f32.mrb[0].mxu0
    %v1432 = vadd.f32 %v1271, %v1431
    %v1433 = vpop.f32.mrb[0].mxu0
    %v1434 = vpop.f32.mrb[0].mxu0
    %v1435 = vadd.f32 %v1274, %v1434
    %v1436 = vpop.f32.mrb[0].mxu0
    %1437 = vmatprep.mubr.bf16.mxu0 %v685
    %1438 = vmatmul.mubr.bf16.gmra.mrb[0].mxu0 %v684
    %v1439 = vpop.f32.mrb[0].mxu0
    %v1440 = vadd.f32 %v1279, %v1439
    %v1441 = vpop.f32.mrb[0].mxu0
    %v1442 = vpop.f32.mrb[0].mxu0
    %v1443 = vadd.f32 %v1282, %v1442
    %v1444 = vpop.f32.mrb[0].mxu0
    %1445 = vmatprep.mubr.bf16.mxu0 %v692
    %1446 = vmatmul.mubr.bf16.gmra.mrb[0].mxu0 %v691
    %v1447 = vpop.f32.mrb[0].mxu0
    %v1448 = vadd.f32 %v1287, %v1447
    %v1449 = vpop.f32.mrb[0].mxu0
    %v1450 = vpop.f32.mrb[0].mxu0
    %v1451 = vadd.f32 %v1290, %v1450
    %v1452 = vpop.f32.mrb[0].mxu0
    %1453 = vmatprep.mubr.bf16.mxu0 %v699
    %1454 = vmatmul.mubr.bf16.gmra.mrb[0].mxu0 %v698
    %v1455 = vpop.f32.mrb[0].mxu0
    %v1456 = vadd.f32 %v1295, %v1455
    %v1457 = vpop.f32.mrb[0].mxu0
    %v1458 = vpop.f32.mrb[0].mxu0
    %v1459 = vadd.f32 %v1298, %v1458
    %v1460 = vpop.f32.mrb[0].mxu0
    %1461 = vmatprep.mubr.bf16.mxu0 %v706
    %1462 = vmatmul.mubr.bf16.gmra.mrb[0].mxu0 %v705
    %v1463 = vpop.f32.mrb[0].mxu0
    %v1464 = vadd.f32 %v1303, %v1463
    %v1465 = vpop.f32.mrb[0].mxu0
    %v1466 = vpop.f32.mrb[0].mxu0
    %v1467 = vadd.f32 %v1306, %v1466
    %v1468 = vpop.f32.mrb[0].mxu0
    %1469 = vmatprep.mubr.bf16.mxu0 %v713
    %1470 = vmatmul.mubr.bf16.gmra.mrb[0].mxu0 %v712
    %v1471 = vpop.f32.mrb[0].mxu0
    %v1472 = vadd.f32 %v1311, %v1471
    %v1473 = vpop.f32.mrb[0].mxu0
    %v1474 = vpop.f32.mrb[0].mxu0
    %v1475 = vadd.f32 %v1314, %v1474
    %v1476 = vpop.f32.mrb[0].mxu0
    %1477 = vmatprep.mubr.bf16.mxu0 %v720
    %1478 = vmatmul.mubr.bf16.gmra.mrb[0].mxu0 %v719
    %v1479 = vpop.f32.mrb[0].mxu0
    %v1480 = vadd.f32 %v1319, %v1479
    %v1481 = vpop.f32.mrb[0].mxu0
    %v1482 = vpop.f32.mrb[0].mxu0
    %v1483 = vadd.f32 %v1322, %v1482
    %v1484 = vpop.f32.mrb[0].mxu0
    %1485 = vmatprep.mubr.bf16.mxu0 %v727
    %1486 = vmatmul.mubr.bf16.gmra.mrb[0].mxu0 %v726
    %v1487 = vpop.f32.mrb[0].mxu0
    %v1488 = vadd.f32 %v1327, %v1487
    %v1489 = vpop.f32.mrb[0].mxu0
    %v1490 = vpop.f32.mrb[0].mxu0
    %v1491 = vadd.f32 %v1330, %v1490
    %v1492 = vpop.f32.mrb[0].mxu0
    %1493 = vmatprep.mubr.bf16.mxu0 %v734
    %1494 = vmatmul.mubr.bf16.gmra.mrb[0].mxu0 %v733
    %v1495 = vpop.f32.mrb[0].mxu0
    %v1496 = vadd.f32 %v1335, %v1495
    %v1497 = vpop.f32.mrb[0].mxu0
    %v1498 = vpop.f32.mrb[0].mxu0
    %v1499 = vadd.f32 %v1338, %v1498
    %v1500 = vpop.f32.mrb[0].mxu0
    %1501 = vmatprep.mubr.bf16.mxu0 %v741
    %1502 = vmatmul.mubr.bf16.gmra.mrb[0].mxu0 %v740
    %v1503 = vpop.f32.mrb[0].mxu0
    %v1504 = vadd.f32 %v1343, %v1503
    %v1505 = vpop.f32.mrb[0].mxu0
    %v1506 = vpop.f32.mrb[0].mxu0
    %v1507 = vadd.f32 %v1346, %v1506
    %v1508 = vpop.f32.mrb[0].mxu0
    %1509 = vmatprep.mubr.bf16.mxu0 %v748
    %1510 = vmatmul.mubr.bf16.gmra.mrb[0].mxu0 %v747
    %v1511 = vpop.f32.mrb[0].mxu0
    %v1512 = vadd.f32 %v1351, %v1511
    %v1513 = vpop.f32.mrb[0].mxu0
    %v1514 = vpop.f32.mrb[0].mxu0
    %v1515 = vadd.f32 %v1354, %v1514
    %v1516 = vpop.f32.mrb[0].mxu0
    %1517 = vmatprep.mubr.bf16.mxu0 %v755
    %1518 = vmatmul.mubr.bf16.gmra.mrb[0].mxu0 %v754
    %v1519 = vpop.f32.mrb[0].mxu0
    %v1520 = vadd.f32 %v1359, %v1519
    %v1521 = vpop.f32.mrb[0].mxu0
    %v1522 = vpop.f32.mrb[0].mxu0
    %v1523 = vadd.f32 %v1362, %v1522
    %v1524 = vpop.f32.mrb[0].mxu0
    %1525 = vmatprep.mubr.bf16.mxu0 %v762
    %1526 = vmatmul.mubr.bf16.gmra.mrb[0].mxu0 %v761
    %v1527 = vpop.f32.mrb[0].mxu0
    %v1528 = vadd.f32 %v1367, %v1527
    %v1529 = vpop.f32.mrb[0].mxu0
    %v1530 = vpop.f32.mrb[0].mxu0
    %v1531 = vadd.f32 %v1370, %v1530
    %v1532 = vpop.f32.mrb[0].mxu0
    %1533 = vmatprep.mubr.bf16.mxu0 %v769
    %1534 = vmatmul.mubr.bf16.gmra.mrb[0].mxu0 %v768
    %v1535 = vpop.f32.mrb[0].mxu0
    %v1536 = vadd.f32 %v1375, %v1535
    %v1537 = vpop.f32.mrb[0].mxu0
    %v1538 = vpop.f32.mrb[0].mxu0
    %v1539 = vadd.f32 %v1378, %v1538
    %v1540 = vpop.f32.mrb[0].mxu0
    %1541 = vmatprep.mubr.bf16.mxu0 %v776
    %1542 = vmatmul.mubr.bf16.gmra.mrb[0].mxu0 %v775
    %v1543 = vpop.f32.mrb[0].mxu0
    %v1544 = vadd.f32 %v1383, %v1543
    %v1545 = vpop.f32.mrb[0].mxu0
    %v1546 = vpop.f32.mrb[0].mxu0
    %v1547 = vadd.f32 %v1386, %v1546
    %v1548 = vpop.f32.mrb[0].mxu0
    %1549 = vdwg.mxu0
    %1550 = vmatprep.subr.bf16.mxu0 0
    %1551 = vmatpush1.bf16.msra.mxu0 %v1148
    %1552 = vmatprep.subr.bf16.mxu0 0
    %1553 = vmatpush1.bf16.msra.mxu0 %v1149
    %1554 = vmatprep.subr.bf16.mxu0 0
    %1555 = vmatpush1.bf16.msra.mxu0 %v1150
    %1556 = vmatprep.subr.bf16.mxu0 0
    %1557 = vmatpush1.bf16.msra.mxu0 %v1151
    %1558 = vmatprep.subr.bf16.mxu0 0
    %1559 = vmatpush1.bf16.msra.mxu0 %v1152
    %1560 = vmatprep.subr.bf16.mxu0 0
    %1561 = vmatpush1.bf16.msra.mxu0 %v1153
    %1562 = vmatprep.subr.bf16.mxu0 0
    %1563 = vmatpush1.bf16.msra.mxu0 %v1154
    %1564 = vmatprep.subr.bf16.mxu0 0
    %1565 = vmatpush1.bf16.msra.mxu0 %v1155
    %1566 = vmatprep.subr.bf16.mxu0 0
    %1567 = vmatpush1.bf16.msra.mxu0 %v1156
    %1568 = vmatprep.subr.bf16.mxu0 0
    %1569 = vmatpush1.bf16.msra.mxu0 %v1157
    %1570 = vmatprep.subr.bf16.mxu0 0
    %1571 = vmatpush1.bf16.msra.mxu0 %v1158
    %1572 = vmatprep.subr.bf16.mxu0 0
    %1573 = vmatpush1.bf16.msra.mxu0 %v1159
    %1574 = vmatprep.subr.bf16.mxu0 0
    %1575 = vmatpush1.bf16.msra.mxu0 %v1160
    %1576 = vmatprep.subr.bf16.mxu0 0
    %1577 = vmatpush1.bf16.msra.mxu0 %v1161
    %1578 = vmatprep.subr.bf16.mxu0 0
    %1579 = vmatpush1.bf16.msra.mxu0 %v1162
    %1580 = vmatprep.subr.bf16.mxu0 0
    %1581 = vmatpush1.bf16.msra.mxu0 %v1163
    %1582 = vmatprep.mubr.bf16.mxu0 %v673
    %1583 = vmatmul.mubr.bf16.gmra.mrb[0].mxu0 %v672
    %v1584 = vpop.f32.mrb[0].mxu0
    %v1585 = vadd.f32 %v1424, %v1584
    %v1586 = vpop.f32.mrb[0].mxu0
    %v1587 = vpop.f32.mrb[0].mxu0
    %v1588 = vadd.f32 %v1427, %v1587
    %v1589 = vpop.f32.mrb[0].mxu0
    %1590 = vmatprep.mubr.bf16.mxu0 %v680
    %1591 = vmatmul.mubr.bf16.gmra.mrb[0].mxu0 %v679
    %v1592 = vpop.f32.mrb[0].mxu0
    %v1593 = vadd.f32 %v1432, %v1592
    %v1594 = vpop.f32.mrb[0].mxu0
    %v1595 = vpop.f32.mrb[0].mxu0
    %v1596 = vadd.f32 %v1435, %v1595
    %v1597 = vpop.f32.mrb[0].mxu0
    %1598 = vmatprep.mubr.bf16.mxu0 %v687
    %1599 = vmatmul.mubr.bf16.gmra.mrb[0].mxu0 %v686
    %v1600 = vpop.f32.mrb[0].mxu0
    %v1601 = vadd.f32 %v1440, %v1600
    %v1602 = vpop.f32.mrb[0].mxu0
    %v1603 = vpop.f32.mrb[0].mxu0
    %v1604 = vadd.f32 %v1443, %v1603
    %v1605 = vpop.f32.mrb[0].mxu0
    %1606 = vmatprep.mubr.bf16.mxu0 %v694
    %1607 = vmatmul.mubr.bf16.gmra.mrb[0].mxu0 %v693
    %v1608 = vpop.f32.mrb[0].mxu0
    %v1609 = vadd.f32 %v1448, %v1608
    %v1610 = vpop.f32.mrb[0].mxu0
    %v1611 = vpop.f32.mrb[0].mxu0
    %v1612 = vadd.f32 %v1451, %v1611
    %v1613 = vpop.f32.mrb[0].mxu0
    %1614 = vmatprep.mubr.bf16.mxu0 %v701
    %1615 = vmatmul.mubr.bf16.gmra.mrb[0].mxu0 %v700
    %v1616 = vpop.f32.mrb[0].mxu0
    %v1617 = vadd.f32 %v1456, %v1616
    %v1618 = vpop.f32.mrb[0].mxu0
    %v1619 = vpop.f32.mrb[0].mxu0
    %v1620 = vadd.f32 %v1459, %v1619
    %v1621 = vpop.f32.mrb[0].mxu0
    %1622 = vmatprep.mubr.bf16.mxu0 %v708
    %1623 = vmatmul.mubr.bf16.gmra.mrb[0].mxu0 %v707
    %v1624 = vpop.f32.mrb[0].mxu0
    %v1625 = vadd.f32 %v1464, %v1624
    %v1626 = vpop.f32.mrb[0].mxu0
    %v1627 = vpop.f32.mrb[0].mxu0
    %v1628 = vadd.f32 %v1467, %v1627
    %v1629 = vpop.f32.mrb[0].mxu0
    %1630 = vmatprep.mubr.bf16.mxu0 %v715
    %1631 = vmatmul.mubr.bf16.gmra.mrb[0].mxu0 %v714
    %v1632 = vpop.f32.mrb[0].mxu0
    %v1633 = vadd.f32 %v1472, %v1632
    %v1634 = vpop.f32.mrb[0].mxu0
    %v1635 = vpop.f32.mrb[0].mxu0
    %v1636 = vadd.f32 %v1475, %v1635
    %v1637 = vpop.f32.mrb[0].mxu0
    %1638 = vmatprep.mubr.bf16.mxu0 %v722
    %1639 = vmatmul.mubr.bf16.gmra.mrb[0].mxu0 %v721
    %v1640 = vpop.f32.mrb[0].mxu0
    %v1641 = vadd.f32 %v1480, %v1640
    %v1642 = vpop.f32.mrb[0].mxu0
    %v1643 = vpop.f32.mrb[0].mxu0
    %v1644 = vadd.f32 %v1483, %v1643
    %v1645 = vpop.f32.mrb[0].mxu0
    %1646 = vmatprep.mubr.bf16.mxu0 %v729
    %1647 = vmatmul.mubr.bf16.gmra.mrb[0].mxu0 %v728
    %v1648 = vpop.f32.mrb[0].mxu0
    %v1649 = vadd.f32 %v1488, %v1648
    %v1650 = vpop.f32.mrb[0].mxu0
    %v1651 = vpop.f32.mrb[0].mxu0
    %v1652 = vadd.f32 %v1491, %v1651
    %v1653 = vpop.f32.mrb[0].mxu0
    %1654 = vmatprep.mubr.bf16.mxu0 %v736
    %1655 = vmatmul.mubr.bf16.gmra.mrb[0].mxu0 %v735
    %v1656 = vpop.f32.mrb[0].mxu0
    %v1657 = vadd.f32 %v1496, %v1656
    %v1658 = vpop.f32.mrb[0].mxu0
    %v1659 = vpop.f32.mrb[0].mxu0
    %v1660 = vadd.f32 %v1499, %v1659
    %v1661 = vpop.f32.mrb[0].mxu0
    %1662 = vmatprep.mubr.bf16.mxu0 %v743
    %1663 = vmatmul.mubr.bf16.gmra.mrb[0].mxu0 %v742
    %v1664 = vpop.f32.mrb[0].mxu0
    %v1665 = vadd.f32 %v1504, %v1664
    %v1666 = vpop.f32.mrb[0].mxu0
    %v1667 = vpop.f32.mrb[0].mxu0
    %v1668 = vadd.f32 %v1507, %v1667
    %v1669 = vpop.f32.mrb[0].mxu0
    %1670 = vmatprep.mubr.bf16.mxu0 %v750
    %1671 = vmatmul.mubr.bf16.gmra.mrb[0].mxu0 %v749
    %v1672 = vpop.f32.mrb[0].mxu0
    %v1673 = vadd.f32 %v1512, %v1672
    %v1674 = vpop.f32.mrb[0].mxu0
    %v1675 = vpop.f32.mrb[0].mxu0
    %v1676 = vadd.f32 %v1515, %v1675
    %v1677 = vpop.f32.mrb[0].mxu0
    %1678 = vmatprep.mubr.bf16.mxu0 %v757
    %1679 = vmatmul.mubr.bf16.gmra.mrb[0].mxu0 %v756
    %v1680 = vpop.f32.mrb[0].mxu0
    %v1681 = vadd.f32 %v1520, %v1680
    %v1682 = vpop.f32.mrb[0].mxu0
    %v1683 = vpop.f32.mrb[0].mxu0
    %v1684 = vadd.f32 %v1523, %v1683
    %v1685 = vpop.f32.mrb[0].mxu0
    %1686 = vmatprep.mubr.bf16.mxu0 %v764
    %1687 = vmatmul.mubr.bf16.gmra.mrb[0].mxu0 %v763
    %v1688 = vpop.f32.mrb[0].mxu0
    %v1689 = vadd.f32 %v1528, %v1688
    %v1690 = vpop.f32.mrb[0].mxu0
    %v1691 = vpop.f32.mrb[0].mxu0
    %v1692 = vadd.f32 %v1531, %v1691
    %v1693 = vpop.f32.mrb[0].mxu0
    %1694 = vmatprep.mubr.bf16.mxu0 %v771
    %1695 = vmatmul.mubr.bf16.gmra.mrb[0].mxu0 %v770
    %v1696 = vpop.f32.mrb[0].mxu0
    %v1697 = vadd.f32 %v1536, %v1696
    %v1698 = vpop.f32.mrb[0].mxu0
    %v1699 = vpop.f32.mrb[0].mxu0
    %v1700 = vadd.f32 %v1539, %v1699
    %v1701 = vpop.f32.mrb[0].mxu0
    %1702 = vmatprep.mubr.bf16.mxu0 %v778
    %1703 = vmatmul.mubr.bf16.gmra.mrb[0].mxu0 %v777
    %v1704 = vpop.f32.mrb[0].mxu0
    %v1705 = vadd.f32 %v1544, %v1704
    %v1706 = vpop.f32.mrb[0].mxu0
    %v1707 = vpop.f32.mrb[0].mxu0
    %v1708 = vadd.f32 %v1547, %v1707
    %v1709 = vpop.f32.mrb[0].mxu0
    %1710 = vdwg.mxu0
    %1711 = vmatprep.subr.bf16.mxu0 0
    %1712 = vmatpush1.bf16.msra.mxu0 %v1164
    %1713 = vmatprep.subr.bf16.mxu0 0
    %1714 = vmatpush1.bf16.msra.mxu0 %v1165
    %1715 = vmatprep.subr.bf16.mxu0 0
    %1716 = vmatpush1.bf16.msra.mxu0 %v1166
    %1717 = vmatprep.subr.bf16.mxu0 0
    %1718 = vmatpush1.bf16.msra.mxu0 %v1167
    %1719 = vmatprep.subr.bf16.mxu0 0
    %1720 = vmatpush1.bf16.msra.mxu0 %v1168
    %1721 = vmatprep.subr.bf16.mxu0 0
    %1722 = vmatpush1.bf16.msra.mxu0 %v1169
    %1723 = vmatprep.subr.bf16.mxu0 0
    %1724 = vmatpush1.bf16.msra.mxu0 %v1170
    %1725 = vmatprep.subr.bf16.mxu0 0
    %1726 = vmatpush1.bf16.msra.mxu0 %v1171
    %1727 = vmatprep.subr.bf16.mxu0 0
    %1728 = vmatpush1.bf16.msra.mxu0 0
    %1729 = vmatprep.subr.bf16.mxu0 0
    %1730 = vmatpush1.bf16.msra.mxu0 0
    %1731 = vmatprep.subr.bf16.mxu0 0
    %1732 = vmatpush1.bf16.msra.mxu0 0
    %1733 = vmatprep.subr.bf16.mxu0 0
    %1734 = vmatpush1.bf16.msra.mxu0 0
    %1735 = vmatprep.subr.bf16.mxu0 0
    %1736 = vmatpush1.bf16.msra.mxu0 0
    %1737 = vmatprep.subr.bf16.mxu0 0
    %1738 = vmatpush1.bf16.msra.mxu0 0
    %1739 = vmatprep.subr.bf16.mxu0 0
    %1740 = vmatpush1.bf16.msra.mxu0 0
    %1741 = vmatprep.subr.bf16.mxu0 0
    %1742 = vmatpush1.bf16.msra.mxu0 0
    %1743 = vmatprep.mubr.bf16.mxu0 0
    %1744 = vmatmul.mubr.bf16.gmra.mrb[0].mxu0 %v674
    %v1745 = vpop.f32.mrb[0].mxu0
    %v1746 = vadd.f32 %v1585, %v1745
    %v1747 = vpop.f32.mrb[0].mxu0
    %v1748 = vpop.f32.mrb[0].mxu0
    %v1749 = vadd.f32 %v1588, %v1748
    %v1750 = vpop.f32.mrb[0].mxu0
    %1751 = vmatprep.mubr.bf16.mxu0 0
    %1752 = vmatmul.mubr.bf16.gmra.mrb[0].mxu0 %v681
    %v1753 = vpop.f32.mrb[0].mxu0
    %v1754 = vadd.f32 %v1593, %v1753
    %v1755 = vpop.f32.mrb[0].mxu0
    %v1756 = vpop.f32.mrb[0].mxu0
    %v1757 = vadd.f32 %v1596, %v1756
    %v1758 = vpop.f32.mrb[0].mxu0
    %1759 = vmatprep.mubr.bf16.mxu0 0
    %1760 = vmatmul.mubr.bf16.gmra.mrb[0].mxu0 %v688
    %v1761 = vpop.f32.mrb[0].mxu0
    %v1762 = vadd.f32 %v1601, %v1761
    %v1763 = vpop.f32.mrb[0].mxu0
    %v1764 = vpop.f32.mrb[0].mxu0
    %v1765 = vadd.f32 %v1604, %v1764
    %v1766 = vpop.f32.mrb[0].mxu0
    %1767 = vmatprep.mubr.bf16.mxu0 0
    %1768 = vmatmul.mubr.bf16.gmra.mrb[0].mxu0 %v695
    %v1769 = vpop.f32.mrb[0].mxu0
    %v1770 = vadd.f32 %v1609, %v1769
    %v1771 = vpop.f32.mrb[0].mxu0
    %v1772 = vpop.f32.mrb[0].mxu0
    %v1773 = vadd.f32 %v1612, %v1772
    %v1774 = vpop.f32.mrb[0].mxu0
    %1775 = vmatprep.mubr.bf16.mxu0 0
    %1776 = vmatmul.mubr.bf16.gmra.mrb[0].mxu0 %v702
    %v1777 = vpop.f32.mrb[0].mxu0
    %v1778 = vadd.f32 %v1617, %v1777
    %v1779 = vpop.f32.mrb[0].mxu0
    %v1780 = vpop.f32.mrb[0].mxu0
    %v1781 = vadd.f32 %v1620, %v1780
    %v1782 = vpop.f32.mrb[0].mxu0
    %1783 = vmatprep.mubr.bf16.mxu0 0
    %1784 = vmatmul.mubr.bf16.gmra.mrb[0].mxu0 %v709
    %v1785 = vpop.f32.mrb[0].mxu0
    %v1786 = vadd.f32 %v1625, %v1785
    %v1787 = vpop.f32.mrb[0].mxu0
    %v1788 = vpop.f32.mrb[0].mxu0
    %v1789 = vadd.f32 %v1628, %v1788
    %v1790 = vpop.f32.mrb[0].mxu0
    %1791 = vmatprep.mubr.bf16.mxu0 0
    %1792 = vmatmul.mubr.bf16.gmra.mrb[0].mxu0 %v716
    %v1793 = vpop.f32.mrb[0].mxu0
    %v1794 = vadd.f32 %v1633, %v1793
    %v1795 = vpop.f32.mrb[0].mxu0
    %v1796 = vpop.f32.mrb[0].mxu0
    %v1797 = vadd.f32 %v1636, %v1796
    %v1798 = vpop.f32.mrb[0].mxu0
    %1799 = vmatprep.mubr.bf16.mxu0 0
    %1800 = vmatmul.mubr.bf16.gmra.mrb[0].mxu0 %v723
    %v1801 = vpop.f32.mrb[0].mxu0
    %v1802 = vadd.f32 %v1641, %v1801
    %v1803 = vpop.f32.mrb[0].mxu0
    %v1804 = vpop.f32.mrb[0].mxu0
    %v1805 = vadd.f32 %v1644, %v1804
    %v1806 = vpop.f32.mrb[0].mxu0
    %1807 = vmatprep.mubr.bf16.mxu0 0
    %1808 = vmatmul.mubr.bf16.gmra.mrb[0].mxu0 %v730
    %v1809 = vpop.f32.mrb[0].mxu0
    %v1810 = vadd.f32 %v1649, %v1809
    %v1811 = vpop.f32.mrb[0].mxu0
    %v1812 = vpop.f32.mrb[0].mxu0
    %v1813 = vadd.f32 %v1652, %v1812
    %v1814 = vpop.f32.mrb[0].mxu0
    %1815 = vmatprep.mubr.bf16.mxu0 0
    %1816 = vmatmul.mubr.bf16.gmra.mrb[0].mxu0 %v737
    %v1817 = vpop.f32.mrb[0].mxu0
    %v1818 = vadd.f32 %v1657, %v1817
    %v1819 = vpop.f32.mrb[0].mxu0
    %v1820 = vpop.f32.mrb[0].mxu0
    %v1821 = vadd.f32 %v1660, %v1820
    %v1822 = vpop.f32.mrb[0].mxu0
    %1823 = vmatprep.mubr.bf16.mxu0 0
    %1824 = vmatmul.mubr.bf16.gmra.mrb[0].mxu0 %v744
    %v1825 = vpop.f32.mrb[0].mxu0
    %v1826 = vadd.f32 %v1665, %v1825
    %v1827 = vpop.f32.mrb[0].mxu0
    %v1828 = vpop.f32.mrb[0].mxu0
    %v1829 = vadd.f32 %v1668, %v1828
    %v1830 = vpop.f32.mrb[0].mxu0
    %1831 = vmatprep.mubr.bf16.mxu0 0
    %1832 = vmatmul.mubr.bf16.gmra.mrb[0].mxu0 %v751
    %v1833 = vpop.f32.mrb[0].mxu0
    %v1834 = vadd.f32 %v1673, %v1833
    %v1835 = vpop.f32.mrb[0].mxu0
    %v1836 = vpop.f32.mrb[0].mxu0
    %v1837 = vadd.f32 %v1676, %v1836
    %v1838 = vpop.f32.mrb[0].mxu0
    %1839 = vmatprep.mubr.bf16.mxu0 0
    %1840 = vmatmul.mubr.bf16.gmra.mrb[0].mxu0 %v758
    %v1841 = vpop.f32.mrb[0].mxu0
    %v1842 = vadd.f32 %v1681, %v1841
    %v1843 = vpop.f32.mrb[0].mxu0
    %v1844 = vpop.f32.mrb[0].mxu0
    %v1845 = vadd.f32 %v1684, %v1844
    %v1846 = vpop.f32.mrb[0].mxu0
    %1847 = vmatprep.mubr.bf16.mxu0 0
    %1848 = vmatmul.mubr.bf16.gmra.mrb[0].mxu0 %v765
    %v1849 = vpop.f32.mrb[0].mxu0
    %v1850 = vadd.f32 %v1689, %v1849
    %v1851 = vpop.f32.mrb[0].mxu0
    %v1852 = vpop.f32.mrb[0].mxu0
    %v1853 = vadd.f32 %v1692, %v1852
    %v1854 = vpop.f32.mrb[0].mxu0
    %1855 = vmatprep.mubr.bf16.mxu0 0
    %1856 = vmatmul.mubr.bf16.gmra.mrb[0].mxu0 %v772
    %v1857 = vpop.f32.mrb[0].mxu0
    %v1858 = vadd.f32 %v1697, %v1857
    %v1859 = vpop.f32.mrb[0].mxu0
    %v1860 = vpop.f32.mrb[0].mxu0
    %v1861 = vadd.f32 %v1700, %v1860
    %v1862 = vpop.f32.mrb[0].mxu0
    %1863 = vmatprep.mubr.bf16.mxu0 0
    %1864 = vmatmul.mubr.bf16.gmra.mrb[0].mxu0 %v779
    %v1865 = vpop.f32.mrb[0].mxu0
    %v1866 = vadd.f32 %v1705, %v1865
    %v1867 = vpop.f32.mrb[0].mxu0
    %v1868 = vpop.f32.mrb[0].mxu0
    %v1869 = vadd.f32 %v1708, %v1868
    %v1870 = vpop.f32.mrb[0].mxu0
    %1871 = vdwg.mxu0
    %v1872 = vmax.f32 %v1746, 0.0
    %v1873 = vmax.f32 %v1749, 0.0
    %v1874 = vmax.f32 %v1754, 0.0
    %v1875 = vmax.f32 %v1757, 0.0
    %v1876 = vmax.f32 %v1762, 0.0
    %v1877 = vmax.f32 %v1765, 0.0
    %v1878 = vmax.f32 %v1770, 0.0
    %v1879 = vmax.f32 %v1773, 0.0
    %v1880 = vmax.f32 %v1778, 0.0
    %v1881 = vmax.f32 %v1781, 0.0
    %v1882 = vmax.f32 %v1786, 0.0
    %v1883 = vmax.f32 %v1789, 0.0
    %v1884 = vmax.f32 %v1794, 0.0
    %v1885 = vmax.f32 %v1797, 0.0
    %v1886 = vmax.f32 %v1802, 0.0
    %v1887 = vmax.f32 %v1805, 0.0
    %v1888 = vmax.f32 %v1810, 0.0
    %v1889 = vmax.f32 %v1813, 0.0
    %v1890 = vmax.f32 %v1818, 0.0
    %v1891 = vmax.f32 %v1821, 0.0
    %v1892 = vmax.f32 %v1826, 0.0
    %v1893 = vmax.f32 %v1829, 0.0
    %v1894 = vmax.f32 %v1834, 0.0
    %v1895 = vmax.f32 %v1837, 0.0
    %v1896 = vmax.f32 %v1842, 0.0
    %v1897 = vmax.f32 %v1845, 0.0
    %v1898 = vmax.f32 %v1850, 0.0
    %v1899 = vmax.f32 %v1853, 0.0
    %v1900 = vmax.f32 %v1858, 0.0
    %v1901 = vmax.f32 %v1861, 0.0
    %v1902 = vmax.f32 %v1866, 0.0
    %v1903 = vmax.f32 %v1869, 0.0
    %v1904 = vpack.c.bf16 %v1873, %v1872
    %v1905 = vpack.c.bf16 %v1875, %v1874
    %v1906 = vpack.c.bf16 %v1877, %v1876
    %v1907 = vpack.c.bf16 %v1879, %v1878
    %v1908 = vpack.c.bf16 %v1881, %v1880
    %v1909 = vpack.c.bf16 %v1883, %v1882
    %v1910 = vpack.c.bf16 %v1885, %v1884
    %v1911 = vpack.c.bf16 %v1887, %v1886
    %v1912 = vpack.c.bf16 %v1889, %v1888
    %v1913 = vpack.c.bf16 %v1891, %v1890
    %v1914 = vpack.c.bf16 %v1893, %v1892
    %v1915 = vpack.c.bf16 %v1895, %v1894
    %v1916 = vpack.c.bf16 %v1897, %v1896
    %v1917 = vpack.c.bf16 %v1899, %v1898
    %v1918 = vpack.c.bf16 %v1901, %v1900
    %v1919 = vpack.c.bf16 %v1903, %v1902
    %v1920 = vld [vmem:[#allocation2] sm:$0xf]
    %v1921 = vld [vmem:[#allocation2 + $0x4] sm:$0xf]
    %v1922 = vld [vmem:[#allocation2 + $0x8] sm:$0xf]
    %v1923 = vld [vmem:[#allocation2 + $0xc] sm:$0xf]
    %v1924 = vld [vmem:[#allocation2 + $0x10] sm:$0xf]
    %v1925 = vld [vmem:[#allocation2 + $0x14] sm:$0xf]
    %v1926 = vld [vmem:[#allocation2 + $0x18] sm:$0xf]
    %v1927 = vld [vmem:[#allocation2 + $0x1c] sm:$0xf]
    %v1928 = vld [vmem:[%s4] sm:$0x1]
    %v1930 = vlaneseq
    %v1931 = vshrl.u32 %v1930, 7
    %v1932 = vsub.s32 0, %v1931
    %v1933 = vrot.slane %v1928, %v1932
    %v1943 = vunpack.c.l.b16 %v1920
    %v1944 = vunpack.c.l.b16 %v1921
    %v1945 = vunpack.c.l.b16 %v1922
    %v1946 = vunpack.c.l.b16 %v1923
    %v1947 = vunpack.c.l.b16 %v1924
    %v1948 = vunpack.c.l.b16 %v1925
    %v1949 = vunpack.c.l.b16 %v1926
    %v1950 = vunpack.c.l.b16 %v1927
    %v1951 = vpack.c.b16 %v1944, %v1943
    %v1952 = vpack.c.b16 %v1946, %v1945
    %v1953 = vpack.c.b16 %v1948, %v1947
    %v1954 = vpack.c.b16 %v1950, %v1949
    %vm1959 = vcmask 523264
    %v1961 = vsel %vm1959, %v1904, 0
    %v1964 = vsel %vm1959, %v1905, 0
    %v1967 = vsel %vm1959, %v1906, 0
    %v1970 = vsel %vm1959, %v1907, 0
    %v1973 = vsel %vm1959, %v1908, 0
    %v1976 = vsel %vm1959, %v1909, 0
    %v1979 = vsel %vm1959, %v1910, 0
    %v1982 = vsel %vm1959, %v1911, 0
    %v1985 = vsel %vm1959, %v1912, 0
    %v1988 = vsel %vm1959, %v1913, 0
    %v1991 = vsel %vm1959, %v1914, 0
    %v1994 = vsel %vm1959, %v1915, 0
    %v1997 = vsel %vm1959, %v1916, 0
    %v2000 = vsel %vm1959, %v1917, 0
    %v2003 = vsel %vm1959, %v1918, 0
    %v2006 = vsel %vm1959, %v1919, 0
    %2008 = vmatprep.subr.bf16.mxu0 0
    %2009 = vmatpush1.bf16.msra.mxu0 %v1951
    %2010 = vmatprep.subr.bf16.mxu0 0
    %2011 = vmatpush1.bf16.msra.mxu0 %v1952
    %2012 = vmatprep.subr.bf16.mxu0 0
    %2013 = vmatpush1.bf16.msra.mxu0 %v1953
    %2014 = vmatprep.subr.bf16.mxu0 0
    %2015 = vmatpush1.bf16.msra.mxu0 %v1954
    %2016 = vmatprep.subr.bf16.mxu0 0
    %2017 = vmatpush1.bf16.msra.mxu0 0
    %2018 = vmatprep.subr.bf16.mxu0 0
    %2019 = vmatpush1.bf16.msra.mxu0 0
    %2020 = vmatprep.subr.bf16.mxu0 0
    %2021 = vmatpush1.bf16.msra.mxu0 0
    %2022 = vmatprep.subr.bf16.mxu0 0
    %2023 = vmatpush1.bf16.msra.mxu0 0
    %2024 = vmatprep.subr.bf16.mxu0 0
    %2025 = vmatpush1.bf16.msra.mxu0 0
    %2026 = vmatprep.subr.bf16.mxu0 0
    %2027 = vmatpush1.bf16.msra.mxu0 0
    %2028 = vmatprep.subr.bf16.mxu0 0
    %2029 = vmatpush1.bf16.msra.mxu0 0
    %2030 = vmatprep.subr.bf16.mxu0 0
    %2031 = vmatpush1.bf16.msra.mxu0 0
    %2032 = vmatprep.subr.bf16.mxu0 0
    %2033 = vmatpush1.bf16.msra.mxu0 0
    %2034 = vmatprep.subr.bf16.mxu0 0
    %2035 = vmatpush1.bf16.msra.mxu0 0
    %2036 = vmatprep.subr.bf16.mxu0 0
    %2037 = vmatpush1.bf16.msra.mxu0 0
    %2038 = vmatprep.subr.bf16.mxu0 0
    %2039 = vmatpush1.bf16.msra.mxu0 0
    %2040 = vmatprep.mubr.bf16.mxu0 0
    %2041 = vmatmul.mubr.bf16.gmra.mrb[0].mxu0 %v1961
    %v2042 = vpop.f32.mrb[0].mxu0
    %v2043 = vadd.f32 %v1933, %v2042
    %v2044 = vpop.f32.mrb[0].mxu0
    %v2045 = vpop.f32.mrb[0].mxu0
    %v2046 = vadd.f32 %v1933, %v2045
    %v2047 = vpop.f32.mrb[0].mxu0
    %2048 = vmatprep.mubr.bf16.mxu0 0
    %2049 = vmatmul.mubr.bf16.gmra.mrb[0].mxu0 %v1964
    %v2050 = vpop.f32.mrb[0].mxu0
    %v2051 = vadd.f32 %v1933, %v2050
    %v2052 = vpop.f32.mrb[0].mxu0
    %v2053 = vpop.f32.mrb[0].mxu0
    %v2054 = vadd.f32 %v1933, %v2053
    %v2055 = vpop.f32.mrb[0].mxu0
    %2056 = vmatprep.mubr.bf16.mxu0 0
    %2057 = vmatmul.mubr.bf16.gmra.mrb[0].mxu0 %v1967
    %v2058 = vpop.f32.mrb[0].mxu0
    %v2059 = vadd.f32 %v1933, %v2058
    %v2060 = vpop.f32.mrb[0].mxu0
    %v2061 = vpop.f32.mrb[0].mxu0
    %v2062 = vadd.f32 %v1933, %v2061
    %v2063 = vpop.f32.mrb[0].mxu0
    %2064 = vmatprep.mubr.bf16.mxu0 0
    %2065 = vmatmul.mubr.bf16.gmra.mrb[0].mxu0 %v1970
    %v2066 = vpop.f32.mrb[0].mxu0
    %v2067 = vadd.f32 %v1933, %v2066
    %v2068 = vpop.f32.mrb[0].mxu0
    %v2069 = vpop.f32.mrb[0].mxu0
    %v2070 = vadd.f32 %v1933, %v2069
    %v2071 = vpop.f32.mrb[0].mxu0
    %2072 = vmatprep.mubr.bf16.mxu0 0
    %2073 = vmatmul.mubr.bf16.gmra.mrb[0].mxu0 %v1973
    %v2074 = vpop.f32.mrb[0].mxu0
    %v2075 = vadd.f32 %v1933, %v2074
    %v2076 = vpop.f32.mrb[0].mxu0
    %v2077 = vpop.f32.mrb[0].mxu0
    %v2078 = vadd.f32 %v1933, %v2077
    %v2079 = vpop.f32.mrb[0].mxu0
    %2080 = vmatprep.mubr.bf16.mxu0 0
    %2081 = vmatmul.mubr.bf16.gmra.mrb[0].mxu0 %v1976
    %v2082 = vpop.f32.mrb[0].mxu0
    %v2083 = vadd.f32 %v1933, %v2082
    %v2084 = vpop.f32.mrb[0].mxu0
    %v2085 = vpop.f32.mrb[0].mxu0
    %v2086 = vadd.f32 %v1933, %v2085
    %v2087 = vpop.f32.mrb[0].mxu0
    %2088 = vmatprep.mubr.bf16.mxu0 0
    %2089 = vmatmul.mubr.bf16.gmra.mrb[0].mxu0 %v1979
    %v2090 = vpop.f32.mrb[0].mxu0
    %v2091 = vadd.f32 %v1933, %v2090
    %v2092 = vpop.f32.mrb[0].mxu0
    %v2093 = vpop.f32.mrb[0].mxu0
    %v2094 = vadd.f32 %v1933, %v2093
    %v2095 = vpop.f32.mrb[0].mxu0
    %2096 = vmatprep.mubr.bf16.mxu0 0
    %2097 = vmatmul.mubr.bf16.gmra.mrb[0].mxu0 %v1982
    %v2098 = vpop.f32.mrb[0].mxu0
    %v2099 = vadd.f32 %v1933, %v2098
    %v2100 = vpop.f32.mrb[0].mxu0
    %v2101 = vpop.f32.mrb[0].mxu0
    %v2102 = vadd.f32 %v1933, %v2101
    %v2103 = vpop.f32.mrb[0].mxu0
    %2104 = vmatprep.mubr.bf16.mxu0 0
    %2105 = vmatmul.mubr.bf16.gmra.mrb[0].mxu0 %v1985
    %v2106 = vpop.f32.mrb[0].mxu0
    %v2107 = vadd.f32 %v1933, %v2106
    %v2108 = vpop.f32.mrb[0].mxu0
    %v2109 = vpop.f32.mrb[0].mxu0
    %v2110 = vadd.f32 %v1933, %v2109
    %v2111 = vpop.f32.mrb[0].mxu0
    %2112 = vmatprep.mubr.bf16.mxu0 0
    %2113 = vmatmul.mubr.bf16.gmra.mrb[0].mxu0 %v1988
    %v2114 = vpop.f32.mrb[0].mxu0
    %v2115 = vadd.f32 %v1933, %v2114
    %v2116 = vpop.f32.mrb[0].mxu0
    %v2117 = vpop.f32.mrb[0].mxu0
    %v2118 = vadd.f32 %v1933, %v2117
    %v2119 = vpop.f32.mrb[0].mxu0
    %2120 = vmatprep.mubr.bf16.mxu0 0
    %2121 = vmatmul.mubr.bf16.gmra.mrb[0].mxu0 %v1991
    %v2122 = vpop.f32.mrb[0].mxu0
    %v2123 = vadd.f32 %v1933, %v2122
    %v2124 = vpop.f32.mrb[0].mxu0
    %v2125 = vpop.f32.mrb[0].mxu0
    %v2126 = vadd.f32 %v1933, %v2125
    %v2127 = vpop.f32.mrb[0].mxu0
    %2128 = vmatprep.mubr.bf16.mxu0 0
    %2129 = vmatmul.mubr.bf16.gmra.mrb[0].mxu0 %v1994
    %v2130 = vpop.f32.mrb[0].mxu0
    %v2131 = vadd.f32 %v1933, %v2130
    %v2132 = vpop.f32.mrb[0].mxu0
    %v2133 = vpop.f32.mrb[0].mxu0
    %v2134 = vadd.f32 %v1933, %v2133
    %v2135 = vpop.f32.mrb[0].mxu0
    %2136 = vmatprep.mubr.bf16.mxu0 0
    %2137 = vmatmul.mubr.bf16.gmra.mrb[0].mxu0 %v1997
    %v2138 = vpop.f32.mrb[0].mxu0
    %v2139 = vadd.f32 %v1933, %v2138
    %v2140 = vpop.f32.mrb[0].mxu0
    %v2141 = vpop.f32.mrb[0].mxu0
    %v2142 = vadd.f32 %v1933, %v2141
    %v2143 = vpop.f32.mrb[0].mxu0
    %2144 = vmatprep.mubr.bf16.mxu0 0
    %2145 = vmatmul.mubr.bf16.gmra.mrb[0].mxu0 %v2000
    %v2146 = vpop.f32.mrb[0].mxu0
    %v2147 = vadd.f32 %v1933, %v2146
    %v2148 = vpop.f32.mrb[0].mxu0
    %v2149 = vpop.f32.mrb[0].mxu0
    %v2150 = vadd.f32 %v1933, %v2149
    %v2151 = vpop.f32.mrb[0].mxu0
    %2152 = vmatprep.mubr.bf16.mxu0 0
    %2153 = vmatmul.mubr.bf16.gmra.mrb[0].mxu0 %v2003
    %v2154 = vpop.f32.mrb[0].mxu0
    %v2155 = vadd.f32 %v1933, %v2154
    %v2156 = vpop.f32.mrb[0].mxu0
    %v2157 = vpop.f32.mrb[0].mxu0
    %v2158 = vadd.f32 %v1933, %v2157
    %v2159 = vpop.f32.mrb[0].mxu0
    %2160 = vmatprep.mubr.bf16.mxu0 0
    %2161 = vmatmul.mubr.bf16.gmra.mrb[0].mxu0 %v2006
    %v2162 = vpop.f32.mrb[0].mxu0
    %v2163 = vadd.f32 %v1933, %v2162
    %v2164 = vpop.f32.mrb[0].mxu0
    %v2165 = vpop.f32.mrb[0].mxu0
    %v2166 = vadd.f32 %v1933, %v2165
    %v2167 = vpop.f32.mrb[0].mxu0
    %2168 = vdwg.mxu0
    %v2169 = vmax.f32 %v2043, 0.0
    %v2170 = vmax.f32 %v2046, 0.0
    %v2171 = vmax.f32 %v2051, 0.0
    %v2172 = vmax.f32 %v2054, 0.0
    %v2173 = vmax.f32 %v2059, 0.0
    %v2174 = vmax.f32 %v2062, 0.0
    %v2175 = vmax.f32 %v2067, 0.0
    %v2176 = vmax.f32 %v2070, 0.0
    %v2177 = vmax.f32 %v2075, 0.0
    %v2178 = vmax.f32 %v2078, 0.0
    %v2179 = vmax.f32 %v2083, 0.0
    %v2180 = vmax.f32 %v2086, 0.0
    %v2181 = vmax.f32 %v2091, 0.0
    %v2182 = vmax.f32 %v2094, 0.0
    %v2183 = vmax.f32 %v2099, 0.0
    %v2184 = vmax.f32 %v2102, 0.0
    %v2185 = vmax.f32 %v2107, 0.0
    %v2186 = vmax.f32 %v2110, 0.0
    %v2187 = vmax.f32 %v2115, 0.0
    %v2188 = vmax.f32 %v2118, 0.0
    %v2189 = vmax.f32 %v2123, 0.0
    %v2190 = vmax.f32 %v2126, 0.0
    %v2191 = vmax.f32 %v2131, 0.0
    %v2192 = vmax.f32 %v2134, 0.0
    %v2193 = vmax.f32 %v2139, 0.0
    %v2194 = vmax.f32 %v2142, 0.0
    %v2195 = vmax.f32 %v2147, 0.0
    %v2196 = vmax.f32 %v2150, 0.0
    %v2197 = vmax.f32 %v2155, 0.0
    %v2198 = vmax.f32 %v2158, 0.0
    %v2199 = vmax.f32 %v2163, 0.0
    %v2200 = vmax.f32 %v2166, 0.0
    %v2201 = vpack.c.bf16 %v2170, %v2169
    %v2202 = vpack.c.bf16 %v2172, %v2171
    %v2203 = vpack.c.bf16 %v2174, %v2173
    %v2204 = vpack.c.bf16 %v2176, %v2175
    %v2205 = vpack.c.bf16 %v2178, %v2177
    %v2206 = vpack.c.bf16 %v2180, %v2179
    %v2207 = vpack.c.bf16 %v2182, %v2181
    %v2208 = vpack.c.bf16 %v2184, %v2183
    %v2209 = vpack.c.bf16 %v2186, %v2185
    %v2210 = vpack.c.bf16 %v2188, %v2187
    %v2211 = vpack.c.bf16 %v2190, %v2189
    %v2212 = vpack.c.bf16 %v2192, %v2191
    %v2213 = vpack.c.bf16 %v2194, %v2193
    %v2214 = vpack.c.bf16 %v2196, %v2195
    %v2215 = vpack.c.bf16 %v2198, %v2197
    %v2216 = vpack.c.bf16 %v2200, %v2199
    %v2217 = vld [vmem:[%s5] sm:$0xf]
    %v2218 = vld [vmem:[%s5 + $0x4] sm:$0xf]
    %v2219 = vld [vmem:[%s5 + $0x8] sm:$0xf]
    %v2220 = vld [vmem:[%s5 + $0xc] sm:$0xf]
    %v2221 = vld [vmem:[%s5 + $0x10] sm:$0xf]
    %v2222 = vld [vmem:[%s5 + $0x14] sm:$0xf]
    %v2223 = vld [vmem:[%s5 + $0x18] sm:$0xf]
    %v2224 = vld [vmem:[%s5 + $0x1c] sm:$0xf]
    %v2233 = vunpack.c.l.b16 %v2217
    %v2234 = vunpack.c.l.b16 %v2218
    %v2235 = vunpack.c.l.b16 %v2219
    %v2236 = vunpack.c.l.b16 %v2220
    %v2237 = vunpack.c.l.b16 %v2221
    %v2238 = vunpack.c.l.b16 %v2222
    %v2239 = vunpack.c.l.b16 %v2223
    %v2240 = vunpack.c.l.b16 %v2224
    %v2241 = vpack.c.b16 %v2234, %v2233
    %v2242 = vpack.c.b16 %v2236, %v2235
    %v2243 = vpack.c.b16 %v2238, %v2237
    %v2244 = vpack.c.b16 %v2240, %v2239
    %v2250 = vsel %vm1959, %v2201, 0
    %v2253 = vsel %vm1959, %v2202, 0
    %v2256 = vsel %vm1959, %v2203, 0
    %v2259 = vsel %vm1959, %v2204, 0
    %v2262 = vsel %vm1959, %v2205, 0
    %v2265 = vsel %vm1959, %v2206, 0
    %v2268 = vsel %vm1959, %v2207, 0
    %v2271 = vsel %vm1959, %v2208, 0
    %v2274 = vsel %vm1959, %v2209, 0
    %v2277 = vsel %vm1959, %v2210, 0
    %v2280 = vsel %vm1959, %v2211, 0
    %v2283 = vsel %vm1959, %v2212, 0
    %v2286 = vsel %vm1959, %v2213, 0
    %v2289 = vsel %vm1959, %v2214, 0
    %v2292 = vsel %vm1959, %v2215, 0
    %v2295 = vsel %vm1959, %v2216, 0
    %2297 = vmatprep.subr.bf16.mxu0 0
    %2298 = vmatpush1.bf16.msra.mxu0 %v2241
    %2299 = vmatprep.subr.bf16.mxu0 0
    %2300 = vmatpush1.bf16.msra.mxu0 %v2242
    %2301 = vmatprep.subr.bf16.mxu0 0
    %2302 = vmatpush1.bf16.msra.mxu0 %v2243
    %2303 = vmatprep.subr.bf16.mxu0 0
    %2304 = vmatpush1.bf16.msra.mxu0 %v2244
    %2305 = vmatprep.subr.bf16.mxu0 0
    %2306 = vmatpush1.bf16.msra.mxu0 0
    %2307 = vmatprep.subr.bf16.mxu0 0
    %2308 = vmatpush1.bf16.msra.mxu0 0
    %2309 = vmatprep.subr.bf16.mxu0 0
    %2310 = vmatpush1.bf16.msra.mxu0 0
    %2311 = vmatprep.subr.bf16.mxu0 0
    %2312 = vmatpush1.bf16.msra.mxu0 0
    %2313 = vmatprep.subr.bf16.mxu0 0
    %2314 = vmatpush1.bf16.msra.mxu0 0
    %2315 = vmatprep.subr.bf16.mxu0 0
    %2316 = vmatpush1.bf16.msra.mxu0 0
    %2317 = vmatprep.subr.bf16.mxu0 0
    %2318 = vmatpush1.bf16.msra.mxu0 0
    %2319 = vmatprep.subr.bf16.mxu0 0
    %2320 = vmatpush1.bf16.msra.mxu0 0
    %2321 = vmatprep.subr.bf16.mxu0 0
    %2322 = vmatpush1.bf16.msra.mxu0 0
    %2323 = vmatprep.subr.bf16.mxu0 0
    %2324 = vmatpush1.bf16.msra.mxu0 0
    %2325 = vmatprep.subr.bf16.mxu0 0
    %2326 = vmatpush1.bf16.msra.mxu0 0
    %2327 = vmatprep.subr.bf16.mxu0 0
    %2328 = vmatpush1.bf16.msra.mxu0 0
    %2329 = vmatprep.mubr.bf16.mxu0 0
    %2330 = vmatmul.mubr.bf16.gmra.mrb[0].mxu0 %v2250
    %v2331 = vpop.f32.mrb[0].mxu0
    %v2332 = vadd.f32 0.0, %v2331
    %v2333 = vpop.f32.mrb[0].mxu0
    %v2334 = vpop.f32.mrb[0].mxu0
    %v2335 = vadd.f32 0.0, %v2334
    %v2336 = vpop.f32.mrb[0].mxu0
    %2337 = vmatprep.mubr.bf16.mxu0 0
    %2338 = vmatmul.mubr.bf16.gmra.mrb[0].mxu0 %v2253
    %v2339 = vpop.f32.mrb[0].mxu0
    %v2340 = vadd.f32 0.0, %v2339
    %v2341 = vpop.f32.mrb[0].mxu0
    %v2342 = vpop.f32.mrb[0].mxu0
    %v2343 = vadd.f32 0.0, %v2342
    %v2344 = vpop.f32.mrb[0].mxu0
    %2345 = vmatprep.mubr.bf16.mxu0 0
    %2346 = vmatmul.mubr.bf16.gmra.mrb[0].mxu0 %v2256
    %v2347 = vpop.f32.mrb[0].mxu0
    %v2348 = vadd.f32 0.0, %v2347
    %v2349 = vpop.f32.mrb[0].mxu0
    %v2350 = vpop.f32.mrb[0].mxu0
    %v2351 = vadd.f32 0.0, %v2350
    %v2352 = vpop.f32.mrb[0].mxu0
    %2353 = vmatprep.mubr.bf16.mxu0 0
    %2354 = vmatmul.mubr.bf16.gmra.mrb[0].mxu0 %v2259
    %v2355 = vpop.f32.mrb[0].mxu0
    %v2356 = vadd.f32 0.0, %v2355
    %v2357 = vpop.f32.mrb[0].mxu0
    %v2358 = vpop.f32.mrb[0].mxu0
    %v2359 = vadd.f32 0.0, %v2358
    %v2360 = vpop.f32.mrb[0].mxu0
    %2361 = vmatprep.mubr.bf16.mxu0 0
    %2362 = vmatmul.mubr.bf16.gmra.mrb[0].mxu0 %v2262
    %v2363 = vpop.f32.mrb[0].mxu0
    %v2364 = vadd.f32 0.0, %v2363
    %v2365 = vpop.f32.mrb[0].mxu0
    %v2366 = vpop.f32.mrb[0].mxu0
    %v2367 = vadd.f32 0.0, %v2366
    %v2368 = vpop.f32.mrb[0].mxu0
    %2369 = vmatprep.mubr.bf16.mxu0 0
    %2370 = vmatmul.mubr.bf16.gmra.mrb[0].mxu0 %v2265
    %v2371 = vpop.f32.mrb[0].mxu0
    %v2372 = vadd.f32 0.0, %v2371
    %v2373 = vpop.f32.mrb[0].mxu0
    %v2374 = vpop.f32.mrb[0].mxu0
    %v2375 = vadd.f32 0.0, %v2374
    %v2376 = vpop.f32.mrb[0].mxu0
    %2377 = vmatprep.mubr.bf16.mxu0 0
    %2378 = vmatmul.mubr.bf16.gmra.mrb[0].mxu0 %v2268
    %v2379 = vpop.f32.mrb[0].mxu0
    %v2380 = vadd.f32 0.0, %v2379
    %v2381 = vpop.f32.mrb[0].mxu0
    %v2382 = vpop.f32.mrb[0].mxu0
    %v2383 = vadd.f32 0.0, %v2382
    %v2384 = vpop.f32.mrb[0].mxu0
    %2385 = vmatprep.mubr.bf16.mxu0 0
    %2386 = vmatmul.mubr.bf16.gmra.mrb[0].mxu0 %v2271
    %v2387 = vpop.f32.mrb[0].mxu0
    %v2388 = vadd.f32 0.0, %v2387
    %v2389 = vpop.f32.mrb[0].mxu0
    %v2390 = vpop.f32.mrb[0].mxu0
    %v2391 = vadd.f32 0.0, %v2390
    %v2392 = vpop.f32.mrb[0].mxu0
    %2393 = vmatprep.mubr.bf16.mxu0 0
    %2394 = vmatmul.mubr.bf16.gmra.mrb[0].mxu0 %v2274
    %v2395 = vpop.f32.mrb[0].mxu0
    %v2396 = vadd.f32 0.0, %v2395
    %v2397 = vpop.f32.mrb[0].mxu0
    %v2398 = vpop.f32.mrb[0].mxu0
    %v2399 = vadd.f32 0.0, %v2398
    %v2400 = vpop.f32.mrb[0].mxu0
    %2401 = vmatprep.mubr.bf16.mxu0 0
    %2402 = vmatmul.mubr.bf16.gmra.mrb[0].mxu0 %v2277
    %v2403 = vpop.f32.mrb[0].mxu0
    %v2404 = vadd.f32 0.0, %v2403
    %v2405 = vpop.f32.mrb[0].mxu0
    %v2406 = vpop.f32.mrb[0].mxu0
    %v2407 = vadd.f32 0.0, %v2406
    %v2408 = vpop.f32.mrb[0].mxu0
    %2409 = vmatprep.mubr.bf16.mxu0 0
    %2410 = vmatmul.mubr.bf16.gmra.mrb[0].mxu0 %v2280
    %v2411 = vpop.f32.mrb[0].mxu0
    %v2412 = vadd.f32 0.0, %v2411
    %v2413 = vpop.f32.mrb[0].mxu0
    %v2414 = vpop.f32.mrb[0].mxu0
    %v2415 = vadd.f32 0.0, %v2414
    %v2416 = vpop.f32.mrb[0].mxu0
    %2417 = vmatprep.mubr.bf16.mxu0 0
    %2418 = vmatmul.mubr.bf16.gmra.mrb[0].mxu0 %v2283
    %v2419 = vpop.f32.mrb[0].mxu0
    %v2420 = vadd.f32 0.0, %v2419
    %v2421 = vpop.f32.mrb[0].mxu0
    %v2422 = vpop.f32.mrb[0].mxu0
    %v2423 = vadd.f32 0.0, %v2422
    %v2424 = vpop.f32.mrb[0].mxu0
    %2425 = vmatprep.mubr.bf16.mxu0 0
    %2426 = vmatmul.mubr.bf16.gmra.mrb[0].mxu0 %v2286
    %v2427 = vpop.f32.mrb[0].mxu0
    %v2428 = vadd.f32 0.0, %v2427
    %v2429 = vpop.f32.mrb[0].mxu0
    %v2430 = vpop.f32.mrb[0].mxu0
    %v2431 = vadd.f32 0.0, %v2430
    %v2432 = vpop.f32.mrb[0].mxu0
    %2433 = vmatprep.mubr.bf16.mxu0 0
    %2434 = vmatmul.mubr.bf16.gmra.mrb[0].mxu0 %v2289
    %v2435 = vpop.f32.mrb[0].mxu0
    %v2436 = vadd.f32 0.0, %v2435
    %v2437 = vpop.f32.mrb[0].mxu0
    %v2438 = vpop.f32.mrb[0].mxu0
    %v2439 = vadd.f32 0.0, %v2438
    %v2440 = vpop.f32.mrb[0].mxu0
    %2441 = vmatprep.mubr.bf16.mxu0 0
    %2442 = vmatmul.mubr.bf16.gmra.mrb[0].mxu0 %v2292
    %v2443 = vpop.f32.mrb[0].mxu0
    %v2444 = vadd.f32 0.0, %v2443
    %v2445 = vpop.f32.mrb[0].mxu0
    %v2446 = vpop.f32.mrb[0].mxu0
    %v2447 = vadd.f32 0.0, %v2446
    %v2448 = vpop.f32.mrb[0].mxu0
    %2449 = vmatprep.mubr.bf16.mxu0 0
    %2450 = vmatmul.mubr.bf16.gmra.mrb[0].mxu0 %v2295
    %v2451 = vpop.f32.mrb[0].mxu0
    %v2452 = vadd.f32 0.0, %v2451
    %v2453 = vpop.f32.mrb[0].mxu0
    %v2454 = vpop.f32.mrb[0].mxu0
    %v2455 = vadd.f32 0.0, %v2454
    %v2456 = vpop.f32.mrb[0].mxu0
    %2457 = vdwg.mxu0
    %v2458 = vlaneseq
    %v2459 = vand.u32 %v2458, 127
    %vm2460 = vcmask 48128
    %v2461 = vsel %vm2460, %v2332, -inf
    %2462 = vmax.xlane.f32.xlu0 %v2461
    %v2463 = vpop.xlane.xlu0 %2462
    %v2464 = vsel %vm2460, %v2335, -inf
    %2465 = vmax.xlane.f32.xlu0 %v2464
    %v2466 = vpop.xlane.xlu0 %2465
    %v2467 = vsel %vm2460, %v2340, -inf
    %2468 = vmax.xlane.f32.xlu0 %v2467
    %v2469 = vpop.xlane.xlu0 %2468
    %v2470 = vsel %vm2460, %v2343, -inf
    %2471 = vmax.xlane.f32.xlu0 %v2470
    %v2472 = vpop.xlane.xlu0 %2471
    %v2473 = vsel %vm2460, %v2348, -inf
    %2474 = vmax.xlane.f32.xlu0 %v2473
    %v2475 = vpop.xlane.xlu0 %2474
    %v2476 = vsel %vm2460, %v2351, -inf
    %2477 = vmax.xlane.f32.xlu0 %v2476
    %v2478 = vpop.xlane.xlu0 %2477
    %v2479 = vsel %vm2460, %v2356, -inf
    %2480 = vmax.xlane.f32.xlu0 %v2479
    %v2481 = vpop.xlane.xlu0 %2480
    %v2482 = vsel %vm2460, %v2359, -inf
    %2483 = vmax.xlane.f32.xlu0 %v2482
    %v2484 = vpop.xlane.xlu0 %2483
    %v2485 = vsel %vm2460, %v2364, -inf
    %2486 = vmax.xlane.f32.xlu0 %v2485
    %v2487 = vpop.xlane.xlu0 %2486
    %v2488 = vsel %vm2460, %v2367, -inf
    %2489 = vmax.xlane.f32.xlu0 %v2488
    %v2490 = vpop.xlane.xlu0 %2489
    %v2491 = vsel %vm2460, %v2372, -inf
    %2492 = vmax.xlane.f32.xlu0 %v2491
    %v2493 = vpop.xlane.xlu0 %2492
    %v2494 = vsel %vm2460, %v2375, -inf
    %2495 = vmax.xlane.f32.xlu0 %v2494
    %v2496 = vpop.xlane.xlu0 %2495
    %v2497 = vsel %vm2460, %v2380, -inf
    %2498 = vmax.xlane.f32.xlu0 %v2497
    %v2499 = vpop.xlane.xlu0 %2498
    %v2500 = vsel %vm2460, %v2383, -inf
    %2501 = vmax.xlane.f32.xlu0 %v2500
    %v2502 = vpop.xlane.xlu0 %2501
    %v2503 = vsel %vm2460, %v2388, -inf
    %2504 = vmax.xlane.f32.xlu0 %v2503
    %v2505 = vpop.xlane.xlu0 %2504
    %v2506 = vsel %vm2460, %v2391, -inf
    %2507 = vmax.xlane.f32.xlu0 %v2506
    %v2508 = vpop.xlane.xlu0 %2507
    %v2509 = vsel %vm2460, %v2396, -inf
    %2510 = vmax.xlane.f32.xlu0 %v2509
    %v2511 = vpop.xlane.xlu0 %2510
    %v2512 = vsel %vm2460, %v2399, -inf
    %2513 = vmax.xlane.f32.xlu0 %v2512
    %v2514 = vpop.xlane.xlu0 %2513
    %v2515 = vsel %vm2460, %v2404, -inf
    %2516 = vmax.xlane.f32.xlu0 %v2515
    %v2517 = vpop.xlane.xlu0 %2516
    %v2518 = vsel %vm2460, %v2407, -inf
    %2519 = vmax.xlane.f32.xlu0 %v2518
    %v2520 = vpop.xlane.xlu0 %2519
    %v2521 = vsel %vm2460, %v2412, -inf
    %2522 = vmax.xlane.f32.xlu0 %v2521
    %v2523 = vpop.xlane.xlu0 %2522
    %v2524 = vsel %vm2460, %v2415, -inf
    %2525 = vmax.xlane.f32.xlu0 %v2524
    %v2526 = vpop.xlane.xlu0 %2525
    %v2527 = vsel %vm2460, %v2420, -inf
    %2528 = vmax.xlane.f32.xlu0 %v2527
    %v2529 = vpop.xlane.xlu0 %2528
    %v2530 = vsel %vm2460, %v2423, -inf
    %2531 = vmax.xlane.f32.xlu0 %v2530
    %v2532 = vpop.xlane.xlu0 %2531
    %v2533 = vsel %vm2460, %v2428, -inf
    %2534 = vmax.xlane.f32.xlu0 %v2533
    %v2535 = vpop.xlane.xlu0 %2534
    %v2536 = vsel %vm2460, %v2431, -inf
    %2537 = vmax.xlane.f32.xlu0 %v2536
    %v2538 = vpop.xlane.xlu0 %2537
    %v2539 = vsel %vm2460, %v2436, -inf
    %2540 = vmax.xlane.f32.xlu0 %v2539
    %v2541 = vpop.xlane.xlu0 %2540
    %v2542 = vsel %vm2460, %v2439, -inf
    %2543 = vmax.xlane.f32.xlu0 %v2542
    %v2544 = vpop.xlane.xlu0 %2543
    %v2545 = vsel %vm2460, %v2444, -inf
    %2546 = vmax.xlane.f32.xlu0 %v2545
    %v2547 = vpop.xlane.xlu0 %2546
    %v2548 = vsel %vm2460, %v2447, -inf
    %2549 = vmax.xlane.f32.xlu0 %v2548
    %v2550 = vpop.xlane.xlu0 %2549
    %v2551 = vsel %vm2460, %v2452, -inf
    %2552 = vmax.xlane.f32.xlu0 %v2551
    %v2553 = vpop.xlane.xlu0 %2552
    %v2554 = vsel %vm2460, %v2455, -inf
    %2555 = vmax.xlane.f32.xlu0 %v2554
    %v2556 = vpop.xlane.xlu0 %2555
    %vm2557 = vcmp.eq.f32.partialorder %v2332, %v2463
    %vm2558 = vcmp.eq.f32.partialorder %v2335, %v2466
    %vm2559 = vcmp.eq.f32.partialorder %v2340, %v2469
    %vm2560 = vcmp.eq.f32.partialorder %v2343, %v2472
    %vm2561 = vcmp.eq.f32.partialorder %v2348, %v2475
    %vm2562 = vcmp.eq.f32.partialorder %v2351, %v2478
    %vm2563 = vcmp.eq.f32.partialorder %v2356, %v2481
    %vm2564 = vcmp.eq.f32.partialorder %v2359, %v2484
    %vm2565 = vcmp.eq.f32.partialorder %v2364, %v2487
    %vm2566 = vcmp.eq.f32.partialorder %v2367, %v2490
    %vm2567 = vcmp.eq.f32.partialorder %v2372, %v2493
    %vm2568 = vcmp.eq.f32.partialorder %v2375, %v2496
    %vm2569 = vcmp.eq.f32.partialorder %v2380, %v2499
    %vm2570 = vcmp.eq.f32.partialorder %v2383, %v2502
    %vm2571 = vcmp.eq.f32.partialorder %v2388, %v2505
    %vm2572 = vcmp.eq.f32.partialorder %v2391, %v2508
    %vm2573 = vcmp.eq.f32.partialorder %v2396, %v2511
    %vm2574 = vcmp.eq.f32.partialorder %v2399, %v2514
    %vm2575 = vcmp.eq.f32.partialorder %v2404, %v2517
    %vm2576 = vcmp.eq.f32.partialorder %v2407, %v2520
    %vm2577 = vcmp.eq.f32.partialorder %v2412, %v2523
    %vm2578 = vcmp.eq.f32.partialorder %v2415, %v2526
    %vm2579 = vcmp.eq.f32.partialorder %v2420, %v2529
    %vm2580 = vcmp.eq.f32.partialorder %v2423, %v2532
    %vm2581 = vcmp.eq.f32.partialorder %v2428, %v2535
    %vm2582 = vcmp.eq.f32.partialorder %v2431, %v2538
    %vm2583 = vcmp.eq.f32.partialorder %v2436, %v2541
    %vm2584 = vcmp.eq.f32.partialorder %v2439, %v2544
    %vm2585 = vcmp.eq.f32.partialorder %v2444, %v2547
    %vm2586 = vcmp.eq.f32.partialorder %v2447, %v2550
    %vm2587 = vcmp.eq.f32.partialorder %v2452, %v2553
    %vm2588 = vcmp.eq.f32.partialorder %v2455, %v2556
    %v2589 = vsel %vm2557, %v2459, 6
    %v2590 = vsel %vm2558, %v2459, 6
    %v2591 = vsel %vm2559, %v2459, 6
    %v2592 = vsel %vm2560, %v2459, 6
    %v2593 = vsel %vm2561, %v2459, 6
    %v2594 = vsel %vm2562, %v2459, 6
    %v2595 = vsel %vm2563, %v2459, 6
    %v2596 = vsel %vm2564, %v2459, 6
    %v2597 = vsel %vm2565, %v2459, 6
    %v2598 = vsel %vm2566, %v2459, 6
    %v2599 = vsel %vm2567, %v2459, 6
    %v2600 = vsel %vm2568, %v2459, 6
    %v2601 = vsel %vm2569, %v2459, 6
    %v2602 = vsel %vm2570, %v2459, 6
    %v2603 = vsel %vm2571, %v2459, 6
    %v2604 = vsel %vm2572, %v2459, 6
    %v2605 = vsel %vm2573, %v2459, 6
    %v2606 = vsel %vm2574, %v2459, 6
    %v2607 = vsel %vm2575, %v2459, 6
    %v2608 = vsel %vm2576, %v2459, 6
    %v2609 = vsel %vm2577, %v2459, 6
    %v2610 = vsel %vm2578, %v2459, 6
    %v2611 = vsel %vm2579, %v2459, 6
    %v2612 = vsel %vm2580, %v2459, 6
    %v2613 = vsel %vm2581, %v2459, 6
    %v2614 = vsel %vm2582, %v2459, 6
    %v2615 = vsel %vm2583, %v2459, 6
    %v2616 = vsel %vm2584, %v2459, 6
    %v2617 = vsel %vm2585, %v2459, 6
    %v2618 = vsel %vm2586, %v2459, 6
    %v2619 = vsel %vm2587, %v2459, 6
    %v2620 = vsel %vm2588, %v2459, 6
    %v2621 = vsel %vm2460, %v2589, 2147483647
    %v2622 = vand.u32 %v2621, 65535
    %v2623 = vshra.s32 %v2621, 16
    %v2624 = vcvt.s32.f32 %v2622
    %v2625 = vcvt.s32.f32 %v2623
    %2626 = vmin.xlane.f32.xlu0 %v2625
    %v2627 = vpop.xlane.xlu0 %2626
    %vm2628 = vcmp.eq.f32.partialorder %v2625, %v2627
    %v2629 = vsel %vm2628, %v2624, inf
    %2630 = vmin.xlane.f32.xlu0 %v2629
    %v2631 = vpop.xlane.xlu0 %2630
    %v2632 = vcvt.f32.s32 %v2631
    %v2633 = vcvt.f32.s32 %v2627
    %v2634 = vshll.u32 %v2633, 16
    %v2635 = vadd.s32 %v2634, %v2632
    %v2636 = vsel %vm2460, %v2590, 2147483647
    %v2637 = vand.u32 %v2636, 65535
    %v2638 = vshra.s32 %v2636, 16
    %v2639 = vcvt.s32.f32 %v2637
    %v2640 = vcvt.s32.f32 %v2638
    %2641 = vmin.xlane.f32.xlu0 %v2640
    %v2642 = vpop.xlane.xlu0 %2641
    %vm2643 = vcmp.eq.f32.partialorder %v2640, %v2642
    %v2644 = vsel %vm2643, %v2639, inf
    %2645 = vmin.xlane.f32.xlu0 %v2644
    %v2646 = vpop.xlane.xlu0 %2645
    %v2647 = vcvt.f32.s32 %v2646
    %v2648 = vcvt.f32.s32 %v2642
    %v2649 = vshll.u32 %v2648, 16
    %v2650 = vadd.s32 %v2649, %v2647
    %v2651 = vsel %vm2460, %v2591, 2147483647
    %v2652 = vand.u32 %v2651, 65535
    %v2653 = vshra.s32 %v2651, 16
    %v2654 = vcvt.s32.f32 %v2652
    %v2655 = vcvt.s32.f32 %v2653
    %2656 = vmin.xlane.f32.xlu0 %v2655
    %v2657 = vpop.xlane.xlu0 %2656
    %vm2658 = vcmp.eq.f32.partialorder %v2655, %v2657
    %v2659 = vsel %vm2658, %v2654, inf
    %2660 = vmin.xlane.f32.xlu0 %v2659
    %v2661 = vpop.xlane.xlu0 %2660
    %v2662 = vcvt.f32.s32 %v2661
    %v2663 = vcvt.f32.s32 %v2657
    %v2664 = vshll.u32 %v2663, 16
    %v2665 = vadd.s32 %v2664, %v2662
    %v2666 = vsel %vm2460, %v2592, 2147483647
    %v2667 = vand.u32 %v2666, 65535
    %v2668 = vshra.s32 %v2666, 16
    %v2669 = vcvt.s32.f32 %v2667
    %v2670 = vcvt.s32.f32 %v2668
    %2671 = vmin.xlane.f32.xlu0 %v2670
    %v2672 = vpop.xlane.xlu0 %2671
    %vm2673 = vcmp.eq.f32.partialorder %v2670, %v2672
    %v2674 = vsel %vm2673, %v2669, inf
    %2675 = vmin.xlane.f32.xlu0 %v2674
    %v2676 = vpop.xlane.xlu0 %2675
    %v2677 = vcvt.f32.s32 %v2676
    %v2678 = vcvt.f32.s32 %v2672
    %v2679 = vshll.u32 %v2678, 16
    %v2680 = vadd.s32 %v2679, %v2677
    %v2681 = vsel %vm2460, %v2593, 2147483647
    %v2682 = vand.u32 %v2681, 65535
    %v2683 = vshra.s32 %v2681, 16
    %v2684 = vcvt.s32.f32 %v2682
    %v2685 = vcvt.s32.f32 %v2683
    %2686 = vmin.xlane.f32.xlu0 %v2685
    %v2687 = vpop.xlane.xlu0 %2686
    %vm2688 = vcmp.eq.f32.partialorder %v2685, %v2687
    %v2689 = vsel %vm2688, %v2684, inf
    %2690 = vmin.xlane.f32.xlu0 %v2689
    %v2691 = vpop.xlane.xlu0 %2690
    %v2692 = vcvt.f32.s32 %v2691
    %v2693 = vcvt.f32.s32 %v2687
    %v2694 = vshll.u32 %v2693, 16
    %v2695 = vadd.s32 %v2694, %v2692
    %v2696 = vsel %vm2460, %v2594, 2147483647
    %v2697 = vand.u32 %v2696, 65535
    %v2698 = vshra.s32 %v2696, 16
    %v2699 = vcvt.s32.f32 %v2697
    %v2700 = vcvt.s32.f32 %v2698
    %2701 = vmin.xlane.f32.xlu0 %v2700
    %v2702 = vpop.xlane.xlu0 %2701
    %vm2703 = vcmp.eq.f32.partialorder %v2700, %v2702
    %v2704 = vsel %vm2703, %v2699, inf
    %2705 = vmin.xlane.f32.xlu0 %v2704
    %v2706 = vpop.xlane.xlu0 %2705
    %v2707 = vcvt.f32.s32 %v2706
    %v2708 = vcvt.f32.s32 %v2702
    %v2709 = vshll.u32 %v2708, 16
    %v2710 = vadd.s32 %v2709, %v2707
    %v2711 = vsel %vm2460, %v2595, 2147483647
    %v2712 = vand.u32 %v2711, 65535
    %v2713 = vshra.s32 %v2711, 16
    %v2714 = vcvt.s32.f32 %v2712
    %v2715 = vcvt.s32.f32 %v2713
    %2716 = vmin.xlane.f32.xlu0 %v2715
    %v2717 = vpop.xlane.xlu0 %2716
    %vm2718 = vcmp.eq.f32.partialorder %v2715, %v2717
    %v2719 = vsel %vm2718, %v2714, inf
    %2720 = vmin.xlane.f32.xlu0 %v2719
    %v2721 = vpop.xlane.xlu0 %2720
    %v2722 = vcvt.f32.s32 %v2721
    %v2723 = vcvt.f32.s32 %v2717
    %v2724 = vshll.u32 %v2723, 16
    %v2725 = vadd.s32 %v2724, %v2722
    %v2726 = vsel %vm2460, %v2596, 2147483647
    %v2727 = vand.u32 %v2726, 65535
    %v2728 = vshra.s32 %v2726, 16
    %v2729 = vcvt.s32.f32 %v2727
    %v2730 = vcvt.s32.f32 %v2728
    %2731 = vmin.xlane.f32.xlu0 %v2730
    %v2732 = vpop.xlane.xlu0 %2731
    %vm2733 = vcmp.eq.f32.partialorder %v2730, %v2732
    %v2734 = vsel %vm2733, %v2729, inf
    %2735 = vmin.xlane.f32.xlu0 %v2734
    %v2736 = vpop.xlane.xlu0 %2735
    %v2737 = vcvt.f32.s32 %v2736
    %v2738 = vcvt.f32.s32 %v2732
    %v2739 = vshll.u32 %v2738, 16
    %v2740 = vadd.s32 %v2739, %v2737
    %v2741 = vsel %vm2460, %v2597, 2147483647
    %v2742 = vand.u32 %v2741, 65535
    %v2743 = vshra.s32 %v2741, 16
    %v2744 = vcvt.s32.f32 %v2742
    %v2745 = vcvt.s32.f32 %v2743
    %2746 = vmin.xlane.f32.xlu0 %v2745
    %v2747 = vpop.xlane.xlu0 %2746
    %vm2748 = vcmp.eq.f32.partialorder %v2745, %v2747
    %v2749 = vsel %vm2748, %v2744, inf
    %2750 = vmin.xlane.f32.xlu0 %v2749
    %v2751 = vpop.xlane.xlu0 %2750
    %v2752 = vcvt.f32.s32 %v2751
    %v2753 = vcvt.f32.s32 %v2747
    %v2754 = vshll.u32 %v2753, 16
    %v2755 = vadd.s32 %v2754, %v2752
    %v2756 = vsel %vm2460, %v2598, 2147483647
    %v2757 = vand.u32 %v2756, 65535
    %v2758 = vshra.s32 %v2756, 16
    %v2759 = vcvt.s32.f32 %v2757
    %v2760 = vcvt.s32.f32 %v2758
    %2761 = vmin.xlane.f32.xlu0 %v2760
    %v2762 = vpop.xlane.xlu0 %2761
    %vm2763 = vcmp.eq.f32.partialorder %v2760, %v2762
    %v2764 = vsel %vm2763, %v2759, inf
    %2765 = vmin.xlane.f32.xlu0 %v2764
    %v2766 = vpop.xlane.xlu0 %2765
    %v2767 = vcvt.f32.s32 %v2766
    %v2768 = vcvt.f32.s32 %v2762
    %v2769 = vshll.u32 %v2768, 16
    %v2770 = vadd.s32 %v2769, %v2767
    %v2771 = vsel %vm2460, %v2599, 2147483647
    %v2772 = vand.u32 %v2771, 65535
    %v2773 = vshra.s32 %v2771, 16
    %v2774 = vcvt.s32.f32 %v2772
    %v2775 = vcvt.s32.f32 %v2773
    %2776 = vmin.xlane.f32.xlu0 %v2775
    %v2777 = vpop.xlane.xlu0 %2776
    %vm2778 = vcmp.eq.f32.partialorder %v2775, %v2777
    %v2779 = vsel %vm2778, %v2774, inf
    %2780 = vmin.xlane.f32.xlu0 %v2779
    %v2781 = vpop.xlane.xlu0 %2780
    %v2782 = vcvt.f32.s32 %v2781
    %v2783 = vcvt.f32.s32 %v2777
    %v2784 = vshll.u32 %v2783, 16
    %v2785 = vadd.s32 %v2784, %v2782
    %v2786 = vsel %vm2460, %v2600, 2147483647
    %v2787 = vand.u32 %v2786, 65535
    %v2788 = vshra.s32 %v2786, 16
    %v2789 = vcvt.s32.f32 %v2787
    %v2790 = vcvt.s32.f32 %v2788
    %2791 = vmin.xlane.f32.xlu0 %v2790
    %v2792 = vpop.xlane.xlu0 %2791
    %vm2793 = vcmp.eq.f32.partialorder %v2790, %v2792
    %v2794 = vsel %vm2793, %v2789, inf
    %2795 = vmin.xlane.f32.xlu0 %v2794
    %v2796 = vpop.xlane.xlu0 %2795
    %v2797 = vcvt.f32.s32 %v2796
    %v2798 = vcvt.f32.s32 %v2792
    %v2799 = vshll.u32 %v2798, 16
    %v2800 = vadd.s32 %v2799, %v2797
    %v2801 = vsel %vm2460, %v2601, 2147483647
    %v2802 = vand.u32 %v2801, 65535
    %v2803 = vshra.s32 %v2801, 16
    %v2804 = vcvt.s32.f32 %v2802
    %v2805 = vcvt.s32.f32 %v2803
    %2806 = vmin.xlane.f32.xlu0 %v2805
    %v2807 = vpop.xlane.xlu0 %2806
    %vm2808 = vcmp.eq.f32.partialorder %v2805, %v2807
    %v2809 = vsel %vm2808, %v2804, inf
    %2810 = vmin.xlane.f32.xlu0 %v2809
    %v2811 = vpop.xlane.xlu0 %2810
    %v2812 = vcvt.f32.s32 %v2811
    %v2813 = vcvt.f32.s32 %v2807
    %v2814 = vshll.u32 %v2813, 16
    %v2815 = vadd.s32 %v2814, %v2812
    %v2816 = vsel %vm2460, %v2602, 2147483647
    %v2817 = vand.u32 %v2816, 65535
    %v2818 = vshra.s32 %v2816, 16
    %v2819 = vcvt.s32.f32 %v2817
    %v2820 = vcvt.s32.f32 %v2818
    %2821 = vmin.xlane.f32.xlu0 %v2820
    %v2822 = vpop.xlane.xlu0 %2821
    %vm2823 = vcmp.eq.f32.partialorder %v2820, %v2822
    %v2824 = vsel %vm2823, %v2819, inf
    %2825 = vmin.xlane.f32.xlu0 %v2824
    %v2826 = vpop.xlane.xlu0 %2825
    %v2827 = vcvt.f32.s32 %v2826
    %v2828 = vcvt.f32.s32 %v2822
    %v2829 = vshll.u32 %v2828, 16
    %v2830 = vadd.s32 %v2829, %v2827
    %v2831 = vsel %vm2460, %v2603, 2147483647
    %v2832 = vand.u32 %v2831, 65535
    %v2833 = vshra.s32 %v2831, 16
    %v2834 = vcvt.s32.f32 %v2832
    %v2835 = vcvt.s32.f32 %v2833
    %2836 = vmin.xlane.f32.xlu0 %v2835
    %v2837 = vpop.xlane.xlu0 %2836
    %vm2838 = vcmp.eq.f32.partialorder %v2835, %v2837
    %v2839 = vsel %vm2838, %v2834, inf
    %2840 = vmin.xlane.f32.xlu0 %v2839
    %v2841 = vpop.xlane.xlu0 %2840
    %v2842 = vcvt.f32.s32 %v2841
    %v2843 = vcvt.f32.s32 %v2837
    %v2844 = vshll.u32 %v2843, 16
    %v2845 = vadd.s32 %v2844, %v2842
    %v2846 = vsel %vm2460, %v2604, 2147483647
    %v2847 = vand.u32 %v2846, 65535
    %v2848 = vshra.s32 %v2846, 16
    %v2849 = vcvt.s32.f32 %v2847
    %v2850 = vcvt.s32.f32 %v2848
    %2851 = vmin.xlane.f32.xlu0 %v2850
    %v2852 = vpop.xlane.xlu0 %2851
    %vm2853 = vcmp.eq.f32.partialorder %v2850, %v2852
    %v2854 = vsel %vm2853, %v2849, inf
    %2855 = vmin.xlane.f32.xlu0 %v2854
    %v2856 = vpop.xlane.xlu0 %2855
    %v2857 = vcvt.f32.s32 %v2856
    %v2858 = vcvt.f32.s32 %v2852
    %v2859 = vshll.u32 %v2858, 16
    %v2860 = vadd.s32 %v2859, %v2857
    %v2861 = vsel %vm2460, %v2605, 2147483647
    %v2862 = vand.u32 %v2861, 65535
    %v2863 = vshra.s32 %v2861, 16
    %v2864 = vcvt.s32.f32 %v2862
    %v2865 = vcvt.s32.f32 %v2863
    %2866 = vmin.xlane.f32.xlu0 %v2865
    %v2867 = vpop.xlane.xlu0 %2866
    %vm2868 = vcmp.eq.f32.partialorder %v2865, %v2867
    %v2869 = vsel %vm2868, %v2864, inf
    %2870 = vmin.xlane.f32.xlu0 %v2869
    %v2871 = vpop.xlane.xlu0 %2870
    %v2872 = vcvt.f32.s32 %v2871
    %v2873 = vcvt.f32.s32 %v2867
    %v2874 = vshll.u32 %v2873, 16
    %v2875 = vadd.s32 %v2874, %v2872
    %v2876 = vsel %vm2460, %v2606, 2147483647
    %v2877 = vand.u32 %v2876, 65535
    %v2878 = vshra.s32 %v2876, 16
    %v2879 = vcvt.s32.f32 %v2877
    %v2880 = vcvt.s32.f32 %v2878
    %2881 = vmin.xlane.f32.xlu0 %v2880
    %v2882 = vpop.xlane.xlu0 %2881
    %vm2883 = vcmp.eq.f32.partialorder %v2880, %v2882
    %v2884 = vsel %vm2883, %v2879, inf
    %2885 = vmin.xlane.f32.xlu0 %v2884
    %v2886 = vpop.xlane.xlu0 %2885
    %v2887 = vcvt.f32.s32 %v2886
    %v2888 = vcvt.f32.s32 %v2882
    %v2889 = vshll.u32 %v2888, 16
    %v2890 = vadd.s32 %v2889, %v2887
    %v2891 = vsel %vm2460, %v2607, 2147483647
    %v2892 = vand.u32 %v2891, 65535
    %v2893 = vshra.s32 %v2891, 16
    %v2894 = vcvt.s32.f32 %v2892
    %v2895 = vcvt.s32.f32 %v2893
    %2896 = vmin.xlane.f32.xlu0 %v2895
    %v2897 = vpop.xlane.xlu0 %2896
    %vm2898 = vcmp.eq.f32.partialorder %v2895, %v2897
    %v2899 = vsel %vm2898, %v2894, inf
    %2900 = vmin.xlane.f32.xlu0 %v2899
    %v2901 = vpop.xlane.xlu0 %2900
    %v2902 = vcvt.f32.s32 %v2901
    %v2903 = vcvt.f32.s32 %v2897
    %v2904 = vshll.u32 %v2903, 16
    %v2905 = vadd.s32 %v2904, %v2902
    %v2906 = vsel %vm2460, %v2608, 2147483647
    %v2907 = vand.u32 %v2906, 65535
    %v2908 = vshra.s32 %v2906, 16
    %v2909 = vcvt.s32.f32 %v2907
    %v2910 = vcvt.s32.f32 %v2908
    %2911 = vmin.xlane.f32.xlu0 %v2910
    %v2912 = vpop.xlane.xlu0 %2911
    %vm2913 = vcmp.eq.f32.partialorder %v2910, %v2912
    %v2914 = vsel %vm2913, %v2909, inf
    %2915 = vmin.xlane.f32.xlu0 %v2914
    %v2916 = vpop.xlane.xlu0 %2915
    %v2917 = vcvt.f32.s32 %v2916
    %v2918 = vcvt.f32.s32 %v2912
    %v2919 = vshll.u32 %v2918, 16
    %v2920 = vadd.s32 %v2919, %v2917
    %v2921 = vsel %vm2460, %v2609, 2147483647
    %v2922 = vand.u32 %v2921, 65535
    %v2923 = vshra.s32 %v2921, 16
    %v2924 = vcvt.s32.f32 %v2922
    %v2925 = vcvt.s32.f32 %v2923
    %2926 = vmin.xlane.f32.xlu0 %v2925
    %v2927 = vpop.xlane.xlu0 %2926
    %vm2928 = vcmp.eq.f32.partialorder %v2925, %v2927
    %v2929 = vsel %vm2928, %v2924, inf
    %2930 = vmin.xlane.f32.xlu0 %v2929
    %v2931 = vpop.xlane.xlu0 %2930
    %v2932 = vcvt.f32.s32 %v2931
    %v2933 = vcvt.f32.s32 %v2927
    %v2934 = vshll.u32 %v2933, 16
    %v2935 = vadd.s32 %v2934, %v2932
    %v2936 = vsel %vm2460, %v2610, 2147483647
    %v2937 = vand.u32 %v2936, 65535
    %v2938 = vshra.s32 %v2936, 16
    %v2939 = vcvt.s32.f32 %v2937
    %v2940 = vcvt.s32.f32 %v2938
    %2941 = vmin.xlane.f32.xlu0 %v2940
    %v2942 = vpop.xlane.xlu0 %2941
    %vm2943 = vcmp.eq.f32.partialorder %v2940, %v2942
    %v2944 = vsel %vm2943, %v2939, inf
    %2945 = vmin.xlane.f32.xlu0 %v2944
    %v2946 = vpop.xlane.xlu0 %2945
    %v2947 = vcvt.f32.s32 %v2946
    %v2948 = vcvt.f32.s32 %v2942
    %v2949 = vshll.u32 %v2948, 16
    %v2950 = vadd.s32 %v2949, %v2947
    %v2951 = vsel %vm2460, %v2611, 2147483647
    %v2952 = vand.u32 %v2951, 65535
    %v2953 = vshra.s32 %v2951, 16
    %v2954 = vcvt.s32.f32 %v2952
    %v2955 = vcvt.s32.f32 %v2953
    %2956 = vmin.xlane.f32.xlu0 %v2955
    %v2957 = vpop.xlane.xlu0 %2956
    %vm2958 = vcmp.eq.f32.partialorder %v2955, %v2957
    %v2959 = vsel %vm2958, %v2954, inf
    %2960 = vmin.xlane.f32.xlu0 %v2959
    %v2961 = vpop.xlane.xlu0 %2960
    %v2962 = vcvt.f32.s32 %v2961
    %v2963 = vcvt.f32.s32 %v2957
    %v2964 = vshll.u32 %v2963, 16
    %v2965 = vadd.s32 %v2964, %v2962
    %v2966 = vsel %vm2460, %v2612, 2147483647
    %v2967 = vand.u32 %v2966, 65535
    %v2968 = vshra.s32 %v2966, 16
    %v2969 = vcvt.s32.f32 %v2967
    %v2970 = vcvt.s32.f32 %v2968
    %2971 = vmin.xlane.f32.xlu0 %v2970
    %v2972 = vpop.xlane.xlu0 %2971
    %vm2973 = vcmp.eq.f32.partialorder %v2970, %v2972
    %v2974 = vsel %vm2973, %v2969, inf
    %2975 = vmin.xlane.f32.xlu0 %v2974
    %v2976 = vpop.xlane.xlu0 %2975
    %v2977 = vcvt.f32.s32 %v2976
    %v2978 = vcvt.f32.s32 %v2972
    %v2979 = vshll.u32 %v2978, 16
    %v2980 = vadd.s32 %v2979, %v2977
    %v2981 = vsel %vm2460, %v2613, 2147483647
    %v2982 = vand.u32 %v2981, 65535
    %v2983 = vshra.s32 %v2981, 16
    %v2984 = vcvt.s32.f32 %v2982
    %v2985 = vcvt.s32.f32 %v2983
    %2986 = vmin.xlane.f32.xlu0 %v2985
    %v2987 = vpop.xlane.xlu0 %2986
    %vm2988 = vcmp.eq.f32.partialorder %v2985, %v2987
    %v2989 = vsel %vm2988, %v2984, inf
    %2990 = vmin.xlane.f32.xlu0 %v2989
    %v2991 = vpop.xlane.xlu0 %2990
    %v2992 = vcvt.f32.s32 %v2991
    %v2993 = vcvt.f32.s32 %v2987
    %v2994 = vshll.u32 %v2993, 16
    %v2995 = vadd.s32 %v2994, %v2992
    %v2996 = vsel %vm2460, %v2614, 2147483647
    %v2997 = vand.u32 %v2996, 65535
    %v2998 = vshra.s32 %v2996, 16
    %v2999 = vcvt.s32.f32 %v2997
    %v3000 = vcvt.s32.f32 %v2998
    %3001 = vmin.xlane.f32.xlu0 %v3000
    %v3002 = vpop.xlane.xlu0 %3001
    %vm3003 = vcmp.eq.f32.partialorder %v3000, %v3002
    %v3004 = vsel %vm3003, %v2999, inf
    %3005 = vmin.xlane.f32.xlu0 %v3004
    %v3006 = vpop.xlane.xlu0 %3005
    %v3007 = vcvt.f32.s32 %v3006
    %v3008 = vcvt.f32.s32 %v3002
    %v3009 = vshll.u32 %v3008, 16
    %v3010 = vadd.s32 %v3009, %v3007
    %v3011 = vsel %vm2460, %v2615, 2147483647
    %v3012 = vand.u32 %v3011, 65535
    %v3013 = vshra.s32 %v3011, 16
    %v3014 = vcvt.s32.f32 %v3012
    %v3015 = vcvt.s32.f32 %v3013
    %3016 = vmin.xlane.f32.xlu0 %v3015
    %v3017 = vpop.xlane.xlu0 %3016
    %vm3018 = vcmp.eq.f32.partialorder %v3015, %v3017
    %v3019 = vsel %vm3018, %v3014, inf
    %3020 = vmin.xlane.f32.xlu0 %v3019
    %v3021 = vpop.xlane.xlu0 %3020
    %v3022 = vcvt.f32.s32 %v3021
    %v3023 = vcvt.f32.s32 %v3017
    %v3024 = vshll.u32 %v3023, 16
    %v3025 = vadd.s32 %v3024, %v3022
    %v3026 = vsel %vm2460, %v2616, 2147483647
    %v3027 = vand.u32 %v3026, 65535
    %v3028 = vshra.s32 %v3026, 16
    %v3029 = vcvt.s32.f32 %v3027
    %v3030 = vcvt.s32.f32 %v3028
    %3031 = vmin.xlane.f32.xlu0 %v3030
    %v3032 = vpop.xlane.xlu0 %3031
    %vm3033 = vcmp.eq.f32.partialorder %v3030, %v3032
    %v3034 = vsel %vm3033, %v3029, inf
    %3035 = vmin.xlane.f32.xlu0 %v3034
    %v3036 = vpop.xlane.xlu0 %3035
    %v3037 = vcvt.f32.s32 %v3036
    %v3038 = vcvt.f32.s32 %v3032
    %v3039 = vshll.u32 %v3038, 16
    %v3040 = vadd.s32 %v3039, %v3037
    %v3041 = vsel %vm2460, %v2617, 2147483647
    %v3042 = vand.u32 %v3041, 65535
    %v3043 = vshra.s32 %v3041, 16
    %v3044 = vcvt.s32.f32 %v3042
    %v3045 = vcvt.s32.f32 %v3043
    %3046 = vmin.xlane.f32.xlu0 %v3045
    %v3047 = vpop.xlane.xlu0 %3046
    %vm3048 = vcmp.eq.f32.partialorder %v3045, %v3047
    %v3049 = vsel %vm3048, %v3044, inf
    %3050 = vmin.xlane.f32.xlu0 %v3049
    %v3051 = vpop.xlane.xlu0 %3050
    %v3052 = vcvt.f32.s32 %v3051
    %v3053 = vcvt.f32.s32 %v3047
    %v3054 = vshll.u32 %v3053, 16
    %v3055 = vadd.s32 %v3054, %v3052
    %v3056 = vsel %vm2460, %v2618, 2147483647
    %v3057 = vand.u32 %v3056, 65535
    %v3058 = vshra.s32 %v3056, 16
    %v3059 = vcvt.s32.f32 %v3057
    %v3060 = vcvt.s32.f32 %v3058
    %3061 = vmin.xlane.f32.xlu0 %v3060
    %v3062 = vpop.xlane.xlu0 %3061
    %vm3063 = vcmp.eq.f32.partialorder %v3060, %v3062
    %v3064 = vsel %vm3063, %v3059, inf
    %3065 = vmin.xlane.f32.xlu0 %v3064
    %v3066 = vpop.xlane.xlu0 %3065
    %v3067 = vcvt.f32.s32 %v3066
    %v3068 = vcvt.f32.s32 %v3062
    %v3069 = vshll.u32 %v3068, 16
    %v3070 = vadd.s32 %v3069, %v3067
    %v3071 = vsel %vm2460, %v2619, 2147483647
    %v3072 = vand.u32 %v3071, 65535
    %v3073 = vshra.s32 %v3071, 16
    %v3074 = vcvt.s32.f32 %v3072
    %v3075 = vcvt.s32.f32 %v3073
    %3076 = vmin.xlane.f32.xlu0 %v3075
    %v3077 = vpop.xlane.xlu0 %3076
    %vm3078 = vcmp.eq.f32.partialorder %v3075, %v3077
    %v3079 = vsel %vm3078, %v3074, inf
    %3080 = vmin.xlane.f32.xlu0 %v3079
    %v3081 = vpop.xlane.xlu0 %3080
    %v3082 = vcvt.f32.s32 %v3081
    %v3083 = vcvt.f32.s32 %v3077
    %v3084 = vshll.u32 %v3083, 16
    %v3085 = vadd.s32 %v3084, %v3082
    %v3086 = vsel %vm2460, %v2620, 2147483647
    %v3087 = vand.u32 %v3086, 65535
    %v3088 = vshra.s32 %v3086, 16
    %v3089 = vcvt.s32.f32 %v3087
    %v3090 = vcvt.s32.f32 %v3088
    %3091 = vmin.xlane.f32.xlu0 %v3090
    %v3092 = vpop.xlane.xlu0 %3091
    %vm3093 = vcmp.eq.f32.partialorder %v3090, %v3092
    %v3094 = vsel %vm3093, %v3089, inf
    %3095 = vmin.xlane.f32.xlu0 %v3094
    %v3096 = vpop.xlane.xlu0 %3095
    %v3097 = vcvt.f32.s32 %v3096
    %v3098 = vcvt.f32.s32 %v3092
    %v3099 = vshll.u32 %v3098, 16
    %v3100 = vadd.s32 %v3099, %v3097
    %vm3101 = vcmp.eq.s32.totalorder %v2459, %v2635
    %vm3102 = vcmp.eq.s32.totalorder %v2459, %v2650
    %vm3103 = vcmp.eq.s32.totalorder %v2459, %v2665
    %vm3104 = vcmp.eq.s32.totalorder %v2459, %v2680
    %vm3105 = vcmp.eq.s32.totalorder %v2459, %v2695
    %vm3106 = vcmp.eq.s32.totalorder %v2459, %v2710
    %vm3107 = vcmp.eq.s32.totalorder %v2459, %v2725
    %vm3108 = vcmp.eq.s32.totalorder %v2459, %v2740
    %vm3109 = vcmp.eq.s32.totalorder %v2459, %v2755
    %vm3110 = vcmp.eq.s32.totalorder %v2459, %v2770
    %vm3111 = vcmp.eq.s32.totalorder %v2459, %v2785
    %vm3112 = vcmp.eq.s32.totalorder %v2459, %v2800
    %vm3113 = vcmp.eq.s32.totalorder %v2459, %v2815
    %vm3114 = vcmp.eq.s32.totalorder %v2459, %v2830
    %vm3115 = vcmp.eq.s32.totalorder %v2459, %v2845
    %vm3116 = vcmp.eq.s32.totalorder %v2459, %v2860
    %vm3117 = vcmp.eq.s32.totalorder %v2459, %v2875
    %vm3118 = vcmp.eq.s32.totalorder %v2459, %v2890
    %vm3119 = vcmp.eq.s32.totalorder %v2459, %v2905
    %vm3120 = vcmp.eq.s32.totalorder %v2459, %v2920
    %vm3121 = vcmp.eq.s32.totalorder %v2459, %v2935
    %vm3122 = vcmp.eq.s32.totalorder %v2459, %v2950
    %vm3123 = vcmp.eq.s32.totalorder %v2459, %v2965
    %vm3124 = vcmp.eq.s32.totalorder %v2459, %v2980
    %vm3125 = vcmp.eq.s32.totalorder %v2459, %v2995
    %vm3126 = vcmp.eq.s32.totalorder %v2459, %v3010
    %vm3127 = vcmp.eq.s32.totalorder %v2459, %v3025
    %vm3128 = vcmp.eq.s32.totalorder %v2459, %v3040
    %vm3129 = vcmp.eq.s32.totalorder %v2459, %v3055
    %vm3130 = vcmp.eq.s32.totalorder %v2459, %v3070
    %vm3131 = vcmp.eq.s32.totalorder %v2459, %v3085
    %vm3132 = vcmp.eq.s32.totalorder %v2459, %v3100
    %v3133 = vsel %vm3101, -1e+30, %v2332
    %v3134 = vsel %vm3102, -1e+30, %v2335
    %v3135 = vsel %vm3103, -1e+30, %v2340
    %v3136 = vsel %vm3104, -1e+30, %v2343
    %v3137 = vsel %vm3105, -1e+30, %v2348
    %v3138 = vsel %vm3106, -1e+30, %v2351
    %v3139 = vsel %vm3107, -1e+30, %v2356
    %v3140 = vsel %vm3108, -1e+30, %v2359
    %v3141 = vsel %vm3109, -1e+30, %v2364
    %v3142 = vsel %vm3110, -1e+30, %v2367
    %v3143 = vsel %vm3111, -1e+30, %v2372
    %v3144 = vsel %vm3112, -1e+30, %v2375
    %v3145 = vsel %vm3113, -1e+30, %v2380
    %v3146 = vsel %vm3114, -1e+30, %v2383
    %v3147 = vsel %vm3115, -1e+30, %v2388
    %v3148 = vsel %vm3116, -1e+30, %v2391
    %v3149 = vsel %vm3117, -1e+30, %v2396
    %v3150 = vsel %vm3118, -1e+30, %v2399
    %v3151 = vsel %vm3119, -1e+30, %v2404
    %v3152 = vsel %vm3120, -1e+30, %v2407
    %v3153 = vsel %vm3121, -1e+30, %v2412
    %v3154 = vsel %vm3122, -1e+30, %v2415
    %v3155 = vsel %vm3123, -1e+30, %v2420
    %v3156 = vsel %vm3124, -1e+30, %v2423
    %v3157 = vsel %vm3125, -1e+30, %v2428
    %v3158 = vsel %vm3126, -1e+30, %v2431
    %v3159 = vsel %vm3127, -1e+30, %v2436
    %v3160 = vsel %vm3128, -1e+30, %v2439
    %v3161 = vsel %vm3129, -1e+30, %v2444
    %v3162 = vsel %vm3130, -1e+30, %v2447
    %v3163 = vsel %vm3131, -1e+30, %v2452
    %v3164 = vsel %vm3132, -1e+30, %v2455
    %v3165 = vsel %vm2460, %v3133, -inf
    %3166 = vmax.xlane.f32.xlu0 %v3165
    %v3167 = vpop.xlane.xlu0 %3166
    %v3168 = vsel %vm2460, %v3134, -inf
    %3169 = vmax.xlane.f32.xlu0 %v3168
    %v3170 = vpop.xlane.xlu0 %3169
    %v3171 = vsel %vm2460, %v3135, -inf
    %3172 = vmax.xlane.f32.xlu0 %v3171
    %v3173 = vpop.xlane.xlu0 %3172
    %v3174 = vsel %vm2460, %v3136, -inf
    %3175 = vmax.xlane.f32.xlu0 %v3174
    %v3176 = vpop.xlane.xlu0 %3175
    %v3177 = vsel %vm2460, %v3137, -inf
    %3178 = vmax.xlane.f32.xlu0 %v3177
    %v3179 = vpop.xlane.xlu0 %3178
    %v3180 = vsel %vm2460, %v3138, -inf
    %3181 = vmax.xlane.f32.xlu0 %v3180
    %v3182 = vpop.xlane.xlu0 %3181
    %v3183 = vsel %vm2460, %v3139, -inf
    %3184 = vmax.xlane.f32.xlu0 %v3183
    %v3185 = vpop.xlane.xlu0 %3184
    %v3186 = vsel %vm2460, %v3140, -inf
    %3187 = vmax.xlane.f32.xlu0 %v3186
    %v3188 = vpop.xlane.xlu0 %3187
    %v3189 = vsel %vm2460, %v3141, -inf
    %3190 = vmax.xlane.f32.xlu0 %v3189
    %v3191 = vpop.xlane.xlu0 %3190
    %v3192 = vsel %vm2460, %v3142, -inf
    %3193 = vmax.xlane.f32.xlu0 %v3192
    %v3194 = vpop.xlane.xlu0 %3193
    %v3195 = vsel %vm2460, %v3143, -inf
    %3196 = vmax.xlane.f32.xlu0 %v3195
    %v3197 = vpop.xlane.xlu0 %3196
    %v3198 = vsel %vm2460, %v3144, -inf
    %3199 = vmax.xlane.f32.xlu0 %v3198
    %v3200 = vpop.xlane.xlu0 %3199
    %v3201 = vsel %vm2460, %v3145, -inf
    %3202 = vmax.xlane.f32.xlu0 %v3201
    %v3203 = vpop.xlane.xlu0 %3202
    %v3204 = vsel %vm2460, %v3146, -inf
    %3205 = vmax.xlane.f32.xlu0 %v3204
    %v3206 = vpop.xlane.xlu0 %3205
    %v3207 = vsel %vm2460, %v3147, -inf
    %3208 = vmax.xlane.f32.xlu0 %v3207
    %v3209 = vpop.xlane.xlu0 %3208
    %v3210 = vsel %vm2460, %v3148, -inf
    %3211 = vmax.xlane.f32.xlu0 %v3210
    %v3212 = vpop.xlane.xlu0 %3211
    %v3213 = vsel %vm2460, %v3149, -inf
    %3214 = vmax.xlane.f32.xlu0 %v3213
    %v3215 = vpop.xlane.xlu0 %3214
    %v3216 = vsel %vm2460, %v3150, -inf
    %3217 = vmax.xlane.f32.xlu0 %v3216
    %v3218 = vpop.xlane.xlu0 %3217
    %v3219 = vsel %vm2460, %v3151, -inf
    %3220 = vmax.xlane.f32.xlu0 %v3219
    %v3221 = vpop.xlane.xlu0 %3220
    %v3222 = vsel %vm2460, %v3152, -inf
    %3223 = vmax.xlane.f32.xlu0 %v3222
    %v3224 = vpop.xlane.xlu0 %3223
    %v3225 = vsel %vm2460, %v3153, -inf
    %3226 = vmax.xlane.f32.xlu0 %v3225
    %v3227 = vpop.xlane.xlu0 %3226
    %v3228 = vsel %vm2460, %v3154, -inf
    %3229 = vmax.xlane.f32.xlu0 %v3228
    %v3230 = vpop.xlane.xlu0 %3229
    %v3231 = vsel %vm2460, %v3155, -inf
    %3232 = vmax.xlane.f32.xlu0 %v3231
    %v3233 = vpop.xlane.xlu0 %3232
    %v3234 = vsel %vm2460, %v3156, -inf
    %3235 = vmax.xlane.f32.xlu0 %v3234
    %v3236 = vpop.xlane.xlu0 %3235
    %v3237 = vsel %vm2460, %v3157, -inf
    %3238 = vmax.xlane.f32.xlu0 %v3237
    %v3239 = vpop.xlane.xlu0 %3238
    %v3240 = vsel %vm2460, %v3158, -inf
    %3241 = vmax.xlane.f32.xlu0 %v3240
    %v3242 = vpop.xlane.xlu0 %3241
    %v3243 = vsel %vm2460, %v3159, -inf
    %3244 = vmax.xlane.f32.xlu0 %v3243
    %v3245 = vpop.xlane.xlu0 %3244
    %v3246 = vsel %vm2460, %v3160, -inf
    %3247 = vmax.xlane.f32.xlu0 %v3246
    %v3248 = vpop.xlane.xlu0 %3247
    %v3249 = vsel %vm2460, %v3161, -inf
    %3250 = vmax.xlane.f32.xlu0 %v3249
    %v3251 = vpop.xlane.xlu0 %3250
    %v3252 = vsel %vm2460, %v3162, -inf
    %3253 = vmax.xlane.f32.xlu0 %v3252
    %v3254 = vpop.xlane.xlu0 %3253
    %v3255 = vsel %vm2460, %v3163, -inf
    %3256 = vmax.xlane.f32.xlu0 %v3255
    %v3257 = vpop.xlane.xlu0 %3256
    %v3258 = vsel %vm2460, %v3164, -inf
    %3259 = vmax.xlane.f32.xlu0 %v3258
    %v3260 = vpop.xlane.xlu0 %3259
    %vm3261 = vcmp.eq.f32.partialorder %v3133, %v3167
    %vm3262 = vcmp.eq.f32.partialorder %v3134, %v3170
    %vm3263 = vcmp.eq.f32.partialorder %v3135, %v3173
    %vm3264 = vcmp.eq.f32.partialorder %v3136, %v3176
    %vm3265 = vcmp.eq.f32.partialorder %v3137, %v3179
    %vm3266 = vcmp.eq.f32.partialorder %v3138, %v3182
    %vm3267 = vcmp.eq.f32.partialorder %v3139, %v3185
    %vm3268 = vcmp.eq.f32.partialorder %v3140, %v3188
    %vm3269 = vcmp.eq.f32.partialorder %v3141, %v3191
    %vm3270 = vcmp.eq.f32.partialorder %v3142, %v3194
    %vm3271 = vcmp.eq.f32.partialorder %v3143, %v3197
    %vm3272 = vcmp.eq.f32.partialorder %v3144, %v3200
    %vm3273 = vcmp.eq.f32.partialorder %v3145, %v3203
    %vm3274 = vcmp.eq.f32.partialorder %v3146, %v3206
    %vm3275 = vcmp.eq.f32.partialorder %v3147, %v3209
    %vm3276 = vcmp.eq.f32.partialorder %v3148, %v3212
    %vm3277 = vcmp.eq.f32.partialorder %v3149, %v3215
    %vm3278 = vcmp.eq.f32.partialorder %v3150, %v3218
    %vm3279 = vcmp.eq.f32.partialorder %v3151, %v3221
    %vm3280 = vcmp.eq.f32.partialorder %v3152, %v3224
    %vm3281 = vcmp.eq.f32.partialorder %v3153, %v3227
    %vm3282 = vcmp.eq.f32.partialorder %v3154, %v3230
    %vm3283 = vcmp.eq.f32.partialorder %v3155, %v3233
    %vm3284 = vcmp.eq.f32.partialorder %v3156, %v3236
    %vm3285 = vcmp.eq.f32.partialorder %v3157, %v3239
    %vm3286 = vcmp.eq.f32.partialorder %v3158, %v3242
    %vm3287 = vcmp.eq.f32.partialorder %v3159, %v3245
    %vm3288 = vcmp.eq.f32.partialorder %v3160, %v3248
    %vm3289 = vcmp.eq.f32.partialorder %v3161, %v3251
    %vm3290 = vcmp.eq.f32.partialorder %v3162, %v3254
    %vm3291 = vcmp.eq.f32.partialorder %v3163, %v3257
    %vm3292 = vcmp.eq.f32.partialorder %v3164, %v3260
    %v3293 = vsel %vm3261, %v2459, 6
    %v3294 = vsel %vm3262, %v2459, 6
    %v3295 = vsel %vm3263, %v2459, 6
    %v3296 = vsel %vm3264, %v2459, 6
    %v3297 = vsel %vm3265, %v2459, 6
    %v3298 = vsel %vm3266, %v2459, 6
    %v3299 = vsel %vm3267, %v2459, 6
    %v3300 = vsel %vm3268, %v2459, 6
    %v3301 = vsel %vm3269, %v2459, 6
    %v3302 = vsel %vm3270, %v2459, 6
    %v3303 = vsel %vm3271, %v2459, 6
    %v3304 = vsel %vm3272, %v2459, 6
    %v3305 = vsel %vm3273, %v2459, 6
    %v3306 = vsel %vm3274, %v2459, 6
    %v3307 = vsel %vm3275, %v2459, 6
    %v3308 = vsel %vm3276, %v2459, 6
    %v3309 = vsel %vm3277, %v2459, 6
    %v3310 = vsel %vm3278, %v2459, 6
    %v3311 = vsel %vm3279, %v2459, 6
    %v3312 = vsel %vm3280, %v2459, 6
    %v3313 = vsel %vm3281, %v2459, 6
    %v3314 = vsel %vm3282, %v2459, 6
    %v3315 = vsel %vm3283, %v2459, 6
    %v3316 = vsel %vm3284, %v2459, 6
    %v3317 = vsel %vm3285, %v2459, 6
    %v3318 = vsel %vm3286, %v2459, 6
    %v3319 = vsel %vm3287, %v2459, 6
    %v3320 = vsel %vm3288, %v2459, 6
    %v3321 = vsel %vm3289, %v2459, 6
    %v3322 = vsel %vm3290, %v2459, 6
    %v3323 = vsel %vm3291, %v2459, 6
    %v3324 = vsel %vm3292, %v2459, 6
    %v3325 = vsel %vm2460, %v3293, 2147483647
    %v3326 = vand.u32 %v3325, 65535
    %v3327 = vshra.s32 %v3325, 16
    %v3328 = vcvt.s32.f32 %v3326
    %v3329 = vcvt.s32.f32 %v3327
    %3330 = vmin.xlane.f32.xlu0 %v3329
    %v3331 = vpop.xlane.xlu0 %3330
    %vm3332 = vcmp.eq.f32.partialorder %v3329, %v3331
    %v3333 = vsel %vm3332, %v3328, inf
    %3334 = vmin.xlane.f32.xlu0 %v3333
    %v3335 = vpop.xlane.xlu0 %3334
    %v3336 = vcvt.f32.s32 %v3335
    %v3337 = vcvt.f32.s32 %v3331
    %v3338 = vshll.u32 %v3337, 16
    %v3339 = vadd.s32 %v3338, %v3336
    %v3340 = vsel %vm2460, %v3294, 2147483647
    %v3341 = vand.u32 %v3340, 65535
    %v3342 = vshra.s32 %v3340, 16
    %v3343 = vcvt.s32.f32 %v3341
    %v3344 = vcvt.s32.f32 %v3342
    %3345 = vmin.xlane.f32.xlu0 %v3344
    %v3346 = vpop.xlane.xlu0 %3345
    %vm3347 = vcmp.eq.f32.partialorder %v3344, %v3346
    %v3348 = vsel %vm3347, %v3343, inf
    %3349 = vmin.xlane.f32.xlu0 %v3348
    %v3350 = vpop.xlane.xlu0 %3349
    %v3351 = vcvt.f32.s32 %v3350
    %v3352 = vcvt.f32.s32 %v3346
    %v3353 = vshll.u32 %v3352, 16
    %v3354 = vadd.s32 %v3353, %v3351
    %v3355 = vsel %vm2460, %v3295, 2147483647
    %v3356 = vand.u32 %v3355, 65535
    %v3357 = vshra.s32 %v3355, 16
    %v3358 = vcvt.s32.f32 %v3356
    %v3359 = vcvt.s32.f32 %v3357
    %3360 = vmin.xlane.f32.xlu0 %v3359
    %v3361 = vpop.xlane.xlu0 %3360
    %vm3362 = vcmp.eq.f32.partialorder %v3359, %v3361
    %v3363 = vsel %vm3362, %v3358, inf
    %3364 = vmin.xlane.f32.xlu0 %v3363
    %v3365 = vpop.xlane.xlu0 %3364
    %v3366 = vcvt.f32.s32 %v3365
    %v3367 = vcvt.f32.s32 %v3361
    %v3368 = vshll.u32 %v3367, 16
    %v3369 = vadd.s32 %v3368, %v3366
    %v3370 = vsel %vm2460, %v3296, 2147483647
    %v3371 = vand.u32 %v3370, 65535
    %v3372 = vshra.s32 %v3370, 16
    %v3373 = vcvt.s32.f32 %v3371
    %v3374 = vcvt.s32.f32 %v3372
    %3375 = vmin.xlane.f32.xlu0 %v3374
    %v3376 = vpop.xlane.xlu0 %3375
    %vm3377 = vcmp.eq.f32.partialorder %v3374, %v3376
    %v3378 = vsel %vm3377, %v3373, inf
    %3379 = vmin.xlane.f32.xlu0 %v3378
    %v3380 = vpop.xlane.xlu0 %3379
    %v3381 = vcvt.f32.s32 %v3380
    %v3382 = vcvt.f32.s32 %v3376
    %v3383 = vshll.u32 %v3382, 16
    %v3384 = vadd.s32 %v3383, %v3381
    %v3385 = vsel %vm2460, %v3297, 2147483647
    %v3386 = vand.u32 %v3385, 65535
    %v3387 = vshra.s32 %v3385, 16
    %v3388 = vcvt.s32.f32 %v3386
    %v3389 = vcvt.s32.f32 %v3387
    %3390 = vmin.xlane.f32.xlu0 %v3389
    %v3391 = vpop.xlane.xlu0 %3390
    %vm3392 = vcmp.eq.f32.partialorder %v3389, %v3391
    %v3393 = vsel %vm3392, %v3388, inf
    %3394 = vmin.xlane.f32.xlu0 %v3393
    %v3395 = vpop.xlane.xlu0 %3394
    %v3396 = vcvt.f32.s32 %v3395
    %v3397 = vcvt.f32.s32 %v3391
    %v3398 = vshll.u32 %v3397, 16
    %v3399 = vadd.s32 %v3398, %v3396
    %v3400 = vsel %vm2460, %v3298, 2147483647
    %v3401 = vand.u32 %v3400, 65535
    %v3402 = vshra.s32 %v3400, 16
    %v3403 = vcvt.s32.f32 %v3401
    %v3404 = vcvt.s32.f32 %v3402
    %3405 = vmin.xlane.f32.xlu0 %v3404
    %v3406 = vpop.xlane.xlu0 %3405
    %vm3407 = vcmp.eq.f32.partialorder %v3404, %v3406
    %v3408 = vsel %vm3407, %v3403, inf
    %3409 = vmin.xlane.f32.xlu0 %v3408
    %v3410 = vpop.xlane.xlu0 %3409
    %v3411 = vcvt.f32.s32 %v3410
    %v3412 = vcvt.f32.s32 %v3406
    %v3413 = vshll.u32 %v3412, 16
    %v3414 = vadd.s32 %v3413, %v3411
    %v3415 = vsel %vm2460, %v3299, 2147483647
    %v3416 = vand.u32 %v3415, 65535
    %v3417 = vshra.s32 %v3415, 16
    %v3418 = vcvt.s32.f32 %v3416
    %v3419 = vcvt.s32.f32 %v3417
    %3420 = vmin.xlane.f32.xlu0 %v3419
    %v3421 = vpop.xlane.xlu0 %3420
    %vm3422 = vcmp.eq.f32.partialorder %v3419, %v3421
    %v3423 = vsel %vm3422, %v3418, inf
    %3424 = vmin.xlane.f32.xlu0 %v3423
    %v3425 = vpop.xlane.xlu0 %3424
    %v3426 = vcvt.f32.s32 %v3425
    %v3427 = vcvt.f32.s32 %v3421
    %v3428 = vshll.u32 %v3427, 16
    %v3429 = vadd.s32 %v3428, %v3426
    %v3430 = vsel %vm2460, %v3300, 2147483647
    %v3431 = vand.u32 %v3430, 65535
    %v3432 = vshra.s32 %v3430, 16
    %v3433 = vcvt.s32.f32 %v3431
    %v3434 = vcvt.s32.f32 %v3432
    %3435 = vmin.xlane.f32.xlu0 %v3434
    %v3436 = vpop.xlane.xlu0 %3435
    %vm3437 = vcmp.eq.f32.partialorder %v3434, %v3436
    %v3438 = vsel %vm3437, %v3433, inf
    %3439 = vmin.xlane.f32.xlu0 %v3438
    %v3440 = vpop.xlane.xlu0 %3439
    %v3441 = vcvt.f32.s32 %v3440
    %v3442 = vcvt.f32.s32 %v3436
    %v3443 = vshll.u32 %v3442, 16
    %v3444 = vadd.s32 %v3443, %v3441
    %v3445 = vsel %vm2460, %v3301, 2147483647
    %v3446 = vand.u32 %v3445, 65535
    %v3447 = vshra.s32 %v3445, 16
    %v3448 = vcvt.s32.f32 %v3446
    %v3449 = vcvt.s32.f32 %v3447
    %3450 = vmin.xlane.f32.xlu0 %v3449
    %v3451 = vpop.xlane.xlu0 %3450
    %vm3452 = vcmp.eq.f32.partialorder %v3449, %v3451
    %v3453 = vsel %vm3452, %v3448, inf
    %3454 = vmin.xlane.f32.xlu0 %v3453
    %v3455 = vpop.xlane.xlu0 %3454
    %v3456 = vcvt.f32.s32 %v3455
    %v3457 = vcvt.f32.s32 %v3451
    %v3458 = vshll.u32 %v3457, 16
    %v3459 = vadd.s32 %v3458, %v3456
    %v3460 = vsel %vm2460, %v3302, 2147483647
    %v3461 = vand.u32 %v3460, 65535
    %v3462 = vshra.s32 %v3460, 16
    %v3463 = vcvt.s32.f32 %v3461
    %v3464 = vcvt.s32.f32 %v3462
    %3465 = vmin.xlane.f32.xlu0 %v3464
    %v3466 = vpop.xlane.xlu0 %3465
    %vm3467 = vcmp.eq.f32.partialorder %v3464, %v3466
    %v3468 = vsel %vm3467, %v3463, inf
    %3469 = vmin.xlane.f32.xlu0 %v3468
    %v3470 = vpop.xlane.xlu0 %3469
    %v3471 = vcvt.f32.s32 %v3470
    %v3472 = vcvt.f32.s32 %v3466
    %v3473 = vshll.u32 %v3472, 16
    %v3474 = vadd.s32 %v3473, %v3471
    %v3475 = vsel %vm2460, %v3303, 2147483647
    %v3476 = vand.u32 %v3475, 65535
    %v3477 = vshra.s32 %v3475, 16
    %v3478 = vcvt.s32.f32 %v3476
    %v3479 = vcvt.s32.f32 %v3477
    %3480 = vmin.xlane.f32.xlu0 %v3479
    %v3481 = vpop.xlane.xlu0 %3480
    %vm3482 = vcmp.eq.f32.partialorder %v3479, %v3481
    %v3483 = vsel %vm3482, %v3478, inf
    %3484 = vmin.xlane.f32.xlu0 %v3483
    %v3485 = vpop.xlane.xlu0 %3484
    %v3486 = vcvt.f32.s32 %v3485
    %v3487 = vcvt.f32.s32 %v3481
    %v3488 = vshll.u32 %v3487, 16
    %v3489 = vadd.s32 %v3488, %v3486
    %v3490 = vsel %vm2460, %v3304, 2147483647
    %v3491 = vand.u32 %v3490, 65535
    %v3492 = vshra.s32 %v3490, 16
    %v3493 = vcvt.s32.f32 %v3491
    %v3494 = vcvt.s32.f32 %v3492
    %3495 = vmin.xlane.f32.xlu0 %v3494
    %v3496 = vpop.xlane.xlu0 %3495
    %vm3497 = vcmp.eq.f32.partialorder %v3494, %v3496
    %v3498 = vsel %vm3497, %v3493, inf
    %3499 = vmin.xlane.f32.xlu0 %v3498
    %v3500 = vpop.xlane.xlu0 %3499
    %v3501 = vcvt.f32.s32 %v3500
    %v3502 = vcvt.f32.s32 %v3496
    %v3503 = vshll.u32 %v3502, 16
    %v3504 = vadd.s32 %v3503, %v3501
    %v3505 = vsel %vm2460, %v3305, 2147483647
    %v3506 = vand.u32 %v3505, 65535
    %v3507 = vshra.s32 %v3505, 16
    %v3508 = vcvt.s32.f32 %v3506
    %v3509 = vcvt.s32.f32 %v3507
    %3510 = vmin.xlane.f32.xlu0 %v3509
    %v3511 = vpop.xlane.xlu0 %3510
    %vm3512 = vcmp.eq.f32.partialorder %v3509, %v3511
    %v3513 = vsel %vm3512, %v3508, inf
    %3514 = vmin.xlane.f32.xlu0 %v3513
    %v3515 = vpop.xlane.xlu0 %3514
    %v3516 = vcvt.f32.s32 %v3515
    %v3517 = vcvt.f32.s32 %v3511
    %v3518 = vshll.u32 %v3517, 16
    %v3519 = vadd.s32 %v3518, %v3516
    %v3520 = vsel %vm2460, %v3306, 2147483647
    %v3521 = vand.u32 %v3520, 65535
    %v3522 = vshra.s32 %v3520, 16
    %v3523 = vcvt.s32.f32 %v3521
    %v3524 = vcvt.s32.f32 %v3522
    %3525 = vmin.xlane.f32.xlu0 %v3524
    %v3526 = vpop.xlane.xlu0 %3525
    %vm3527 = vcmp.eq.f32.partialorder %v3524, %v3526
    %v3528 = vsel %vm3527, %v3523, inf
    %3529 = vmin.xlane.f32.xlu0 %v3528
    %v3530 = vpop.xlane.xlu0 %3529
    %v3531 = vcvt.f32.s32 %v3530
    %v3532 = vcvt.f32.s32 %v3526
    %v3533 = vshll.u32 %v3532, 16
    %v3534 = vadd.s32 %v3533, %v3531
    %v3535 = vsel %vm2460, %v3307, 2147483647
    %v3536 = vand.u32 %v3535, 65535
    %v3537 = vshra.s32 %v3535, 16
    %v3538 = vcvt.s32.f32 %v3536
    %v3539 = vcvt.s32.f32 %v3537
    %3540 = vmin.xlane.f32.xlu0 %v3539
    %v3541 = vpop.xlane.xlu0 %3540
    %vm3542 = vcmp.eq.f32.partialorder %v3539, %v3541
    %v3543 = vsel %vm3542, %v3538, inf
    %3544 = vmin.xlane.f32.xlu0 %v3543
    %v3545 = vpop.xlane.xlu0 %3544
    %v3546 = vcvt.f32.s32 %v3545
    %v3547 = vcvt.f32.s32 %v3541
    %v3548 = vshll.u32 %v3547, 16
    %v3549 = vadd.s32 %v3548, %v3546
    %v3550 = vsel %vm2460, %v3308, 2147483647
    %v3551 = vand.u32 %v3550, 65535
    %v3552 = vshra.s32 %v3550, 16
    %v3553 = vcvt.s32.f32 %v3551
    %v3554 = vcvt.s32.f32 %v3552
    %3555 = vmin.xlane.f32.xlu0 %v3554
    %v3556 = vpop.xlane.xlu0 %3555
    %vm3557 = vcmp.eq.f32.partialorder %v3554, %v3556
    %v3558 = vsel %vm3557, %v3553, inf
    %3559 = vmin.xlane.f32.xlu0 %v3558
    %v3560 = vpop.xlane.xlu0 %3559
    %v3561 = vcvt.f32.s32 %v3560
    %v3562 = vcvt.f32.s32 %v3556
    %v3563 = vshll.u32 %v3562, 16
    %v3564 = vadd.s32 %v3563, %v3561
    %v3565 = vsel %vm2460, %v3309, 2147483647
    %v3566 = vand.u32 %v3565, 65535
    %v3567 = vshra.s32 %v3565, 16
    %v3568 = vcvt.s32.f32 %v3566
    %v3569 = vcvt.s32.f32 %v3567
    %3570 = vmin.xlane.f32.xlu0 %v3569
    %v3571 = vpop.xlane.xlu0 %3570
    %vm3572 = vcmp.eq.f32.partialorder %v3569, %v3571
    %v3573 = vsel %vm3572, %v3568, inf
    %3574 = vmin.xlane.f32.xlu0 %v3573
    %v3575 = vpop.xlane.xlu0 %3574
    %v3576 = vcvt.f32.s32 %v3575
    %v3577 = vcvt.f32.s32 %v3571
    %v3578 = vshll.u32 %v3577, 16
    %v3579 = vadd.s32 %v3578, %v3576
    %v3580 = vsel %vm2460, %v3310, 2147483647
    %v3581 = vand.u32 %v3580, 65535
    %v3582 = vshra.s32 %v3580, 16
    %v3583 = vcvt.s32.f32 %v3581
    %v3584 = vcvt.s32.f32 %v3582
    %3585 = vmin.xlane.f32.xlu0 %v3584
    %v3586 = vpop.xlane.xlu0 %3585
    %vm3587 = vcmp.eq.f32.partialorder %v3584, %v3586
    %v3588 = vsel %vm3587, %v3583, inf
    %3589 = vmin.xlane.f32.xlu0 %v3588
    %v3590 = vpop.xlane.xlu0 %3589
    %v3591 = vcvt.f32.s32 %v3590
    %v3592 = vcvt.f32.s32 %v3586
    %v3593 = vshll.u32 %v3592, 16
    %v3594 = vadd.s32 %v3593, %v3591
    %v3595 = vsel %vm2460, %v3311, 2147483647
    %v3596 = vand.u32 %v3595, 65535
    %v3597 = vshra.s32 %v3595, 16
    %v3598 = vcvt.s32.f32 %v3596
    %v3599 = vcvt.s32.f32 %v3597
    %3600 = vmin.xlane.f32.xlu0 %v3599
    %v3601 = vpop.xlane.xlu0 %3600
    %vm3602 = vcmp.eq.f32.partialorder %v3599, %v3601
    %v3603 = vsel %vm3602, %v3598, inf
    %3604 = vmin.xlane.f32.xlu0 %v3603
    %v3605 = vpop.xlane.xlu0 %3604
    %v3606 = vcvt.f32.s32 %v3605
    %v3607 = vcvt.f32.s32 %v3601
    %v3608 = vshll.u32 %v3607, 16
    %v3609 = vadd.s32 %v3608, %v3606
    %v3610 = vsel %vm2460, %v3312, 2147483647
    %v3611 = vand.u32 %v3610, 65535
    %v3612 = vshra.s32 %v3610, 16
    %v3613 = vcvt.s32.f32 %v3611
    %v3614 = vcvt.s32.f32 %v3612
    %3615 = vmin.xlane.f32.xlu0 %v3614
    %v3616 = vpop.xlane.xlu0 %3615
    %vm3617 = vcmp.eq.f32.partialorder %v3614, %v3616
    %v3618 = vsel %vm3617, %v3613, inf
    %3619 = vmin.xlane.f32.xlu0 %v3618
    %v3620 = vpop.xlane.xlu0 %3619
    %v3621 = vcvt.f32.s32 %v3620
    %v3622 = vcvt.f32.s32 %v3616
    %v3623 = vshll.u32 %v3622, 16
    %v3624 = vadd.s32 %v3623, %v3621
    %v3625 = vsel %vm2460, %v3313, 2147483647
    %v3626 = vand.u32 %v3625, 65535
    %v3627 = vshra.s32 %v3625, 16
    %v3628 = vcvt.s32.f32 %v3626
    %v3629 = vcvt.s32.f32 %v3627
    %3630 = vmin.xlane.f32.xlu0 %v3629
    %v3631 = vpop.xlane.xlu0 %3630
    %vm3632 = vcmp.eq.f32.partialorder %v3629, %v3631
    %v3633 = vsel %vm3632, %v3628, inf
    %3634 = vmin.xlane.f32.xlu0 %v3633
    %v3635 = vpop.xlane.xlu0 %3634
    %v3636 = vcvt.f32.s32 %v3635
    %v3637 = vcvt.f32.s32 %v3631
    %v3638 = vshll.u32 %v3637, 16
    %v3639 = vadd.s32 %v3638, %v3636
    %v3640 = vsel %vm2460, %v3314, 2147483647
    %v3641 = vand.u32 %v3640, 65535
    %v3642 = vshra.s32 %v3640, 16
    %v3643 = vcvt.s32.f32 %v3641
    %v3644 = vcvt.s32.f32 %v3642
    %3645 = vmin.xlane.f32.xlu0 %v3644
    %v3646 = vpop.xlane.xlu0 %3645
    %vm3647 = vcmp.eq.f32.partialorder %v3644, %v3646
    %v3648 = vsel %vm3647, %v3643, inf
    %3649 = vmin.xlane.f32.xlu0 %v3648
    %v3650 = vpop.xlane.xlu0 %3649
    %v3651 = vcvt.f32.s32 %v3650
    %v3652 = vcvt.f32.s32 %v3646
    %v3653 = vshll.u32 %v3652, 16
    %v3654 = vadd.s32 %v3653, %v3651
    %v3655 = vsel %vm2460, %v3315, 2147483647
    %v3656 = vand.u32 %v3655, 65535
    %v3657 = vshra.s32 %v3655, 16
    %v3658 = vcvt.s32.f32 %v3656
    %v3659 = vcvt.s32.f32 %v3657
    %3660 = vmin.xlane.f32.xlu0 %v3659
    %v3661 = vpop.xlane.xlu0 %3660
    %vm3662 = vcmp.eq.f32.partialorder %v3659, %v3661
    %v3663 = vsel %vm3662, %v3658, inf
    %3664 = vmin.xlane.f32.xlu0 %v3663
    %v3665 = vpop.xlane.xlu0 %3664
    %v3666 = vcvt.f32.s32 %v3665
    %v3667 = vcvt.f32.s32 %v3661
    %v3668 = vshll.u32 %v3667, 16
    %v3669 = vadd.s32 %v3668, %v3666
    %v3670 = vsel %vm2460, %v3316, 2147483647
    %v3671 = vand.u32 %v3670, 65535
    %v3672 = vshra.s32 %v3670, 16
    %v3673 = vcvt.s32.f32 %v3671
    %v3674 = vcvt.s32.f32 %v3672
    %3675 = vmin.xlane.f32.xlu0 %v3674
    %v3676 = vpop.xlane.xlu0 %3675
    %vm3677 = vcmp.eq.f32.partialorder %v3674, %v3676
    %v3678 = vsel %vm3677, %v3673, inf
    %3679 = vmin.xlane.f32.xlu0 %v3678
    %v3680 = vpop.xlane.xlu0 %3679
    %v3681 = vcvt.f32.s32 %v3680
    %v3682 = vcvt.f32.s32 %v3676
    %v3683 = vshll.u32 %v3682, 16
    %v3684 = vadd.s32 %v3683, %v3681
    %v3685 = vsel %vm2460, %v3317, 2147483647
    %v3686 = vand.u32 %v3685, 65535
    %v3687 = vshra.s32 %v3685, 16
    %v3688 = vcvt.s32.f32 %v3686
    %v3689 = vcvt.s32.f32 %v3687
    %3690 = vmin.xlane.f32.xlu0 %v3689
    %v3691 = vpop.xlane.xlu0 %3690
    %vm3692 = vcmp.eq.f32.partialorder %v3689, %v3691
    %v3693 = vsel %vm3692, %v3688, inf
    %3694 = vmin.xlane.f32.xlu0 %v3693
    %v3695 = vpop.xlane.xlu0 %3694
    %v3696 = vcvt.f32.s32 %v3695
    %v3697 = vcvt.f32.s32 %v3691
    %v3698 = vshll.u32 %v3697, 16
    %v3699 = vadd.s32 %v3698, %v3696
    %v3700 = vsel %vm2460, %v3318, 2147483647
    %v3701 = vand.u32 %v3700, 65535
    %v3702 = vshra.s32 %v3700, 16
    %v3703 = vcvt.s32.f32 %v3701
    %v3704 = vcvt.s32.f32 %v3702
    %3705 = vmin.xlane.f32.xlu0 %v3704
    %v3706 = vpop.xlane.xlu0 %3705
    %vm3707 = vcmp.eq.f32.partialorder %v3704, %v3706
    %v3708 = vsel %vm3707, %v3703, inf
    %3709 = vmin.xlane.f32.xlu0 %v3708
    %v3710 = vpop.xlane.xlu0 %3709
    %v3711 = vcvt.f32.s32 %v3710
    %v3712 = vcvt.f32.s32 %v3706
    %v3713 = vshll.u32 %v3712, 16
    %v3714 = vadd.s32 %v3713, %v3711
    %v3715 = vsel %vm2460, %v3319, 2147483647
    %v3716 = vand.u32 %v3715, 65535
    %v3717 = vshra.s32 %v3715, 16
    %v3718 = vcvt.s32.f32 %v3716
    %v3719 = vcvt.s32.f32 %v3717
    %3720 = vmin.xlane.f32.xlu0 %v3719
    %v3721 = vpop.xlane.xlu0 %3720
    %vm3722 = vcmp.eq.f32.partialorder %v3719, %v3721
    %v3723 = vsel %vm3722, %v3718, inf
    %3724 = vmin.xlane.f32.xlu0 %v3723
    %v3725 = vpop.xlane.xlu0 %3724
    %v3726 = vcvt.f32.s32 %v3725
    %v3727 = vcvt.f32.s32 %v3721
    %v3728 = vshll.u32 %v3727, 16
    %v3729 = vadd.s32 %v3728, %v3726
    %v3730 = vsel %vm2460, %v3320, 2147483647
    %v3731 = vand.u32 %v3730, 65535
    %v3732 = vshra.s32 %v3730, 16
    %v3733 = vcvt.s32.f32 %v3731
    %v3734 = vcvt.s32.f32 %v3732
    %3735 = vmin.xlane.f32.xlu0 %v3734
    %v3736 = vpop.xlane.xlu0 %3735
    %vm3737 = vcmp.eq.f32.partialorder %v3734, %v3736
    %v3738 = vsel %vm3737, %v3733, inf
    %3739 = vmin.xlane.f32.xlu0 %v3738
    %v3740 = vpop.xlane.xlu0 %3739
    %v3741 = vcvt.f32.s32 %v3740
    %v3742 = vcvt.f32.s32 %v3736
    %v3743 = vshll.u32 %v3742, 16
    %v3744 = vadd.s32 %v3743, %v3741
    %v3745 = vsel %vm2460, %v3321, 2147483647
    %v3746 = vand.u32 %v3745, 65535
    %v3747 = vshra.s32 %v3745, 16
    %v3748 = vcvt.s32.f32 %v3746
    %v3749 = vcvt.s32.f32 %v3747
    %3750 = vmin.xlane.f32.xlu0 %v3749
    %v3751 = vpop.xlane.xlu0 %3750
    %vm3752 = vcmp.eq.f32.partialorder %v3749, %v3751
    %v3753 = vsel %vm3752, %v3748, inf
    %3754 = vmin.xlane.f32.xlu0 %v3753
    %v3755 = vpop.xlane.xlu0 %3754
    %v3756 = vcvt.f32.s32 %v3755
    %v3757 = vcvt.f32.s32 %v3751
    %v3758 = vshll.u32 %v3757, 16
    %v3759 = vadd.s32 %v3758, %v3756
    %v3760 = vsel %vm2460, %v3322, 2147483647
    %v3761 = vand.u32 %v3760, 65535
    %v3762 = vshra.s32 %v3760, 16
    %v3763 = vcvt.s32.f32 %v3761
    %v3764 = vcvt.s32.f32 %v3762
    %3765 = vmin.xlane.f32.xlu0 %v3764
    %v3766 = vpop.xlane.xlu0 %3765
    %vm3767 = vcmp.eq.f32.partialorder %v3764, %v3766
    %v3768 = vsel %vm3767, %v3763, inf
    %3769 = vmin.xlane.f32.xlu0 %v3768
    %v3770 = vpop.xlane.xlu0 %3769
    %v3771 = vcvt.f32.s32 %v3770
    %v3772 = vcvt.f32.s32 %v3766
    %v3773 = vshll.u32 %v3772, 16
    %v3774 = vadd.s32 %v3773, %v3771
    %v3775 = vsel %vm2460, %v3323, 2147483647
    %v3776 = vand.u32 %v3775, 65535
    %v3777 = vshra.s32 %v3775, 16
    %v3778 = vcvt.s32.f32 %v3776
    %v3779 = vcvt.s32.f32 %v3777
    %3780 = vmin.xlane.f32.xlu0 %v3779
    %v3781 = vpop.xlane.xlu0 %3780
    %vm3782 = vcmp.eq.f32.partialorder %v3779, %v3781
    %v3783 = vsel %vm3782, %v3778, inf
    %3784 = vmin.xlane.f32.xlu0 %v3783
    %v3785 = vpop.xlane.xlu0 %3784
    %v3786 = vcvt.f32.s32 %v3785
    %v3787 = vcvt.f32.s32 %v3781
    %v3788 = vshll.u32 %v3787, 16
    %v3789 = vadd.s32 %v3788, %v3786
    %v3790 = vsel %vm2460, %v3324, 2147483647
    %v3791 = vand.u32 %v3790, 65535
    %v3792 = vshra.s32 %v3790, 16
    %v3793 = vcvt.s32.f32 %v3791
    %v3794 = vcvt.s32.f32 %v3792
    %3795 = vmin.xlane.f32.xlu0 %v3794
    %v3796 = vpop.xlane.xlu0 %3795
    %vm3797 = vcmp.eq.f32.partialorder %v3794, %v3796
    %v3798 = vsel %vm3797, %v3793, inf
    %3799 = vmin.xlane.f32.xlu0 %v3798
    %v3800 = vpop.xlane.xlu0 %3799
    %v3801 = vcvt.f32.s32 %v3800
    %v3802 = vcvt.f32.s32 %v3796
    %v3803 = vshll.u32 %v3802, 16
    %v3804 = vadd.s32 %v3803, %v3801
    %vm3805 = vcmp.eq.s32.totalorder %v2459, %v3339
    %vm3806 = vcmp.eq.s32.totalorder %v2459, %v3354
    %vm3807 = vcmp.eq.s32.totalorder %v2459, %v3369
    %vm3808 = vcmp.eq.s32.totalorder %v2459, %v3384
    %vm3809 = vcmp.eq.s32.totalorder %v2459, %v3399
    %vm3810 = vcmp.eq.s32.totalorder %v2459, %v3414
    %vm3811 = vcmp.eq.s32.totalorder %v2459, %v3429
    %vm3812 = vcmp.eq.s32.totalorder %v2459, %v3444
    %vm3813 = vcmp.eq.s32.totalorder %v2459, %v3459
    %vm3814 = vcmp.eq.s32.totalorder %v2459, %v3474
    %vm3815 = vcmp.eq.s32.totalorder %v2459, %v3489
    %vm3816 = vcmp.eq.s32.totalorder %v2459, %v3504
    %vm3817 = vcmp.eq.s32.totalorder %v2459, %v3519
    %vm3818 = vcmp.eq.s32.totalorder %v2459, %v3534
    %vm3819 = vcmp.eq.s32.totalorder %v2459, %v3549
    %vm3820 = vcmp.eq.s32.totalorder %v2459, %v3564
    %vm3821 = vcmp.eq.s32.totalorder %v2459, %v3579
    %vm3822 = vcmp.eq.s32.totalorder %v2459, %v3594
    %vm3823 = vcmp.eq.s32.totalorder %v2459, %v3609
    %vm3824 = vcmp.eq.s32.totalorder %v2459, %v3624
    %vm3825 = vcmp.eq.s32.totalorder %v2459, %v3639
    %vm3826 = vcmp.eq.s32.totalorder %v2459, %v3654
    %vm3827 = vcmp.eq.s32.totalorder %v2459, %v3669
    %vm3828 = vcmp.eq.s32.totalorder %v2459, %v3684
    %vm3829 = vcmp.eq.s32.totalorder %v2459, %v3699
    %vm3830 = vcmp.eq.s32.totalorder %v2459, %v3714
    %vm3831 = vcmp.eq.s32.totalorder %v2459, %v3729
    %vm3832 = vcmp.eq.s32.totalorder %v2459, %v3744
    %vm3833 = vcmp.eq.s32.totalorder %v2459, %v3759
    %vm3834 = vcmp.eq.s32.totalorder %v2459, %v3774
    %vm3835 = vcmp.eq.s32.totalorder %v2459, %v3789
    %vm3836 = vcmp.eq.s32.totalorder %v2459, %v3804
    %v3837 = vsub.f32 %v3167, %v2463
    %v3838 = vsub.f32 %v3170, %v2466
    %v3839 = vsub.f32 %v3173, %v2469
    %v3840 = vsub.f32 %v3176, %v2472
    %v3841 = vsub.f32 %v3179, %v2475
    %v3842 = vsub.f32 %v3182, %v2478
    %v3843 = vsub.f32 %v3185, %v2481
    %v3844 = vsub.f32 %v3188, %v2484
    %v3845 = vsub.f32 %v3191, %v2487
    %v3846 = vsub.f32 %v3194, %v2490
    %v3847 = vsub.f32 %v3197, %v2493
    %v3848 = vsub.f32 %v3200, %v2496
    %v3849 = vsub.f32 %v3203, %v2499
    %v3850 = vsub.f32 %v3206, %v2502
    %v3851 = vsub.f32 %v3209, %v2505
    %v3852 = vsub.f32 %v3212, %v2508
    %v3853 = vsub.f32 %v3215, %v2511
    %v3854 = vsub.f32 %v3218, %v2514
    %v3855 = vsub.f32 %v3221, %v2517
    %v3856 = vsub.f32 %v3224, %v2520
    %v3857 = vsub.f32 %v3227, %v2523
    %v3858 = vsub.f32 %v3230, %v2526
    %v3859 = vsub.f32 %v3233, %v2529
    %v3860 = vsub.f32 %v3236, %v2532
    %v3861 = vsub.f32 %v3239, %v2535
    %v3862 = vsub.f32 %v3242, %v2538
    %v3863 = vsub.f32 %v3245, %v2541
    %v3864 = vsub.f32 %v3248, %v2544
    %v3865 = vsub.f32 %v3251, %v2547
    %v3866 = vsub.f32 %v3254, %v2550
    %v3867 = vsub.f32 %v3257, %v2553
    %v3868 = vsub.f32 %v3260, %v2556
    %v3869 = vmul.f32 %v3837, 1.442695
    %v3870 = vpow.pop %v3869
    %v3871 = vmul.f32 %v3838, 1.442695
    %v3872 = vpow.pop %v3871
    %v3873 = vmul.f32 %v3839, 1.442695
    %v3874 = vpow.pop %v3873
    %v3875 = vmul.f32 %v3840, 1.442695
    %v3876 = vpow.pop %v3875
    %v3877 = vmul.f32 %v3841, 1.442695
    %v3878 = vpow.pop %v3877
    %v3879 = vmul.f32 %v3842, 1.442695
    %v3880 = vpow.pop %v3879
    %v3881 = vmul.f32 %v3843, 1.442695
    %v3882 = vpow.pop %v3881
    %v3883 = vmul.f32 %v3844, 1.442695
    %v3884 = vpow.pop %v3883
    %v3885 = vmul.f32 %v3845, 1.442695
    %v3886 = vpow.pop %v3885
    %v3887 = vmul.f32 %v3846, 1.442695
    %v3888 = vpow.pop %v3887
    %v3889 = vmul.f32 %v3847, 1.442695
    %v3890 = vpow.pop %v3889
    %v3891 = vmul.f32 %v3848, 1.442695
    %v3892 = vpow.pop %v3891
    %v3893 = vmul.f32 %v3849, 1.442695
    %v3894 = vpow.pop %v3893
    %v3895 = vmul.f32 %v3850, 1.442695
    %v3896 = vpow.pop %v3895
    %v3897 = vmul.f32 %v3851, 1.442695
    %v3898 = vpow.pop %v3897
    %v3899 = vmul.f32 %v3852, 1.442695
    %v3900 = vpow.pop %v3899
    %v3901 = vmul.f32 %v3853, 1.442695
    %v3902 = vpow.pop %v3901
    %v3903 = vmul.f32 %v3854, 1.442695
    %v3904 = vpow.pop %v3903
    %v3905 = vmul.f32 %v3855, 1.442695
    %v3906 = vpow.pop %v3905
    %v3907 = vmul.f32 %v3856, 1.442695
    %v3908 = vpow.pop %v3907
    %v3909 = vmul.f32 %v3857, 1.442695
    %v3910 = vpow.pop %v3909
    %v3911 = vmul.f32 %v3858, 1.442695
    %v3912 = vpow.pop %v3911
    %v3913 = vmul.f32 %v3859, 1.442695
    %v3914 = vpow.pop %v3913
    %v3915 = vmul.f32 %v3860, 1.442695
    %v3916 = vpow.pop %v3915
    %v3917 = vmul.f32 %v3861, 1.442695
    %v3918 = vpow.pop %v3917
    %v3919 = vmul.f32 %v3862, 1.442695
    %v3920 = vpow.pop %v3919
    %v3921 = vmul.f32 %v3863, 1.442695
    %v3922 = vpow.pop %v3921
    %v3923 = vmul.f32 %v3864, 1.442695
    %v3924 = vpow.pop %v3923
    %v3925 = vmul.f32 %v3865, 1.442695
    %v3926 = vpow.pop %v3925
    %v3927 = vmul.f32 %v3866, 1.442695
    %v3928 = vpow.pop %v3927
    %v3929 = vmul.f32 %v3867, 1.442695
    %v3930 = vpow.pop %v3929
    %v3931 = vmul.f32 %v3868, 1.442695
    %v3932 = vpow.pop %v3931
    %v3933 = vadd.f32 %v3870, 1.0
    %v3934 = vadd.f32 %v3872, 1.0
    %v3935 = vadd.f32 %v3874, 1.0
    %v3936 = vadd.f32 %v3876, 1.0
    %v3937 = vadd.f32 %v3878, 1.0
    %v3938 = vadd.f32 %v3880, 1.0
    %v3939 = vadd.f32 %v3882, 1.0
    %v3940 = vadd.f32 %v3884, 1.0
    %v3941 = vadd.f32 %v3886, 1.0
    %v3942 = vadd.f32 %v3888, 1.0
    %v3943 = vadd.f32 %v3890, 1.0
    %v3944 = vadd.f32 %v3892, 1.0
    %v3945 = vadd.f32 %v3894, 1.0
    %v3946 = vadd.f32 %v3896, 1.0
    %v3947 = vadd.f32 %v3898, 1.0
    %v3948 = vadd.f32 %v3900, 1.0
    %v3949 = vadd.f32 %v3902, 1.0
    %v3950 = vadd.f32 %v3904, 1.0
    %v3951 = vadd.f32 %v3906, 1.0
    %v3952 = vadd.f32 %v3908, 1.0
    %v3953 = vadd.f32 %v3910, 1.0
    %v3954 = vadd.f32 %v3912, 1.0
    %v3955 = vadd.f32 %v3914, 1.0
    %v3956 = vadd.f32 %v3916, 1.0
    %v3957 = vadd.f32 %v3918, 1.0
    %v3958 = vadd.f32 %v3920, 1.0
    %v3959 = vadd.f32 %v3922, 1.0
    %v3960 = vadd.f32 %v3924, 1.0
    %v3961 = vadd.f32 %v3926, 1.0
    %v3962 = vadd.f32 %v3928, 1.0
    %v3963 = vadd.f32 %v3930, 1.0
    %v3964 = vadd.f32 %v3932, 1.0
    %v3965 = vrcp.pop %v3933
    %v3966 = vmul.f32 1.0, %v3965
    %v3967 = vrcp.pop %v3934
    %v3968 = vmul.f32 1.0, %v3967
    %v3969 = vrcp.pop %v3935
    %v3970 = vmul.f32 1.0, %v3969
    %v3971 = vrcp.pop %v3936
    %v3972 = vmul.f32 1.0, %v3971
    %v3973 = vrcp.pop %v3937
    %v3974 = vmul.f32 1.0, %v3973
    %v3975 = vrcp.pop %v3938
    %v3976 = vmul.f32 1.0, %v3975
    %v3977 = vrcp.pop %v3939
    %v3978 = vmul.f32 1.0, %v3977
    %v3979 = vrcp.pop %v3940
    %v3980 = vmul.f32 1.0, %v3979
    %v3981 = vrcp.pop %v3941
    %v3982 = vmul.f32 1.0, %v3981
    %v3983 = vrcp.pop %v3942
    %v3984 = vmul.f32 1.0, %v3983
    %v3985 = vrcp.pop %v3943
    %v3986 = vmul.f32 1.0, %v3985
    %v3987 = vrcp.pop %v3944
    %v3988 = vmul.f32 1.0, %v3987
    %v3989 = vrcp.pop %v3945
    %v3990 = vmul.f32 1.0, %v3989
    %v3991 = vrcp.pop %v3946
    %v3992 = vmul.f32 1.0, %v3991
    %v3993 = vrcp.pop %v3947
    %v3994 = vmul.f32 1.0, %v3993
    %v3995 = vrcp.pop %v3948
    %v3996 = vmul.f32 1.0, %v3995
    %v3997 = vrcp.pop %v3949
    %v3998 = vmul.f32 1.0, %v3997
    %v3999 = vrcp.pop %v3950
    %v4000 = vmul.f32 1.0, %v3999
    %v4001 = vrcp.pop %v3951
    %v4002 = vmul.f32 1.0, %v4001
    %v4003 = vrcp.pop %v3952
    %v4004 = vmul.f32 1.0, %v4003
    %v4005 = vrcp.pop %v3953
    %v4006 = vmul.f32 1.0, %v4005
    %v4007 = vrcp.pop %v3954
    %v4008 = vmul.f32 1.0, %v4007
    %v4009 = vrcp.pop %v3955
    %v4010 = vmul.f32 1.0, %v4009
    %v4011 = vrcp.pop %v3956
    %v4012 = vmul.f32 1.0, %v4011
    %v4013 = vrcp.pop %v3957
    %v4014 = vmul.f32 1.0, %v4013
    %v4015 = vrcp.pop %v3958
    %v4016 = vmul.f32 1.0, %v4015
    %v4017 = vrcp.pop %v3959
    %v4018 = vmul.f32 1.0, %v4017
    %v4019 = vrcp.pop %v3960
    %v4020 = vmul.f32 1.0, %v4019
    %v4021 = vrcp.pop %v3961
    %v4022 = vmul.f32 1.0, %v4021
    %v4023 = vrcp.pop %v3962
    %v4024 = vmul.f32 1.0, %v4023
    %v4025 = vrcp.pop %v3963
    %v4026 = vmul.f32 1.0, %v4025
    %v4027 = vrcp.pop %v3964
    %v4028 = vmul.f32 1.0, %v4027
    %v4029 = vsub.f32 1.0, %v3966
    %v4030 = vsub.f32 1.0, %v3968
    %v4031 = vsub.f32 1.0, %v3970
    %v4032 = vsub.f32 1.0, %v3972
    %v4033 = vsub.f32 1.0, %v3974
    %v4034 = vsub.f32 1.0, %v3976
    %v4035 = vsub.f32 1.0, %v3978
    %v4036 = vsub.f32 1.0, %v3980
    %v4037 = vsub.f32 1.0, %v3982
    %v4038 = vsub.f32 1.0, %v3984
    %v4039 = vsub.f32 1.0, %v3986
    %v4040 = vsub.f32 1.0, %v3988
    %v4041 = vsub.f32 1.0, %v3990
    %v4042 = vsub.f32 1.0, %v3992
    %v4043 = vsub.f32 1.0, %v3994
    %v4044 = vsub.f32 1.0, %v3996
    %v4045 = vsub.f32 1.0, %v3998
    %v4046 = vsub.f32 1.0, %v4000
    %v4047 = vsub.f32 1.0, %v4002
    %v4048 = vsub.f32 1.0, %v4004
    %v4049 = vsub.f32 1.0, %v4006
    %v4050 = vsub.f32 1.0, %v4008
    %v4051 = vsub.f32 1.0, %v4010
    %v4052 = vsub.f32 1.0, %v4012
    %v4053 = vsub.f32 1.0, %v4014
    %v4054 = vsub.f32 1.0, %v4016
    %v4055 = vsub.f32 1.0, %v4018
    %v4056 = vsub.f32 1.0, %v4020
    %v4057 = vsub.f32 1.0, %v4022
    %v4058 = vsub.f32 1.0, %v4024
    %v4059 = vsub.f32 1.0, %v4026
    %v4060 = vsub.f32 1.0, %v4028
    %v4061 = vsel %vm3101, %v3966, 0.0
    %v4062 = vsel %vm3102, %v3968, 0.0
    %v4063 = vsel %vm3103, %v3970, 0.0
    %v4064 = vsel %vm3104, %v3972, 0.0
    %v4065 = vsel %vm3105, %v3974, 0.0
    %v4066 = vsel %vm3106, %v3976, 0.0
    %v4067 = vsel %vm3107, %v3978, 0.0
    %v4068 = vsel %vm3108, %v3980, 0.0
    %v4069 = vsel %vm3109, %v3982, 0.0
    %v4070 = vsel %vm3110, %v3984, 0.0
    %v4071 = vsel %vm3111, %v3986, 0.0
    %v4072 = vsel %vm3112, %v3988, 0.0
    %v4073 = vsel %vm3113, %v3990, 0.0
    %v4074 = vsel %vm3114, %v3992, 0.0
    %v4075 = vsel %vm3115, %v3994, 0.0
    %v4076 = vsel %vm3116, %v3996, 0.0
    %v4077 = vsel %vm3117, %v3998, 0.0
    %v4078 = vsel %vm3118, %v4000, 0.0
    %v4079 = vsel %vm3119, %v4002, 0.0
    %v4080 = vsel %vm3120, %v4004, 0.0
    %v4081 = vsel %vm3121, %v4006, 0.0
    %v4082 = vsel %vm3122, %v4008, 0.0
    %v4083 = vsel %vm3123, %v4010, 0.0
    %v4084 = vsel %vm3124, %v4012, 0.0
    %v4085 = vsel %vm3125, %v4014, 0.0
    %v4086 = vsel %vm3126, %v4016, 0.0
    %v4087 = vsel %vm3127, %v4018, 0.0
    %v4088 = vsel %vm3128, %v4020, 0.0
    %v4089 = vsel %vm3129, %v4022, 0.0
    %v4090 = vsel %vm3130, %v4024, 0.0
    %v4091 = vsel %vm3131, %v4026, 0.0
    %v4092 = vsel %vm3132, %v4028, 0.0
    %v4093 = vsel %vm3805, %v4029, 0.0
    %v4094 = vsel %vm3806, %v4030, 0.0
    %v4095 = vsel %vm3807, %v4031, 0.0
    %v4096 = vsel %vm3808, %v4032, 0.0
    %v4097 = vsel %vm3809, %v4033, 0.0
    %v4098 = vsel %vm3810, %v4034, 0.0
    %v4099 = vsel %vm3811, %v4035, 0.0
    %v4100 = vsel %vm3812, %v4036, 0.0
    %v4101 = vsel %vm3813, %v4037, 0.0
    %v4102 = vsel %vm3814, %v4038, 0.0
    %v4103 = vsel %vm3815, %v4039, 0.0
    %v4104 = vsel %vm3816, %v4040, 0.0
    %v4105 = vsel %vm3817, %v4041, 0.0
    %v4106 = vsel %vm3818, %v4042, 0.0
    %v4107 = vsel %vm3819, %v4043, 0.0
    %v4108 = vsel %vm3820, %v4044, 0.0
    %v4109 = vsel %vm3821, %v4045, 0.0
    %v4110 = vsel %vm3822, %v4046, 0.0
    %v4111 = vsel %vm3823, %v4047, 0.0
    %v4112 = vsel %vm3824, %v4048, 0.0
    %v4113 = vsel %vm3825, %v4049, 0.0
    %v4114 = vsel %vm3826, %v4050, 0.0
    %v4115 = vsel %vm3827, %v4051, 0.0
    %v4116 = vsel %vm3828, %v4052, 0.0
    %v4117 = vsel %vm3829, %v4053, 0.0
    %v4118 = vsel %vm3830, %v4054, 0.0
    %v4119 = vsel %vm3831, %v4055, 0.0
    %v4120 = vsel %vm3832, %v4056, 0.0
    %v4121 = vsel %vm3833, %v4057, 0.0
    %v4122 = vsel %vm3834, %v4058, 0.0
    %v4123 = vsel %vm3835, %v4059, 0.0
    %v4124 = vsel %vm3836, %v4060, 0.0
    %v4125 = vadd.f32 %v4061, %v4093
    %v4126 = vadd.f32 %v4062, %v4094
    %v4127 = vadd.f32 %v4063, %v4095
    %v4128 = vadd.f32 %v4064, %v4096
    %v4129 = vadd.f32 %v4065, %v4097
    %v4130 = vadd.f32 %v4066, %v4098
    %v4131 = vadd.f32 %v4067, %v4099
    %v4132 = vadd.f32 %v4068, %v4100
    %v4133 = vadd.f32 %v4069, %v4101
    %v4134 = vadd.f32 %v4070, %v4102
    %v4135 = vadd.f32 %v4071, %v4103
    %v4136 = vadd.f32 %v4072, %v4104
    %v4137 = vadd.f32 %v4073, %v4105
    %v4138 = vadd.f32 %v4074, %v4106
    %v4139 = vadd.f32 %v4075, %v4107
    %v4140 = vadd.f32 %v4076, %v4108
    %v4141 = vadd.f32 %v4077, %v4109
    %v4142 = vadd.f32 %v4078, %v4110
    %v4143 = vadd.f32 %v4079, %v4111
    %v4144 = vadd.f32 %v4080, %v4112
    %v4145 = vadd.f32 %v4081, %v4113
    %v4146 = vadd.f32 %v4082, %v4114
    %v4147 = vadd.f32 %v4083, %v4115
    %v4148 = vadd.f32 %v4084, %v4116
    %v4149 = vadd.f32 %v4085, %v4117
    %v4150 = vadd.f32 %v4086, %v4118
    %v4151 = vadd.f32 %v4087, %v4119
    %v4152 = vadd.f32 %v4088, %v4120
    %v4153 = vadd.f32 %v4089, %v4121
    %v4154 = vadd.f32 %v4090, %v4122
    %v4155 = vadd.f32 %v4091, %v4123
    %v4156 = vadd.f32 %v4092, %v4124
    %v4157 = vld [vmem:[%s6] sm:$0xff]
    %v4158 = vld [vmem:[%s6 + $0x8] sm:$0xf]
    %v4159 = vld [vmem:[%s6 + $0xc] sm:$0xff]
    %v4160 = vld [vmem:[%s6 + $0x14] sm:$0xf]
    %v4161 = vld [vmem:[%s6 + $0x18] sm:$0xff]
    %v4162 = vld [vmem:[%s6 + $0x20] sm:$0xf]
    %v4163 = vld [vmem:[%s6 + $0x24] sm:$0xff]
    %v4164 = vld [vmem:[%s6 + $0x2c] sm:$0xf]
    %v4165 = vld [vmem:[%s6 + $0x30] sm:$0xff]
    %v4166 = vld [vmem:[%s6 + $0x38] sm:$0xf]
    %v4167 = vld [vmem:[%s6 + $0x3c] sm:$0xff]
    %v4168 = vld [vmem:[%s6 + $0x44] sm:$0xf]
    %v4169 = vld [vmem:[%s6 + $0x48] sm:$0xff]
    %v4170 = vld [vmem:[%s6 + $0x50] sm:$0xf]
    %v4171 = vld [vmem:[%s6 + $0x54] sm:$0xff]
    %v4172 = vld [vmem:[%s6 + $0x5c] sm:$0xf]
    %v4173 = vld [vmem:[%s7] sm:$0x7]
    %v4175 = vlaneseq
    %v4176 = vshrl.u32 %v4175, 7
    %v4177 = vsub.s32 0, %v4176
    %v4178 = vrot.slane %v4173, %v4177
    %v4179 = vlaneseq
    %v4180 = vshrl.u32 %v4179, 7
    %v4181 = vsub.s32 1, %v4180
    %v4182 = vrot.slane %v4173, %v4181
    %v4183 = vlaneseq
    %v4184 = vshrl.u32 %v4183, 7
    %v4185 = vsub.s32 2, %v4184
    %v4186 = vrot.slane %v4173, %v4185
    %v4206 = vunpack.c.l.b16 %v4157
    %v4207 = vunpack.c.h.b16 %v4157
    %v4208 = vunpack.c.l.b16 %v4158
    %v4209 = vunpack.c.l.b16 %v4159
    %v4210 = vunpack.c.h.b16 %v4159
    %v4211 = vunpack.c.l.b16 %v4160
    %v4212 = vunpack.c.l.b16 %v4161
    %v4213 = vunpack.c.h.b16 %v4161
    %v4214 = vunpack.c.l.b16 %v4162
    %v4215 = vunpack.c.l.b16 %v4163
    %v4216 = vunpack.c.h.b16 %v4163
    %v4217 = vunpack.c.l.b16 %v4164
    %v4218 = vunpack.c.l.b16 %v4165
    %v4219 = vunpack.c.h.b16 %v4165
    %v4220 = vunpack.c.l.b16 %v4166
    %v4221 = vunpack.c.l.b16 %v4167
    %v4222 = vunpack.c.h.b16 %v4167
    %v4223 = vunpack.c.l.b16 %v4168
    %v4224 = vunpack.c.l.b16 %v4169
    %v4225 = vunpack.c.h.b16 %v4169
    %v4226 = vunpack.c.l.b16 %v4170
    %v4227 = vunpack.c.l.b16 %v4171
    %v4228 = vunpack.c.h.b16 %v4171
    %v4229 = vunpack.c.l.b16 %v4172
    %v4230 = vpack.c.b16 %v4209, %v4206
    %v4231 = vpack.c.b16 %v4210, %v4207
    %v4232 = vpack.c.b16 %v4211, %v4208
    %v4233 = vpack.c.b16 %v4215, %v4212
    %v4234 = vpack.c.b16 %v4216, %v4213
    %v4235 = vpack.c.b16 %v4217, %v4214
    %v4236 = vpack.c.b16 %v4221, %v4218
    %v4237 = vpack.c.b16 %v4222, %v4219
    %v4238 = vpack.c.b16 %v4223, %v4220
    %v4239 = vpack.c.b16 %v4227, %v4224
    %v4240 = vpack.c.b16 %v4228, %v4225
    %v4241 = vpack.c.b16 %v4229, %v4226
    %4254 = vmatprep.subr.bf16.mxu0 %v4231
    %4255 = vmatpush1.bf16.msra.mxu0 %v4230
    %4256 = vmatprep.subr.bf16.mxu0 %v4234
    %4257 = vmatpush1.bf16.msra.mxu0 %v4233
    %4258 = vmatprep.subr.bf16.mxu0 %v4237
    %4259 = vmatpush1.bf16.msra.mxu0 %v4236
    %4260 = vmatprep.subr.bf16.mxu0 %v4240
    %4261 = vmatpush1.bf16.msra.mxu0 %v4239
    %4262 = vmatprep.subr.bf16.mxu0 0
    %4263 = vmatpush1.bf16.msra.mxu0 0
    %4264 = vmatprep.subr.bf16.mxu0 0
    %4265 = vmatpush1.bf16.msra.mxu0 0
    %4266 = vmatprep.subr.bf16.mxu0 0
    %4267 = vmatpush1.bf16.msra.mxu0 0
    %4268 = vmatprep.subr.bf16.mxu0 0
    %4269 = vmatpush1.bf16.msra.mxu0 0
    %4270 = vmatprep.subr.bf16.mxu0 0
    %4271 = vmatpush1.bf16.msra.mxu0 0
    %4272 = vmatprep.subr.bf16.mxu0 0
    %4273 = vmatpush1.bf16.msra.mxu0 0
    %4274 = vmatprep.subr.bf16.mxu0 0
    %4275 = vmatpush1.bf16.msra.mxu0 0
    %4276 = vmatprep.subr.bf16.mxu0 0
    %4277 = vmatpush1.bf16.msra.mxu0 0
    %4278 = vmatprep.subr.bf16.mxu0 0
    %4279 = vmatpush1.bf16.msra.mxu0 0
    %4280 = vmatprep.subr.bf16.mxu0 0
    %4281 = vmatpush1.bf16.msra.mxu0 0
    %4282 = vmatprep.subr.bf16.mxu0 0
    %4283 = vmatpush1.bf16.msra.mxu0 0
    %4284 = vmatprep.subr.bf16.mxu0 0
    %4285 = vmatpush1.bf16.msra.mxu0 0
    %4286 = vmatprep.mubr.bf16.mxu0 0
    %4287 = vmatmul.mubr.bf16.gmra.mrb[0].mxu0 %v2250
    %v4288 = vpop.f32.mrb[0].mxu0
    %v4289 = vadd.f32 %v4178, %v4288
    %v4290 = vpop.f32.mrb[0].mxu0
    %v4291 = vadd.f32 %v4182, %v4290
    %v4292 = vpop.f32.mrb[0].mxu0
    %v4293 = vadd.f32 %v4178, %v4292
    %v4294 = vpop.f32.mrb[0].mxu0
    %v4295 = vadd.f32 %v4182, %v4294
    %4296 = vmatprep.mubr.bf16.mxu0 0
    %4297 = vmatmul.mubr.bf16.gmra.mrb[0].mxu0 %v2253
    %v4298 = vpop.f32.mrb[0].mxu0
    %v4299 = vadd.f32 %v4178, %v4298
    %v4300 = vpop.f32.mrb[0].mxu0
    %v4301 = vadd.f32 %v4182, %v4300
    %v4302 = vpop.f32.mrb[0].mxu0
    %v4303 = vadd.f32 %v4178, %v4302
    %v4304 = vpop.f32.mrb[0].mxu0
    %v4305 = vadd.f32 %v4182, %v4304
    %4306 = vmatprep.mubr.bf16.mxu0 0
    %4307 = vmatmul.mubr.bf16.gmra.mrb[0].mxu0 %v2256
    %v4308 = vpop.f32.mrb[0].mxu0
    %v4309 = vadd.f32 %v4178, %v4308
    %v4310 = vpop.f32.mrb[0].mxu0
    %v4311 = vadd.f32 %v4182, %v4310
    %v4312 = vpop.f32.mrb[0].mxu0
    %v4313 = vadd.f32 %v4178, %v4312
    %v4314 = vpop.f32.mrb[0].mxu0
    %v4315 = vadd.f32 %v4182, %v4314
    %4316 = vmatprep.mubr.bf16.mxu0 0
    %4317 = vmatmul.mubr.bf16.gmra.mrb[0].mxu0 %v2259
    %v4318 = vpop.f32.mrb[0].mxu0
    %v4319 = vadd.f32 %v4178, %v4318
    %v4320 = vpop.f32.mrb[0].mxu0
    %v4321 = vadd.f32 %v4182, %v4320
    %v4322 = vpop.f32.mrb[0].mxu0
    %v4323 = vadd.f32 %v4178, %v4322
    %v4324 = vpop.f32.mrb[0].mxu0
    %v4325 = vadd.f32 %v4182, %v4324
    %4326 = vmatprep.mubr.bf16.mxu0 0
    %4327 = vmatmul.mubr.bf16.gmra.mrb[0].mxu0 %v2262
    %v4328 = vpop.f32.mrb[0].mxu0
    %v4329 = vadd.f32 %v4178, %v4328
    %v4330 = vpop.f32.mrb[0].mxu0
    %v4331 = vadd.f32 %v4182, %v4330
    %v4332 = vpop.f32.mrb[0].mxu0
    %v4333 = vadd.f32 %v4178, %v4332
    %v4334 = vpop.f32.mrb[0].mxu0
    %v4335 = vadd.f32 %v4182, %v4334
    %4336 = vmatprep.mubr.bf16.mxu0 0
    %4337 = vmatmul.mubr.bf16.gmra.mrb[0].mxu0 %v2265
    %v4338 = vpop.f32.mrb[0].mxu0
    %v4339 = vadd.f32 %v4178, %v4338
    %v4340 = vpop.f32.mrb[0].mxu0
    %v4341 = vadd.f32 %v4182, %v4340
    %v4342 = vpop.f32.mrb[0].mxu0
    %v4343 = vadd.f32 %v4178, %v4342
    %v4344 = vpop.f32.mrb[0].mxu0
    %v4345 = vadd.f32 %v4182, %v4344
    %4346 = vmatprep.mubr.bf16.mxu0 0
    %4347 = vmatmul.mubr.bf16.gmra.mrb[0].mxu0 %v2268
    %v4348 = vpop.f32.mrb[0].mxu0
    %v4349 = vadd.f32 %v4178, %v4348
    %v4350 = vpop.f32.mrb[0].mxu0
    %v4351 = vadd.f32 %v4182, %v4350
    %v4352 = vpop.f32.mrb[0].mxu0
    %v4353 = vadd.f32 %v4178, %v4352
    %v4354 = vpop.f32.mrb[0].mxu0
    %v4355 = vadd.f32 %v4182, %v4354
    %4356 = vmatprep.mubr.bf16.mxu0 0
    %4357 = vmatmul.mubr.bf16.gmra.mrb[0].mxu0 %v2271
    %v4358 = vpop.f32.mrb[0].mxu0
    %v4359 = vadd.f32 %v4178, %v4358
    %v4360 = vpop.f32.mrb[0].mxu0
    %v4361 = vadd.f32 %v4182, %v4360
    %v4362 = vpop.f32.mrb[0].mxu0
    %v4363 = vadd.f32 %v4178, %v4362
    %v4364 = vpop.f32.mrb[0].mxu0
    %v4365 = vadd.f32 %v4182, %v4364
    %4366 = vmatprep.mubr.bf16.mxu0 0
    %4367 = vmatmul.mubr.bf16.gmra.mrb[0].mxu0 %v2274
    %v4368 = vpop.f32.mrb[0].mxu0
    %v4369 = vadd.f32 %v4178, %v4368
    %v4370 = vpop.f32.mrb[0].mxu0
    %v4371 = vadd.f32 %v4182, %v4370
    %v4372 = vpop.f32.mrb[0].mxu0
    %v4373 = vadd.f32 %v4178, %v4372
    %v4374 = vpop.f32.mrb[0].mxu0
    %v4375 = vadd.f32 %v4182, %v4374
    %4376 = vmatprep.mubr.bf16.mxu0 0
    %4377 = vmatmul.mubr.bf16.gmra.mrb[0].mxu0 %v2277
    %v4378 = vpop.f32.mrb[0].mxu0
    %v4379 = vadd.f32 %v4178, %v4378
    %v4380 = vpop.f32.mrb[0].mxu0
    %v4381 = vadd.f32 %v4182, %v4380
    %v4382 = vpop.f32.mrb[0].mxu0
    %v4383 = vadd.f32 %v4178, %v4382
    %v4384 = vpop.f32.mrb[0].mxu0
    %v4385 = vadd.f32 %v4182, %v4384
    %4386 = vmatprep.mubr.bf16.mxu0 0
    %4387 = vmatmul.mubr.bf16.gmra.mrb[0].mxu0 %v2280
    %v4388 = vpop.f32.mrb[0].mxu0
    %v4389 = vadd.f32 %v4178, %v4388
    %v4390 = vpop.f32.mrb[0].mxu0
    %v4391 = vadd.f32 %v4182, %v4390
    %v4392 = vpop.f32.mrb[0].mxu0
    %v4393 = vadd.f32 %v4178, %v4392
    %v4394 = vpop.f32.mrb[0].mxu0
    %v4395 = vadd.f32 %v4182, %v4394
    %4396 = vmatprep.mubr.bf16.mxu0 0
    %4397 = vmatmul.mubr.bf16.gmra.mrb[0].mxu0 %v2283
    %v4398 = vpop.f32.mrb[0].mxu0
    %v4399 = vadd.f32 %v4178, %v4398
    %v4400 = vpop.f32.mrb[0].mxu0
    %v4401 = vadd.f32 %v4182, %v4400
    %v4402 = vpop.f32.mrb[0].mxu0
    %v4403 = vadd.f32 %v4178, %v4402
    %v4404 = vpop.f32.mrb[0].mxu0
    %v4405 = vadd.f32 %v4182, %v4404
    %4406 = vmatprep.mubr.bf16.mxu0 0
    %4407 = vmatmul.mubr.bf16.gmra.mrb[0].mxu0 %v2286
    %v4408 = vpop.f32.mrb[0].mxu0
    %v4409 = vadd.f32 %v4178, %v4408
    %v4410 = vpop.f32.mrb[0].mxu0
    %v4411 = vadd.f32 %v4182, %v4410
    %v4412 = vpop.f32.mrb[0].mxu0
    %v4413 = vadd.f32 %v4178, %v4412
    %v4414 = vpop.f32.mrb[0].mxu0
    %v4415 = vadd.f32 %v4182, %v4414
    %4416 = vmatprep.mubr.bf16.mxu0 0
    %4417 = vmatmul.mubr.bf16.gmra.mrb[0].mxu0 %v2289
    %v4418 = vpop.f32.mrb[0].mxu0
    %v4419 = vadd.f32 %v4178, %v4418
    %v4420 = vpop.f32.mrb[0].mxu0
    %v4421 = vadd.f32 %v4182, %v4420
    %v4422 = vpop.f32.mrb[0].mxu0
    %v4423 = vadd.f32 %v4178, %v4422
    %v4424 = vpop.f32.mrb[0].mxu0
    %v4425 = vadd.f32 %v4182, %v4424
    %4426 = vmatprep.mubr.bf16.mxu0 0
    %4427 = vmatmul.mubr.bf16.gmra.mrb[0].mxu0 %v2292
    %v4428 = vpop.f32.mrb[0].mxu0
    %v4429 = vadd.f32 %v4178, %v4428
    %v4430 = vpop.f32.mrb[0].mxu0
    %v4431 = vadd.f32 %v4182, %v4430
    %v4432 = vpop.f32.mrb[0].mxu0
    %v4433 = vadd.f32 %v4178, %v4432
    %v4434 = vpop.f32.mrb[0].mxu0
    %v4435 = vadd.f32 %v4182, %v4434
    %4436 = vmatprep.mubr.bf16.mxu0 0
    %4437 = vmatmul.mubr.bf16.gmra.mrb[0].mxu0 %v2295
    %v4438 = vpop.f32.mrb[0].mxu0
    %v4439 = vadd.f32 %v4178, %v4438
    %v4440 = vpop.f32.mrb[0].mxu0
    %v4441 = vadd.f32 %v4182, %v4440
    %v4442 = vpop.f32.mrb[0].mxu0
    %v4443 = vadd.f32 %v4178, %v4442
    %v4444 = vpop.f32.mrb[0].mxu0
    %v4445 = vadd.f32 %v4182, %v4444
    %4446 = vdwg.mxu0
    %4447 = vmatprep.subr.bf16.mxu0 0
    %4448 = vmatpush1.bf16.msra.mxu0 %v4232
    %4449 = vmatprep.subr.bf16.mxu0 0
    %4450 = vmatpush1.bf16.msra.mxu0 %v4235
    %4451 = vmatprep.subr.bf16.mxu0 0
    %4452 = vmatpush1.bf16.msra.mxu0 %v4238
    %4453 = vmatprep.subr.bf16.mxu0 0
    %4454 = vmatpush1.bf16.msra.mxu0 %v4241
    %4455 = vmatprep.subr.bf16.mxu0 0
    %4456 = vmatpush1.bf16.msra.mxu0 0
    %4457 = vmatprep.subr.bf16.mxu0 0
    %4458 = vmatpush1.bf16.msra.mxu0 0
    %4459 = vmatprep.subr.bf16.mxu0 0
    %4460 = vmatpush1.bf16.msra.mxu0 0
    %4461 = vmatprep.subr.bf16.mxu0 0
    %4462 = vmatpush1.bf16.msra.mxu0 0
    %4463 = vmatprep.subr.bf16.mxu0 0
    %4464 = vmatpush1.bf16.msra.mxu0 0
    %4465 = vmatprep.subr.bf16.mxu0 0
    %4466 = vmatpush1.bf16.msra.mxu0 0
    %4467 = vmatprep.subr.bf16.mxu0 0
    %4468 = vmatpush1.bf16.msra.mxu0 0
    %4469 = vmatprep.subr.bf16.mxu0 0
    %4470 = vmatpush1.bf16.msra.mxu0 0
    %4471 = vmatprep.subr.bf16.mxu0 0
    %4472 = vmatpush1.bf16.msra.mxu0 0
    %4473 = vmatprep.subr.bf16.mxu0 0
    %4474 = vmatpush1.bf16.msra.mxu0 0
    %4475 = vmatprep.subr.bf16.mxu0 0
    %4476 = vmatpush1.bf16.msra.mxu0 0
    %4477 = vmatprep.subr.bf16.mxu0 0
    %4478 = vmatpush1.bf16.msra.mxu0 0
    %4479 = vmatprep.mubr.bf16.mxu0 0
    %4480 = vmatmul.mubr.bf16.gmra.mrb[0].mxu0 %v2250
    %v4481 = vpop.f32.mrb[0].mxu0
    %v4482 = vadd.f32 %v4186, %v4481
    %v4483 = vpop.f32.mrb[0].mxu0
    %v4484 = vpop.f32.mrb[0].mxu0
    %v4485 = vadd.f32 %v4186, %v4484
    %v4486 = vpop.f32.mrb[0].mxu0
    %4487 = vmatprep.mubr.bf16.mxu0 0
    %4488 = vmatmul.mubr.bf16.gmra.mrb[0].mxu0 %v2253
    %v4489 = vpop.f32.mrb[0].mxu0
    %v4490 = vadd.f32 %v4186, %v4489
    %v4491 = vpop.f32.mrb[0].mxu0
    %v4492 = vpop.f32.mrb[0].mxu0
    %v4493 = vadd.f32 %v4186, %v4492
    %v4494 = vpop.f32.mrb[0].mxu0
    %4495 = vmatprep.mubr.bf16.mxu0 0
    %4496 = vmatmul.mubr.bf16.gmra.mrb[0].mxu0 %v2256
    %v4497 = vpop.f32.mrb[0].mxu0
    %v4498 = vadd.f32 %v4186, %v4497
    %v4499 = vpop.f32.mrb[0].mxu0
    %v4500 = vpop.f32.mrb[0].mxu0
    %v4501 = vadd.f32 %v4186, %v4500
    %v4502 = vpop.f32.mrb[0].mxu0
    %4503 = vmatprep.mubr.bf16.mxu0 0
    %4504 = vmatmul.mubr.bf16.gmra.mrb[0].mxu0 %v2259
    %v4505 = vpop.f32.mrb[0].mxu0
    %v4506 = vadd.f32 %v4186, %v4505
    %v4507 = vpop.f32.mrb[0].mxu0
    %v4508 = vpop.f32.mrb[0].mxu0
    %v4509 = vadd.f32 %v4186, %v4508
    %v4510 = vpop.f32.mrb[0].mxu0
    %4511 = vmatprep.mubr.bf16.mxu0 0
    %4512 = vmatmul.mubr.bf16.gmra.mrb[0].mxu0 %v2262
    %v4513 = vpop.f32.mrb[0].mxu0
    %v4514 = vadd.f32 %v4186, %v4513
    %v4515 = vpop.f32.mrb[0].mxu0
    %v4516 = vpop.f32.mrb[0].mxu0
    %v4517 = vadd.f32 %v4186, %v4516
    %v4518 = vpop.f32.mrb[0].mxu0
    %4519 = vmatprep.mubr.bf16.mxu0 0
    %4520 = vmatmul.mubr.bf16.gmra.mrb[0].mxu0 %v2265
    %v4521 = vpop.f32.mrb[0].mxu0
    %v4522 = vadd.f32 %v4186, %v4521
    %v4523 = vpop.f32.mrb[0].mxu0
    %v4524 = vpop.f32.mrb[0].mxu0
    %v4525 = vadd.f32 %v4186, %v4524
    %v4526 = vpop.f32.mrb[0].mxu0
    %4527 = vmatprep.mubr.bf16.mxu0 0
    %4528 = vmatmul.mubr.bf16.gmra.mrb[0].mxu0 %v2268
    %v4529 = vpop.f32.mrb[0].mxu0
    %v4530 = vadd.f32 %v4186, %v4529
    %v4531 = vpop.f32.mrb[0].mxu0
    %v4532 = vpop.f32.mrb[0].mxu0
    %v4533 = vadd.f32 %v4186, %v4532
    %v4534 = vpop.f32.mrb[0].mxu0
    %4535 = vmatprep.mubr.bf16.mxu0 0
    %4536 = vmatmul.mubr.bf16.gmra.mrb[0].mxu0 %v2271
    %v4537 = vpop.f32.mrb[0].mxu0
    %v4538 = vadd.f32 %v4186, %v4537
    %v4539 = vpop.f32.mrb[0].mxu0
    %v4540 = vpop.f32.mrb[0].mxu0
    %v4541 = vadd.f32 %v4186, %v4540
    %v4542 = vpop.f32.mrb[0].mxu0
    %4543 = vmatprep.mubr.bf16.mxu0 0
    %4544 = vmatmul.mubr.bf16.gmra.mrb[0].mxu0 %v2274
    %v4545 = vpop.f32.mrb[0].mxu0
    %v4546 = vadd.f32 %v4186, %v4545
    %v4547 = vpop.f32.mrb[0].mxu0
    %v4548 = vpop.f32.mrb[0].mxu0
    %v4549 = vadd.f32 %v4186, %v4548
    %v4550 = vpop.f32.mrb[0].mxu0
    %4551 = vmatprep.mubr.bf16.mxu0 0
    %4552 = vmatmul.mubr.bf16.gmra.mrb[0].mxu0 %v2277
    %v4553 = vpop.f32.mrb[0].mxu0
    %v4554 = vadd.f32 %v4186, %v4553
    %v4555 = vpop.f32.mrb[0].mxu0
    %v4556 = vpop.f32.mrb[0].mxu0
    %v4557 = vadd.f32 %v4186, %v4556
    %v4558 = vpop.f32.mrb[0].mxu0
    %4559 = vmatprep.mubr.bf16.mxu0 0
    %4560 = vmatmul.mubr.bf16.gmra.mrb[0].mxu0 %v2280
    %v4561 = vpop.f32.mrb[0].mxu0
    %v4562 = vadd.f32 %v4186, %v4561
    %v4563 = vpop.f32.mrb[0].mxu0
    %v4564 = vpop.f32.mrb[0].mxu0
    %v4565 = vadd.f32 %v4186, %v4564
    %v4566 = vpop.f32.mrb[0].mxu0
    %4567 = vmatprep.mubr.bf16.mxu0 0
    %4568 = vmatmul.mubr.bf16.gmra.mrb[0].mxu0 %v2283
    %v4569 = vpop.f32.mrb[0].mxu0
    %v4570 = vadd.f32 %v4186, %v4569
    %v4571 = vpop.f32.mrb[0].mxu0
    %v4572 = vpop.f32.mrb[0].mxu0
    %v4573 = vadd.f32 %v4186, %v4572
    %v4574 = vpop.f32.mrb[0].mxu0
    %4575 = vmatprep.mubr.bf16.mxu0 0
    %4576 = vmatmul.mubr.bf16.gmra.mrb[0].mxu0 %v2286
    %v4577 = vpop.f32.mrb[0].mxu0
    %v4578 = vadd.f32 %v4186, %v4577
    %v4579 = vpop.f32.mrb[0].mxu0
    %v4580 = vpop.f32.mrb[0].mxu0
    %v4581 = vadd.f32 %v4186, %v4580
    %v4582 = vpop.f32.mrb[0].mxu0
    %4583 = vmatprep.mubr.bf16.mxu0 0
    %4584 = vmatmul.mubr.bf16.gmra.mrb[0].mxu0 %v2289
    %v4585 = vpop.f32.mrb[0].mxu0
    %v4586 = vadd.f32 %v4186, %v4585
    %v4587 = vpop.f32.mrb[0].mxu0
    %v4588 = vpop.f32.mrb[0].mxu0
    %v4589 = vadd.f32 %v4186, %v4588
    %v4590 = vpop.f32.mrb[0].mxu0
    %4591 = vmatprep.mubr.bf16.mxu0 0
    %4592 = vmatmul.mubr.bf16.gmra.mrb[0].mxu0 %v2292
    %v4593 = vpop.f32.mrb[0].mxu0
    %v4594 = vadd.f32 %v4186, %v4593
    %v4595 = vpop.f32.mrb[0].mxu0
    %v4596 = vpop.f32.mrb[0].mxu0
    %v4597 = vadd.f32 %v4186, %v4596
    %v4598 = vpop.f32.mrb[0].mxu0
    %4599 = vmatprep.mubr.bf16.mxu0 0
    %4600 = vmatmul.mubr.bf16.gmra.mrb[0].mxu0 %v2295
    %v4601 = vpop.f32.mrb[0].mxu0
    %v4602 = vadd.f32 %v4186, %v4601
    %v4603 = vpop.f32.mrb[0].mxu0
    %v4604 = vpop.f32.mrb[0].mxu0
    %v4605 = vadd.f32 %v4186, %v4604
    %v4606 = vpop.f32.mrb[0].mxu0
    %4607 = vdwg.mxu0
    %v4608 = vpack.c.bf16 %v4126, %v4125
    %v4609 = vpack.c.bf16 %v4128, %v4127
    %v4610 = vpack.c.bf16 %v4130, %v4129
    %v4611 = vpack.c.bf16 %v4132, %v4131
    %v4612 = vpack.c.bf16 %v4134, %v4133
    %v4613 = vpack.c.bf16 %v4136, %v4135
    %v4614 = vpack.c.bf16 %v4138, %v4137
    %v4615 = vpack.c.bf16 %v4140, %v4139
    %v4616 = vpack.c.bf16 %v4142, %v4141
    %v4617 = vpack.c.bf16 %v4144, %v4143
    %v4618 = vpack.c.bf16 %v4146, %v4145
    %v4619 = vpack.c.bf16 %v4148, %v4147
    %v4620 = vpack.c.bf16 %v4150, %v4149
    %v4621 = vpack.c.bf16 %v4152, %v4151
    %v4622 = vpack.c.bf16 %v4154, %v4153
    %v4623 = vpack.c.bf16 %v4156, %v4155
    %v4624 = vld [vmem:[#allocation5] sm:$0x77]
    %v4625 = vld [vmem:[#allocation5 + $0x8] sm:$0x7]
    %v4628 = vunpack.c.l.b16 %v4624
    %v4629 = vunpack.c.h.b16 %v4624
    %v4630 = vunpack.c.l.b16 %v4625
    %v4631 = vpack.c.b16 %v4628, %v4628
    %v4632 = vpack.c.b16 %v4629, %v4629
    %v4633 = vpack.c.b16 %v4630, %v4630
    %v4635 = vsel %vm2460, %v4608, 0
    %v4638 = vsel %vm2460, %v4609, 0
    %v4641 = vsel %vm2460, %v4610, 0
    %v4644 = vsel %vm2460, %v4611, 0
    %v4647 = vsel %vm2460, %v4612, 0
    %v4650 = vsel %vm2460, %v4613, 0
    %v4653 = vsel %vm2460, %v4614, 0
    %v4656 = vsel %vm2460, %v4615, 0
    %v4659 = vsel %vm2460, %v4616, 0
    %v4662 = vsel %vm2460, %v4617, 0
    %v4665 = vsel %vm2460, %v4618, 0
    %v4668 = vsel %vm2460, %v4619, 0
    %v4671 = vsel %vm2460, %v4620, 0
    %v4674 = vsel %vm2460, %v4621, 0
    %v4677 = vsel %vm2460, %v4622, 0
    %v4680 = vsel %vm2460, %v4623, 0
    %vm4682 = vcmask 1042432
    %v4684 = vsel %vm4682, %v4631, 0
    %v4687 = vsel %vm4682, %v4632, 0
    %v4690 = vsel %vm4682, %v4633, 0
    %4692 = vmatprep.subr.bf16.mxu0 %v4687
    %4693 = vmatpush1.bf16.msra.mxu0 %v4684
    %4694 = vmatprep.subr.bf16.mxu0 0
    %4695 = vmatpush1.bf16.msra.mxu0 0
    %4696 = vmatprep.subr.bf16.mxu0 0
    %4697 = vmatpush1.bf16.msra.mxu0 0
    %4698 = vmatprep.subr.bf16.mxu0 0
    %4699 = vmatpush1.bf16.msra.mxu0 0
    %4700 = vmatprep.subr.bf16.mxu0 0
    %4701 = vmatpush1.bf16.msra.mxu0 0
    %4702 = vmatprep.subr.bf16.mxu0 0
    %4703 = vmatpush1.bf16.msra.mxu0 0
    %4704 = vmatprep.subr.bf16.mxu0 0
    %4705 = vmatpush1.bf16.msra.mxu0 0
    %4706 = vmatprep.subr.bf16.mxu0 0
    %4707 = vmatpush1.bf16.msra.mxu0 0
    %4708 = vmatprep.subr.bf16.mxu0 0
    %4709 = vmatpush1.bf16.msra.mxu0 0
    %4710 = vmatprep.subr.bf16.mxu0 0
    %4711 = vmatpush1.bf16.msra.mxu0 0
    %4712 = vmatprep.subr.bf16.mxu0 0
    %4713 = vmatpush1.bf16.msra.mxu0 0
    %4714 = vmatprep.subr.bf16.mxu0 0
    %4715 = vmatpush1.bf16.msra.mxu0 0
    %4716 = vmatprep.subr.bf16.mxu0 0
    %4717 = vmatpush1.bf16.msra.mxu0 0
    %4718 = vmatprep.subr.bf16.mxu0 0
    %4719 = vmatpush1.bf16.msra.mxu0 0
    %4720 = vmatprep.subr.bf16.mxu0 0
    %4721 = vmatpush1.bf16.msra.mxu0 0
    %4722 = vmatprep.subr.bf16.mxu0 0
    %4723 = vmatpush1.bf16.msra.mxu0 0
    %4724 = vmatprep.mubr.bf16.mxu0 0
    %4725 = vmatmul.mubr.bf16.gmra.mrb[0].mxu0 %v4635
    %v4726 = vpop.f32.mrb[0].mxu0
    %v4727 = vadd.f32 0.0, %v4726
    %v4728 = vpop.f32.mrb[0].mxu0
    %v4729 = vadd.f32 0.0, %v4728
    %v4730 = vpop.f32.mrb[0].mxu0
    %v4731 = vadd.f32 0.0, %v4730
    %v4732 = vpop.f32.mrb[0].mxu0
    %v4733 = vadd.f32 0.0, %v4732
    %4734 = vmatprep.mubr.bf16.mxu0 0
    %4735 = vmatmul.mubr.bf16.gmra.mrb[0].mxu0 %v4638
    %v4736 = vpop.f32.mrb[0].mxu0
    %v4737 = vadd.f32 0.0, %v4736
    %v4738 = vpop.f32.mrb[0].mxu0
    %v4739 = vadd.f32 0.0, %v4738
    %v4740 = vpop.f32.mrb[0].mxu0
    %v4741 = vadd.f32 0.0, %v4740
    %v4742 = vpop.f32.mrb[0].mxu0
    %v4743 = vadd.f32 0.0, %v4742
    %4744 = vmatprep.mubr.bf16.mxu0 0
    %4745 = vmatmul.mubr.bf16.gmra.mrb[0].mxu0 %v4641
    %v4746 = vpop.f32.mrb[0].mxu0
    %v4747 = vadd.f32 0.0, %v4746
    %v4748 = vpop.f32.mrb[0].mxu0
    %v4749 = vadd.f32 0.0, %v4748
    %v4750 = vpop.f32.mrb[0].mxu0
    %v4751 = vadd.f32 0.0, %v4750
    %v4752 = vpop.f32.mrb[0].mxu0
    %v4753 = vadd.f32 0.0, %v4752
    %4754 = vmatprep.mubr.bf16.mxu0 0
    %4755 = vmatmul.mubr.bf16.gmra.mrb[0].mxu0 %v4644
    %v4756 = vpop.f32.mrb[0].mxu0
    %v4757 = vadd.f32 0.0, %v4756
    %v4758 = vpop.f32.mrb[0].mxu0
    %v4759 = vadd.f32 0.0, %v4758
    %v4760 = vpop.f32.mrb[0].mxu0
    %v4761 = vadd.f32 0.0, %v4760
    %v4762 = vpop.f32.mrb[0].mxu0
    %v4763 = vadd.f32 0.0, %v4762
    %4764 = vmatprep.mubr.bf16.mxu0 0
    %4765 = vmatmul.mubr.bf16.gmra.mrb[0].mxu0 %v4647
    %v4766 = vpop.f32.mrb[0].mxu0
    %v4767 = vadd.f32 0.0, %v4766
    %v4768 = vpop.f32.mrb[0].mxu0
    %v4769 = vadd.f32 0.0, %v4768
    %v4770 = vpop.f32.mrb[0].mxu0
    %v4771 = vadd.f32 0.0, %v4770
    %v4772 = vpop.f32.mrb[0].mxu0
    %v4773 = vadd.f32 0.0, %v4772
    %4774 = vmatprep.mubr.bf16.mxu0 0
    %4775 = vmatmul.mubr.bf16.gmra.mrb[0].mxu0 %v4650
    %v4776 = vpop.f32.mrb[0].mxu0
    %v4777 = vadd.f32 0.0, %v4776
    %v4778 = vpop.f32.mrb[0].mxu0
    %v4779 = vadd.f32 0.0, %v4778
    %v4780 = vpop.f32.mrb[0].mxu0
    %v4781 = vadd.f32 0.0, %v4780
    %v4782 = vpop.f32.mrb[0].mxu0
    %v4783 = vadd.f32 0.0, %v4782
    %4784 = vmatprep.mubr.bf16.mxu0 0
    %4785 = vmatmul.mubr.bf16.gmra.mrb[0].mxu0 %v4653
    %v4786 = vpop.f32.mrb[0].mxu0
    %v4787 = vadd.f32 0.0, %v4786
    %v4788 = vpop.f32.mrb[0].mxu0
    %v4789 = vadd.f32 0.0, %v4788
    %v4790 = vpop.f32.mrb[0].mxu0
    %v4791 = vadd.f32 0.0, %v4790
    %v4792 = vpop.f32.mrb[0].mxu0
    %v4793 = vadd.f32 0.0, %v4792
    %4794 = vmatprep.mubr.bf16.mxu0 0
    %4795 = vmatmul.mubr.bf16.gmra.mrb[0].mxu0 %v4656
    %v4796 = vpop.f32.mrb[0].mxu0
    %v4797 = vadd.f32 0.0, %v4796
    %v4798 = vpop.f32.mrb[0].mxu0
    %v4799 = vadd.f32 0.0, %v4798
    %v4800 = vpop.f32.mrb[0].mxu0
    %v4801 = vadd.f32 0.0, %v4800
    %v4802 = vpop.f32.mrb[0].mxu0
    %v4803 = vadd.f32 0.0, %v4802
    %4804 = vmatprep.mubr.bf16.mxu0 0
    %4805 = vmatmul.mubr.bf16.gmra.mrb[0].mxu0 %v4659
    %v4806 = vpop.f32.mrb[0].mxu0
    %v4807 = vadd.f32 0.0, %v4806
    %v4808 = vpop.f32.mrb[0].mxu0
    %v4809 = vadd.f32 0.0, %v4808
    %v4810 = vpop.f32.mrb[0].mxu0
    %v4811 = vadd.f32 0.0, %v4810
    %v4812 = vpop.f32.mrb[0].mxu0
    %v4813 = vadd.f32 0.0, %v4812
    %4814 = vmatprep.mubr.bf16.mxu0 0
    %4815 = vmatmul.mubr.bf16.gmra.mrb[0].mxu0 %v4662
    %v4816 = vpop.f32.mrb[0].mxu0
    %v4817 = vadd.f32 0.0, %v4816
    %v4818 = vpop.f32.mrb[0].mxu0
    %v4819 = vadd.f32 0.0, %v4818
    %v4820 = vpop.f32.mrb[0].mxu0
    %v4821 = vadd.f32 0.0, %v4820
    %v4822 = vpop.f32.mrb[0].mxu0
    %v4823 = vadd.f32 0.0, %v4822
    %4824 = vmatprep.mubr.bf16.mxu0 0
    %4825 = vmatmul.mubr.bf16.gmra.mrb[0].mxu0 %v4665
    %v4826 = vpop.f32.mrb[0].mxu0
    %v4827 = vadd.f32 0.0, %v4826
    %v4828 = vpop.f32.mrb[0].mxu0
    %v4829 = vadd.f32 0.0, %v4828
    %v4830 = vpop.f32.mrb[0].mxu0
    %v4831 = vadd.f32 0.0, %v4830
    %v4832 = vpop.f32.mrb[0].mxu0
    %v4833 = vadd.f32 0.0, %v4832
    %4834 = vmatprep.mubr.bf16.mxu0 0
    %4835 = vmatmul.mubr.bf16.gmra.mrb[0].mxu0 %v4668
    %v4836 = vpop.f32.mrb[0].mxu0
    %v4837 = vadd.f32 0.0, %v4836
    %v4838 = vpop.f32.mrb[0].mxu0
    %v4839 = vadd.f32 0.0, %v4838
    %v4840 = vpop.f32.mrb[0].mxu0
    %v4841 = vadd.f32 0.0, %v4840
    %v4842 = vpop.f32.mrb[0].mxu0
    %v4843 = vadd.f32 0.0, %v4842
    %4844 = vmatprep.mubr.bf16.mxu0 0
    %4845 = vmatmul.mubr.bf16.gmra.mrb[0].mxu0 %v4671
    %v4846 = vpop.f32.mrb[0].mxu0
    %v4847 = vadd.f32 0.0, %v4846
    %v4848 = vpop.f32.mrb[0].mxu0
    %v4849 = vadd.f32 0.0, %v4848
    %v4850 = vpop.f32.mrb[0].mxu0
    %v4851 = vadd.f32 0.0, %v4850
    %v4852 = vpop.f32.mrb[0].mxu0
    %v4853 = vadd.f32 0.0, %v4852
    %4854 = vmatprep.mubr.bf16.mxu0 0
    %4855 = vmatmul.mubr.bf16.gmra.mrb[0].mxu0 %v4674
    %v4856 = vpop.f32.mrb[0].mxu0
    %v4857 = vadd.f32 0.0, %v4856
    %v4858 = vpop.f32.mrb[0].mxu0
    %v4859 = vadd.f32 0.0, %v4858
    %v4860 = vpop.f32.mrb[0].mxu0
    %v4861 = vadd.f32 0.0, %v4860
    %v4862 = vpop.f32.mrb[0].mxu0
    %v4863 = vadd.f32 0.0, %v4862
    %4864 = vmatprep.mubr.bf16.mxu0 0
    %4865 = vmatmul.mubr.bf16.gmra.mrb[0].mxu0 %v4677
    %v4866 = vpop.f32.mrb[0].mxu0
    %v4867 = vadd.f32 0.0, %v4866
    %v4868 = vpop.f32.mrb[0].mxu0
    %v4869 = vadd.f32 0.0, %v4868
    %v4870 = vpop.f32.mrb[0].mxu0
    %v4871 = vadd.f32 0.0, %v4870
    %v4872 = vpop.f32.mrb[0].mxu0
    %v4873 = vadd.f32 0.0, %v4872
    %4874 = vmatprep.mubr.bf16.mxu0 0
    %4875 = vmatmul.mubr.bf16.gmra.mrb[0].mxu0 %v4680
    %v4876 = vpop.f32.mrb[0].mxu0
    %v4877 = vadd.f32 0.0, %v4876
    %v4878 = vpop.f32.mrb[0].mxu0
    %v4879 = vadd.f32 0.0, %v4878
    %v4880 = vpop.f32.mrb[0].mxu0
    %v4881 = vadd.f32 0.0, %v4880
    %v4882 = vpop.f32.mrb[0].mxu0
    %v4883 = vadd.f32 0.0, %v4882
    %4884 = vdwg.mxu0
    %4885 = vmatprep.subr.bf16.mxu0 0
    %4886 = vmatpush1.bf16.msra.mxu0 %v4690
    %4887 = vmatprep.subr.bf16.mxu0 0
    %4888 = vmatpush1.bf16.msra.mxu0 0
    %4889 = vmatprep.subr.bf16.mxu0 0
    %4890 = vmatpush1.bf16.msra.mxu0 0
    %4891 = vmatprep.subr.bf16.mxu0 0
    %4892 = vmatpush1.bf16.msra.mxu0 0
    %4893 = vmatprep.subr.bf16.mxu0 0
    %4894 = vmatpush1.bf16.msra.mxu0 0
    %4895 = vmatprep.subr.bf16.mxu0 0
    %4896 = vmatpush1.bf16.msra.mxu0 0
    %4897 = vmatprep.subr.bf16.mxu0 0
    %4898 = vmatpush1.bf16.msra.mxu0 0
    %4899 = vmatprep.subr.bf16.mxu0 0
    %4900 = vmatpush1.bf16.msra.mxu0 0
    %4901 = vmatprep.subr.bf16.mxu0 0
    %4902 = vmatpush1.bf16.msra.mxu0 0
    %4903 = vmatprep.subr.bf16.mxu0 0
    %4904 = vmatpush1.bf16.msra.mxu0 0
    %4905 = vmatprep.subr.bf16.mxu0 0
    %4906 = vmatpush1.bf16.msra.mxu0 0
    %4907 = vmatprep.subr.bf16.mxu0 0
    %4908 = vmatpush1.bf16.msra.mxu0 0
    %4909 = vmatprep.subr.bf16.mxu0 0
    %4910 = vmatpush1.bf16.msra.mxu0 0
    %4911 = vmatprep.subr.bf16.mxu0 0
    %4912 = vmatpush1.bf16.msra.mxu0 0
    %4913 = vmatprep.subr.bf16.mxu0 0
    %4914 = vmatpush1.bf16.msra.mxu0 0
    %4915 = vmatprep.subr.bf16.mxu0 0
    %4916 = vmatpush1.bf16.msra.mxu0 0
    %4917 = vmatprep.mubr.bf16.mxu0 0
    %4918 = vmatmul.mubr.bf16.gmra.mrb[0].mxu0 %v4635
    %v4919 = vpop.f32.mrb[0].mxu0
    %v4920 = vadd.f32 0.0, %v4919
    %v4921 = vpop.f32.mrb[0].mxu0
    %v4922 = vpop.f32.mrb[0].mxu0
    %v4923 = vadd.f32 0.0, %v4922
    %v4924 = vpop.f32.mrb[0].mxu0
    %4925 = vmatprep.mubr.bf16.mxu0 0
    %4926 = vmatmul.mubr.bf16.gmra.mrb[0].mxu0 %v4638
    %v4927 = vpop.f32.mrb[0].mxu0
    %v4928 = vadd.f32 0.0, %v4927
    %v4929 = vpop.f32.mrb[0].mxu0
    %v4930 = vpop.f32.mrb[0].mxu0
    %v4931 = vadd.f32 0.0, %v4930
    %v4932 = vpop.f32.mrb[0].mxu0
    %4933 = vmatprep.mubr.bf16.mxu0 0
    %4934 = vmatmul.mubr.bf16.gmra.mrb[0].mxu0 %v4641
    %v4935 = vpop.f32.mrb[0].mxu0
    %v4936 = vadd.f32 0.0, %v4935
    %v4937 = vpop.f32.mrb[0].mxu0
    %v4938 = vpop.f32.mrb[0].mxu0
    %v4939 = vadd.f32 0.0, %v4938
    %v4940 = vpop.f32.mrb[0].mxu0
    %4941 = vmatprep.mubr.bf16.mxu0 0
    %4942 = vmatmul.mubr.bf16.gmra.mrb[0].mxu0 %v4644
    %v4943 = vpop.f32.mrb[0].mxu0
    %v4944 = vadd.f32 0.0, %v4943
    %v4945 = vpop.f32.mrb[0].mxu0
    %v4946 = vpop.f32.mrb[0].mxu0
    %v4947 = vadd.f32 0.0, %v4946
    %v4948 = vpop.f32.mrb[0].mxu0
    %4949 = vmatprep.mubr.bf16.mxu0 0
    %4950 = vmatmul.mubr.bf16.gmra.mrb[0].mxu0 %v4647
    %v4951 = vpop.f32.mrb[0].mxu0
    %v4952 = vadd.f32 0.0, %v4951
    %v4953 = vpop.f32.mrb[0].mxu0
    %v4954 = vpop.f32.mrb[0].mxu0
    %v4955 = vadd.f32 0.0, %v4954
    %v4956 = vpop.f32.mrb[0].mxu0
    %4957 = vmatprep.mubr.bf16.mxu0 0
    %4958 = vmatmul.mubr.bf16.gmra.mrb[0].mxu0 %v4650
    %v4959 = vpop.f32.mrb[0].mxu0
    %v4960 = vadd.f32 0.0, %v4959
    %v4961 = vpop.f32.mrb[0].mxu0
    %v4962 = vpop.f32.mrb[0].mxu0
    %v4963 = vadd.f32 0.0, %v4962
    %v4964 = vpop.f32.mrb[0].mxu0
    %4965 = vmatprep.mubr.bf16.mxu0 0
    %4966 = vmatmul.mubr.bf16.gmra.mrb[0].mxu0 %v4653
    %v4967 = vpop.f32.mrb[0].mxu0
    %v4968 = vadd.f32 0.0, %v4967
    %v4969 = vpop.f32.mrb[0].mxu0
    %v4970 = vpop.f32.mrb[0].mxu0
    %v4971 = vadd.f32 0.0, %v4970
    %v4972 = vpop.f32.mrb[0].mxu0
    %4973 = vmatprep.mubr.bf16.mxu0 0
    %4974 = vmatmul.mubr.bf16.gmra.mrb[0].mxu0 %v4656
    %v4975 = vpop.f32.mrb[0].mxu0
    %v4976 = vadd.f32 0.0, %v4975
    %v4977 = vpop.f32.mrb[0].mxu0
    %v4978 = vpop.f32.mrb[0].mxu0
    %v4979 = vadd.f32 0.0, %v4978
    %v4980 = vpop.f32.mrb[0].mxu0
    %4981 = vmatprep.mubr.bf16.mxu0 0
    %4982 = vmatmul.mubr.bf16.gmra.mrb[0].mxu0 %v4659
    %v4983 = vpop.f32.mrb[0].mxu0
    %v4984 = vadd.f32 0.0, %v4983
    %v4985 = vpop.f32.mrb[0].mxu0
    %v4986 = vpop.f32.mrb[0].mxu0
    %v4987 = vadd.f32 0.0, %v4986
    %v4988 = vpop.f32.mrb[0].mxu0
    %4989 = vmatprep.mubr.bf16.mxu0 0
    %4990 = vmatmul.mubr.bf16.gmra.mrb[0].mxu0 %v4662
    %v4991 = vpop.f32.mrb[0].mxu0
    %v4992 = vadd.f32 0.0, %v4991
    %v4993 = vpop.f32.mrb[0].mxu0
    %v4994 = vpop.f32.mrb[0].mxu0
    %v4995 = vadd.f32 0.0, %v4994
    %v4996 = vpop.f32.mrb[0].mxu0
    %4997 = vmatprep.mubr.bf16.mxu0 0
    %4998 = vmatmul.mubr.bf16.gmra.mrb[0].mxu0 %v4665
    %v4999 = vpop.f32.mrb[0].mxu0
    %v5000 = vadd.f32 0.0, %v4999
    %v5001 = vpop.f32.mrb[0].mxu0
    %v5002 = vpop.f32.mrb[0].mxu0
    %v5003 = vadd.f32 0.0, %v5002
    %v5004 = vpop.f32.mrb[0].mxu0
    %5005 = vmatprep.mubr.bf16.mxu0 0
    %5006 = vmatmul.mubr.bf16.gmra.mrb[0].mxu0 %v4668
    %v5007 = vpop.f32.mrb[0].mxu0
    %v5008 = vadd.f32 0.0, %v5007
    %v5009 = vpop.f32.mrb[0].mxu0
    %v5010 = vpop.f32.mrb[0].mxu0
    %v5011 = vadd.f32 0.0, %v5010
    %v5012 = vpop.f32.mrb[0].mxu0
    %5013 = vmatprep.mubr.bf16.mxu0 0
    %5014 = vmatmul.mubr.bf16.gmra.mrb[0].mxu0 %v4671
    %v5015 = vpop.f32.mrb[0].mxu0
    %v5016 = vadd.f32 0.0, %v5015
    %v5017 = vpop.f32.mrb[0].mxu0
    %v5018 = vpop.f32.mrb[0].mxu0
    %v5019 = vadd.f32 0.0, %v5018
    %v5020 = vpop.f32.mrb[0].mxu0
    %5021 = vmatprep.mubr.bf16.mxu0 0
    %5022 = vmatmul.mubr.bf16.gmra.mrb[0].mxu0 %v4674
    %v5023 = vpop.f32.mrb[0].mxu0
    %v5024 = vadd.f32 0.0, %v5023
    %v5025 = vpop.f32.mrb[0].mxu0
    %v5026 = vpop.f32.mrb[0].mxu0
    %v5027 = vadd.f32 0.0, %v5026
    %v5028 = vpop.f32.mrb[0].mxu0
    %5029 = vmatprep.mubr.bf16.mxu0 0
    %5030 = vmatmul.mubr.bf16.gmra.mrb[0].mxu0 %v4677
    %v5031 = vpop.f32.mrb[0].mxu0
    %v5032 = vadd.f32 0.0, %v5031
    %v5033 = vpop.f32.mrb[0].mxu0
    %v5034 = vpop.f32.mrb[0].mxu0
    %v5035 = vadd.f32 0.0, %v5034
    %v5036 = vpop.f32.mrb[0].mxu0
    %5037 = vmatprep.mubr.bf16.mxu0 0
    %5038 = vmatmul.mubr.bf16.gmra.mrb[0].mxu0 %v4680
    %v5039 = vpop.f32.mrb[0].mxu0
    %v5040 = vadd.f32 0.0, %v5039
    %v5041 = vpop.f32.mrb[0].mxu0
    %v5042 = vpop.f32.mrb[0].mxu0
    %v5043 = vadd.f32 0.0, %v5042
    %v5044 = vpop.f32.mrb[0].mxu0
    %5045 = vdwg.mxu0
    %v5046 = vmul.f32 %v4289, %v4727
    %v5047 = vmul.f32 %v4291, %v4729
    %v5048 = vmul.f32 %v4482, %v4920
    %v5049 = vmul.f32 %v4293, %v4731
    %v5050 = vmul.f32 %v4295, %v4733
    %v5051 = vmul.f32 %v4485, %v4923
    %v5052 = vmul.f32 %v4299, %v4737
    %v5053 = vmul.f32 %v4301, %v4739
    %v5054 = vmul.f32 %v4490, %v4928
    %v5055 = vmul.f32 %v4303, %v4741
    %v5056 = vmul.f32 %v4305, %v4743
    %v5057 = vmul.f32 %v4493, %v4931
    %v5058 = vmul.f32 %v4309, %v4747
    %v5059 = vmul.f32 %v4311, %v4749
    %v5060 = vmul.f32 %v4498, %v4936
    %v5061 = vmul.f32 %v4313, %v4751
    %v5062 = vmul.f32 %v4315, %v4753
    %v5063 = vmul.f32 %v4501, %v4939
    %v5064 = vmul.f32 %v4319, %v4757
    %v5065 = vmul.f32 %v4321, %v4759
    %v5066 = vmul.f32 %v4506, %v4944
    %v5067 = vmul.f32 %v4323, %v4761
    %v5068 = vmul.f32 %v4325, %v4763
    %v5069 = vmul.f32 %v4509, %v4947
    %v5070 = vmul.f32 %v4329, %v4767
    %v5071 = vmul.f32 %v4331, %v4769
    %v5072 = vmul.f32 %v4514, %v4952
    %v5073 = vmul.f32 %v4333, %v4771
    %v5074 = vmul.f32 %v4335, %v4773
    %v5075 = vmul.f32 %v4517, %v4955
    %v5076 = vmul.f32 %v4339, %v4777
    %v5077 = vmul.f32 %v4341, %v4779
    %v5078 = vmul.f32 %v4522, %v4960
    %v5079 = vmul.f32 %v4343, %v4781
    %v5080 = vmul.f32 %v4345, %v4783
    %v5081 = vmul.f32 %v4525, %v4963
    %v5082 = vmul.f32 %v4349, %v4787
    %v5083 = vmul.f32 %v4351, %v4789
    %v5084 = vmul.f32 %v4530, %v4968
    %v5085 = vmul.f32 %v4353, %v4791
    %v5086 = vmul.f32 %v4355, %v4793
    %v5087 = vmul.f32 %v4533, %v4971
    %v5088 = vmul.f32 %v4359, %v4797
    %v5089 = vmul.f32 %v4361, %v4799
    %v5090 = vmul.f32 %v4538, %v4976
    %v5091 = vmul.f32 %v4363, %v4801
    %v5092 = vmul.f32 %v4365, %v4803
    %v5093 = vmul.f32 %v4541, %v4979
    %v5094 = vmul.f32 %v4369, %v4807
    %v5095 = vmul.f32 %v4371, %v4809
    %v5096 = vmul.f32 %v4546, %v4984
    %v5097 = vmul.f32 %v4373, %v4811
    %v5098 = vmul.f32 %v4375, %v4813
    %v5099 = vmul.f32 %v4549, %v4987
    %v5100 = vmul.f32 %v4379, %v4817
    %v5101 = vmul.f32 %v4381, %v4819
    %v5102 = vmul.f32 %v4554, %v4992
    %v5103 = vmul.f32 %v4383, %v4821
    %v5104 = vmul.f32 %v4385, %v4823
    %v5105 = vmul.f32 %v4557, %v4995
    %v5106 = vmul.f32 %v4389, %v4827
    %v5107 = vmul.f32 %v4391, %v4829
    %v5108 = vmul.f32 %v4562, %v5000
    %v5109 = vmul.f32 %v4393, %v4831
    %v5110 = vmul.f32 %v4395, %v4833
    %v5111 = vmul.f32 %v4565, %v5003
    %v5112 = vmul.f32 %v4399, %v4837
    %v5113 = vmul.f32 %v4401, %v4839
    %v5114 = vmul.f32 %v4570, %v5008
    %v5115 = vmul.f32 %v4403, %v4841
    %v5116 = vmul.f32 %v4405, %v4843
    %v5117 = vmul.f32 %v4573, %v5011
    %v5118 = vmul.f32 %v4409, %v4847
    %v5119 = vmul.f32 %v4411, %v4849
    %v5120 = vmul.f32 %v4578, %v5016
    %v5121 = vmul.f32 %v4413, %v4851
    %v5122 = vmul.f32 %v4415, %v4853
    %v5123 = vmul.f32 %v4581, %v5019
    %v5124 = vmul.f32 %v4419, %v4857
    %v5125 = vmul.f32 %v4421, %v4859
    %v5126 = vmul.f32 %v4586, %v5024
    %v5127 = vmul.f32 %v4423, %v4861
    %v5128 = vmul.f32 %v4425, %v4863
    %v5129 = vmul.f32 %v4589, %v5027
    %v5130 = vmul.f32 %v4429, %v4867
    %v5131 = vmul.f32 %v4431, %v4869
    %v5132 = vmul.f32 %v4594, %v5032
    %v5133 = vmul.f32 %v4433, %v4871
    %v5134 = vmul.f32 %v4435, %v4873
    %v5135 = vmul.f32 %v4597, %v5035
    %v5136 = vmul.f32 %v4439, %v4877
    %v5137 = vmul.f32 %v4441, %v4879
    %v5138 = vmul.f32 %v4602, %v5040
    %v5139 = vmul.f32 %v4443, %v4881
    %v5140 = vmul.f32 %v4445, %v4883
    %v5141 = vmul.f32 %v4605, %v5043
    %v5142 = vpack.c.bf16 %v5049, %v5046
    %v5143 = vpack.c.bf16 %v5050, %v5047
    %v5144 = vpack.c.bf16 %v5051, %v5048
    %v5145 = vpack.c.bf16 %v5055, %v5052
    %v5146 = vpack.c.bf16 %v5056, %v5053
    %v5147 = vpack.c.bf16 %v5057, %v5054
    %v5148 = vpack.c.bf16 %v5061, %v5058
    %v5149 = vpack.c.bf16 %v5062, %v5059
    %v5150 = vpack.c.bf16 %v5063, %v5060
    %v5151 = vpack.c.bf16 %v5067, %v5064
    %v5152 = vpack.c.bf16 %v5068, %v5065
    %v5153 = vpack.c.bf16 %v5069, %v5066
    %v5154 = vpack.c.bf16 %v5073, %v5070
    %v5155 = vpack.c.bf16 %v5074, %v5071
    %v5156 = vpack.c.bf16 %v5075, %v5072
    %v5157 = vpack.c.bf16 %v5079, %v5076
    %v5158 = vpack.c.bf16 %v5080, %v5077
    %v5159 = vpack.c.bf16 %v5081, %v5078
    %v5160 = vpack.c.bf16 %v5085, %v5082
    %v5161 = vpack.c.bf16 %v5086, %v5083
    %v5162 = vpack.c.bf16 %v5087, %v5084
    %v5163 = vpack.c.bf16 %v5091, %v5088
    %v5164 = vpack.c.bf16 %v5092, %v5089
    %v5165 = vpack.c.bf16 %v5093, %v5090
    %v5166 = vpack.c.bf16 %v5097, %v5094
    %v5167 = vpack.c.bf16 %v5098, %v5095
    %v5168 = vpack.c.bf16 %v5099, %v5096
    %v5169 = vpack.c.bf16 %v5103, %v5100
    %v5170 = vpack.c.bf16 %v5104, %v5101
    %v5171 = vpack.c.bf16 %v5105, %v5102
    %v5172 = vpack.c.bf16 %v5109, %v5106
    %v5173 = vpack.c.bf16 %v5110, %v5107
    %v5174 = vpack.c.bf16 %v5111, %v5108
    %v5175 = vpack.c.bf16 %v5115, %v5112
    %v5176 = vpack.c.bf16 %v5116, %v5113
    %v5177 = vpack.c.bf16 %v5117, %v5114
    %v5178 = vpack.c.bf16 %v5121, %v5118
    %v5179 = vpack.c.bf16 %v5122, %v5119
    %v5180 = vpack.c.bf16 %v5123, %v5120
    %v5181 = vpack.c.bf16 %v5127, %v5124
    %v5182 = vpack.c.bf16 %v5128, %v5125
    %v5183 = vpack.c.bf16 %v5129, %v5126
    %v5184 = vpack.c.bf16 %v5133, %v5130
    %v5185 = vpack.c.bf16 %v5134, %v5131
    %v5186 = vpack.c.bf16 %v5135, %v5132
    %v5187 = vpack.c.bf16 %v5139, %v5136
    %v5188 = vpack.c.bf16 %v5140, %v5137
    %v5189 = vpack.c.bf16 %v5141, %v5138
    %v5190 = vld [vmem:[%s9] sm:$0xf]
    %v5191 = vld [vmem:[%s9 + $0x4] sm:$0xf]
    %v5192 = vld [vmem:[%s9 + $0x8] sm:$0xf]
    %v5193 = vld [vmem:[%s9 + $0xc] sm:$0xf]
    %v5194 = vld [vmem:[%s9 + $0x10] sm:$0xf]
    %v5195 = vld [vmem:[%s9 + $0x14] sm:$0xf]
    %v5196 = vld [vmem:[%s9 + $0x18] sm:$0xf]
    %v5197 = vld [vmem:[%s9 + $0x1c] sm:$0xf]
    %v5198 = vld [vmem:[%s9 + $0x20] sm:$0xf]
    %v5199 = vld [vmem:[%s9 + $0x24] sm:$0xf]
    %v5200 = vld [vmem:[%s9 + $0x28] sm:$0xf]
    %v5201 = vld [vmem:[%s9 + $0x2c] sm:$0xf]
    %v5202 = vld [vmem:[%s9 + $0x30] sm:$0xf]
    %v5203 = vld [vmem:[%s9 + $0x34] sm:$0xf]
    %v5204 = vld [vmem:[%s9 + $0x38] sm:$0xf]
    %v5205 = vld [vmem:[%s9 + $0x3c] sm:$0xf]
    %v5206 = vld [vmem:[%s9 + $0x40] sm:$0xf]
    %v5207 = vld [vmem:[%s9 + $0x44] sm:$0xf]
    %v5208 = vld [vmem:[%s9 + $0x48] sm:$0xf]
    %v5209 = vld [vmem:[%s9 + $0x4c] sm:$0xf]
    %v5210 = vld [vmem:[%s9 + $0x50] sm:$0xf]
    %v5211 = vld [vmem:[%s9 + $0x54] sm:$0xf]
    %v5212 = vld [vmem:[%s9 + $0x58] sm:$0xf]
    %v5213 = vld [vmem:[%s9 + $0x5c] sm:$0xf]
    %v5214 = vld [vmem:[%s9 + $0x60] sm:$0xf]
    %v5215 = vld [vmem:[%s9 + $0x64] sm:$0xf]
    %v5216 = vld [vmem:[%s9 + $0x68] sm:$0xf]
    %v5217 = vld [vmem:[%s9 + $0x6c] sm:$0xf]
    %v5218 = vld [vmem:[%s9 + $0x70] sm:$0xf]
    %v5219 = vld [vmem:[%s9 + $0x74] sm:$0xf]
    %v5220 = vld [vmem:[%s9 + $0x78] sm:$0xf]
    %v5221 = vld [vmem:[%s9 + $0x7c] sm:$0xf]
    %v5222 = vld [vmem:[%s9 + $0x80] sm:$0xf]
    %v5223 = vld [vmem:[%s9 + $0x84] sm:$0xf]
    %v5224 = vld [vmem:[%s9 + $0x88] sm:$0xf]
    %v5225 = vld [vmem:[%s9 + $0x8c] sm:$0xf]
    %v5226 = vld [vmem:[%s9 + $0x90] sm:$0xf]
    %v5227 = vld [vmem:[%s9 + $0x94] sm:$0xf]
    %v5228 = vld [vmem:[%s9 + $0x98] sm:$0xf]
    %v5229 = vld [vmem:[%s9 + $0x9c] sm:$0xf]
    %v5230 = vld [vmem:[%s9 + $0xa0] sm:$0xf]
    %v5231 = vld [vmem:[%s9 + $0xa4] sm:$0xf]
    %v5232 = vld [vmem:[%s9 + $0xa8] sm:$0xf]
    %v5233 = vld [vmem:[%s9 + $0xac] sm:$0xf]
    %v5234 = vld [vmem:[%s9 + $0xb0] sm:$0xf]
    %v5235 = vld [vmem:[%s9 + $0xb4] sm:$0xf]
    %v5236 = vld [vmem:[%s9 + $0xb8] sm:$0xf]
    %v5237 = vld [vmem:[%s9 + $0xbc] sm:$0xf]
    %v5286 = vunpack.c.l.b16 %v5190
    %v5287 = vunpack.c.l.b16 %v5191
    %v5288 = vunpack.c.l.b16 %v5192
    %v5289 = vunpack.c.l.b16 %v5193
    %v5290 = vunpack.c.l.b16 %v5194
    %v5291 = vunpack.c.l.b16 %v5195
    %v5292 = vunpack.c.l.b16 %v5196
    %v5293 = vunpack.c.l.b16 %v5197
    %v5294 = vunpack.c.l.b16 %v5198
    %v5295 = vunpack.c.l.b16 %v5199
    %v5296 = vunpack.c.l.b16 %v5200
    %v5297 = vunpack.c.l.b16 %v5201
    %v5298 = vunpack.c.l.b16 %v5202
    %v5299 = vunpack.c.l.b16 %v5203
    %v5300 = vunpack.c.l.b16 %v5204
    %v5301 = vunpack.c.l.b16 %v5205
    %v5302 = vunpack.c.l.b16 %v5206
    %v5303 = vunpack.c.l.b16 %v5207
    %v5304 = vunpack.c.l.b16 %v5208
    %v5305 = vunpack.c.l.b16 %v5209
    %v5306 = vunpack.c.l.b16 %v5210
    %v5307 = vunpack.c.l.b16 %v5211
    %v5308 = vunpack.c.l.b16 %v5212
    %v5309 = vunpack.c.l.b16 %v5213
    %v5310 = vunpack.c.l.b16 %v5214
    %v5311 = vunpack.c.l.b16 %v5215
    %v5312 = vunpack.c.l.b16 %v5216
    %v5313 = vunpack.c.l.b16 %v5217
    %v5314 = vunpack.c.l.b16 %v5218
    %v5315 = vunpack.c.l.b16 %v5219
    %v5316 = vunpack.c.l.b16 %v5220
    %v5317 = vunpack.c.l.b16 %v5221
    %v5318 = vunpack.c.l.b16 %v5222
    %v5319 = vunpack.c.l.b16 %v5223
    %v5320 = vunpack.c.l.b16 %v5224
    %v5321 = vunpack.c.l.b16 %v5225
    %v5322 = vunpack.c.l.b16 %v5226
    %v5323 = vunpack.c.l.b16 %v5227
    %v5324 = vunpack.c.l.b16 %v5228
    %v5325 = vunpack.c.l.b16 %v5229
    %v5326 = vunpack.c.l.b16 %v5230
    %v5327 = vunpack.c.l.b16 %v5231
    %v5328 = vunpack.c.l.b16 %v5232
    %v5329 = vunpack.c.l.b16 %v5233
    %v5330 = vunpack.c.l.b16 %v5234
    %v5331 = vunpack.c.l.b16 %v5235
    %v5332 = vunpack.c.l.b16 %v5236
    %v5333 = vunpack.c.l.b16 %v5237
    %v5334 = vpack.c.b16 %v5287, %v5286
    %v5335 = vpack.c.b16 %v5289, %v5288
    %v5336 = vpack.c.b16 %v5291, %v5290
    %v5337 = vpack.c.b16 %v5293, %v5292
    %v5338 = vpack.c.b16 %v5295, %v5294
    %v5339 = vpack.c.b16 %v5297, %v5296
    %v5340 = vpack.c.b16 %v5299, %v5298
    %v5341 = vpack.c.b16 %v5301, %v5300
    %v5342 = vpack.c.b16 %v5303, %v5302
    %v5343 = vpack.c.b16 %v5305, %v5304
    %v5344 = vpack.c.b16 %v5307, %v5306
    %v5345 = vpack.c.b16 %v5309, %v5308
    %v5346 = vpack.c.b16 %v5311, %v5310
    %v5347 = vpack.c.b16 %v5313, %v5312
    %v5348 = vpack.c.b16 %v5315, %v5314
    %v5349 = vpack.c.b16 %v5317, %v5316
    %v5350 = vpack.c.b16 %v5319, %v5318
    %v5351 = vpack.c.b16 %v5321, %v5320
    %v5352 = vpack.c.b16 %v5323, %v5322
    %v5353 = vpack.c.b16 %v5325, %v5324
    %v5354 = vpack.c.b16 %v5327, %v5326
    %v5355 = vpack.c.b16 %v5329, %v5328
    %v5356 = vpack.c.b16 %v5331, %v5330
    %v5357 = vpack.c.b16 %v5333, %v5332
    %5382 = vmatprep.subr.bf16.mxu0 0
    %5383 = vmatpush1.bf16.msra.mxu0 %v5334
    %5384 = vmatprep.subr.bf16.mxu0 0
    %5385 = vmatpush1.bf16.msra.mxu0 %v5335
    %5386 = vmatprep.subr.bf16.mxu0 0
    %5387 = vmatpush1.bf16.msra.mxu0 %v5336
    %5388 = vmatprep.subr.bf16.mxu0 0
    %5389 = vmatpush1.bf16.msra.mxu0 %v5337
    %5390 = vmatprep.subr.bf16.mxu0 0
    %5391 = vmatpush1.bf16.msra.mxu0 %v5338
    %5392 = vmatprep.subr.bf16.mxu0 0
    %5393 = vmatpush1.bf16.msra.mxu0 %v5339
    %5394 = vmatprep.subr.bf16.mxu0 0
    %5395 = vmatpush1.bf16.msra.mxu0 %v5340
    %5396 = vmatprep.subr.bf16.mxu0 0
    %5397 = vmatpush1.bf16.msra.mxu0 %v5341
    %5398 = vmatprep.subr.bf16.mxu0 0
    %5399 = vmatpush1.bf16.msra.mxu0 %v5342
    %5400 = vmatprep.subr.bf16.mxu0 0
    %5401 = vmatpush1.bf16.msra.mxu0 %v5343
    %5402 = vmatprep.subr.bf16.mxu0 0
    %5403 = vmatpush1.bf16.msra.mxu0 %v5344
    %5404 = vmatprep.subr.bf16.mxu0 0
    %5405 = vmatpush1.bf16.msra.mxu0 %v5345
    %5406 = vmatprep.subr.bf16.mxu0 0
    %5407 = vmatpush1.bf16.msra.mxu0 %v5346
    %5408 = vmatprep.subr.bf16.mxu0 0
    %5409 = vmatpush1.bf16.msra.mxu0 %v5347
    %5410 = vmatprep.subr.bf16.mxu0 0
    %5411 = vmatpush1.bf16.msra.mxu0 %v5348
    %5412 = vmatprep.subr.bf16.mxu0 0
    %5413 = vmatpush1.bf16.msra.mxu0 %v5349
    %5414 = vmatprep.mubr.bf16.mxu0 %v5143
    %5415 = vmatmul.mubr.bf16.gmra.mrb[0].mxu0 %v5142
    %v5416 = vpop.f32.mrb[0].mxu0
    %v5417 = vadd.f32 0.0, %v5416
    %v5418 = vpop.f32.mrb[0].mxu0
    %v5419 = vpop.f32.mrb[0].mxu0
    %v5420 = vadd.f32 0.0, %v5419
    %v5421 = vpop.f32.mrb[0].mxu0
    %5422 = vmatprep.mubr.bf16.mxu0 %v5146
    %5423 = vmatmul.mubr.bf16.gmra.mrb[0].mxu0 %v5145
    %v5424 = vpop.f32.mrb[0].mxu0
    %v5425 = vadd.f32 0.0, %v5424
    %v5426 = vpop.f32.mrb[0].mxu0
    %v5427 = vpop.f32.mrb[0].mxu0
    %v5428 = vadd.f32 0.0, %v5427
    %v5429 = vpop.f32.mrb[0].mxu0
    %5430 = vmatprep.mubr.bf16.mxu0 %v5149
    %5431 = vmatmul.mubr.bf16.gmra.mrb[0].mxu0 %v5148
    %v5432 = vpop.f32.mrb[0].mxu0
    %v5433 = vadd.f32 0.0, %v5432
    %v5434 = vpop.f32.mrb[0].mxu0
    %v5435 = vpop.f32.mrb[0].mxu0
    %v5436 = vadd.f32 0.0, %v5435
    %v5437 = vpop.f32.mrb[0].mxu0
    %5438 = vmatprep.mubr.bf16.mxu0 %v5152
    %5439 = vmatmul.mubr.bf16.gmra.mrb[0].mxu0 %v5151
    %v5440 = vpop.f32.mrb[0].mxu0
    %v5441 = vadd.f32 0.0, %v5440
    %v5442 = vpop.f32.mrb[0].mxu0
    %v5443 = vpop.f32.mrb[0].mxu0
    %v5444 = vadd.f32 0.0, %v5443
    %v5445 = vpop.f32.mrb[0].mxu0
    %5446 = vmatprep.mubr.bf16.mxu0 %v5155
    %5447 = vmatmul.mubr.bf16.gmra.mrb[0].mxu0 %v5154
    %v5448 = vpop.f32.mrb[0].mxu0
    %v5449 = vadd.f32 0.0, %v5448
    %v5450 = vpop.f32.mrb[0].mxu0
    %v5451 = vpop.f32.mrb[0].mxu0
    %v5452 = vadd.f32 0.0, %v5451
    %v5453 = vpop.f32.mrb[0].mxu0
    %5454 = vmatprep.mubr.bf16.mxu0 %v5158
    %5455 = vmatmul.mubr.bf16.gmra.mrb[0].mxu0 %v5157
    %v5456 = vpop.f32.mrb[0].mxu0
    %v5457 = vadd.f32 0.0, %v5456
    %v5458 = vpop.f32.mrb[0].mxu0
    %v5459 = vpop.f32.mrb[0].mxu0
    %v5460 = vadd.f32 0.0, %v5459
    %v5461 = vpop.f32.mrb[0].mxu0
    %5462 = vmatprep.mubr.bf16.mxu0 %v5161
    %5463 = vmatmul.mubr.bf16.gmra.mrb[0].mxu0 %v5160
    %v5464 = vpop.f32.mrb[0].mxu0
    %v5465 = vadd.f32 0.0, %v5464
    %v5466 = vpop.f32.mrb[0].mxu0
    %v5467 = vpop.f32.mrb[0].mxu0
    %v5468 = vadd.f32 0.0, %v5467
    %v5469 = vpop.f32.mrb[0].mxu0
    %5470 = vmatprep.mubr.bf16.mxu0 %v5164
    %5471 = vmatmul.mubr.bf16.gmra.mrb[0].mxu0 %v5163
    %v5472 = vpop.f32.mrb[0].mxu0
    %v5473 = vadd.f32 0.0, %v5472
    %v5474 = vpop.f32.mrb[0].mxu0
    %v5475 = vpop.f32.mrb[0].mxu0
    %v5476 = vadd.f32 0.0, %v5475
    %v5477 = vpop.f32.mrb[0].mxu0
    %5478 = vmatprep.mubr.bf16.mxu0 %v5167
    %5479 = vmatmul.mubr.bf16.gmra.mrb[0].mxu0 %v5166
    %v5480 = vpop.f32.mrb[0].mxu0
    %v5481 = vadd.f32 0.0, %v5480
    %v5482 = vpop.f32.mrb[0].mxu0
    %v5483 = vpop.f32.mrb[0].mxu0
    %v5484 = vadd.f32 0.0, %v5483
    %v5485 = vpop.f32.mrb[0].mxu0
    %5486 = vmatprep.mubr.bf16.mxu0 %v5170
    %5487 = vmatmul.mubr.bf16.gmra.mrb[0].mxu0 %v5169
    %v5488 = vpop.f32.mrb[0].mxu0
    %v5489 = vadd.f32 0.0, %v5488
    %v5490 = vpop.f32.mrb[0].mxu0
    %v5491 = vpop.f32.mrb[0].mxu0
    %v5492 = vadd.f32 0.0, %v5491
    %v5493 = vpop.f32.mrb[0].mxu0
    %5494 = vmatprep.mubr.bf16.mxu0 %v5173
    %5495 = vmatmul.mubr.bf16.gmra.mrb[0].mxu0 %v5172
    %v5496 = vpop.f32.mrb[0].mxu0
    %v5497 = vadd.f32 0.0, %v5496
    %v5498 = vpop.f32.mrb[0].mxu0
    %v5499 = vpop.f32.mrb[0].mxu0
    %v5500 = vadd.f32 0.0, %v5499
    %v5501 = vpop.f32.mrb[0].mxu0
    %5502 = vmatprep.mubr.bf16.mxu0 %v5176
    %5503 = vmatmul.mubr.bf16.gmra.mrb[0].mxu0 %v5175
    %v5504 = vpop.f32.mrb[0].mxu0
    %v5505 = vadd.f32 0.0, %v5504
    %v5506 = vpop.f32.mrb[0].mxu0
    %v5507 = vpop.f32.mrb[0].mxu0
    %v5508 = vadd.f32 0.0, %v5507
    %v5509 = vpop.f32.mrb[0].mxu0
    %5510 = vmatprep.mubr.bf16.mxu0 %v5179
    %5511 = vmatmul.mubr.bf16.gmra.mrb[0].mxu0 %v5178
    %v5512 = vpop.f32.mrb[0].mxu0
    %v5513 = vadd.f32 0.0, %v5512
    %v5514 = vpop.f32.mrb[0].mxu0
    %v5515 = vpop.f32.mrb[0].mxu0
    %v5516 = vadd.f32 0.0, %v5515
    %v5517 = vpop.f32.mrb[0].mxu0
    %5518 = vmatprep.mubr.bf16.mxu0 %v5182
    %5519 = vmatmul.mubr.bf16.gmra.mrb[0].mxu0 %v5181
    %v5520 = vpop.f32.mrb[0].mxu0
    %v5521 = vadd.f32 0.0, %v5520
    %v5522 = vpop.f32.mrb[0].mxu0
    %v5523 = vpop.f32.mrb[0].mxu0
    %v5524 = vadd.f32 0.0, %v5523
    %v5525 = vpop.f32.mrb[0].mxu0
    %5526 = vmatprep.mubr.bf16.mxu0 %v5185
    %5527 = vmatmul.mubr.bf16.gmra.mrb[0].mxu0 %v5184
    %v5528 = vpop.f32.mrb[0].mxu0
    %v5529 = vadd.f32 0.0, %v5528
    %v5530 = vpop.f32.mrb[0].mxu0
    %v5531 = vpop.f32.mrb[0].mxu0
    %v5532 = vadd.f32 0.0, %v5531
    %v5533 = vpop.f32.mrb[0].mxu0
    %5534 = vmatprep.mubr.bf16.mxu0 %v5188
    %5535 = vmatmul.mubr.bf16.gmra.mrb[0].mxu0 %v5187
    %v5536 = vpop.f32.mrb[0].mxu0
    %v5537 = vadd.f32 0.0, %v5536
    %v5538 = vpop.f32.mrb[0].mxu0
    %v5539 = vpop.f32.mrb[0].mxu0
    %v5540 = vadd.f32 0.0, %v5539
    %v5541 = vpop.f32.mrb[0].mxu0
    %5542 = vdwg.mxu0
    %5543 = vmatprep.subr.bf16.mxu0 0
    %5544 = vmatpush1.bf16.msra.mxu0 %v5350
    %5545 = vmatprep.subr.bf16.mxu0 0
    %5546 = vmatpush1.bf16.msra.mxu0 %v5351
    %5547 = vmatprep.subr.bf16.mxu0 0
    %5548 = vmatpush1.bf16.msra.mxu0 %v5352
    %5549 = vmatprep.subr.bf16.mxu0 0
    %5550 = vmatpush1.bf16.msra.mxu0 %v5353
    %5551 = vmatprep.subr.bf16.mxu0 0
    %5552 = vmatpush1.bf16.msra.mxu0 %v5354
    %5553 = vmatprep.subr.bf16.mxu0 0
    %5554 = vmatpush1.bf16.msra.mxu0 %v5355
    %5555 = vmatprep.subr.bf16.mxu0 0
    %5556 = vmatpush1.bf16.msra.mxu0 %v5356
    %5557 = vmatprep.subr.bf16.mxu0 0
    %5558 = vmatpush1.bf16.msra.mxu0 %v5357
    %5559 = vmatprep.subr.bf16.mxu0 0
    %5560 = vmatpush1.bf16.msra.mxu0 0
    %5561 = vmatprep.subr.bf16.mxu0 0
    %5562 = vmatpush1.bf16.msra.mxu0 0
    %5563 = vmatprep.subr.bf16.mxu0 0
    %5564 = vmatpush1.bf16.msra.mxu0 0
    %5565 = vmatprep.subr.bf16.mxu0 0
    %5566 = vmatpush1.bf16.msra.mxu0 0
    %5567 = vmatprep.subr.bf16.mxu0 0
    %5568 = vmatpush1.bf16.msra.mxu0 0
    %5569 = vmatprep.subr.bf16.mxu0 0
    %5570 = vmatpush1.bf16.msra.mxu0 0
    %5571 = vmatprep.subr.bf16.mxu0 0
    %5572 = vmatpush1.bf16.msra.mxu0 0
    %5573 = vmatprep.subr.bf16.mxu0 0
    %5574 = vmatpush1.bf16.msra.mxu0 0
    %5575 = vmatprep.mubr.bf16.mxu0 0
    %5576 = vmatmul.mubr.bf16.gmra.mrb[0].mxu0 %v5144
    %v5577 = vpop.f32.mrb[0].mxu0
    %v5578 = vadd.f32 %v5417, %v5577
    %v5579 = vpop.f32.mrb[0].mxu0
    %v5580 = vpop.f32.mrb[0].mxu0
    %v5581 = vadd.f32 %v5420, %v5580
    %v5582 = vpop.f32.mrb[0].mxu0
    %5583 = vmatprep.mubr.bf16.mxu0 0
    %5584 = vmatmul.mubr.bf16.gmra.mrb[0].mxu0 %v5147
    %v5585 = vpop.f32.mrb[0].mxu0
    %v5586 = vadd.f32 %v5425, %v5585
    %v5587 = vpop.f32.mrb[0].mxu0
    %v5588 = vpop.f32.mrb[0].mxu0
    %v5589 = vadd.f32 %v5428, %v5588
    %v5590 = vpop.f32.mrb[0].mxu0
    %5591 = vmatprep.mubr.bf16.mxu0 0
    %5592 = vmatmul.mubr.bf16.gmra.mrb[0].mxu0 %v5150
    %v5593 = vpop.f32.mrb[0].mxu0
    %v5594 = vadd.f32 %v5433, %v5593
    %v5595 = vpop.f32.mrb[0].mxu0
    %v5596 = vpop.f32.mrb[0].mxu0
    %v5597 = vadd.f32 %v5436, %v5596
    %v5598 = vpop.f32.mrb[0].mxu0
    %5599 = vmatprep.mubr.bf16.mxu0 0
    %5600 = vmatmul.mubr.bf16.gmra.mrb[0].mxu0 %v5153
    %v5601 = vpop.f32.mrb[0].mxu0
    %v5602 = vadd.f32 %v5441, %v5601
    %v5603 = vpop.f32.mrb[0].mxu0
    %v5604 = vpop.f32.mrb[0].mxu0
    %v5605 = vadd.f32 %v5444, %v5604
    %v5606 = vpop.f32.mrb[0].mxu0
    %5607 = vmatprep.mubr.bf16.mxu0 0
    %5608 = vmatmul.mubr.bf16.gmra.mrb[0].mxu0 %v5156
    %v5609 = vpop.f32.mrb[0].mxu0
    %v5610 = vadd.f32 %v5449, %v5609
    %v5611 = vpop.f32.mrb[0].mxu0
    %v5612 = vpop.f32.mrb[0].mxu0
    %v5613 = vadd.f32 %v5452, %v5612
    %v5614 = vpop.f32.mrb[0].mxu0
    %5615 = vmatprep.mubr.bf16.mxu0 0
    %5616 = vmatmul.mubr.bf16.gmra.mrb[0].mxu0 %v5159
    %v5617 = vpop.f32.mrb[0].mxu0
    %v5618 = vadd.f32 %v5457, %v5617
    %v5619 = vpop.f32.mrb[0].mxu0
    %v5620 = vpop.f32.mrb[0].mxu0
    %v5621 = vadd.f32 %v5460, %v5620
    %v5622 = vpop.f32.mrb[0].mxu0
    %5623 = vmatprep.mubr.bf16.mxu0 0
    %5624 = vmatmul.mubr.bf16.gmra.mrb[0].mxu0 %v5162
    %v5625 = vpop.f32.mrb[0].mxu0
    %v5626 = vadd.f32 %v5465, %v5625
    %v5627 = vpop.f32.mrb[0].mxu0
    %v5628 = vpop.f32.mrb[0].mxu0
    %v5629 = vadd.f32 %v5468, %v5628
    %v5630 = vpop.f32.mrb[0].mxu0
    %5631 = vmatprep.mubr.bf16.mxu0 0
    %5632 = vmatmul.mubr.bf16.gmra.mrb[0].mxu0 %v5165
    %v5633 = vpop.f32.mrb[0].mxu0
    %v5634 = vadd.f32 %v5473, %v5633
    %v5635 = vpop.f32.mrb[0].mxu0
    %v5636 = vpop.f32.mrb[0].mxu0
    %v5637 = vadd.f32 %v5476, %v5636
    %v5638 = vpop.f32.mrb[0].mxu0
    %5639 = vmatprep.mubr.bf16.mxu0 0
    %5640 = vmatmul.mubr.bf16.gmra.mrb[0].mxu0 %v5168
    %v5641 = vpop.f32.mrb[0].mxu0
    %v5642 = vadd.f32 %v5481, %v5641
    %v5643 = vpop.f32.mrb[0].mxu0
    %v5644 = vpop.f32.mrb[0].mxu0
    %v5645 = vadd.f32 %v5484, %v5644
    %v5646 = vpop.f32.mrb[0].mxu0
    %5647 = vmatprep.mubr.bf16.mxu0 0
    %5648 = vmatmul.mubr.bf16.gmra.mrb[0].mxu0 %v5171
    %v5649 = vpop.f32.mrb[0].mxu0
    %v5650 = vadd.f32 %v5489, %v5649
    %v5651 = vpop.f32.mrb[0].mxu0
    %v5652 = vpop.f32.mrb[0].mxu0
    %v5653 = vadd.f32 %v5492, %v5652
    %v5654 = vpop.f32.mrb[0].mxu0
    %5655 = vmatprep.mubr.bf16.mxu0 0
    %5656 = vmatmul.mubr.bf16.gmra.mrb[0].mxu0 %v5174
    %v5657 = vpop.f32.mrb[0].mxu0
    %v5658 = vadd.f32 %v5497, %v5657
    %v5659 = vpop.f32.mrb[0].mxu0
    %v5660 = vpop.f32.mrb[0].mxu0
    %v5661 = vadd.f32 %v5500, %v5660
    %v5662 = vpop.f32.mrb[0].mxu0
    %5663 = vmatprep.mubr.bf16.mxu0 0
    %5664 = vmatmul.mubr.bf16.gmra.mrb[0].mxu0 %v5177
    %v5665 = vpop.f32.mrb[0].mxu0
    %v5666 = vadd.f32 %v5505, %v5665
    %v5667 = vpop.f32.mrb[0].mxu0
    %v5668 = vpop.f32.mrb[0].mxu0
    %v5669 = vadd.f32 %v5508, %v5668
    %v5670 = vpop.f32.mrb[0].mxu0
    %5671 = vmatprep.mubr.bf16.mxu0 0
    %5672 = vmatmul.mubr.bf16.gmra.mrb[0].mxu0 %v5180
    %v5673 = vpop.f32.mrb[0].mxu0
    %v5674 = vadd.f32 %v5513, %v5673
    %v5675 = vpop.f32.mrb[0].mxu0
    %v5676 = vpop.f32.mrb[0].mxu0
    %v5677 = vadd.f32 %v5516, %v5676
    %v5678 = vpop.f32.mrb[0].mxu0
    %5679 = vmatprep.mubr.bf16.mxu0 0
    %5680 = vmatmul.mubr.bf16.gmra.mrb[0].mxu0 %v5183
    %v5681 = vpop.f32.mrb[0].mxu0
    %v5682 = vadd.f32 %v5521, %v5681
    %v5683 = vpop.f32.mrb[0].mxu0
    %v5684 = vpop.f32.mrb[0].mxu0
    %v5685 = vadd.f32 %v5524, %v5684
    %v5686 = vpop.f32.mrb[0].mxu0
    %5687 = vmatprep.mubr.bf16.mxu0 0
    %5688 = vmatmul.mubr.bf16.gmra.mrb[0].mxu0 %v5186
    %v5689 = vpop.f32.mrb[0].mxu0
    %v5690 = vadd.f32 %v5529, %v5689
    %v5691 = vpop.f32.mrb[0].mxu0
    %v5692 = vpop.f32.mrb[0].mxu0
    %v5693 = vadd.f32 %v5532, %v5692
    %v5694 = vpop.f32.mrb[0].mxu0
    %5695 = vmatprep.mubr.bf16.mxu0 0
    %5696 = vmatmul.mubr.bf16.gmra.mrb[0].mxu0 %v5189
    %v5697 = vpop.f32.mrb[0].mxu0
    %v5698 = vadd.f32 %v5537, %v5697
    %v5699 = vpop.f32.mrb[0].mxu0
    %v5700 = vpop.f32.mrb[0].mxu0
    %v5701 = vadd.f32 %v5540, %v5700
    %v5702 = vpop.f32.mrb[0].mxu0
    %5703 = vdwg.mxu0
    %v5704 = vpack.c.bf16 %v5581, %v5578
    %v5705 = vpack.c.bf16 %v5589, %v5586
    %v5706 = vpack.c.bf16 %v5597, %v5594
    %v5707 = vpack.c.bf16 %v5605, %v5602
    %v5708 = vpack.c.bf16 %v5613, %v5610
    %v5709 = vpack.c.bf16 %v5621, %v5618
    %v5710 = vpack.c.bf16 %v5629, %v5626
    %v5711 = vpack.c.bf16 %v5637, %v5634
    %v5712 = vpack.c.bf16 %v5645, %v5642
    %v5713 = vpack.c.bf16 %v5653, %v5650
    %v5714 = vpack.c.bf16 %v5661, %v5658
    %v5715 = vpack.c.bf16 %v5669, %v5666
    %v5716 = vpack.c.bf16 %v5677, %v5674
    %v5717 = vpack.c.bf16 %v5685, %v5682
    %v5718 = vpack.c.bf16 %v5693, %v5690
    %v5719 = vpack.c.bf16 %v5701, %v5698
    %v5720 = vld [vmem:[%s10] sm:$0xf]
    %v5721 = vld [vmem:[%s10 + $0x4] sm:$0xf]
    %v5722 = vld [vmem:[%s10 + $0x8] sm:$0xf]
    %v5723 = vld [vmem:[%s10 + $0xc] sm:$0xf]
    %v5724 = vld [vmem:[%s10 + $0x10] sm:$0xf]
    %v5725 = vld [vmem:[%s10 + $0x14] sm:$0xf]
    %v5726 = vld [vmem:[%s10 + $0x18] sm:$0xf]
    %v5727 = vld [vmem:[%s10 + $0x1c] sm:$0xf]
    %v5728 = vld [vmem:[%s11] sm:$0x1]
    %v5730 = vlaneseq
    %v5731 = vshrl.u32 %v5730, 7
    %v5732 = vsub.s32 0, %v5731
    %v5733 = vrot.slane %v5728, %v5732
    %v5743 = vunpack.c.l.b16 %v5720
    %v5744 = vunpack.c.l.b16 %v5721
    %v5745 = vunpack.c.l.b16 %v5722
    %v5746 = vunpack.c.l.b16 %v5723
    %v5747 = vunpack.c.l.b16 %v5724
    %v5748 = vunpack.c.l.b16 %v5725
    %v5749 = vunpack.c.l.b16 %v5726
    %v5750 = vunpack.c.l.b16 %v5727
    %v5751 = vpack.c.b16 %v5744, %v5743
    %v5752 = vpack.c.b16 %v5746, %v5745
    %v5753 = vpack.c.b16 %v5748, %v5747
    %v5754 = vpack.c.b16 %v5750, %v5749
    %v5760 = vsel %vm1959, %v5704, 0
    %v5763 = vsel %vm1959, %v5705, 0
    %v5766 = vsel %vm1959, %v5706, 0
    %v5769 = vsel %vm1959, %v5707, 0
    %v5772 = vsel %vm1959, %v5708, 0
    %v5775 = vsel %vm1959, %v5709, 0
    %v5778 = vsel %vm1959, %v5710, 0
    %v5781 = vsel %vm1959, %v5711, 0
    %v5784 = vsel %vm1959, %v5712, 0
    %v5787 = vsel %vm1959, %v5713, 0
    %v5790 = vsel %vm1959, %v5714, 0
    %v5793 = vsel %vm1959, %v5715, 0
    %v5796 = vsel %vm1959, %v5716, 0
    %v5799 = vsel %vm1959, %v5717, 0
    %v5802 = vsel %vm1959, %v5718, 0
    %v5805 = vsel %vm1959, %v5719, 0
    %5807 = vmatprep.subr.bf16.mxu0 0
    %5808 = vmatpush1.bf16.msra.mxu0 %v5751
    %5809 = vmatprep.subr.bf16.mxu0 0
    %5810 = vmatpush1.bf16.msra.mxu0 %v5752
    %5811 = vmatprep.subr.bf16.mxu0 0
    %5812 = vmatpush1.bf16.msra.mxu0 %v5753
    %5813 = vmatprep.subr.bf16.mxu0 0
    %5814 = vmatpush1.bf16.msra.mxu0 %v5754
    %5815 = vmatprep.subr.bf16.mxu0 0
    %5816 = vmatpush1.bf16.msra.mxu0 0
    %5817 = vmatprep.subr.bf16.mxu0 0
    %5818 = vmatpush1.bf16.msra.mxu0 0
    %5819 = vmatprep.subr.bf16.mxu0 0
    %5820 = vmatpush1.bf16.msra.mxu0 0
    %5821 = vmatprep.subr.bf16.mxu0 0
    %5822 = vmatpush1.bf16.msra.mxu0 0
    %5823 = vmatprep.subr.bf16.mxu0 0
    %5824 = vmatpush1.bf16.msra.mxu0 0
    %5825 = vmatprep.subr.bf16.mxu0 0
    %5826 = vmatpush1.bf16.msra.mxu0 0
    %5827 = vmatprep.subr.bf16.mxu0 0
    %5828 = vmatpush1.bf16.msra.mxu0 0
    %5829 = vmatprep.subr.bf16.mxu0 0
    %5830 = vmatpush1.bf16.msra.mxu0 0
    %5831 = vmatprep.subr.bf16.mxu0 0
    %5832 = vmatpush1.bf16.msra.mxu0 0
    %5833 = vmatprep.subr.bf16.mxu0 0
    %5834 = vmatpush1.bf16.msra.mxu0 0
    %5835 = vmatprep.subr.bf16.mxu0 0
    %5836 = vmatpush1.bf16.msra.mxu0 0
    %5837 = vmatprep.subr.bf16.mxu0 0
    %5838 = vmatpush1.bf16.msra.mxu0 0
    %5839 = vmatprep.mubr.bf16.mxu0 0
    %5840 = vmatmul.mubr.bf16.gmra.mrb[0].mxu0 %v5760
    %v5841 = vpop.f32.mrb[0].mxu0
    %v5842 = vadd.f32 %v5733, %v5841
    %v5843 = vpop.f32.mrb[0].mxu0
    %v5844 = vpop.f32.mrb[0].mxu0
    %v5845 = vadd.f32 %v5733, %v5844
    %v5846 = vpop.f32.mrb[0].mxu0
    %5847 = vmatprep.mubr.bf16.mxu0 0
    %5848 = vmatmul.mubr.bf16.gmra.mrb[0].mxu0 %v5763
    %v5849 = vpop.f32.mrb[0].mxu0
    %v5850 = vadd.f32 %v5733, %v5849
    %v5851 = vpop.f32.mrb[0].mxu0
    %v5852 = vpop.f32.mrb[0].mxu0
    %v5853 = vadd.f32 %v5733, %v5852
    %v5854 = vpop.f32.mrb[0].mxu0
    %5855 = vmatprep.mubr.bf16.mxu0 0
    %5856 = vmatmul.mubr.bf16.gmra.mrb[0].mxu0 %v5766
    %v5857 = vpop.f32.mrb[0].mxu0
    %v5858 = vadd.f32 %v5733, %v5857
    %v5859 = vpop.f32.mrb[0].mxu0
    %v5860 = vpop.f32.mrb[0].mxu0
    %v5861 = vadd.f32 %v5733, %v5860
    %v5862 = vpop.f32.mrb[0].mxu0
    %5863 = vmatprep.mubr.bf16.mxu0 0
    %5864 = vmatmul.mubr.bf16.gmra.mrb[0].mxu0 %v5769
    %v5865 = vpop.f32.mrb[0].mxu0
    %v5866 = vadd.f32 %v5733, %v5865
    %v5867 = vpop.f32.mrb[0].mxu0
    %v5868 = vpop.f32.mrb[0].mxu0
    %v5869 = vadd.f32 %v5733, %v5868
    %v5870 = vpop.f32.mrb[0].mxu0
    %5871 = vmatprep.mubr.bf16.mxu0 0
    %5872 = vmatmul.mubr.bf16.gmra.mrb[0].mxu0 %v5772
    %v5873 = vpop.f32.mrb[0].mxu0
    %v5874 = vadd.f32 %v5733, %v5873
    %v5875 = vpop.f32.mrb[0].mxu0
    %v5876 = vpop.f32.mrb[0].mxu0
    %v5877 = vadd.f32 %v5733, %v5876
    %v5878 = vpop.f32.mrb[0].mxu0
    %5879 = vmatprep.mubr.bf16.mxu0 0
    %5880 = vmatmul.mubr.bf16.gmra.mrb[0].mxu0 %v5775
    %v5881 = vpop.f32.mrb[0].mxu0
    %v5882 = vadd.f32 %v5733, %v5881
    %v5883 = vpop.f32.mrb[0].mxu0
    %v5884 = vpop.f32.mrb[0].mxu0
    %v5885 = vadd.f32 %v5733, %v5884
    %v5886 = vpop.f32.mrb[0].mxu0
    %5887 = vmatprep.mubr.bf16.mxu0 0
    %5888 = vmatmul.mubr.bf16.gmra.mrb[0].mxu0 %v5778
    %v5889 = vpop.f32.mrb[0].mxu0
    %v5890 = vadd.f32 %v5733, %v5889
    %v5891 = vpop.f32.mrb[0].mxu0
    %v5892 = vpop.f32.mrb[0].mxu0
    %v5893 = vadd.f32 %v5733, %v5892
    %v5894 = vpop.f32.mrb[0].mxu0
    %5895 = vmatprep.mubr.bf16.mxu0 0
    %5896 = vmatmul.mubr.bf16.gmra.mrb[0].mxu0 %v5781
    %v5897 = vpop.f32.mrb[0].mxu0
    %v5898 = vadd.f32 %v5733, %v5897
    %v5899 = vpop.f32.mrb[0].mxu0
    %v5900 = vpop.f32.mrb[0].mxu0
    %v5901 = vadd.f32 %v5733, %v5900
    %v5902 = vpop.f32.mrb[0].mxu0
    %5903 = vmatprep.mubr.bf16.mxu0 0
    %5904 = vmatmul.mubr.bf16.gmra.mrb[0].mxu0 %v5784
    %v5905 = vpop.f32.mrb[0].mxu0
    %v5906 = vadd.f32 %v5733, %v5905
    %v5907 = vpop.f32.mrb[0].mxu0
    %v5908 = vpop.f32.mrb[0].mxu0
    %v5909 = vadd.f32 %v5733, %v5908
    %v5910 = vpop.f32.mrb[0].mxu0
    %5911 = vmatprep.mubr.bf16.mxu0 0
    %5912 = vmatmul.mubr.bf16.gmra.mrb[0].mxu0 %v5787
    %v5913 = vpop.f32.mrb[0].mxu0
    %v5914 = vadd.f32 %v5733, %v5913
    %v5915 = vpop.f32.mrb[0].mxu0
    %v5916 = vpop.f32.mrb[0].mxu0
    %v5917 = vadd.f32 %v5733, %v5916
    %v5918 = vpop.f32.mrb[0].mxu0
    %5919 = vmatprep.mubr.bf16.mxu0 0
    %5920 = vmatmul.mubr.bf16.gmra.mrb[0].mxu0 %v5790
    %v5921 = vpop.f32.mrb[0].mxu0
    %v5922 = vadd.f32 %v5733, %v5921
    %v5923 = vpop.f32.mrb[0].mxu0
    %v5924 = vpop.f32.mrb[0].mxu0
    %v5925 = vadd.f32 %v5733, %v5924
    %v5926 = vpop.f32.mrb[0].mxu0
    %5927 = vmatprep.mubr.bf16.mxu0 0
    %5928 = vmatmul.mubr.bf16.gmra.mrb[0].mxu0 %v5793
    %v5929 = vpop.f32.mrb[0].mxu0
    %v5930 = vadd.f32 %v5733, %v5929
    %v5931 = vpop.f32.mrb[0].mxu0
    %v5932 = vpop.f32.mrb[0].mxu0
    %v5933 = vadd.f32 %v5733, %v5932
    %v5934 = vpop.f32.mrb[0].mxu0
    %5935 = vmatprep.mubr.bf16.mxu0 0
    %5936 = vmatmul.mubr.bf16.gmra.mrb[0].mxu0 %v5796
    %v5937 = vpop.f32.mrb[0].mxu0
    %v5938 = vadd.f32 %v5733, %v5937
    %v5939 = vpop.f32.mrb[0].mxu0
    %v5940 = vpop.f32.mrb[0].mxu0
    %v5941 = vadd.f32 %v5733, %v5940
    %v5942 = vpop.f32.mrb[0].mxu0
    %5943 = vmatprep.mubr.bf16.mxu0 0
    %5944 = vmatmul.mubr.bf16.gmra.mrb[0].mxu0 %v5799
    %v5945 = vpop.f32.mrb[0].mxu0
    %v5946 = vadd.f32 %v5733, %v5945
    %v5947 = vpop.f32.mrb[0].mxu0
    %v5948 = vpop.f32.mrb[0].mxu0
    %v5949 = vadd.f32 %v5733, %v5948
    %v5950 = vpop.f32.mrb[0].mxu0
    %5951 = vmatprep.mubr.bf16.mxu0 0
    %5952 = vmatmul.mubr.bf16.gmra.mrb[0].mxu0 %v5802
    %v5953 = vpop.f32.mrb[0].mxu0
    %v5954 = vadd.f32 %v5733, %v5953
    %v5955 = vpop.f32.mrb[0].mxu0
    %v5956 = vpop.f32.mrb[0].mxu0
    %v5957 = vadd.f32 %v5733, %v5956
    %v5958 = vpop.f32.mrb[0].mxu0
    %5959 = vmatprep.mubr.bf16.mxu0 0
    %5960 = vmatmul.mubr.bf16.gmra.mrb[0].mxu0 %v5805
    %v5961 = vpop.f32.mrb[0].mxu0
    %v5962 = vadd.f32 %v5733, %v5961
    %v5963 = vpop.f32.mrb[0].mxu0
    %v5964 = vpop.f32.mrb[0].mxu0
    %v5965 = vadd.f32 %v5733, %v5964
    %v5966 = vpop.f32.mrb[0].mxu0
    %5967 = vdwg.mxu0
    %vm5968 = vcmp.lt.s32.totalorder %v2459, 10
    %v5969 = vsel %vm5968, %v5842, -1e+30
    %v5970 = vsel %vm5968, %v5845, -1e+30
    %v5971 = vsel %vm5968, %v5850, -1e+30
    %v5972 = vsel %vm5968, %v5853, -1e+30
    %v5973 = vsel %vm5968, %v5858, -1e+30
    %v5974 = vsel %vm5968, %v5861, -1e+30
    %v5975 = vsel %vm5968, %v5866, -1e+30
    %v5976 = vsel %vm5968, %v5869, -1e+30
    %v5977 = vsel %vm5968, %v5874, -1e+30
    %v5978 = vsel %vm5968, %v5877, -1e+30
    %v5979 = vsel %vm5968, %v5882, -1e+30
    %v5980 = vsel %vm5968, %v5885, -1e+30
    %v5981 = vsel %vm5968, %v5890, -1e+30
    %v5982 = vsel %vm5968, %v5893, -1e+30
    %v5983 = vsel %vm5968, %v5898, -1e+30
    %v5984 = vsel %vm5968, %v5901, -1e+30
    %v5985 = vsel %vm5968, %v5906, -1e+30
    %v5986 = vsel %vm5968, %v5909, -1e+30
    %v5987 = vsel %vm5968, %v5914, -1e+30
    %v5988 = vsel %vm5968, %v5917, -1e+30
    %v5989 = vsel %vm5968, %v5922, -1e+30
    %v5990 = vsel %vm5968, %v5925, -1e+30
    %v5991 = vsel %vm5968, %v5930, -1e+30
    %v5992 = vsel %vm5968, %v5933, -1e+30
    %v5993 = vsel %vm5968, %v5938, -1e+30
    %v5994 = vsel %vm5968, %v5941, -1e+30
    %v5995 = vsel %vm5968, %v5946, -1e+30
    %v5996 = vsel %vm5968, %v5949, -1e+30
    %v5997 = vsel %vm5968, %v5954, -1e+30
    %v5998 = vsel %vm5968, %v5957, -1e+30
    %v5999 = vsel %vm5968, %v5962, -1e+30
    %v6000 = vsel %vm5968, %v5965, -1e+30
    %6001 = vmax.xlane.f32.xlu0 %v5969
    %v6002 = vpop.xlane.xlu0 %6001
    %6003 = vmax.xlane.f32.xlu0 %v5970
    %v6004 = vpop.xlane.xlu0 %6003
    %6005 = vmax.xlane.f32.xlu0 %v5971
    %v6006 = vpop.xlane.xlu0 %6005
    %6007 = vmax.xlane.f32.xlu0 %v5972
    %v6008 = vpop.xlane.xlu0 %6007
    %6009 = vmax.xlane.f32.xlu0 %v5973
    %v6010 = vpop.xlane.xlu0 %6009
    %6011 = vmax.xlane.f32.xlu0 %v5974
    %v6012 = vpop.xlane.xlu0 %6011
    %6013 = vmax.xlane.f32.xlu0 %v5975
    %v6014 = vpop.xlane.xlu0 %6013
    %6015 = vmax.xlane.f32.xlu0 %v5976
    %v6016 = vpop.xlane.xlu0 %6015
    %6017 = vmax.xlane.f32.xlu0 %v5977
    %v6018 = vpop.xlane.xlu0 %6017
    %6019 = vmax.xlane.f32.xlu0 %v5978
    %v6020 = vpop.xlane.xlu0 %6019
    %6021 = vmax.xlane.f32.xlu0 %v5979
    %v6022 = vpop.xlane.xlu0 %6021
    %6023 = vmax.xlane.f32.xlu0 %v5980
    %v6024 = vpop.xlane.xlu0 %6023
    %6025 = vmax.xlane.f32.xlu0 %v5981
    %v6026 = vpop.xlane.xlu0 %6025
    %6027 = vmax.xlane.f32.xlu0 %v5982
    %v6028 = vpop.xlane.xlu0 %6027
    %6029 = vmax.xlane.f32.xlu0 %v5983
    %v6030 = vpop.xlane.xlu0 %6029
    %6031 = vmax.xlane.f32.xlu0 %v5984
    %v6032 = vpop.xlane.xlu0 %6031
    %6033 = vmax.xlane.f32.xlu0 %v5985
    %v6034 = vpop.xlane.xlu0 %6033
    %6035 = vmax.xlane.f32.xlu0 %v5986
    %v6036 = vpop.xlane.xlu0 %6035
    %6037 = vmax.xlane.f32.xlu0 %v5987
    %v6038 = vpop.xlane.xlu0 %6037
    %6039 = vmax.xlane.f32.xlu0 %v5988
    %v6040 = vpop.xlane.xlu0 %6039
    %6041 = vmax.xlane.f32.xlu0 %v5989
    %v6042 = vpop.xlane.xlu0 %6041
    %6043 = vmax.xlane.f32.xlu0 %v5990
    %v6044 = vpop.xlane.xlu0 %6043
    %6045 = vmax.xlane.f32.xlu0 %v5991
    %v6046 = vpop.xlane.xlu0 %6045
    %6047 = vmax.xlane.f32.xlu0 %v5992
    %v6048 = vpop.xlane.xlu0 %6047
    %6049 = vmax.xlane.f32.xlu0 %v5993
    %v6050 = vpop.xlane.xlu0 %6049
    %6051 = vmax.xlane.f32.xlu0 %v5994
    %v6052 = vpop.xlane.xlu0 %6051
    %6053 = vmax.xlane.f32.xlu0 %v5995
    %v6054 = vpop.xlane.xlu0 %6053
    %6055 = vmax.xlane.f32.xlu0 %v5996
    %v6056 = vpop.xlane.xlu0 %6055
    %6057 = vmax.xlane.f32.xlu0 %v5997
    %v6058 = vpop.xlane.xlu0 %6057
    %6059 = vmax.xlane.f32.xlu0 %v5998
    %v6060 = vpop.xlane.xlu0 %6059
    %6061 = vmax.xlane.f32.xlu0 %v5999
    %v6062 = vpop.xlane.xlu0 %6061
    %6063 = vmax.xlane.f32.xlu0 %v6000
    %v6064 = vpop.xlane.xlu0 %6063
    %v6065 = vsub.f32 %v5969, %v6002
    %v6066 = vsub.f32 %v5970, %v6004
    %v6067 = vsub.f32 %v5971, %v6006
    %v6068 = vsub.f32 %v5972, %v6008
    %v6069 = vsub.f32 %v5973, %v6010
    %v6070 = vsub.f32 %v5974, %v6012
    %v6071 = vsub.f32 %v5975, %v6014
    %v6072 = vsub.f32 %v5976, %v6016
    %v6073 = vsub.f32 %v5977, %v6018
    %v6074 = vsub.f32 %v5978, %v6020
    %v6075 = vsub.f32 %v5979, %v6022
    %v6076 = vsub.f32 %v5980, %v6024
    %v6077 = vsub.f32 %v5981, %v6026
    %v6078 = vsub.f32 %v5982, %v6028
    %v6079 = vsub.f32 %v5983, %v6030
    %v6080 = vsub.f32 %v5984, %v6032
    %v6081 = vsub.f32 %v5985, %v6034
    %v6082 = vsub.f32 %v5986, %v6036
    %v6083 = vsub.f32 %v5987, %v6038
    %v6084 = vsub.f32 %v5988, %v6040
    %v6085 = vsub.f32 %v5989, %v6042
    %v6086 = vsub.f32 %v5990, %v6044
    %v6087 = vsub.f32 %v5991, %v6046
    %v6088 = vsub.f32 %v5992, %v6048
    %v6089 = vsub.f32 %v5993, %v6050
    %v6090 = vsub.f32 %v5994, %v6052
    %v6091 = vsub.f32 %v5995, %v6054
    %v6092 = vsub.f32 %v5996, %v6056
    %v6093 = vsub.f32 %v5997, %v6058
    %v6094 = vsub.f32 %v5998, %v6060
    %v6095 = vsub.f32 %v5999, %v6062
    %v6096 = vsub.f32 %v6000, %v6064
    %v6097 = vmul.f32 %v6065, 1.442695
    %v6098 = vpow.pop %v6097
    %v6099 = vmul.f32 %v6066, 1.442695
    %v6100 = vpow.pop %v6099
    %v6101 = vmul.f32 %v6067, 1.442695
    %v6102 = vpow.pop %v6101
    %v6103 = vmul.f32 %v6068, 1.442695
    %v6104 = vpow.pop %v6103
    %v6105 = vmul.f32 %v6069, 1.442695
    %v6106 = vpow.pop %v6105
    %v6107 = vmul.f32 %v6070, 1.442695
    %v6108 = vpow.pop %v6107
    %v6109 = vmul.f32 %v6071, 1.442695
    %v6110 = vpow.pop %v6109
    %v6111 = vmul.f32 %v6072, 1.442695
    %v6112 = vpow.pop %v6111
    %v6113 = vmul.f32 %v6073, 1.442695
    %v6114 = vpow.pop %v6113
    %v6115 = vmul.f32 %v6074, 1.442695
    %v6116 = vpow.pop %v6115
    %v6117 = vmul.f32 %v6075, 1.442695
    %v6118 = vpow.pop %v6117
    %v6119 = vmul.f32 %v6076, 1.442695
    %v6120 = vpow.pop %v6119
    %v6121 = vmul.f32 %v6077, 1.442695
    %v6122 = vpow.pop %v6121
    %v6123 = vmul.f32 %v6078, 1.442695
    %v6124 = vpow.pop %v6123
    %v6125 = vmul.f32 %v6079, 1.442695
    %v6126 = vpow.pop %v6125
    %v6127 = vmul.f32 %v6080, 1.442695
    %v6128 = vpow.pop %v6127
    %v6129 = vmul.f32 %v6081, 1.442695
    %v6130 = vpow.pop %v6129
    %v6131 = vmul.f32 %v6082, 1.442695
    %v6132 = vpow.pop %v6131
    %v6133 = vmul.f32 %v6083, 1.442695
    %v6134 = vpow.pop %v6133
    %v6135 = vmul.f32 %v6084, 1.442695
    %v6136 = vpow.pop %v6135
    %v6137 = vmul.f32 %v6085, 1.442695
    %v6138 = vpow.pop %v6137
    %v6139 = vmul.f32 %v6086, 1.442695
    %v6140 = vpow.pop %v6139
    %v6141 = vmul.f32 %v6087, 1.442695
    %v6142 = vpow.pop %v6141
    %v6143 = vmul.f32 %v6088, 1.442695
    %v6144 = vpow.pop %v6143
    %v6145 = vmul.f32 %v6089, 1.442695
    %v6146 = vpow.pop %v6145
    %v6147 = vmul.f32 %v6090, 1.442695
    %v6148 = vpow.pop %v6147
    %v6149 = vmul.f32 %v6091, 1.442695
    %v6150 = vpow.pop %v6149
    %v6151 = vmul.f32 %v6092, 1.442695
    %v6152 = vpow.pop %v6151
    %v6153 = vmul.f32 %v6093, 1.442695
    %v6154 = vpow.pop %v6153
    %v6155 = vmul.f32 %v6094, 1.442695
    %v6156 = vpow.pop %v6155
    %v6157 = vmul.f32 %v6095, 1.442695
    %v6158 = vpow.pop %v6157
    %v6159 = vmul.f32 %v6096, 1.442695
    %v6160 = vpow.pop %v6159
    %6161 = vadd.xlane.f32.xlu0 %v6098
    %v6162 = vpop.xlane.xlu0 %6161
    %6163 = vadd.xlane.f32.xlu0 %v6100
    %v6164 = vpop.xlane.xlu0 %6163
    %6165 = vadd.xlane.f32.xlu0 %v6102
    %v6166 = vpop.xlane.xlu0 %6165
    %6167 = vadd.xlane.f32.xlu0 %v6104
    %v6168 = vpop.xlane.xlu0 %6167
    %6169 = vadd.xlane.f32.xlu0 %v6106
    %v6170 = vpop.xlane.xlu0 %6169
    %6171 = vadd.xlane.f32.xlu0 %v6108
    %v6172 = vpop.xlane.xlu0 %6171
    %6173 = vadd.xlane.f32.xlu0 %v6110
    %v6174 = vpop.xlane.xlu0 %6173
    %6175 = vadd.xlane.f32.xlu0 %v6112
    %v6176 = vpop.xlane.xlu0 %6175
    %6177 = vadd.xlane.f32.xlu0 %v6114
    %v6178 = vpop.xlane.xlu0 %6177
    %6179 = vadd.xlane.f32.xlu0 %v6116
    %v6180 = vpop.xlane.xlu0 %6179
    %6181 = vadd.xlane.f32.xlu0 %v6118
    %v6182 = vpop.xlane.xlu0 %6181
    %6183 = vadd.xlane.f32.xlu0 %v6120
    %v6184 = vpop.xlane.xlu0 %6183
    %6185 = vadd.xlane.f32.xlu0 %v6122
    %v6186 = vpop.xlane.xlu0 %6185
    %6187 = vadd.xlane.f32.xlu0 %v6124
    %v6188 = vpop.xlane.xlu0 %6187
    %6189 = vadd.xlane.f32.xlu0 %v6126
    %v6190 = vpop.xlane.xlu0 %6189
    %6191 = vadd.xlane.f32.xlu0 %v6128
    %v6192 = vpop.xlane.xlu0 %6191
    %6193 = vadd.xlane.f32.xlu0 %v6130
    %v6194 = vpop.xlane.xlu0 %6193
    %6195 = vadd.xlane.f32.xlu0 %v6132
    %v6196 = vpop.xlane.xlu0 %6195
    %6197 = vadd.xlane.f32.xlu0 %v6134
    %v6198 = vpop.xlane.xlu0 %6197
    %6199 = vadd.xlane.f32.xlu0 %v6136
    %v6200 = vpop.xlane.xlu0 %6199
    %6201 = vadd.xlane.f32.xlu0 %v6138
    %v6202 = vpop.xlane.xlu0 %6201
    %6203 = vadd.xlane.f32.xlu0 %v6140
    %v6204 = vpop.xlane.xlu0 %6203
    %6205 = vadd.xlane.f32.xlu0 %v6142
    %v6206 = vpop.xlane.xlu0 %6205
    %6207 = vadd.xlane.f32.xlu0 %v6144
    %v6208 = vpop.xlane.xlu0 %6207
    %6209 = vadd.xlane.f32.xlu0 %v6146
    %v6210 = vpop.xlane.xlu0 %6209
    %6211 = vadd.xlane.f32.xlu0 %v6148
    %v6212 = vpop.xlane.xlu0 %6211
    %6213 = vadd.xlane.f32.xlu0 %v6150
    %v6214 = vpop.xlane.xlu0 %6213
    %6215 = vadd.xlane.f32.xlu0 %v6152
    %v6216 = vpop.xlane.xlu0 %6215
    %6217 = vadd.xlane.f32.xlu0 %v6154
    %v6218 = vpop.xlane.xlu0 %6217
    %6219 = vadd.xlane.f32.xlu0 %v6156
    %v6220 = vpop.xlane.xlu0 %6219
    %6221 = vadd.xlane.f32.xlu0 %v6158
    %v6222 = vpop.xlane.xlu0 %6221
    %6223 = vadd.xlane.f32.xlu0 %v6160
    %v6224 = vpop.xlane.xlu0 %6223
    %v6225 = vlog2.pop %v6162
    %v6226 = vmul.f32 %v6225, 0.6931472
    %v6227 = vlog2.pop %v6164
    %v6228 = vmul.f32 %v6227, 0.6931472
    %v6229 = vlog2.pop %v6166
    %v6230 = vmul.f32 %v6229, 0.6931472
    %v6231 = vlog2.pop %v6168
    %v6232 = vmul.f32 %v6231, 0.6931472
    %v6233 = vlog2.pop %v6170
    %v6234 = vmul.f32 %v6233, 0.6931472
    %v6235 = vlog2.pop %v6172
    %v6236 = vmul.f32 %v6235, 0.6931472
    %v6237 = vlog2.pop %v6174
    %v6238 = vmul.f32 %v6237, 0.6931472
    %v6239 = vlog2.pop %v6176
    %v6240 = vmul.f32 %v6239, 0.6931472
    %v6241 = vlog2.pop %v6178
    %v6242 = vmul.f32 %v6241, 0.6931472
    %v6243 = vlog2.pop %v6180
    %v6244 = vmul.f32 %v6243, 0.6931472
    %v6245 = vlog2.pop %v6182
    %v6246 = vmul.f32 %v6245, 0.6931472
    %v6247 = vlog2.pop %v6184
    %v6248 = vmul.f32 %v6247, 0.6931472
    %v6249 = vlog2.pop %v6186
    %v6250 = vmul.f32 %v6249, 0.6931472
    %v6251 = vlog2.pop %v6188
    %v6252 = vmul.f32 %v6251, 0.6931472
    %v6253 = vlog2.pop %v6190
    %v6254 = vmul.f32 %v6253, 0.6931472
    %v6255 = vlog2.pop %v6192
    %v6256 = vmul.f32 %v6255, 0.6931472
    %v6257 = vlog2.pop %v6194
    %v6258 = vmul.f32 %v6257, 0.6931472
    %v6259 = vlog2.pop %v6196
    %v6260 = vmul.f32 %v6259, 0.6931472
    %v6261 = vlog2.pop %v6198
    %v6262 = vmul.f32 %v6261, 0.6931472
    %v6263 = vlog2.pop %v6200
    %v6264 = vmul.f32 %v6263, 0.6931472
    %v6265 = vlog2.pop %v6202
    %v6266 = vmul.f32 %v6265, 0.6931472
    %v6267 = vlog2.pop %v6204
    %v6268 = vmul.f32 %v6267, 0.6931472
    %v6269 = vlog2.pop %v6206
    %v6270 = vmul.f32 %v6269, 0.6931472
    %v6271 = vlog2.pop %v6208
    %v6272 = vmul.f32 %v6271, 0.6931472
    %v6273 = vlog2.pop %v6210
    %v6274 = vmul.f32 %v6273, 0.6931472
    %v6275 = vlog2.pop %v6212
    %v6276 = vmul.f32 %v6275, 0.6931472
    %v6277 = vlog2.pop %v6214
    %v6278 = vmul.f32 %v6277, 0.6931472
    %v6279 = vlog2.pop %v6216
    %v6280 = vmul.f32 %v6279, 0.6931472
    %v6281 = vlog2.pop %v6218
    %v6282 = vmul.f32 %v6281, 0.6931472
    %v6283 = vlog2.pop %v6220
    %v6284 = vmul.f32 %v6283, 0.6931472
    %v6285 = vlog2.pop %v6222
    %v6286 = vmul.f32 %v6285, 0.6931472
    %v6287 = vlog2.pop %v6224
    %v6288 = vmul.f32 %v6287, 0.6931472
    %v6289 = vadd.f32 %v6002, %v6226
    %v6290 = vadd.f32 %v6004, %v6228
    %v6291 = vadd.f32 %v6006, %v6230
    %v6292 = vadd.f32 %v6008, %v6232
    %v6293 = vadd.f32 %v6010, %v6234
    %v6294 = vadd.f32 %v6012, %v6236
    %v6295 = vadd.f32 %v6014, %v6238
    %v6296 = vadd.f32 %v6016, %v6240
    %v6297 = vadd.f32 %v6018, %v6242
    %v6298 = vadd.f32 %v6020, %v6244
    %v6299 = vadd.f32 %v6022, %v6246
    %v6300 = vadd.f32 %v6024, %v6248
    %v6301 = vadd.f32 %v6026, %v6250
    %v6302 = vadd.f32 %v6028, %v6252
    %v6303 = vadd.f32 %v6030, %v6254
    %v6304 = vadd.f32 %v6032, %v6256
    %v6305 = vadd.f32 %v6034, %v6258
    %v6306 = vadd.f32 %v6036, %v6260
    %v6307 = vadd.f32 %v6038, %v6262
    %v6308 = vadd.f32 %v6040, %v6264
    %v6309 = vadd.f32 %v6042, %v6266
    %v6310 = vadd.f32 %v6044, %v6268
    %v6311 = vadd.f32 %v6046, %v6270
    %v6312 = vadd.f32 %v6048, %v6272
    %v6313 = vadd.f32 %v6050, %v6274
    %v6314 = vadd.f32 %v6052, %v6276
    %v6315 = vadd.f32 %v6054, %v6278
    %v6316 = vadd.f32 %v6056, %v6280
    %v6317 = vadd.f32 %v6058, %v6282
    %v6318 = vadd.f32 %v6060, %v6284
    %v6319 = vadd.f32 %v6062, %v6286
    %v6320 = vadd.f32 %v6064, %v6288
    %v6321 = vsub.f32 %v5842, %v6289
    %v6322 = vsub.f32 %v5845, %v6290
    %v6323 = vsub.f32 %v5850, %v6291
    %v6324 = vsub.f32 %v5853, %v6292
    %v6325 = vsub.f32 %v5858, %v6293
    %v6326 = vsub.f32 %v5861, %v6294
    %v6327 = vsub.f32 %v5866, %v6295
    %v6328 = vsub.f32 %v5869, %v6296
    %v6329 = vsub.f32 %v5874, %v6297
    %v6330 = vsub.f32 %v5877, %v6298
    %v6331 = vsub.f32 %v5882, %v6299
    %v6332 = vsub.f32 %v5885, %v6300
    %v6333 = vsub.f32 %v5890, %v6301
    %v6334 = vsub.f32 %v5893, %v6302
    %v6335 = vsub.f32 %v5898, %v6303
    %v6336 = vsub.f32 %v5901, %v6304
    %v6337 = vsub.f32 %v5906, %v6305
    %v6338 = vsub.f32 %v5909, %v6306
    %v6339 = vsub.f32 %v5914, %v6307
    %v6340 = vsub.f32 %v5917, %v6308
    %v6341 = vsub.f32 %v5922, %v6309
    %v6342 = vsub.f32 %v5925, %v6310
    %v6343 = vsub.f32 %v5930, %v6311
    %v6344 = vsub.f32 %v5933, %v6312
    %v6345 = vsub.f32 %v5938, %v6313
    %v6346 = vsub.f32 %v5941, %v6314
    %v6347 = vsub.f32 %v5946, %v6315
    %v6348 = vsub.f32 %v5949, %v6316
    %v6349 = vsub.f32 %v5954, %v6317
    %v6350 = vsub.f32 %v5957, %v6318
    %v6351 = vsub.f32 %v5962, %v6319
    %v6352 = vsub.f32 %v5965, %v6320
    %6353 = vst [vmem:[#allocation7] sm:$0xff] %v6321
    %6354 = vst [vmem:[#allocation7 + $0x8] sm:$0xff] %v6322
    %6355 = vst [vmem:[#allocation7 + $0x10] sm:$0xff] %v6323
    %6356 = vst [vmem:[#allocation7 + $0x18] sm:$0xff] %v6324
    %6357 = vst [vmem:[#allocation7 + $0x20] sm:$0xff] %v6325
    %6358 = vst [vmem:[#allocation7 + $0x28] sm:$0xff] %v6326
    %6359 = vst [vmem:[#allocation7 + $0x30] sm:$0xff] %v6327
    %6360 = vst [vmem:[#allocation7 + $0x38] sm:$0xff] %v6328
    %6361 = vst [vmem:[#allocation7 + $0x40] sm:$0xff] %v6329
    %6362 = vst [vmem:[#allocation7 + $0x48] sm:$0xff] %v6330
    %6363 = vst [vmem:[#allocation7 + $0x50] sm:$0xff] %v6331
    %6364 = vst [vmem:[#allocation7 + $0x58] sm:$0xff] %v6332
    %6365 = vst [vmem:[#allocation7 + $0x60] sm:$0xff] %v6333
    %6366 = vst [vmem:[#allocation7 + $0x68] sm:$0xff] %v6334
    %6367 = vst [vmem:[#allocation7 + $0x70] sm:$0xff] %v6335
    %6368 = vst [vmem:[#allocation7 + $0x78] sm:$0xff] %v6336
    %6369 = vst [vmem:[#allocation7 + $0x80] sm:$0xff] %v6337
    %6370 = vst [vmem:[#allocation7 + $0x88] sm:$0xff] %v6338
    %6371 = vst [vmem:[#allocation7 + $0x90] sm:$0xff] %v6339
    %6372 = vst [vmem:[#allocation7 + $0x98] sm:$0xff] %v6340
    %6373 = vst [vmem:[#allocation7 + $0xa0] sm:$0xff] %v6341
    %6374 = vst [vmem:[#allocation7 + $0xa8] sm:$0xff] %v6342
    %6375 = vst [vmem:[#allocation7 + $0xb0] sm:$0xff] %v6343
    %6376 = vst [vmem:[#allocation7 + $0xb8] sm:$0xff] %v6344
    %6377 = vst [vmem:[#allocation7 + $0xc0] sm:$0xff] %v6345
    %6378 = vst [vmem:[#allocation7 + $0xc8] sm:$0xff] %v6346
    %6379 = vst [vmem:[#allocation7 + $0xd0] sm:$0xff] %v6347
    %6380 = vst [vmem:[#allocation7 + $0xd8] sm:$0xff] %v6348
    %6381 = vst [vmem:[#allocation7 + $0xe0] sm:$0xff] %v6349
    %6382 = vst [vmem:[#allocation7 + $0xe8] sm:$0xff] %v6350
    %6383 = vst [vmem:[#allocation7 + $0xf0] sm:$0xff] %v6351
    %6384 = vst [vmem:[#allocation7 + $0xf8] sm:$0xff] %v6352
    // Predicated region
    $region58: #{tpu_custom_call.1} parent=1 // pred_check
      _
    $region59: #{tpu_custom_call.1} parent=1 // pred_check_branch
      %6386 = sbr.rel (0) target = $region61
    $region60: #{tpu_custom_call.1} parent=1 // pred_region
      %s6388 = ssub.s32 4096, 4096
      %6389 = vsyncadd [#allocation4], %s6388
      %s6390 = sshll.u32 [#allocation7], 4
      %s6391 = int_to_ptr.vmem [resolvable:$true] %s6390
      %6396 = dma.vmem_to_hbm [thread:$0]  %s6391, 4096, %s12, [#allocation4], 128, 128, 8
    $region61: #{tpu_custom_call.1} parent=1 // pred_fallthru
      _
    // Predicated region
    $region62: #{tpu_custom_call.1} parent=1 // pred_check
      _
    $region63: #{tpu_custom_call.1} parent=1 // pred_check_branch
      %6398 = sbr.rel (0) target = $region65
    $region64: #{tpu_custom_call.1} parent=1 // pred_region
      %6399 = dma.done [#allocation4], 4096
    $region65: #{tpu_custom_call.1} parent=1 // pred_fallthru
      _
    %6400 = vsyncpa [#allocation3], 1
    %6401 = vsyncpa [#allocation6], 1
    %6402 = vsyncpa [#allocation4], 1

</llo_original>
